<compile_context>
chip_gen: v7x
topology: tpu7x:2x2x1
jax: 0.10.0
libtpu: 0.0.40
codegen_flags: <defaults>
</compile_context>

<pallas_src>
import functools

import numpy as np
import jax
import jax.numpy as jnp
from jax import lax
from jax.experimental import pallas as pl
from jax.experimental.pallas import tpu as pltpu


# Explicit, conservative scoped-VMEM budget (safe on v5e/v6e/v7x); blocks used
# here are tiny, so no generation-specific re-tiling is needed at these shapes.
_VMEM_LIMIT = 32 * 1024 * 1024


# -----------------------------------------------------------------------------
# Kernel 1: 1x1 conv == matmul, fused folded-BN affine + per-channel ReLU mask
# -----------------------------------------------------------------------------
def _mm_bn_act_kernel(x_ref, w_ref, s_ref, b_ref, m_ref, o_ref):
    # x_ref: (TM, Cin) bf16   w_ref: (Cin, Cout) bf16 (resident)
    # s/b/m_ref: (1, Cout) f32 (scale, shift, relu mask)   o_ref: (TM, Cout)
    acc = jnp.dot(x_ref[...], w_ref[...], preferred_element_type=jnp.float32)
    y = acc * s_ref[...] + b_ref[...]
    y = jnp.where(m_ref[...] > 0.0, jnp.maximum(y, 0.0), y)
    o_ref[...] = y.astype(o_ref.dtype)


def matmul_bn_act(x2d, w, scale, shift, relu_mask, *, out_dtype, row_tile=256):
    """Fused 1x1-conv (+folded BN)(+masked ReLU).  x2d: (M, Cin)."""
    m, cin = x2d.shape
    cout = w.shape[-1]
    # Largest 8-aligned row tile that divides M (sweepable; 256-2048 is the
    # sweet spot at real resolutions -- budget VMEM, don't guess, on v7x).
    tm = row_tile if (m % row_tile == 0) else m

    return pl.pallas_call(
        _mm_bn_act_kernel,
        out_shape=jax.ShapeDtypeStruct((m, cout), out_dtype),
        grid_spec=pltpu.PrefetchScalarGridSpec(
            num_scalar_prefetch=0,
            grid=(m // tm,),
            in_specs=[
                pl.BlockSpec((tm, cin), lambda i: (i, 0)),
                pl.BlockSpec((cin, cout), lambda i: (0, 0)),   # resident weight
                pl.BlockSpec((1, cout), lambda i: (0, 0)),
                pl.BlockSpec((1, cout), lambda i: (0, 0)),
                pl.BlockSpec((1, cout), lambda i: (0, 0)),
            ],
            out_specs=pl.BlockSpec((tm, cout), lambda i: (i, 0)),
        ),
        compiler_params=pltpu.CompilerParams(
            dimension_semantics=("parallel",),
            vmem_limit_bytes=_VMEM_LIMIT,
        ),
    )(x2d.astype(jnp.bfloat16), w.astype(jnp.bfloat16),
      scale.reshape(1, cout).astype(jnp.float32),
      shift.reshape(1, cout).astype(jnp.float32),
      relu_mask.reshape(1, cout).astype(jnp.float32))


# -----------------------------------------------------------------------------
# Kernel 2: dilated KxK conv with in-kernel unrolled taps + folded BN + ReLU
# -----------------------------------------------------------------------------
def _dconv_bn_act_kernel(xp_ref, w_ref, s_ref, b_ref, o_ref, *,
                         ksize, rate, th, width, relu):
    # xp_ref: (1, Hp, Wp, Cin) padded image (resident across row tiles)
    # w_ref : (K*K, Cin, Cout) all tap weights (resident)
    # s/b_ref: (1, Cout) folded BN scale / shift
    # o_ref : (1, th, width, Cout) output row tile
    cin = xp_ref.shape[-1]
    cout = o_ref.shape[-1]
    row0 = pl.program_id(1) * th

    acc = jnp.zeros((th * width, cout), jnp.float32)
    for kh in range(ksize):            # taps statically unrolled: the 3x3
        for kw in range(ksize):        # reduction folds into f32 registers
            win = xp_ref[0,
                         pl.ds(row0 + kh * rate, th),
                         pl.ds(kw * rate, width),
                         :]
            acc += jnp.dot(win.reshape(th * width, cin),
                           w_ref[kh * ksize + kw],
                           preferred_element_type=jnp.float32)

    y = acc * s_ref[...] + b_ref[...]
    if relu:
        y = jnp.maximum(y, 0.0)
    o_ref[...] = y.reshape(1, th, width, cout).astype(o_ref.dtype)


def dconv_bn_act(x, w, scale, shift, *, rate, relu=True,
                 out_dtype=jnp.bfloat16, row_tile=8):
    """Fused dilated conv (+folded BN)(+ReLU).  x: (N, H, W, Cin) NHWC."""
    n, h, wd, cin = x.shape
    ksize = w.shape[0]
    cout = w.shape[-1]
    pad = rate * (ksize - 1) // 2

    # Pad once in glue (no 9x tap materialization in HBM).
    xp = jnp.pad(x.astype(jnp.bfloat16),
                 ((0, 0), (pad, pad), (pad, pad), (0, 0)))
    hp, wp = h + 2 * pad, wd + 2 * pad

    th = row_tile if (h % row_tile == 0) else h
    nh = h // th
    wt = w.reshape(ksize * ksize, cin, cout).astype(jnp.bfloat16)

    kernel = functools.partial(_dconv_bn_act_kernel, ksize=ksize, rate=rate,
                               th=th, width=wd, relu=relu)
    return pl.pallas_call(
        kernel,
        out_shape=jax.ShapeDtypeStruct((n, h, wd, cout), out_dtype),
        grid_spec=pltpu.PrefetchScalarGridSpec(
            num_scalar_prefetch=0,
            grid=(n, nh),
            in_specs=[
                # Whole padded image per batch element; DMA'd once per n
                # (block index independent of the row-tile axis).
                pl.BlockSpec((1, hp, wp, cin), lambda b, r: (b, 0, 0, 0)),
                pl.BlockSpec((ksize * ksize, cin, cout), lambda b, r: (0, 0, 0)),
                pl.BlockSpec((1, cout), lambda b, r: (0, 0)),
                pl.BlockSpec((1, cout), lambda b, r: (0, 0)),
            ],
            out_specs=pl.BlockSpec((1, th, wd, cout), lambda b, r: (b, r, 0, 0)),
        ),
        compiler_params=pltpu.CompilerParams(
            dimension_semantics=("parallel", "parallel"),
            vmem_limit_bytes=_VMEM_LIMIT,
        ),
    )(xp, wt,
      scale.reshape(1, cout).astype(jnp.float32),
      shift.reshape(1, cout).astype(jnp.float32))


# -----------------------------------------------------------------------------
# Parameter construction (deterministic, synthetic).  BN folded into scale/shift.
# -----------------------------------------------------------------------------
def make_conv_bn_params(key, K, cin, cout, with_bn=True):
    k1, k2, k3, k4, k5, k6 = jax.random.split(key, 6)
    w = jax.random.normal(k1, (K, K, cin, cout), jnp.float32) / np.sqrt(K * K * cin)
    b = 0.1 * jax.random.normal(k2, (cout,), jnp.float32)
    if with_bn:
        gamma = 1.0 + 0.1 * jax.random.normal(k3, (cout,), jnp.float32)
        beta = 0.1 * jax.random.normal(k4, (cout,), jnp.float32)
        mean = 0.1 * jax.random.normal(k5, (cout,), jnp.float32)
        var = jax.random.uniform(k6, (cout,), jnp.float32, minval=0.5, maxval=1.5)
        eps = 1e-5
        scale = gamma / jnp.sqrt(var + eps)
        shift = beta + scale * (b - mean)
    else:
        scale = jnp.ones((cout,), jnp.float32)
        shift = b
    return {"w": w, "scale": scale, "shift": shift}


def make_easpp_params(key, in_channels, out_channels):
    branch_out = out_channels // 4
    keys = jax.random.split(key, 16)

    def branch_params(ks):
        return [
            make_conv_bn_params(ks[0], 1, in_channels, branch_out),
            make_conv_bn_params(ks[1], 3, branch_out, branch_out),
            make_conv_bn_params(ks[2], 3, branch_out, branch_out),
            make_conv_bn_params(ks[3], 1, branch_out, out_channels),
        ]

    return {
        "branch1": make_conv_bn_params(keys[0], 1, in_channels, out_channels,
                                       with_bn=False),
        "branch2": branch_params(keys[1:5]),
        "branch3": branch_params(keys[5:9]),
        "branch4": branch_params(keys[9:13]),
        "final": make_conv_bn_params(keys[13], 1, 4 * out_channels, out_channels,
                                     with_bn=False),
    }


# -----------------------------------------------------------------------------
# eASPP forward (Pallas kernels) and pure-JAX reference
# -----------------------------------------------------------------------------
def easpp_forward(x_nchw, params):
    x = jnp.transpose(x_nchw, (0, 2, 3, 1)).astype(jnp.float32)   # -> NHWC
    n, h, wd, cin = x.shape
    out_ch = params["branch1"]["w"].shape[-1]
    br = params["branch2"][0]["w"].shape[-1]
    m = n * h * wd

    # --- Stage A: branch1 + all three branches' first 1x1, ONE matmul ---------
    p1 = params["branch1"]
    firsts = [params["branch2"][0], params["branch3"][0], params["branch4"][0]]
    w_a = jnp.concatenate([p1["w"].reshape(cin, out_ch)]
                          + [p["w"].reshape(cin, br) for p in firsts], axis=-1)
    s_a = jnp.concatenate([p1["scale"]] + [p["scale"] for p in firsts])
    b_a = jnp.concatenate([p1["shift"]] + [p["shift"] for p in firsts])
    m_a = jnp.concatenate([jnp.zeros((out_ch,), jnp.float32),   # branch1: no ReLU
                           jnp.ones((3 * br,), jnp.float32)])   # others: ReLU
    y_a = matmul_bn_act(x.reshape(m, cin), w_a, s_a, b_a, m_a,
                        out_dtype=jnp.bfloat16)

    b1 = y_a[:, :out_ch]                                         # (m, out_ch)
    zs = [y_a[:, out_ch + i * br: out_ch + (i + 1) * br].reshape(n, h, wd, br)
          for i in range(3)]

    # --- Stages B/C: two dilated 3x3 conv+BN+ReLU per branch (Pallas dconv) ---
    rates = (3, 6, 12)
    branches = (params["branch2"], params["branch3"], params["branch4"])
    ys = []
    for z, rate, pbr in zip(zs, rates, branches):
        y = dconv_bn_act(z, pbr[1]["w"], pbr[1]["scale"], pbr[1]["shift"], rate=rate)
        y = dconv_bn_act(y, pbr[2]["w"], pbr[2]["scale"], pbr[2]["shift"], rate=rate)
        ys.append(y.reshape(m, br))

    # --- Stage D: the three branch-final 1x1s as one block-diagonal matmul ----
    w_d = jnp.zeros((3 * br, 3 * out_ch), jnp.float32)
    for i, pbr in enumerate(branches):
        w_d = w_d.at[i * br:(i + 1) * br,
                     i * out_ch:(i + 1) * out_ch].set(pbr[3]["w"].reshape(br, out_ch))
    s_d = jnp.concatenate([pbr[3]["scale"] for pbr in branches])
    b_d = jnp.concatenate([pbr[3]["shift"] for pbr in branches])
    m_d = jnp.ones((3 * out_ch,), jnp.float32)
    y_d = matmul_bn_act(jnp.concatenate(ys, axis=-1), w_d, s_d, b_d, m_d,
                        out_dtype=jnp.bfloat16)

    # --- Final 1x1 over the lane-dense (m, 4*out_ch = 128) concat -------------
    cat = jnp.concatenate([b1, y_d], axis=-1)   # order: [branch1, b2, b3, b4]
    pf = params["final"]
    out = matmul_bn_act(cat, pf["w"].reshape(4 * out_ch, out_ch),
                        pf["scale"], pf["shift"],
                        jnp.zeros((out_ch,), jnp.float32),
                        out_dtype=jnp.float32)
    return jnp.transpose(out.reshape(n, h, wd, out_ch), (0, 3, 1, 2))  # -> NCHW


def easpp_ref(x_nchw, params):
    """Pure-JAX reference with the SAME numerics contract as the kernels:
    bf16 inputs/weights to every conv, f32 accumulation, f32 epilogue."""
    x = jnp.transpose(x_nchw, (0, 2, 3, 1)).astype(jnp.float32)

    def apply(xin, p, rate, relu):
        K = p["w"].shape[0]
        pad = rate * (K - 1) // 2
        y = lax.conv_general_dilated(
            xin.astype(jnp.bfloat16), p["w"].astype(jnp.bfloat16),
            (1, 1), [(pad, pad), (pad, pad)],
            rhs_dilation=(rate, rate),
            dimension_numbers=("NHWC", "HWIO", "NHWC"),
            preferred_element_type=jnp.float32)
        y = y * p["scale"] + p["shift"]
        return jnp.maximum(y, 0.0) if relu else y

    def branch(xin, ps, rate):
        y = apply(xin, ps[0], 1, True)
        y = apply(y, ps[1], rate, True)
        y = apply(y, ps[2], rate, True)
        y = apply(y, ps[3], 1, True)
        return y

    b1 = apply(x, params["branch1"], 1, False)
    b2 = branch(x, params["branch2"], 3)
    b3 = branch(x, params["branch3"], 6)
    b4 = branch(x, params["branch4"], 12)
    cat = jnp.concatenate([b1, b2, b3, b4], axis=-1)
    out = apply(cat, params["final"], 1, False)
    return jnp.transpose(out, (0, 3, 1, 2))


if __name__ == "__main__":
    key = jax.random.PRNGKey(0)
    k_params, k_x = jax.random.split(key)

    N, IN_CH, H, W = 2, 8, 16, 16
    OUT_CH = 32   # branch_out = 8; concat = 128 channels (lane-dense)

    params = make_easpp_params(k_params, IN_CH, OUT_CH)
    x = jax.random.normal(k_x, (N, IN_CH, H, W), jnp.float32)

    out = jax.jit(easpp_forward)(x, params)
    out = jax.block_until_ready(out)
    assert out.shape == (N, OUT_CH, H, W), out.shape

    ref = jax.block_until_ready(easpp_ref(x, params))
    # bf16 MXU inputs + f32 accumulation on both sides; tolerance covers
    # accumulation-order / rounding-tie differences only.
    np.testing.assert_allclose(np.asarray(out), np.asarray(ref),
                               rtol=2e-2, atol=2e-2)

    print("KERNEL_OK")
</pallas_src>

<mosaic_0001>
module attributes {stable_mosaic.version = 11 : i64} {
  func.func @_mm_bn_act_kernel(%arg0: i32, %arg1: memref<256x8xbf16, #tpu.memory_space<vmem>>, %arg2: memref<8x56xbf16, #tpu.memory_space<vmem>>, %arg3: memref<1x56xf32, #tpu.memory_space<vmem>>, %arg4: memref<1x56xf32, #tpu.memory_space<vmem>>, %arg5: memref<1x56xf32, #tpu.memory_space<vmem>>, %arg6: memref<256x56xbf16, #tpu.memory_space<vmem>>) attributes {dimension_semantics = [#tpu.dimension_semantics<parallel>], iteration_bounds = array<i64: 2>, scalar_prefetch = 0 : i64, scratch_operands = 0 : i64, tpu.core_type = #tpu.core_type<tc>, window_params = [{transform_indices = @transform_0, window_bounds = array<i64: 256, 8>}, {pipeline_mode = #tpu.pipeline_mode<synchronous>, transform_indices = @transform_1, window_bounds = array<i64: 8, 56>}, {pipeline_mode = #tpu.pipeline_mode<synchronous>, transform_indices = @transform_2, window_bounds = array<i64: 1, 56>}, {pipeline_mode = #tpu.pipeline_mode<synchronous>, transform_indices = @transform_3, window_bounds = array<i64: 1, 56>}, {pipeline_mode = #tpu.pipeline_mode<synchronous>, transform_indices = @transform_4, window_bounds = array<i64: 1, 56>}, {transform_indices = @transform_5, window_bounds = array<i64: 256, 56>}]} {
    %c0 = arith.constant 0 : index
    %c0_0 = arith.constant 0 : index
    %0 = vector.load %arg1[%c0, %c0_0] : memref<256x8xbf16, #tpu.memory_space<vmem>>, vector<256x8xbf16>
    %c0_1 = arith.constant 0 : index
    %c0_2 = arith.constant 0 : index
    %1 = vector.load %arg2[%c0_1, %c0_2] : memref<8x56xbf16, #tpu.memory_space<vmem>>, vector<8x56xbf16>
    %cst = arith.constant dense<0.000000e+00> : vector<256x56xf32>
    %2 = tpu.matmul %0, %1, %cst {dimension_numbers = #tpu.dot_dimension_numbers<[1], [0], [0], [1], [0, 0, 1, 1], [], []>} : vector<256x8xbf16>, vector<8x56xbf16>, vector<256x56xf32> -> vector<256x56xf32>
    %c0_3 = arith.constant 0 : index
    %c0_4 = arith.constant 0 : index
    %3 = vector.load %arg3[%c0_3, %c0_4] : memref<1x56xf32, #tpu.memory_space<vmem>>, vector<1x56xf32>
    %4 = vector.broadcast %3 : vector<1x56xf32> to vector<256x56xf32>
    %5 = arith.mulf %2, %4 : vector<256x56xf32>
    %c0_5 = arith.constant 0 : index
    %c0_6 = arith.constant 0 : index
    %6 = vector.load %arg4[%c0_5, %c0_6] : memref<1x56xf32, #tpu.memory_space<vmem>>, vector<1x56xf32>
    %7 = vector.broadcast %6 : vector<1x56xf32> to vector<256x56xf32>
    %8 = arith.addf %5, %7 : vector<256x56xf32>
    %c0_7 = arith.constant 0 : index
    %c0_8 = arith.constant 0 : index
    %9 = vector.load %arg5[%c0_7, %c0_8] : memref<1x56xf32, #tpu.memory_space<vmem>>, vector<1x56xf32>
    %cst_9 = arith.constant 0.000000e+00 : f32
    %10 = vector.broadcast %cst_9 : f32 to vector<1x56xf32>
    %11 = arith.cmpf ogt, %9, %10 : vector<1x56xf32>
    %cst_10 = arith.constant 0.000000e+00 : f32
    %12 = vector.broadcast %cst_10 : f32 to vector<256x56xf32>
    %13 = arith.maximumf %8, %12 : vector<256x56xf32>
    %14 = vector.shape_cast %11 : vector<1x56xi1> to vector<1x56xi1>
    %15 = vector.broadcast %14 : vector<1x56xi1> to vector<256x56xi1>
    %16 = arith.select %15, %13, %8 : vector<256x56xi1>, vector<256x56xf32>
    %17 = arith.truncf %16 : vector<256x56xf32> to vector<256x56xbf16>
    %c0_11 = arith.constant 0 : index
    %c0_12 = arith.constant 0 : index
    %18 = vector.load %arg6[%c0_11, %c0_12] : memref<256x56xbf16, #tpu.memory_space<vmem>>, vector<256x56xbf16>
    tpu.vector_store %arg6[%c0_11, %c0_12], %17 {strides = array<i32>} : memref<256x56xbf16, #tpu.memory_space<vmem>>, vector<256x56xbf16>,
    return
  }
  func.func @transform_0(%arg0: i32) -> (i32, i32) {
    %c0_i32 = arith.constant 0 : i32
    %c0_i32_0 = arith.constant 0 : i32
    return %arg0, %c0_i32 : i32, i32
  }
  func.func @transform_1(%arg0: i32) -> (i32, i32) {
    %c0_i32 = arith.constant 0 : i32
    %c0_i32_0 = arith.constant 0 : i32
    %c0_i32_1 = arith.constant 0 : i32
    return %c0_i32, %c0_i32_0 : i32, i32
  }
  func.func @transform_2(%arg0: i32) -> (i32, i32) {
    %c0_i32 = arith.constant 0 : i32
    %c0_i32_0 = arith.constant 0 : i32
    %c0_i32_1 = arith.constant 0 : i32
    return %c0_i32, %c0_i32_0 : i32, i32
  }
  func.func @transform_3(%arg0: i32) -> (i32, i32) {
    %c0_i32 = arith.constant 0 : i32
    %c0_i32_0 = arith.constant 0 : i32
    %c0_i32_1 = arith.constant 0 : i32
    return %c0_i32, %c0_i32_0 : i32, i32
  }
  func.func @transform_4(%arg0: i32) -> (i32, i32) {
    %c0_i32 = arith.constant 0 : i32
    %c0_i32_0 = arith.constant 0 : i32
    %c0_i32_1 = arith.constant 0 : i32
    return %c0_i32, %c0_i32_0 : i32, i32
  }
  func.func @transform_5(%arg0: i32) -> (i32, i32) {
    %c0_i32 = arith.constant 0 : i32
    %c0_i32_0 = arith.constant 0 : i32
    return %arg0, %c0_i32 : i32, i32
  }
}

module attributes {stable_mosaic.version = 11 : i64} {
  func.func @_dconv_bn_act_kernel(%arg0: i32, %arg1: i32, %arg2: memref<1x40x40x8xbf16, #tpu.memory_space<vmem>>, %arg3: memref<9x8x8xbf16, #tpu.memory_space<vmem>>, %arg4: memref<1x8xf32, #tpu.memory_space<vmem>>, %arg5: memref<1x8xf32, #tpu.memory_space<vmem>>, %arg6: memref<1x8x16x8xbf16, #tpu.memory_space<vmem>>) attributes {dimension_semantics = [#tpu.dimension_semantics<parallel>, #tpu.dimension_semantics<parallel>], iteration_bounds = array<i64: 2, 2>, scalar_prefetch = 0 : i64, scratch_operands = 0 : i64, tpu.core_type = #tpu.core_type<tc>, window_params = [{transform_indices = @transform_0, window_bounds = array<i64: 1, 40, 40, 8>}, {pipeline_mode = #tpu.pipeline_mode<synchronous>, transform_indices = @transform_1, window_bounds = array<i64: 9, 8, 8>}, {pipeline_mode = #tpu.pipeline_mode<synchronous>, transform_indices = @transform_2, window_bounds = array<i64: 1, 8>}, {pipeline_mode = #tpu.pipeline_mode<synchronous>, transform_indices = @transform_3, window_bounds = array<i64: 1, 8>}, {transform_indices = @transform_4, window_bounds = array<i64: 1, 8, 16, 8>}]} {
    %c8_i32 = arith.constant 8 : i32
    %0 = arith.muli %arg1, %c8_i32 : i32
    %cst = arith.constant 0.000000e+00 : f32
    %1 = vector.broadcast %cst : f32 to vector<128x8xf32>
    %c0_i32 = arith.constant 0 : i32
    %2 = arith.addi %0, %c0_i32 : i32
    %c0 = arith.constant 0 : index
    %3 = arith.index_cast %2 : i32 to index
    %c0_0 = arith.constant 0 : index
    %c0_1 = arith.constant 0 : index
    %4 = vector.load %arg2[%c0, %3, %c0_0, %c0_1] : memref<1x40x40x8xbf16, #tpu.memory_space<vmem>>, vector<1x8x16x8xbf16>
    %5 = vector.shape_cast %4 : vector<1x8x16x8xbf16> to vector<8x16x8xbf16>
    %6 = vector.shape_cast %5 : vector<8x16x8xbf16> to vector<128x8xbf16>
    %c0_2 = arith.constant 0 : index
    %c0_3 = arith.constant 0 : index
    %c0_4 = arith.constant 0 : index
    %7 = vector.load %arg3[%c0_2, %c0_3, %c0_4] : memref<9x8x8xbf16, #tpu.memory_space<vmem>>, vector<1x8x8xbf16>
    %8 = vector.shape_cast %7 : vector<1x8x8xbf16> to vector<8x8xbf16>
    %cst_5 = arith.constant dense<0.000000e+00> : vector<128x8xf32>
    %9 = tpu.matmul %6, %8, %cst_5 {dimension_numbers = #tpu.dot_dimension_numbers<[1], [0], [0], [1], [0, 0, 1, 1], [], []>} : vector<128x8xbf16>, vector<8x8xbf16>, vector<128x8xf32> -> vector<128x8xf32>
    %10 = arith.addf %1, %9 : vector<128x8xf32>
    %c0_i32_6 = arith.constant 0 : i32
    %11 = arith.addi %0, %c0_i32_6 : i32
    %c0_7 = arith.constant 0 : index
    %12 = arith.index_cast %11 : i32 to index
    %c12 = arith.constant 12 : index
    %c0_8 = arith.constant 0 : index
    %13 = vector.load %arg2[%c0_7, %12, %c12, %c0_8] : memref<1x40x40x8xbf16, #tpu.memory_space<vmem>>, vector<1x8x16x8xbf16>
    %14 = vector.shape_cast %13 : vector<1x8x16x8xbf16> to vector<8x16x8xbf16>
    %15 = vector.shape_cast %14 : vector<8x16x8xbf16> to vector<128x8xbf16>
    %c1 = arith.constant 1 : index
    %c0_9 = arith.constant 0 : index
    %c0_10 = arith.constant 0 : index
    %16 = vector.load %arg3[%c1, %c0_9, %c0_10] : memref<9x8x8xbf16, #tpu.memory_space<vmem>>, vector<1x8x8xbf16>
    %17 = vector.shape_cast %16 : vector<1x8x8xbf16> to vector<8x8xbf16>
    %cst_11 = arith.constant dense<0.000000e+00> : vector<128x8xf32>
    %18 = tpu.matmul %15, %17, %cst_11 {dimension_numbers = #tpu.dot_dimension_numbers<[1], [0], [0], [1], [0, 0, 1, 1], [], []>} : vector<128x8xbf16>, vector<8x8xbf16>, vector<128x8xf32> -> vector<128x8xf32>
    %19 = arith.addf %10, %18 : vector<128x8xf32>
    %c0_i32_12 = arith.constant 0 : i32
    %20 = arith.addi %0, %c0_i32_12 : i32
    %c0_13 = arith.constant 0 : index
    %21 = arith.index_cast %20 : i32 to index
    %c24 = arith.constant 24 : index
    %c0_14 = arith.constant 0 : index
    %22 = vector.load %arg2[%c0_13, %21, %c24, %c0_14] : memref<1x40x40x8xbf16, #tpu.memory_space<vmem>>, vector<1x8x16x8xbf16>
    %23 = vector.shape_cast %22 : vector<1x8x16x8xbf16> to vector<8x16x8xbf16>
    %24 = vector.shape_cast %23 : vector<8x16x8xbf16> to vector<128x8xbf16>
    %c2 = arith.constant 2 : index
    %c0_15 = arith.constant 0 : index
    %c0_16 = arith.constant 0 : index
    %25 = vector.load %arg3[%c2, %c0_15, %c0_16] : memref<9x8x8xbf16, #tpu.memory_space<vmem>>, vector<1x8x8xbf16>
    %26 = vector.shape_cast %25 : vector<1x8x8xbf16> to vector<8x8xbf16>
    %cst_17 = arith.constant dense<0.000000e+00> : vector<128x8xf32>
    %27 = tpu.matmul %24, %26, %cst_17 {dimension_numbers = #tpu.dot_dimension_numbers<[1], [0], [0], [1], [0, 0, 1, 1], [], []>} : vector<128x8xbf16>, vector<8x8xbf16>, vector<128x8xf32> -> vector<128x8xf32>
    %28 = arith.addf %19, %27 : vector<128x8xf32>
    %c12_i32 = arith.constant 12 : i32
    %29 = arith.addi %0, %c12_i32 : i32
    %c0_18 = arith.constant 0 : index
    %30 = arith.index_cast %29 : i32 to index
    %c0_19 = arith.constant 0 : index
    %c0_20 = arith.constant 0 : index
    %31 = vector.load %arg2[%c0_18, %30, %c0_19, %c0_20] : memref<1x40x40x8xbf16, #tpu.memory_space<vmem>>, vector<1x8x16x8xbf16>
    %32 = vector.shape_cast %31 : vector<1x8x16x8xbf16> to vector<8x16x8xbf16>
    %33 = vector.shape_cast %32 : vector<8x16x8xbf16> to vector<128x8xbf16>
    %c3 = arith.constant 3 : index
    %c0_21 = arith.constant 0 : index
    %c0_22 = arith.constant 0 : index
    %34 = vector.load %arg3[%c3, %c0_21, %c0_22] : memref<9x8x8xbf16, #tpu.memory_space<vmem>>, vector<1x8x8xbf16>
    %35 = vector.shape_cast %34 : vector<1x8x8xbf16> to vector<8x8xbf16>
    %cst_23 = arith.constant dense<0.000000e+00> : vector<128x8xf32>
    %36 = tpu.matmul %33, %35, %cst_23 {dimension_numbers = #tpu.dot_dimension_numbers<[1], [0], [0], [1], [0, 0, 1, 1], [], []>} : vector<128x8xbf16>, vector<8x8xbf16>, vector<128x8xf32> -> vector<128x8xf32>
    %37 = arith.addf %28, %36 : vector<128x8xf32>
    %c12_i32_24 = arith.constant 12 : i32
    %38 = arith.addi %0, %c12_i32_24 : i32
    %c0_25 = arith.constant 0 : index
    %39 = arith.index_cast %38 : i32 to index
    %c12_26 = arith.constant 12 : index
    %c0_27 = arith.constant 0 : index
    %40 = vector.load %arg2[%c0_25, %39, %c12_26, %c0_27] : memref<1x40x40x8xbf16, #tpu.memory_space<vmem>>, vector<1x8x16x8xbf16>
    %41 = vector.shape_cast %40 : vector<1x8x16x8xbf16> to vector<8x16x8xbf16>
    %42 = vector.shape_cast %41 : vector<8x16x8xbf16> to vector<128x8xbf16>
    %c4 = arith.constant 4 : index
    %c0_28 = arith.constant 0 : index
    %c0_29 = arith.constant 0 : index
    %43 = vector.load %arg3[%c4, %c0_28, %c0_29] : memref<9x8x8xbf16, #tpu.memory_space<vmem>>, vector<1x8x8xbf16>
    %44 = vector.shape_cast %43 : vector<1x8x8xbf16> to vector<8x8xbf16>
    %cst_30 = arith.constant dense<0.000000e+00> : vector<128x8xf32>
    %45 = tpu.matmul %42, %44, %cst_30 {dimension_numbers = #tpu.dot_dimension_numbers<[1], [0], [0], [1], [0, 0, 1, 1], [], []>} : vector<128x8xbf16>, vector<8x8xbf16>, vector<128x8xf32> -> vector<128x8xf32>
    %46 = arith.addf %37, %45 : vector<128x8xf32>
    %c12_i32_31 = arith.constant 12 : i32
    %47 = arith.addi %0, %c12_i32_31 : i32
    %c0_32 = arith.constant 0 : index
    %48 = arith.index_cast %47 : i32 to index
    %c24_33 = arith.constant 24 : index
    %c0_34 = arith.constant 0 : index
    %49 = vector.load %arg2[%c0_32, %48, %c24_33, %c0_34] : memref<1x40x40x8xbf16, #tpu.memory_space<vmem>>, vector<1x8x16x8xbf16>
    %50 = vector.shape_cast %49 : vector<1x8x16x8xbf16> to vector<8x16x8xbf16>
    %51 = vector.shape_cast %50 : vector<8x16x8xbf16> to vector<128x8xbf16>
    %c5 = arith.constant 5 : index
    %c0_35 = arith.constant 0 : index
    %c0_36 = arith.constant 0 : index
    %52 = vector.load %arg3[%c5, %c0_35, %c0_36] : memref<9x8x8xbf16, #tpu.memory_space<vmem>>, vector<1x8x8xbf16>
    %53 = vector.shape_cast %52 : vector<1x8x8xbf16> to vector<8x8xbf16>
    %cst_37 = arith.constant dense<0.000000e+00> : vector<128x8xf32>
    %54 = tpu.matmul %51, %53, %cst_37 {dimension_numbers = #tpu.dot_dimension_numbers<[1], [0], [0], [1], [0, 0, 1, 1], [], []>} : vector<128x8xbf16>, vector<8x8xbf16>, vector<128x8xf32> -> vector<128x8xf32>
    %55 = arith.addf %46, %54 : vector<128x8xf32>
    %c24_i32 = arith.constant 24 : i32
    %56 = arith.addi %0, %c24_i32 : i32
    %c0_38 = arith.constant 0 : index
    %57 = arith.index_cast %56 : i32 to index
    %c0_39 = arith.constant 0 : index
    %c0_40 = arith.constant 0 : index
    %58 = vector.load %arg2[%c0_38, %57, %c0_39, %c0_40] : memref<1x40x40x8xbf16, #tpu.memory_space<vmem>>, vector<1x8x16x8xbf16>
    %59 = vector.shape_cast %58 : vector<1x8x16x8xbf16> to vector<8x16x8xbf16>
    %60 = vector.shape_cast %59 : vector<8x16x8xbf16> to vector<128x8xbf16>
    %c6 = arith.constant 6 : index
    %c0_41 = arith.constant 0 : index
    %c0_42 = arith.constant 0 : index
    %61 = vector.load %arg3[%c6, %c0_41, %c0_42] : memref<9x8x8xbf16, #tpu.memory_space<vmem>>, vector<1x8x8xbf16>
    %62 = vector.shape_cast %61 : vector<1x8x8xbf16> to vector<8x8xbf16>
    %cst_43 = arith.constant dense<0.000000e+00> : vector<128x8xf32>
    %63 = tpu.matmul %60, %62, %cst_43 {dimension_numbers = #tpu.dot_dimension_numbers<[1], [0], [0], [1], [0, 0, 1, 1], [], []>} : vector<128x8xbf16>, vector<8x8xbf16>, vector<128x8xf32> -> vector<128x8xf32>
    %64 = arith.addf %55, %63 : vector<128x8xf32>
    %c24_i32_44 = arith.constant 24 : i32
    %65 = arith.addi %0, %c24_i32_44 : i32
    %c0_45 = arith.constant 0 : index
    %66 = arith.index_cast %65 : i32 to index
    %c12_46 = arith.constant 12 : index
    %c0_47 = arith.constant 0 : index
    %67 = vector.load %arg2[%c0_45, %66, %c12_46, %c0_47] : memref<1x40x40x8xbf16, #tpu.memory_space<vmem>>, vector<1x8x16x8xbf16>
    %68 = vector.shape_cast %67 : vector<1x8x16x8xbf16> to vector<8x16x8xbf16>
    %69 = vector.shape_cast %68 : vector<8x16x8xbf16> to vector<128x8xbf16>
    %c7 = arith.constant 7 : index
    %c0_48 = arith.constant 0 : index
    %c0_49 = arith.constant 0 : index
    %70 = vector.load %arg3[%c7, %c0_48, %c0_49] : memref<9x8x8xbf16, #tpu.memory_space<vmem>>, vector<1x8x8xbf16>
    %71 = vector.shape_cast %70 : vector<1x8x8xbf16> to vector<8x8xbf16>
    %cst_50 = arith.constant dense<0.000000e+00> : vector<128x8xf32>
    %72 = tpu.matmul %69, %71, %cst_50 {dimension_numbers = #tpu.dot_dimension_numbers<[1], [0], [0], [1], [0, 0, 1, 1], [], []>} : vector<128x8xbf16>, vector<8x8xbf16>, vector<128x8xf32> -> vector<128x8xf32>
    %73 = arith.addf %64, %72 : vector<128x8xf32>
    %c24_i32_51 = arith.constant 24 : i32
    %74 = arith.addi %0, %c24_i32_51 : i32
    %c0_52 = arith.constant 0 : index
    %75 = arith.index_cast %74 : i32 to index
    %c24_53 = arith.constant 24 : index
    %c0_54 = arith.constant 0 : index
    %76 = vector.load %arg2[%c0_52, %75, %c24_53, %c0_54] : memref<1x40x40x8xbf16, #tpu.memory_space<vmem>>, vector<1x8x16x8xbf16>
    %77 = vector.shape_cast %76 : vector<1x8x16x8xbf16> to vector<8x16x8xbf16>
    %78 = vector.shape_cast %77 : vector<8x16x8xbf16> to vector<128x8xbf16>
    %c8 = arith.constant 8 : index
    %c0_55 = arith.constant 0 : index
    %c0_56 = arith.constant 0 : index
    %79 = vector.load %arg3[%c8, %c0_55, %c0_56] : memref<9x8x8xbf16, #tpu.memory_space<vmem>>, vector<1x8x8xbf16>
    %80 = vector.shape_cast %79 : vector<1x8x8xbf16> to vector<8x8xbf16>
    %cst_57 = arith.constant dense<0.000000e+00> : vector<128x8xf32>
    %81 = tpu.matmul %78, %80, %cst_57 {dimension_numbers = #tpu.dot_dimension_numbers<[1], [0], [0], [1], [0, 0, 1, 1], [], []>} : vector<128x8xbf16>, vector<8x8xbf16>, vector<128x8xf32> -> vector<128x8xf32>
    %82 = arith.addf %73, %81 : vector<128x8xf32>
    %c0_58 = arith.constant 0 : index
    %c0_59 = arith.constant 0 : index
    %83 = vector.load %arg4[%c0_58, %c0_59] : memref<1x8xf32, #tpu.memory_space<vmem>>, vector<1x8xf32>
    %84 = vector.broadcast %83 : vector<1x8xf32> to vector<128x8xf32>
    %85 = arith.mulf %82, %84 : vector<128x8xf32>
    %c0_60 = arith.constant 0 : index
    %c0_61 = arith.constant 0 : index
    %86 = vector.load %arg5[%c0_60, %c0_61] : memref<1x8xf32, #tpu.memory_space<vmem>>, vector<1x8xf32>
    %87 = vector.broadcast %86 : vector<1x8xf32> to vector<128x8xf32>
    %88 = arith.addf %85, %87 : vector<128x8xf32>
    %cst_62 = arith.constant 0.000000e+00 : f32
    %89 = vector.broadcast %cst_62 : f32 to vector<128x8xf32>
    %90 = arith.maximumf %88, %89 : vector<128x8xf32>
    %91 = vector.shape_cast %90 : vector<128x8xf32> to vector<1x8x16x8xf32>
    %92 = arith.truncf %91 : vector<1x8x16x8xf32> to vector<1x8x16x8xbf16>
    %c0_63 = arith.constant 0 : index
    %c0_64 = arith.constant 0 : index
    %c0_65 = arith.constant 0 : index
    %c0_66 = arith.constant 0 : index
    %93 = vector.load %arg6[%c0_63, %c0_64, %c0_65, %c0_66] : memref<1x8x16x8xbf16, #tpu.memory_space<vmem>>, vector<1x8x16x8xbf16>
    tpu.vector_store %arg6[%c0_63, %c0_64, %c0_65, %c0_66], %92 {strides = array<i32>} : memref<1x8x16x8xbf16, #tpu.memory_space<vmem>>, vector<1x8x16x8xbf16>,
    return
  }
  func.func @transform_0(%arg0: i32, %arg1: i32) -> (i32, i32, i32, i32) {
    %c0_i32 = arith.constant 0 : i32
    %c0_i32_0 = arith.constant 0 : i32
    %c0_i32_1 = arith.constant 0 : i32
    %c0_i32_2 = arith.constant 0 : i32
    return %arg0, %c0_i32, %c0_i32_0, %c0_i32_1 : i32, i32, i32, i32
  }
  func.func @transform_1(%arg0: i32, %arg1: i32) -> (i32, i32, i32) {
    %c0_i32 = arith.constant 0 : i32
    %c0_i32_0 = arith.constant 0 : i32
    %c0_i32_1 = arith.constant 0 : i32
    %c0_i32_2 = arith.constant 0 : i32
    return %c0_i32, %c0_i32_0, %c0_i32_1 : i32, i32, i32
  }
  func.func @transform_2(%arg0: i32, %arg1: i32) -> (i32, i32) {
    %c0_i32 = arith.constant 0 : i32
    %c0_i32_0 = arith.constant 0 : i32
    %c0_i32_1 = arith.constant 0 : i32
    return %c0_i32, %c0_i32_0 : i32, i32
  }
  func.func @transform_3(%arg0: i32, %arg1: i32) -> (i32, i32) {
    %c0_i32 = arith.constant 0 : i32
    %c0_i32_0 = arith.constant 0 : i32
    %c0_i32_1 = arith.constant 0 : i32
    return %c0_i32, %c0_i32_0 : i32, i32
  }
  func.func @transform_4(%arg0: i32, %arg1: i32) -> (i32, i32, i32, i32) {
    %c0_i32 = arith.constant 0 : i32
    %c0_i32_0 = arith.constant 0 : i32
    %c0_i32_1 = arith.constant 0 : i32
    return %arg0, %arg1, %c0_i32, %c0_i32_0 : i32, i32, i32, i32
  }
}

module attributes {stable_mosaic.version = 11 : i64} {
  func.func @_dconv_bn_act_kernel(%arg0: i32, %arg1: i32, %arg2: memref<1x28x28x8xbf16, #tpu.memory_space<vmem>>, %arg3: memref<9x8x8xbf16, #tpu.memory_space<vmem>>, %arg4: memref<1x8xf32, #tpu.memory_space<vmem>>, %arg5: memref<1x8xf32, #tpu.memory_space<vmem>>, %arg6: memref<1x8x16x8xbf16, #tpu.memory_space<vmem>>) attributes {dimension_semantics = [#tpu.dimension_semantics<parallel>, #tpu.dimension_semantics<parallel>], iteration_bounds = array<i64: 2, 2>, scalar_prefetch = 0 : i64, scratch_operands = 0 : i64, tpu.core_type = #tpu.core_type<tc>, window_params = [{transform_indices = @transform_0, window_bounds = array<i64: 1, 28, 28, 8>}, {pipeline_mode = #tpu.pipeline_mode<synchronous>, transform_indices = @transform_1, window_bounds = array<i64: 9, 8, 8>}, {pipeline_mode = #tpu.pipeline_mode<synchronous>, transform_indices = @transform_2, window_bounds = array<i64: 1, 8>}, {pipeline_mode = #tpu.pipeline_mode<synchronous>, transform_indices = @transform_3, window_bounds = array<i64: 1, 8>}, {transform_indices = @transform_4, window_bounds = array<i64: 1, 8, 16, 8>}]} {
    %c8_i32 = arith.constant 8 : i32
    %0 = arith.muli %arg1, %c8_i32 : i32
    %cst = arith.constant 0.000000e+00 : f32
    %1 = vector.broadcast %cst : f32 to vector<128x8xf32>
    %c0_i32 = arith.constant 0 : i32
    %2 = arith.addi %0, %c0_i32 : i32
    %c0 = arith.constant 0 : index
    %3 = arith.index_cast %2 : i32 to index
    %c0_0 = arith.constant 0 : index
    %c0_1 = arith.constant 0 : index
    %4 = vector.load %arg2[%c0, %3, %c0_0, %c0_1] : memref<1x28x28x8xbf16, #tpu.memory_space<vmem>>, vector<1x8x16x8xbf16>
    %5 = vector.shape_cast %4 : vector<1x8x16x8xbf16> to vector<8x16x8xbf16>
    %6 = vector.shape_cast %5 : vector<8x16x8xbf16> to vector<128x8xbf16>
    %c0_2 = arith.constant 0 : index
    %c0_3 = arith.constant 0 : index
    %c0_4 = arith.constant 0 : index
    %7 = vector.load %arg3[%c0_2, %c0_3, %c0_4] : memref<9x8x8xbf16, #tpu.memory_space<vmem>>, vector<1x8x8xbf16>
    %8 = vector.shape_cast %7 : vector<1x8x8xbf16> to vector<8x8xbf16>
    %cst_5 = arith.constant dense<0.000000e+00> : vector<128x8xf32>
    %9 = tpu.matmul %6, %8, %cst_5 {dimension_numbers = #tpu.dot_dimension_numbers<[1], [0], [0], [1], [0, 0, 1, 1], [], []>} : vector<128x8xbf16>, vector<8x8xbf16>, vector<128x8xf32> -> vector<128x8xf32>
    %10 = arith.addf %1, %9 : vector<128x8xf32>
    %c0_i32_6 = arith.constant 0 : i32
    %11 = arith.addi %0, %c0_i32_6 : i32
    %c0_7 = arith.constant 0 : index
    %12 = arith.index_cast %11 : i32 to index
    %c6 = arith.constant 6 : index
    %c0_8 = arith.constant 0 : index
    %13 = vector.load %arg2[%c0_7, %12, %c6, %c0_8] : memref<1x28x28x8xbf16, #tpu.memory_space<vmem>>, vector<1x8x16x8xbf16>
    %14 = vector.shape_cast %13 : vector<1x8x16x8xbf16> to vector<8x16x8xbf16>
    %15 = vector.shape_cast %14 : vector<8x16x8xbf16> to vector<128x8xbf16>
    %c1 = arith.constant 1 : index
    %c0_9 = arith.constant 0 : index
    %c0_10 = arith.constant 0 : index
    %16 = vector.load %arg3[%c1, %c0_9, %c0_10] : memref<9x8x8xbf16, #tpu.memory_space<vmem>>, vector<1x8x8xbf16>
    %17 = vector.shape_cast %16 : vector<1x8x8xbf16> to vector<8x8xbf16>
    %cst_11 = arith.constant dense<0.000000e+00> : vector<128x8xf32>
    %18 = tpu.matmul %15, %17, %cst_11 {dimension_numbers = #tpu.dot_dimension_numbers<[1], [0], [0], [1], [0, 0, 1, 1], [], []>} : vector<128x8xbf16>, vector<8x8xbf16>, vector<128x8xf32> -> vector<128x8xf32>
    %19 = arith.addf %10, %18 : vector<128x8xf32>
    %c0_i32_12 = arith.constant 0 : i32
    %20 = arith.addi %0, %c0_i32_12 : i32
    %c0_13 = arith.constant 0 : index
    %21 = arith.index_cast %20 : i32 to index
    %c12 = arith.constant 12 : index
    %c0_14 = arith.constant 0 : index
    %22 = vector.load %arg2[%c0_13, %21, %c12, %c0_14] : memref<1x28x28x8xbf16, #tpu.memory_space<vmem>>, vector<1x8x16x8xbf16>
    %23 = vector.shape_cast %22 : vector<1x8x16x8xbf16> to vector<8x16x8xbf16>
    %24 = vector.shape_cast %23 : vector<8x16x8xbf16> to vector<128x8xbf16>
    %c2 = arith.constant 2 : index
    %c0_15 = arith.constant 0 : index
    %c0_16 = arith.constant 0 : index
    %25 = vector.load %arg3[%c2, %c0_15, %c0_16] : memref<9x8x8xbf16, #tpu.memory_space<vmem>>, vector<1x8x8xbf16>
    %26 = vector.shape_cast %25 : vector<1x8x8xbf16> to vector<8x8xbf16>
    %cst_17 = arith.constant dense<0.000000e+00> : vector<128x8xf32>
    %27 = tpu.matmul %24, %26, %cst_17 {dimension_numbers = #tpu.dot_dimension_numbers<[1], [0], [0], [1], [0, 0, 1, 1], [], []>} : vector<128x8xbf16>, vector<8x8xbf16>, vector<128x8xf32> -> vector<128x8xf32>
    %28 = arith.addf %19, %27 : vector<128x8xf32>
    %c6_i32 = arith.constant 6 : i32
    %29 = arith.addi %0, %c6_i32 : i32
    %c0_18 = arith.constant 0 : index
    %30 = arith.index_cast %29 : i32 to index
    %c0_19 = arith.constant 0 : index
    %c0_20 = arith.constant 0 : index
    %31 = vector.load %arg2[%c0_18, %30, %c0_19, %c0_20] : memref<1x28x28x8xbf16, #tpu.memory_space<vmem>>, vector<1x8x16x8xbf16>
    %32 = vector.shape_cast %31 : vector<1x8x16x8xbf16> to vector<8x16x8xbf16>
    %33 = vector.shape_cast %32 : vector<8x16x8xbf16> to vector<128x8xbf16>
    %c3 = arith.constant 3 : index
    %c0_21 = arith.constant 0 : index
    %c0_22 = arith.constant 0 : index
    %34 = vector.load %arg3[%c3, %c0_21, %c0_22] : memref<9x8x8xbf16, #tpu.memory_space<vmem>>, vector<1x8x8xbf16>
    %35 = vector.shape_cast %34 : vector<1x8x8xbf16> to vector<8x8xbf16>
    %cst_23 = arith.constant dense<0.000000e+00> : vector<128x8xf32>
    %36 = tpu.matmul %33, %35, %cst_23 {dimension_numbers = #tpu.dot_dimension_numbers<[1], [0], [0], [1], [0, 0, 1, 1], [], []>} : vector<128x8xbf16>, vector<8x8xbf16>, vector<128x8xf32> -> vector<128x8xf32>
    %37 = arith.addf %28, %36 : vector<128x8xf32>
    %c6_i32_24 = arith.constant 6 : i32
    %38 = arith.addi %0, %c6_i32_24 : i32
    %c0_25 = arith.constant 0 : index
    %39 = arith.index_cast %38 : i32 to index
    %c6_26 = arith.constant 6 : index
    %c0_27 = arith.constant 0 : index
    %40 = vector.load %arg2[%c0_25, %39, %c6_26, %c0_27] : memref<1x28x28x8xbf16, #tpu.memory_space<vmem>>, vector<1x8x16x8xbf16>
    %41 = vector.shape_cast %40 : vector<1x8x16x8xbf16> to vector<8x16x8xbf16>
    %42 = vector.shape_cast %41 : vector<8x16x8xbf16> to vector<128x8xbf16>
    %c4 = arith.constant 4 : index
    %c0_28 = arith.constant 0 : index
    %c0_29 = arith.constant 0 : index
    %43 = vector.load %arg3[%c4, %c0_28, %c0_29] : memref<9x8x8xbf16, #tpu.memory_space<vmem>>, vector<1x8x8xbf16>
    %44 = vector.shape_cast %43 : vector<1x8x8xbf16> to vector<8x8xbf16>
    %cst_30 = arith.constant dense<0.000000e+00> : vector<128x8xf32>
    %45 = tpu.matmul %42, %44, %cst_30 {dimension_numbers = #tpu.dot_dimension_numbers<[1], [0], [0], [1], [0, 0, 1, 1], [], []>} : vector<128x8xbf16>, vector<8x8xbf16>, vector<128x8xf32> -> vector<128x8xf32>
    %46 = arith.addf %37, %45 : vector<128x8xf32>
    %c6_i32_31 = arith.constant 6 : i32
    %47 = arith.addi %0, %c6_i32_31 : i32
    %c0_32 = arith.constant 0 : index
    %48 = arith.index_cast %47 : i32 to index
    %c12_33 = arith.constant 12 : index
    %c0_34 = arith.constant 0 : index
    %49 = vector.load %arg2[%c0_32, %48, %c12_33, %c0_34] : memref<1x28x28x8xbf16, #tpu.memory_space<vmem>>, vector<1x8x16x8xbf16>
    %50 = vector.shape_cast %49 : vector<1x8x16x8xbf16> to vector<8x16x8xbf16>
    %51 = vector.shape_cast %50 : vector<8x16x8xbf16> to vector<128x8xbf16>
    %c5 = arith.constant 5 : index
    %c0_35 = arith.constant 0 : index
    %c0_36 = arith.constant 0 : index
    %52 = vector.load %arg3[%c5, %c0_35, %c0_36] : memref<9x8x8xbf16, #tpu.memory_space<vmem>>, vector<1x8x8xbf16>
    %53 = vector.shape_cast %52 : vector<1x8x8xbf16> to vector<8x8xbf16>
    %cst_37 = arith.constant dense<0.000000e+00> : vector<128x8xf32>
    %54 = tpu.matmul %51, %53, %cst_37 {dimension_numbers = #tpu.dot_dimension_numbers<[1], [0], [0], [1], [0, 0, 1, 1], [], []>} : vector<128x8xbf16>, vector<8x8xbf16>, vector<128x8xf32> -> vector<128x8xf32>
    %55 = arith.addf %46, %54 : vector<128x8xf32>
    %c12_i32 = arith.constant 12 : i32
    %56 = arith.addi %0, %c12_i32 : i32
    %c0_38 = arith.constant 0 : index
    %57 = arith.index_cast %56 : i32 to index
    %c0_39 = arith.constant 0 : index
    %c0_40 = arith.constant 0 : index
    %58 = vector.load %arg2[%c0_38, %57, %c0_39, %c0_40] : memref<1x28x28x8xbf16, #tpu.memory_space<vmem>>, vector<1x8x16x8xbf16>
    %59 = vector.shape_cast %58 : vector<1x8x16x8xbf16> to vector<8x16x8xbf16>
    %60 = vector.shape_cast %59 : vector<8x16x8xbf16> to vector<128x8xbf16>
    %c6_41 = arith.constant 6 : index
    %c0_42 = arith.constant 0 : index
    %c0_43 = arith.constant 0 : index
    %61 = vector.load %arg3[%c6_41, %c0_42, %c0_43] : memref<9x8x8xbf16, #tpu.memory_space<vmem>>, vector<1x8x8xbf16>
    %62 = vector.shape_cast %61 : vector<1x8x8xbf16> to vector<8x8xbf16>
    %cst_44 = arith.constant dense<0.000000e+00> : vector<128x8xf32>
    %63 = tpu.matmul %60, %62, %cst_44 {dimension_numbers = #tpu.dot_dimension_numbers<[1], [0], [0], [1], [0, 0, 1, 1], [], []>} : vector<128x8xbf16>, vector<8x8xbf16>, vector<128x8xf32> -> vector<128x8xf32>
    %64 = arith.addf %55, %63 : vector<128x8xf32>
    %c12_i32_45 = arith.constant 12 : i32
    %65 = arith.addi %0, %c12_i32_45 : i32
    %c0_46 = arith.constant 0 : index
    %66 = arith.index_cast %65 : i32 to index
    %c6_47 = arith.constant 6 : index
    %c0_48 = arith.constant 0 : index
    %67 = vector.load %arg2[%c0_46, %66, %c6_47, %c0_48] : memref<1x28x28x8xbf16, #tpu.memory_space<vmem>>, vector<1x8x16x8xbf16>
    %68 = vector.shape_cast %67 : vector<1x8x16x8xbf16> to vector<8x16x8xbf16>
    %69 = vector.shape_cast %68 : vector<8x16x8xbf16> to vector<128x8xbf16>
    %c7 = arith.constant 7 : index
    %c0_49 = arith.constant 0 : index
    %c0_50 = arith.constant 0 : index
    %70 = vector.load %arg3[%c7, %c0_49, %c0_50] : memref<9x8x8xbf16, #tpu.memory_space<vmem>>, vector<1x8x8xbf16>
    %71 = vector.shape_cast %70 : vector<1x8x8xbf16> to vector<8x8xbf16>
    %cst_51 = arith.constant dense<0.000000e+00> : vector<128x8xf32>
    %72 = tpu.matmul %69, %71, %cst_51 {dimension_numbers = #tpu.dot_dimension_numbers<[1], [0], [0], [1], [0, 0, 1, 1], [], []>} : vector<128x8xbf16>, vector<8x8xbf16>, vector<128x8xf32> -> vector<128x8xf32>
    %73 = arith.addf %64, %72 : vector<128x8xf32>
    %c12_i32_52 = arith.constant 12 : i32
    %74 = arith.addi %0, %c12_i32_52 : i32
    %c0_53 = arith.constant 0 : index
    %75 = arith.index_cast %74 : i32 to index
    %c12_54 = arith.constant 12 : index
    %c0_55 = arith.constant 0 : index
    %76 = vector.load %arg2[%c0_53, %75, %c12_54, %c0_55] : memref<1x28x28x8xbf16, #tpu.memory_space<vmem>>, vector<1x8x16x8xbf16>
    %77 = vector.shape_cast %76 : vector<1x8x16x8xbf16> to vector<8x16x8xbf16>
    %78 = vector.shape_cast %77 : vector<8x16x8xbf16> to vector<128x8xbf16>
    %c8 = arith.constant 8 : index
    %c0_56 = arith.constant 0 : index
    %c0_57 = arith.constant 0 : index
    %79 = vector.load %arg3[%c8, %c0_56, %c0_57] : memref<9x8x8xbf16, #tpu.memory_space<vmem>>, vector<1x8x8xbf16>
    %80 = vector.shape_cast %79 : vector<1x8x8xbf16> to vector<8x8xbf16>
    %cst_58 = arith.constant dense<0.000000e+00> : vector<128x8xf32>
    %81 = tpu.matmul %78, %80, %cst_58 {dimension_numbers = #tpu.dot_dimension_numbers<[1], [0], [0], [1], [0, 0, 1, 1], [], []>} : vector<128x8xbf16>, vector<8x8xbf16>, vector<128x8xf32> -> vector<128x8xf32>
    %82 = arith.addf %73, %81 : vector<128x8xf32>
    %c0_59 = arith.constant 0 : index
    %c0_60 = arith.constant 0 : index
    %83 = vector.load %arg4[%c0_59, %c0_60] : memref<1x8xf32, #tpu.memory_space<vmem>>, vector<1x8xf32>
    %84 = vector.broadcast %83 : vector<1x8xf32> to vector<128x8xf32>
    %85 = arith.mulf %82, %84 : vector<128x8xf32>
    %c0_61 = arith.constant 0 : index
    %c0_62 = arith.constant 0 : index
    %86 = vector.load %arg5[%c0_61, %c0_62] : memref<1x8xf32, #tpu.memory_space<vmem>>, vector<1x8xf32>
    %87 = vector.broadcast %86 : vector<1x8xf32> to vector<128x8xf32>
    %88 = arith.addf %85, %87 : vector<128x8xf32>
    %cst_63 = arith.constant 0.000000e+00 : f32
    %89 = vector.broadcast %cst_63 : f32 to vector<128x8xf32>
    %90 = arith.maximumf %88, %89 : vector<128x8xf32>
    %91 = vector.shape_cast %90 : vector<128x8xf32> to vector<1x8x16x8xf32>
    %92 = arith.truncf %91 : vector<1x8x16x8xf32> to vector<1x8x16x8xbf16>
    %c0_64 = arith.constant 0 : index
    %c0_65 = arith.constant 0 : index
    %c0_66 = arith.constant 0 : index
    %c0_67 = arith.constant 0 : index
    %93 = vector.load %arg6[%c0_64, %c0_65, %c0_66, %c0_67] : memref<1x8x16x8xbf16, #tpu.memory_space<vmem>>, vector<1x8x16x8xbf16>
    tpu.vector_store %arg6[%c0_64, %c0_65, %c0_66, %c0_67], %92 {strides = array<i32>} : memref<1x8x16x8xbf16, #tpu.memory_space<vmem>>, vector<1x8x16x8xbf16>,
    return
  }
  func.func @transform_0(%arg0: i32, %arg1: i32) -> (i32, i32, i32, i32) {
    %c0_i32 = arith.constant 0 : i32
    %c0_i32_0 = arith.constant 0 : i32
    %c0_i32_1 = arith.constant 0 : i32
    %c0_i32_2 = arith.constant 0 : i32
    return %arg0, %c0_i32, %c0_i32_0, %c0_i32_1 : i32, i32, i32, i32
  }
  func.func @transform_1(%arg0: i32, %arg1: i32) -> (i32, i32, i32) {
    %c0_i32 = arith.constant 0 : i32
    %c0_i32_0 = arith.constant 0 : i32
    %c0_i32_1 = arith.constant 0 : i32
    %c0_i32_2 = arith.constant 0 : i32
    return %c0_i32, %c0_i32_0, %c0_i32_1 : i32, i32, i32
  }
  func.func @transform_2(%arg0: i32, %arg1: i32) -> (i32, i32) {
    %c0_i32 = arith.constant 0 : i32
    %c0_i32_0 = arith.constant 0 : i32
    %c0_i32_1 = arith.constant 0 : i32
    return %c0_i32, %c0_i32_0 : i32, i32
  }
  func.func @transform_3(%arg0: i32, %arg1: i32) -> (i32, i32) {
    %c0_i32 = arith.constant 0 : i32
    %c0_i32_0 = arith.constant 0 : i32
    %c0_i32_1 = arith.constant 0 : i32
    return %c0_i32, %c0_i32_0 : i32, i32
  }
  func.func @transform_4(%arg0: i32, %arg1: i32) -> (i32, i32, i32, i32) {
    %c0_i32 = arith.constant 0 : i32
    %c0_i32_0 = arith.constant 0 : i32
    %c0_i32_1 = arith.constant 0 : i32
    return %arg0, %arg1, %c0_i32, %c0_i32_0 : i32, i32, i32, i32
  }
}

module attributes {stable_mosaic.version = 11 : i64} {
  func.func @_dconv_bn_act_kernel(%arg0: i32, %arg1: i32, %arg2: memref<1x22x22x8xbf16, #tpu.memory_space<vmem>>, %arg3: memref<9x8x8xbf16, #tpu.memory_space<vmem>>, %arg4: memref<1x8xf32, #tpu.memory_space<vmem>>, %arg5: memref<1x8xf32, #tpu.memory_space<vmem>>, %arg6: memref<1x8x16x8xbf16, #tpu.memory_space<vmem>>) attributes {dimension_semantics = [#tpu.dimension_semantics<parallel>, #tpu.dimension_semantics<parallel>], iteration_bounds = array<i64: 2, 2>, scalar_prefetch = 0 : i64, scratch_operands = 0 : i64, tpu.core_type = #tpu.core_type<tc>, window_params = [{transform_indices = @transform_0, window_bounds = array<i64: 1, 22, 22, 8>}, {pipeline_mode = #tpu.pipeline_mode<synchronous>, transform_indices = @transform_1, window_bounds = array<i64: 9, 8, 8>}, {pipeline_mode = #tpu.pipeline_mode<synchronous>, transform_indices = @transform_2, window_bounds = array<i64: 1, 8>}, {pipeline_mode = #tpu.pipeline_mode<synchronous>, transform_indices = @transform_3, window_bounds = array<i64: 1, 8>}, {transform_indices = @transform_4, window_bounds = array<i64: 1, 8, 16, 8>}]} {
    %c8_i32 = arith.constant 8 : i32
    %0 = arith.muli %arg1, %c8_i32 : i32
    %cst = arith.constant 0.000000e+00 : f32
    %1 = vector.broadcast %cst : f32 to vector<128x8xf32>
    %c0_i32 = arith.constant 0 : i32
    %2 = arith.addi %0, %c0_i32 : i32
    %c0 = arith.constant 0 : index
    %3 = arith.index_cast %2 : i32 to index
    %c0_0 = arith.constant 0 : index
    %c0_1 = arith.constant 0 : index
    %4 = vector.load %arg2[%c0, %3, %c0_0, %c0_1] : memref<1x22x22x8xbf16, #tpu.memory_space<vmem>>, vector<1x8x16x8xbf16>
    %5 = vector.shape_cast %4 : vector<1x8x16x8xbf16> to vector<8x16x8xbf16>
    %6 = vector.shape_cast %5 : vector<8x16x8xbf16> to vector<128x8xbf16>
    %c0_2 = arith.constant 0 : index
    %c0_3 = arith.constant 0 : index
    %c0_4 = arith.constant 0 : index
    %7 = vector.load %arg3[%c0_2, %c0_3, %c0_4] : memref<9x8x8xbf16, #tpu.memory_space<vmem>>, vector<1x8x8xbf16>
    %8 = vector.shape_cast %7 : vector<1x8x8xbf16> to vector<8x8xbf16>
    %cst_5 = arith.constant dense<0.000000e+00> : vector<128x8xf32>
    %9 = tpu.matmul %6, %8, %cst_5 {dimension_numbers = #tpu.dot_dimension_numbers<[1], [0], [0], [1], [0, 0, 1, 1], [], []>} : vector<128x8xbf16>, vector<8x8xbf16>, vector<128x8xf32> -> vector<128x8xf32>
    %10 = arith.addf %1, %9 : vector<128x8xf32>
    %c0_i32_6 = arith.constant 0 : i32
    %11 = arith.addi %0, %c0_i32_6 : i32
    %c0_7 = arith.constant 0 : index
    %12 = arith.index_cast %11 : i32 to index
    %c3 = arith.constant 3 : index
    %c0_8 = arith.constant 0 : index
    %13 = vector.load %arg2[%c0_7, %12, %c3, %c0_8] : memref<1x22x22x8xbf16, #tpu.memory_space<vmem>>, vector<1x8x16x8xbf16>
    %14 = vector.shape_cast %13 : vector<1x8x16x8xbf16> to vector<8x16x8xbf16>
    %15 = vector.shape_cast %14 : vector<8x16x8xbf16> to vector<128x8xbf16>
    %c1 = arith.constant 1 : index
    %c0_9 = arith.constant 0 : index
    %c0_10 = arith.constant 0 : index
    %16 = vector.load %arg3[%c1, %c0_9, %c0_10] : memref<9x8x8xbf16, #tpu.memory_space<vmem>>, vector<1x8x8xbf16>
    %17 = vector.shape_cast %16 : vector<1x8x8xbf16> to vector<8x8xbf16>
    %cst_11 = arith.constant dense<0.000000e+00> : vector<128x8xf32>
    %18 = tpu.matmul %15, %17, %cst_11 {dimension_numbers = #tpu.dot_dimension_numbers<[1], [0], [0], [1], [0, 0, 1, 1], [], []>} : vector<128x8xbf16>, vector<8x8xbf16>, vector<128x8xf32> -> vector<128x8xf32>
    %19 = arith.addf %10, %18 : vector<128x8xf32>
    %c0_i32_12 = arith.constant 0 : i32
    %20 = arith.addi %0, %c0_i32_12 : i32
    %c0_13 = arith.constant 0 : index
    %21 = arith.index_cast %20 : i32 to index
    %c6 = arith.constant 6 : index
    %c0_14 = arith.constant 0 : index
    %22 = vector.load %arg2[%c0_13, %21, %c6, %c0_14] : memref<1x22x22x8xbf16, #tpu.memory_space<vmem>>, vector<1x8x16x8xbf16>
    %23 = vector.shape_cast %22 : vector<1x8x16x8xbf16> to vector<8x16x8xbf16>
    %24 = vector.shape_cast %23 : vector<8x16x8xbf16> to vector<128x8xbf16>
    %c2 = arith.constant 2 : index
    %c0_15 = arith.constant 0 : index
    %c0_16 = arith.constant 0 : index
    %25 = vector.load %arg3[%c2, %c0_15, %c0_16] : memref<9x8x8xbf16, #tpu.memory_space<vmem>>, vector<1x8x8xbf16>
    %26 = vector.shape_cast %25 : vector<1x8x8xbf16> to vector<8x8xbf16>
    %cst_17 = arith.constant dense<0.000000e+00> : vector<128x8xf32>
    %27 = tpu.matmul %24, %26, %cst_17 {dimension_numbers = #tpu.dot_dimension_numbers<[1], [0], [0], [1], [0, 0, 1, 1], [], []>} : vector<128x8xbf16>, vector<8x8xbf16>, vector<128x8xf32> -> vector<128x8xf32>
    %28 = arith.addf %19, %27 : vector<128x8xf32>
    %c3_i32 = arith.constant 3 : i32
    %29 = arith.addi %0, %c3_i32 : i32
    %c0_18 = arith.constant 0 : index
    %30 = arith.index_cast %29 : i32 to index
    %c0_19 = arith.constant 0 : index
    %c0_20 = arith.constant 0 : index
    %31 = vector.load %arg2[%c0_18, %30, %c0_19, %c0_20] : memref<1x22x22x8xbf16, #tpu.memory_space<vmem>>, vector<1x8x16x8xbf16>
    %32 = vector.shape_cast %31 : vector<1x8x16x8xbf16> to vector<8x16x8xbf16>
    %33 = vector.shape_cast %32 : vector<8x16x8xbf16> to vector<128x8xbf16>
    %c3_21 = arith.constant 3 : index
    %c0_22 = arith.constant 0 : index
    %c0_23 = arith.constant 0 : index
    %34 = vector.load %arg3[%c3_21, %c0_22, %c0_23] : memref<9x8x8xbf16, #tpu.memory_space<vmem>>, vector<1x8x8xbf16>
    %35 = vector.shape_cast %34 : vector<1x8x8xbf16> to vector<8x8xbf16>
    %cst_24 = arith.constant dense<0.000000e+00> : vector<128x8xf32>
    %36 = tpu.matmul %33, %35, %cst_24 {dimension_numbers = #tpu.dot_dimension_numbers<[1], [0], [0], [1], [0, 0, 1, 1], [], []>} : vector<128x8xbf16>, vector<8x8xbf16>, vector<128x8xf32> -> vector<128x8xf32>
    %37 = arith.addf %28, %36 : vector<128x8xf32>
    %c3_i32_25 = arith.constant 3 : i32
    %38 = arith.addi %0, %c3_i32_25 : i32
    %c0_26 = arith.constant 0 : index
    %39 = arith.index_cast %38 : i32 to index
    %c3_27 = arith.constant 3 : index
    %c0_28 = arith.constant 0 : index
    %40 = vector.load %arg2[%c0_26, %39, %c3_27, %c0_28] : memref<1x22x22x8xbf16, #tpu.memory_space<vmem>>, vector<1x8x16x8xbf16>
    %41 = vector.shape_cast %40 : vector<1x8x16x8xbf16> to vector<8x16x8xbf16>
    %42 = vector.shape_cast %41 : vector<8x16x8xbf16> to vector<128x8xbf16>
    %c4 = arith.constant 4 : index
    %c0_29 = arith.constant 0 : index
    %c0_30 = arith.constant 0 : index
    %43 = vector.load %arg3[%c4, %c0_29, %c0_30] : memref<9x8x8xbf16, #tpu.memory_space<vmem>>, vector<1x8x8xbf16>
    %44 = vector.shape_cast %43 : vector<1x8x8xbf16> to vector<8x8xbf16>
    %cst_31 = arith.constant dense<0.000000e+00> : vector<128x8xf32>
    %45 = tpu.matmul %42, %44, %cst_31 {dimension_numbers = #tpu.dot_dimension_numbers<[1], [0], [0], [1], [0, 0, 1, 1], [], []>} : vector<128x8xbf16>, vector<8x8xbf16>, vector<128x8xf32> -> vector<128x8xf32>
    %46 = arith.addf %37, %45 : vector<128x8xf32>
    %c3_i32_32 = arith.constant 3 : i32
    %47 = arith.addi %0, %c3_i32_32 : i32
    %c0_33 = arith.constant 0 : index
    %48 = arith.index_cast %47 : i32 to index
    %c6_34 = arith.constant 6 : index
    %c0_35 = arith.constant 0 : index
    %49 = vector.load %arg2[%c0_33, %48, %c6_34, %c0_35] : memref<1x22x22x8xbf16, #tpu.memory_space<vmem>>, vector<1x8x16x8xbf16>
    %50 = vector.shape_cast %49 : vector<1x8x16x8xbf16> to vector<8x16x8xbf16>
    %51 = vector.shape_cast %50 : vector<8x16x8xbf16> to vector<128x8xbf16>
    %c5 = arith.constant 5 : index
    %c0_36 = arith.constant 0 : index
    %c0_37 = arith.constant 0 : index
    %52 = vector.load %arg3[%c5, %c0_36, %c0_37] : memref<9x8x8xbf16, #tpu.memory_space<vmem>>, vector<1x8x8xbf16>
    %53 = vector.shape_cast %52 : vector<1x8x8xbf16> to vector<8x8xbf16>
    %cst_38 = arith.constant dense<0.000000e+00> : vector<128x8xf32>
    %54 = tpu.matmul %51, %53, %cst_38 {dimension_numbers = #tpu.dot_dimension_numbers<[1], [0], [0], [1], [0, 0, 1, 1], [], []>} : vector<128x8xbf16>, vector<8x8xbf16>, vector<128x8xf32> -> vector<128x8xf32>
    %55 = arith.addf %46, %54 : vector<128x8xf32>
    %c6_i32 = arith.constant 6 : i32
    %56 = arith.addi %0, %c6_i32 : i32
    %c0_39 = arith.constant 0 : index
    %57 = arith.index_cast %56 : i32 to index
    %c0_40 = arith.constant 0 : index
    %c0_41 = arith.constant 0 : index
    %58 = vector.load %arg2[%c0_39, %57, %c0_40, %c0_41] : memref<1x22x22x8xbf16, #tpu.memory_space<vmem>>, vector<1x8x16x8xbf16>
    %59 = vector.shape_cast %58 : vector<1x8x16x8xbf16> to vector<8x16x8xbf16>
    %60 = vector.shape_cast %59 : vector<8x16x8xbf16> to vector<128x8xbf16>
    %c6_42 = arith.constant 6 : index
    %c0_43 = arith.constant 0 : index
    %c0_44 = arith.constant 0 : index
    %61 = vector.load %arg3[%c6_42, %c0_43, %c0_44] : memref<9x8x8xbf16, #tpu.memory_space<vmem>>, vector<1x8x8xbf16>
    %62 = vector.shape_cast %61 : vector<1x8x8xbf16> to vector<8x8xbf16>
    %cst_45 = arith.constant dense<0.000000e+00> : vector<128x8xf32>
    %63 = tpu.matmul %60, %62, %cst_45 {dimension_numbers = #tpu.dot_dimension_numbers<[1], [0], [0], [1], [0, 0, 1, 1], [], []>} : vector<128x8xbf16>, vector<8x8xbf16>, vector<128x8xf32> -> vector<128x8xf32>
    %64 = arith.addf %55, %63 : vector<128x8xf32>
    %c6_i32_46 = arith.constant 6 : i32
    %65 = arith.addi %0, %c6_i32_46 : i32
    %c0_47 = arith.constant 0 : index
    %66 = arith.index_cast %65 : i32 to index
    %c3_48 = arith.constant 3 : index
    %c0_49 = arith.constant 0 : index
    %67 = vector.load %arg2[%c0_47, %66, %c3_48, %c0_49] : memref<1x22x22x8xbf16, #tpu.memory_space<vmem>>, vector<1x8x16x8xbf16>
    %68 = vector.shape_cast %67 : vector<1x8x16x8xbf16> to vector<8x16x8xbf16>
    %69 = vector.shape_cast %68 : vector<8x16x8xbf16> to vector<128x8xbf16>
    %c7 = arith.constant 7 : index
    %c0_50 = arith.constant 0 : index
    %c0_51 = arith.constant 0 : index
    %70 = vector.load %arg3[%c7, %c0_50, %c0_51] : memref<9x8x8xbf16, #tpu.memory_space<vmem>>, vector<1x8x8xbf16>
    %71 = vector.shape_cast %70 : vector<1x8x8xbf16> to vector<8x8xbf16>
    %cst_52 = arith.constant dense<0.000000e+00> : vector<128x8xf32>
    %72 = tpu.matmul %69, %71, %cst_52 {dimension_numbers = #tpu.dot_dimension_numbers<[1], [0], [0], [1], [0, 0, 1, 1], [], []>} : vector<128x8xbf16>, vector<8x8xbf16>, vector<128x8xf32> -> vector<128x8xf32>
    %73 = arith.addf %64, %72 : vector<128x8xf32>
    %c6_i32_53 = arith.constant 6 : i32
    %74 = arith.addi %0, %c6_i32_53 : i32
    %c0_54 = arith.constant 0 : index
    %75 = arith.index_cast %74 : i32 to index
    %c6_55 = arith.constant 6 : index
    %c0_56 = arith.constant 0 : index
    %76 = vector.load %arg2[%c0_54, %75, %c6_55, %c0_56] : memref<1x22x22x8xbf16, #tpu.memory_space<vmem>>, vector<1x8x16x8xbf16>
    %77 = vector.shape_cast %76 : vector<1x8x16x8xbf16> to vector<8x16x8xbf16>
    %78 = vector.shape_cast %77 : vector<8x16x8xbf16> to vector<128x8xbf16>
    %c8 = arith.constant 8 : index
    %c0_57 = arith.constant 0 : index
    %c0_58 = arith.constant 0 : index
    %79 = vector.load %arg3[%c8, %c0_57, %c0_58] : memref<9x8x8xbf16, #tpu.memory_space<vmem>>, vector<1x8x8xbf16>
    %80 = vector.shape_cast %79 : vector<1x8x8xbf16> to vector<8x8xbf16>
    %cst_59 = arith.constant dense<0.000000e+00> : vector<128x8xf32>
    %81 = tpu.matmul %78, %80, %cst_59 {dimension_numbers = #tpu.dot_dimension_numbers<[1], [0], [0], [1], [0, 0, 1, 1], [], []>} : vector<128x8xbf16>, vector<8x8xbf16>, vector<128x8xf32> -> vector<128x8xf32>
    %82 = arith.addf %73, %81 : vector<128x8xf32>
    %c0_60 = arith.constant 0 : index
    %c0_61 = arith.constant 0 : index
    %83 = vector.load %arg4[%c0_60, %c0_61] : memref<1x8xf32, #tpu.memory_space<vmem>>, vector<1x8xf32>
    %84 = vector.broadcast %83 : vector<1x8xf32> to vector<128x8xf32>
    %85 = arith.mulf %82, %84 : vector<128x8xf32>
    %c0_62 = arith.constant 0 : index
    %c0_63 = arith.constant 0 : index
    %86 = vector.load %arg5[%c0_62, %c0_63] : memref<1x8xf32, #tpu.memory_space<vmem>>, vector<1x8xf32>
    %87 = vector.broadcast %86 : vector<1x8xf32> to vector<128x8xf32>
    %88 = arith.addf %85, %87 : vector<128x8xf32>
    %cst_64 = arith.constant 0.000000e+00 : f32
    %89 = vector.broadcast %cst_64 : f32 to vector<128x8xf32>
    %90 = arith.maximumf %88, %89 : vector<128x8xf32>
    %91 = vector.shape_cast %90 : vector<128x8xf32> to vector<1x8x16x8xf32>
    %92 = arith.truncf %91 : vector<1x8x16x8xf32> to vector<1x8x16x8xbf16>
    %c0_65 = arith.constant 0 : index
    %c0_66 = arith.constant 0 : index
    %c0_67 = arith.constant 0 : index
    %c0_68 = arith.constant 0 : index
    %93 = vector.load %arg6[%c0_65, %c0_66, %c0_67, %c0_68] : memref<1x8x16x8xbf16, #tpu.memory_space<vmem>>, vector<1x8x16x8xbf16>
    tpu.vector_store %arg6[%c0_65, %c0_66, %c0_67, %c0_68], %92 {strides = array<i32>} : memref<1x8x16x8xbf16, #tpu.memory_space<vmem>>, vector<1x8x16x8xbf16>,
    return
  }
  func.func @transform_0(%arg0: i32, %arg1: i32) -> (i32, i32, i32, i32) {
    %c0_i32 = arith.constant 0 : i32
    %c0_i32_0 = arith.constant 0 : i32
    %c0_i32_1 = arith.constant 0 : i32
    %c0_i32_2 = arith.constant 0 : i32
    return %arg0, %c0_i32, %c0_i32_0, %c0_i32_1 : i32, i32, i32, i32
  }
  func.func @transform_1(%arg0: i32, %arg1: i32) -> (i32, i32, i32) {
    %c0_i32 = arith.constant 0 : i32
    %c0_i32_0 = arith.constant 0 : i32
    %c0_i32_1 = arith.constant 0 : i32
    %c0_i32_2 = arith.constant 0 : i32
    return %c0_i32, %c0_i32_0, %c0_i32_1 : i32, i32, i32
  }
  func.func @transform_2(%arg0: i32, %arg1: i32) -> (i32, i32) {
    %c0_i32 = arith.constant 0 : i32
    %c0_i32_0 = arith.constant 0 : i32
    %c0_i32_1 = arith.constant 0 : i32
    return %c0_i32, %c0_i32_0 : i32, i32
  }
  func.func @transform_3(%arg0: i32, %arg1: i32) -> (i32, i32) {
    %c0_i32 = arith.constant 0 : i32
    %c0_i32_0 = arith.constant 0 : i32
    %c0_i32_1 = arith.constant 0 : i32
    return %c0_i32, %c0_i32_0 : i32, i32
  }
  func.func @transform_4(%arg0: i32, %arg1: i32) -> (i32, i32, i32, i32) {
    %c0_i32 = arith.constant 0 : i32
    %c0_i32_0 = arith.constant 0 : i32
    %c0_i32_1 = arith.constant 0 : i32
    return %arg0, %arg1, %c0_i32, %c0_i32_0 : i32, i32, i32, i32
  }
}

module attributes {stable_mosaic.version = 11 : i64} {
  func.func @_mm_bn_act_kernel(%arg0: i32, %arg1: memref<256x24xbf16, #tpu.memory_space<vmem>>, %arg2: memref<24x96xbf16, #tpu.memory_space<vmem>>, %arg3: memref<1x96xf32, #tpu.memory_space<vmem>>, %arg4: memref<1x96xf32, #tpu.memory_space<vmem>>, %arg5: memref<1x96xf32, #tpu.memory_space<vmem>>, %arg6: memref<256x96xbf16, #tpu.memory_space<vmem>>) attributes {dimension_semantics = [#tpu.dimension_semantics<parallel>], iteration_bounds = array<i64: 2>, scalar_prefetch = 0 : i64, scratch_operands = 0 : i64, tpu.core_type = #tpu.core_type<tc>, window_params = [{transform_indices = @transform_0, window_bounds = array<i64: 256, 24>}, {pipeline_mode = #tpu.pipeline_mode<synchronous>, transform_indices = @transform_1, window_bounds = array<i64: 24, 96>}, {pipeline_mode = #tpu.pipeline_mode<synchronous>, transform_indices = @transform_2, window_bounds = array<i64: 1, 96>}, {pipeline_mode = #tpu.pipeline_mode<synchronous>, transform_indices = @transform_3, window_bounds = array<i64: 1, 96>}, {pipeline_mode = #tpu.pipeline_mode<synchronous>, transform_indices = @transform_4, window_bounds = array<i64: 1, 96>}, {transform_indices = @transform_5, window_bounds = array<i64: 256, 96>}]} {
    %c0 = arith.constant 0 : index
    %c0_0 = arith.constant 0 : index
    %0 = vector.load %arg1[%c0, %c0_0] : memref<256x24xbf16, #tpu.memory_space<vmem>>, vector<256x24xbf16>
    %c0_1 = arith.constant 0 : index
    %c0_2 = arith.constant 0 : index
    %1 = vector.load %arg2[%c0_1, %c0_2] : memref<24x96xbf16, #tpu.memory_space<vmem>>, vector<24x96xbf16>
    %cst = arith.constant dense<0.000000e+00> : vector<256x96xf32>
    %2 = tpu.matmul %0, %1, %cst {dimension_numbers = #tpu.dot_dimension_numbers<[1], [0], [0], [1], [0, 0, 1, 1], [], []>} : vector<256x24xbf16>, vector<24x96xbf16>, vector<256x96xf32> -> vector<256x96xf32>
    %c0_3 = arith.constant 0 : index
    %c0_4 = arith.constant 0 : index
    %3 = vector.load %arg3[%c0_3, %c0_4] : memref<1x96xf32, #tpu.memory_space<vmem>>, vector<1x96xf32>
    %4 = vector.broadcast %3 : vector<1x96xf32> to vector<256x96xf32>
    %5 = arith.mulf %2, %4 : vector<256x96xf32>
    %c0_5 = arith.constant 0 : index
    %c0_6 = arith.constant 0 : index
    %6 = vector.load %arg4[%c0_5, %c0_6] : memref<1x96xf32, #tpu.memory_space<vmem>>, vector<1x96xf32>
    %7 = vector.broadcast %6 : vector<1x96xf32> to vector<256x96xf32>
    %8 = arith.addf %5, %7 : vector<256x96xf32>
    %c0_7 = arith.constant 0 : index
    %c0_8 = arith.constant 0 : index
    %9 = vector.load %arg5[%c0_7, %c0_8] : memref<1x96xf32, #tpu.memory_space<vmem>>, vector<1x96xf32>
    %cst_9 = arith.constant 0.000000e+00 : f32
    %10 = vector.broadcast %cst_9 : f32 to vector<1x96xf32>
    %11 = arith.cmpf ogt, %9, %10 : vector<1x96xf32>
    %cst_10 = arith.constant 0.000000e+00 : f32
    %12 = vector.broadcast %cst_10 : f32 to vector<256x96xf32>
    %13 = arith.maximumf %8, %12 : vector<256x96xf32>
    %14 = vector.shape_cast %11 : vector<1x96xi1> to vector<1x96xi1>
    %15 = vector.broadcast %14 : vector<1x96xi1> to vector<256x96xi1>
    %16 = arith.select %15, %13, %8 : vector<256x96xi1>, vector<256x96xf32>
    %17 = arith.truncf %16 : vector<256x96xf32> to vector<256x96xbf16>
    %c0_11 = arith.constant 0 : index
    %c0_12 = arith.constant 0 : index
    %18 = vector.load %arg6[%c0_11, %c0_12] : memref<256x96xbf16, #tpu.memory_space<vmem>>, vector<256x96xbf16>
    tpu.vector_store %arg6[%c0_11, %c0_12], %17 {strides = array<i32>} : memref<256x96xbf16, #tpu.memory_space<vmem>>, vector<256x96xbf16>,
    return
  }
  func.func @transform_0(%arg0: i32) -> (i32, i32) {
    %c0_i32 = arith.constant 0 : i32
    %c0_i32_0 = arith.constant 0 : i32
    return %arg0, %c0_i32 : i32, i32
  }
  func.func @transform_1(%arg0: i32) -> (i32, i32) {
    %c0_i32 = arith.constant 0 : i32
    %c0_i32_0 = arith.constant 0 : i32
    %c0_i32_1 = arith.constant 0 : i32
    return %c0_i32, %c0_i32_0 : i32, i32
  }
  func.func @transform_2(%arg0: i32) -> (i32, i32) {
    %c0_i32 = arith.constant 0 : i32
    %c0_i32_0 = arith.constant 0 : i32
    %c0_i32_1 = arith.constant 0 : i32
    return %c0_i32, %c0_i32_0 : i32, i32
  }
  func.func @transform_3(%arg0: i32) -> (i32, i32) {
    %c0_i32 = arith.constant 0 : i32
    %c0_i32_0 = arith.constant 0 : i32
    %c0_i32_1 = arith.constant 0 : i32
    return %c0_i32, %c0_i32_0 : i32, i32
  }
  func.func @transform_4(%arg0: i32) -> (i32, i32) {
    %c0_i32 = arith.constant 0 : i32
    %c0_i32_0 = arith.constant 0 : i32
    %c0_i32_1 = arith.constant 0 : i32
    return %c0_i32, %c0_i32_0 : i32, i32
  }
  func.func @transform_5(%arg0: i32) -> (i32, i32) {
    %c0_i32 = arith.constant 0 : i32
    %c0_i32_0 = arith.constant 0 : i32
    return %arg0, %c0_i32 : i32, i32
  }
}

module attributes {stable_mosaic.version = 11 : i64} {
  func.func @_mm_bn_act_kernel(%arg0: i32, %arg1: memref<256x128xbf16, #tpu.memory_space<vmem>>, %arg2: memref<128x32xbf16, #tpu.memory_space<vmem>>, %arg3: memref<1x32xf32, #tpu.memory_space<vmem>>, %arg4: memref<1x32xf32, #tpu.memory_space<vmem>>, %arg5: memref<1x32xf32, #tpu.memory_space<vmem>>, %arg6: memref<256x32xf32, #tpu.memory_space<vmem>>) attributes {dimension_semantics = [#tpu.dimension_semantics<parallel>], iteration_bounds = array<i64: 2>, scalar_prefetch = 0 : i64, scratch_operands = 0 : i64, tpu.core_type = #tpu.core_type<tc>, window_params = [{transform_indices = @transform_0, window_bounds = array<i64: 256, 128>}, {pipeline_mode = #tpu.pipeline_mode<synchronous>, transform_indices = @transform_1, window_bounds = array<i64: 128, 32>}, {pipeline_mode = #tpu.pipeline_mode<synchronous>, transform_indices = @transform_2, window_bounds = array<i64: 1, 32>}, {pipeline_mode = #tpu.pipeline_mode<synchronous>, transform_indices = @transform_3, window_bounds = array<i64: 1, 32>}, {pipeline_mode = #tpu.pipeline_mode<synchronous>, transform_indices = @transform_4, window_bounds = array<i64: 1, 32>}, {transform_indices = @transform_5, window_bounds = array<i64: 256, 32>}]} {
    %c0 = arith.constant 0 : index
    %c0_0 = arith.constant 0 : index
    %0 = vector.load %arg1[%c0, %c0_0] : memref<256x128xbf16, #tpu.memory_space<vmem>>, vector<256x128xbf16>
    %c0_1 = arith.constant 0 : index
    %c0_2 = arith.constant 0 : index
    %1 = vector.load %arg2[%c0_1, %c0_2] : memref<128x32xbf16, #tpu.memory_space<vmem>>, vector<128x32xbf16>
    %cst = arith.constant dense<0.000000e+00> : vector<256x32xf32>
    %2 = tpu.matmul %0, %1, %cst {dimension_numbers = #tpu.dot_dimension_numbers<[1], [0], [0], [1], [0, 0, 1, 1], [], []>} : vector<256x128xbf16>, vector<128x32xbf16>, vector<256x32xf32> -> vector<256x32xf32>
    %c0_3 = arith.constant 0 : index
    %c0_4 = arith.constant 0 : index
    %3 = vector.load %arg3[%c0_3, %c0_4] : memref<1x32xf32, #tpu.memory_space<vmem>>, vector<1x32xf32>
    %4 = vector.broadcast %3 : vector<1x32xf32> to vector<256x32xf32>
    %5 = arith.mulf %2, %4 : vector<256x32xf32>
    %c0_5 = arith.constant 0 : index
    %c0_6 = arith.constant 0 : index
    %6 = vector.load %arg4[%c0_5, %c0_6] : memref<1x32xf32, #tpu.memory_space<vmem>>, vector<1x32xf32>
    %7 = vector.broadcast %6 : vector<1x32xf32> to vector<256x32xf32>
    %8 = arith.addf %5, %7 : vector<256x32xf32>
    %c0_7 = arith.constant 0 : index
    %c0_8 = arith.constant 0 : index
    %9 = vector.load %arg5[%c0_7, %c0_8] : memref<1x32xf32, #tpu.memory_space<vmem>>, vector<1x32xf32>
    %cst_9 = arith.constant 0.000000e+00 : f32
    %10 = vector.broadcast %cst_9 : f32 to vector<1x32xf32>
    %11 = arith.cmpf ogt, %9, %10 : vector<1x32xf32>
    %cst_10 = arith.constant 0.000000e+00 : f32
    %12 = vector.broadcast %cst_10 : f32 to vector<256x32xf32>
    %13 = arith.maximumf %8, %12 : vector<256x32xf32>
    %14 = vector.shape_cast %11 : vector<1x32xi1> to vector<1x32xi1>
    %15 = vector.broadcast %14 : vector<1x32xi1> to vector<256x32xi1>
    %16 = arith.select %15, %13, %8 : vector<256x32xi1>, vector<256x32xf32>
    %c0_11 = arith.constant 0 : index
    %c0_12 = arith.constant 0 : index
    %17 = vector.load %arg6[%c0_11, %c0_12] : memref<256x32xf32, #tpu.memory_space<vmem>>, vector<256x32xf32>
    tpu.vector_store %arg6[%c0_11, %c0_12], %16 {strides = array<i32>} : memref<256x32xf32, #tpu.memory_space<vmem>>, vector<256x32xf32>,
    return
  }
  func.func @transform_0(%arg0: i32) -> (i32, i32) {
    %c0_i32 = arith.constant 0 : i32
    %c0_i32_0 = arith.constant 0 : i32
    return %arg0, %c0_i32 : i32, i32
  }
  func.func @transform_1(%arg0: i32) -> (i32, i32) {
    %c0_i32 = arith.constant 0 : i32
    %c0_i32_0 = arith.constant 0 : i32
    %c0_i32_1 = arith.constant 0 : i32
    return %c0_i32, %c0_i32_0 : i32, i32
  }
  func.func @transform_2(%arg0: i32) -> (i32, i32) {
    %c0_i32 = arith.constant 0 : i32
    %c0_i32_0 = arith.constant 0 : i32
    %c0_i32_1 = arith.constant 0 : i32
    return %c0_i32, %c0_i32_0 : i32, i32
  }
  func.func @transform_3(%arg0: i32) -> (i32, i32) {
    %c0_i32 = arith.constant 0 : i32
    %c0_i32_0 = arith.constant 0 : i32
    %c0_i32_1 = arith.constant 0 : i32
    return %c0_i32, %c0_i32_0 : i32, i32
  }
  func.func @transform_4(%arg0: i32) -> (i32, i32) {
    %c0_i32 = arith.constant 0 : i32
    %c0_i32_0 = arith.constant 0 : i32
    %c0_i32_1 = arith.constant 0 : i32
    return %c0_i32, %c0_i32_0 : i32, i32
  }
  func.func @transform_5(%arg0: i32) -> (i32, i32) {
    %c0_i32 = arith.constant 0 : i32
    %c0_i32_0 = arith.constant 0 : i32
    return %arg0, %c0_i32 : i32, i32
  }
}

</mosaic_0001>

<llo_original>
// kernel: easpp_forward.9
$region0: #{easpp_forward.9}
  #allocation0 [shape = 'u32[]', space=smem, size = 0x4, offset = 0x4, fixed_abs, tag = 'smem constant byte address 0x4 - core index']
  #allocation1 [shape = 'u32[144,128]{1,0:T(1,128)}', space=vmem, size = 0x12000, scoped, tag = 'internal scratch']
  %s0 = inlined_call_operand.vmem [shape: bf16[512,8], index: 0, kind: input, shape index: {}]
  %s1 = inlined_call_operand.vmem [shape: bf16[8,56], index: 1, kind: input, shape index: {}]
  %s2 = inlined_call_operand.vmem [shape: f32[1,56], index: 2, kind: input, shape index: {}]
  %s3 = inlined_call_operand.vmem [shape: f32[1,56], index: 3, kind: input, shape index: {}]
  %s4 = inlined_call_operand.vmem [shape: f32[1,56], index: 4, kind: input, shape index: {}]
  %s5 = inlined_call_operand.vmem [shape: bf16[512,56], index: 5, kind: output, shape index: {}]
  %s6 = sld [smem:[#allocation0]]
  $region53: #{easpp_forward.9} parent=0
    _
  %s8 = ssub.s32 1, %s6
  %s9 = scalar_select 0, %s8, %s6
  loop: start=0, step=1, limit=4
  $region2: #{easpp_forward.9} parent=0 // loop_pre_header
    _
  $region3: #{easpp_forward.9} parent=0 // loop_header
    %s11 = sphi 0, %s15
    %p12 = scmp.ge.s32.totalorder %s11, 4
    %s21 = sphi 0, %s23
    %s24 = sphi 0, %s21
    %s25 = sphi 0, %s24
    %s41 = sphi 0, %s25
    %s45 = sphi 0, %s45
    %s47 = sphi 0, %s45
    %s48 = sphi 0, %s47
    %s62 = sphi 0, %s48
    %s66 = sphi 0, %s66
    %s68 = sphi 0, %s66
    %s69 = sphi 0, %s68
    %s83 = sphi 0, %s69
    %s87 = sphi 0, %s87
    %s89 = sphi 0, %s87
    %s90 = sphi 0, %s89
    %s104 = sphi 0, %s90
    %s108 = sphi 0, %s108
    %s110 = sphi 0, %s108
    %s111 = sphi 0, %s110
    %s125 = sphi 0, %s111
    %s131 = sphi 0, %s133
    %s134 = sphi 0, %s131
    %s135 = sphi 0, %s134
    %s151 = sphi 0, %s135
  $region4: #{easpp_forward.9} parent=0 // loop_header_branch
    %14 = sbr.rel (%p12) target = $region8
  $region5: #{easpp_forward.9} parent=0 // loop_body
    %s16 = ssub.s32 %s11, 1
    %s17 = ssub.s32 %s11, 2
    %s18 = sadd.s32 %s11, 1
    %s19 = ssub.s32 %s11, %s18
    %p20 = scmp.eq.s32.totalorder %s19, 0
    %s22 = sadd.s32 %s21, 1
    %s23 = scalar_select %p20, %s21, %s22
    %p26 = pneg %p20
    %p27 = scmp.eq.s32.totalorder %s11, 1
    %p28 = por %p26, %p27
    %p29 = scmp.ne.s32.totalorder %s21, %s24
    %p30 = scmp.eq.s32.totalorder %s11, 0
    %p31 = por %p29, %p30
    %p32 = scmp.ne.s32.totalorder %s21, %s24
    %p33 = scmp.eq.s32.totalorder %s16, 1
    %p34 = por %p32, %p33
    %p35 = scmp.ne.s32.totalorder %s24, %s25
    %p36 = scmp.eq.s32.totalorder %s16, 0
    %p37 = por %p35, %p36
    %p38 = scmp.ne.s32.totalorder %s24, %s25
    %p39 = scmp.eq.s32.totalorder %s17, 1
    %p40 = por %p38, %p39
    %p42 = scmp.ne.s32.totalorder %s25, %s41
    %p43 = scmp.eq.s32.totalorder %s17, 0
    %p44 = por %p42, %p43
    %s46 = sadd.s32 %s45, 1
    %p49 = scmp.eq.s32.totalorder %s11, 1
    %p50 = scmp.ne.s32.totalorder %s45, %s47
    %p51 = scmp.eq.s32.totalorder %s11, 0
    %p52 = por %p50, %p51
    %p53 = scmp.ne.s32.totalorder %s45, %s47
    %p54 = scmp.eq.s32.totalorder %s16, 1
    %p55 = por %p53, %p54
    %p56 = scmp.ne.s32.totalorder %s47, %s48
    %p57 = scmp.eq.s32.totalorder %s16, 0
    %p58 = por %p56, %p57
    %p59 = scmp.ne.s32.totalorder %s47, %s48
    %p60 = scmp.eq.s32.totalorder %s17, 1
    %p61 = por %p59, %p60
    %p63 = scmp.ne.s32.totalorder %s48, %s62
    %p64 = scmp.eq.s32.totalorder %s17, 0
    %p65 = por %p63, %p64
    %s67 = sadd.s32 %s66, 1
    %p70 = scmp.eq.s32.totalorder %s11, 1
    %p71 = scmp.ne.s32.totalorder %s66, %s68
    %p72 = scmp.eq.s32.totalorder %s11, 0
    %p73 = por %p71, %p72
    %p74 = scmp.ne.s32.totalorder %s66, %s68
    %p75 = scmp.eq.s32.totalorder %s16, 1
    %p76 = por %p74, %p75
    %p77 = scmp.ne.s32.totalorder %s68, %s69
    %p78 = scmp.eq.s32.totalorder %s16, 0
    %p79 = por %p77, %p78
    %p80 = scmp.ne.s32.totalorder %s68, %s69
    %p81 = scmp.eq.s32.totalorder %s17, 1
    %p82 = por %p80, %p81
    %p84 = scmp.ne.s32.totalorder %s69, %s83
    %p85 = scmp.eq.s32.totalorder %s17, 0
    %p86 = por %p84, %p85
    %s88 = sadd.s32 %s87, 1
    %p91 = scmp.eq.s32.totalorder %s11, 1
    %p92 = scmp.ne.s32.totalorder %s87, %s89
    %p93 = scmp.eq.s32.totalorder %s11, 0
    %p94 = por %p92, %p93
    %p95 = scmp.ne.s32.totalorder %s87, %s89
    %p96 = scmp.eq.s32.totalorder %s16, 1
    %p97 = por %p95, %p96
    %p98 = scmp.ne.s32.totalorder %s89, %s90
    %p99 = scmp.eq.s32.totalorder %s16, 0
    %p100 = por %p98, %p99
    %p101 = scmp.ne.s32.totalorder %s89, %s90
    %p102 = scmp.eq.s32.totalorder %s17, 1
    %p103 = por %p101, %p102
    %p105 = scmp.ne.s32.totalorder %s90, %s104
    %p106 = scmp.eq.s32.totalorder %s17, 0
    %p107 = por %p105, %p106
    %s109 = sadd.s32 %s108, 1
    %p112 = scmp.eq.s32.totalorder %s11, 1
    %p113 = scmp.ne.s32.totalorder %s108, %s110
    %p114 = scmp.eq.s32.totalorder %s11, 0
    %p115 = por %p113, %p114
    %p116 = scmp.ne.s32.totalorder %s108, %s110
    %p117 = scmp.eq.s32.totalorder %s16, 1
    %p118 = por %p116, %p117
    %p119 = scmp.ne.s32.totalorder %s110, %s111
    %p120 = scmp.eq.s32.totalorder %s16, 0
    %p121 = por %p119, %p120
    %p122 = scmp.ne.s32.totalorder %s110, %s111
    %p123 = scmp.eq.s32.totalorder %s17, 1
    %p124 = por %p122, %p123
    %p126 = scmp.ne.s32.totalorder %s111, %s125
    %p127 = scmp.eq.s32.totalorder %s17, 0
    %p128 = por %p126, %p127
    %s129 = ssub.s32 %s11, %s18
    %p130 = scmp.eq.s32.totalorder %s129, 0
    %s132 = sadd.s32 %s131, 1
    %s133 = scalar_select %p130, %s131, %s132
    %p136 = pneg %p130
    %p137 = scmp.eq.s32.totalorder %s11, 1
    %p138 = por %p136, %p137
    %p139 = scmp.ne.s32.totalorder %s131, %s134
    %p140 = scmp.eq.s32.totalorder %s11, 0
    %p141 = por %p139, %p140
    %p142 = scmp.ne.s32.totalorder %s131, %s134
    %p143 = scmp.eq.s32.totalorder %s16, 1
    %p144 = por %p142, %p143
    %p145 = scmp.ne.s32.totalorder %s134, %s135
    %p146 = scmp.eq.s32.totalorder %s16, 0
    %p147 = por %p145, %p146
    %p148 = scmp.ne.s32.totalorder %s134, %s135
    %p149 = scmp.eq.s32.totalorder %s17, 1
    %p150 = por %p148, %p149
    %p152 = scmp.ne.s32.totalorder %s135, %s151
    %p153 = scmp.eq.s32.totalorder %s17, 0
    %p154 = por %p152, %p153
    %p155 = scmp.le.s32.totalorder 1, %s11
    %p156 = scmp.lt.s32.totalorder %s11, 3
    %p157 = pnand %p155, %p156
    %p158 = pneg %p157
    // Predicated region
    $region9: #{easpp_forward.9} parent=5 // pred_check
      _
    $region10: #{easpp_forward.9} parent=5 // pred_check_branch
      %160 = sbr.rel (%p157) target = $region12
    $region11: #{easpp_forward.9} parent=5 // pred_region
      %s161 = ssub.s32 %s11, 1
      // Predicated region
      $region13: #{easpp_forward.9} parent=11 // pred_check
        %p162 = pneg %p58
      $region14: #{easpp_forward.9} parent=11 // pred_check_branch
        %164 = sbr.rel (%p162) target = $region16
      $region15: #{easpp_forward.9} parent=11 // pred_region
        _
      $region16: #{easpp_forward.9} parent=11 // pred_fallthru
        _
      // Predicated region
      $region17: #{easpp_forward.9} parent=11 // pred_check
        %p165 = pneg %p79
      $region18: #{easpp_forward.9} parent=11 // pred_check_branch
        %167 = sbr.rel (%p165) target = $region20
      $region19: #{easpp_forward.9} parent=11 // pred_region
        _
      $region20: #{easpp_forward.9} parent=11 // pred_fallthru
        _
      // Predicated region
      $region21: #{easpp_forward.9} parent=11 // pred_check
        %p168 = pneg %p100
      $region22: #{easpp_forward.9} parent=11 // pred_check_branch
        %170 = sbr.rel (%p168) target = $region24
      $region23: #{easpp_forward.9} parent=11 // pred_region
        _
      $region24: #{easpp_forward.9} parent=11 // pred_fallthru
        _
      // Predicated region
      $region25: #{easpp_forward.9} parent=11 // pred_check
        %p171 = pneg %p121
      $region26: #{easpp_forward.9} parent=11 // pred_check_branch
        %173 = sbr.rel (%p171) target = $region28
      $region27: #{easpp_forward.9} parent=11 // pred_region
        _
      $region28: #{easpp_forward.9} parent=11 // pred_fallthru
        _
    $region12: #{easpp_forward.9} parent=5 // pred_fallthru
      _
    %p174 = scmp.lt.s32.totalorder %s11, 2
    // Predicated region
    $region29: #{easpp_forward.9} parent=5 // pred_check
      %p175 = pneg %p174
    $region30: #{easpp_forward.9} parent=5 // pred_check_branch
      %177 = sbr.rel (%p175) target = $region32
    $region31: #{easpp_forward.9} parent=5 // pred_region
      // Predicated region
      $region33: #{easpp_forward.9} parent=31 // pred_check
        %p178 = pneg %p31
      $region34: #{easpp_forward.9} parent=31 // pred_check_branch
        %180 = sbr.rel (%p178) target = $region36
      $region35: #{easpp_forward.9} parent=31 // pred_region
        %s181 = smul.u32 32, %s11
        %p182 = scmp.lt.s32.totalorder %s181, 63
        %s183 = scalar_select %p182, %s181, 63
        %s184 = smul.addr %s183, 4
        %s185 = scalar_lea.vmem %s0, %s184
        %s186 = smul.u32 32, %s11
      $region36: #{easpp_forward.9} parent=31 // pred_fallthru
        _
    $region32: #{easpp_forward.9} parent=5 // pred_fallthru
      _
    %p187 = scmp.le.s32.totalorder 1, %s11
    %p188 = scmp.lt.s32.totalorder %s11, 3
    %p189 = pnand %p187, %p188
    %p190 = pneg %p189
    // Predicated region
    $region37: #{easpp_forward.9} parent=5 // pred_check
      _
    $region38: #{easpp_forward.9} parent=5 // pred_check_branch
      %192 = sbr.rel (%p189) target = $region40
    $region39: #{easpp_forward.9} parent=5 // pred_region
      %s193 = ssub.s32 %s11, 1
      %s194 = smul.u32 32, %s16
      %p195 = scmp.lt.s32.totalorder %s194, 63
      %s196 = scalar_select %p195, %s194, 63
      %s197 = smul.addr %s196, 4
      %s198 = scalar_lea.vmem %s0, %s197
      %p199 = pneg %p37
      %p200 = pneg %p34
      %p201 = pneg %p58
      %p202 = pneg %p55
      %p203 = pneg %p79
      %p204 = pneg %p76
      %p205 = pneg %p100
      %p206 = pneg %p97
      %p207 = pneg %p121
      %p208 = pneg %p118
      %p209 = pneg %p147
      %p210 = pneg %p144
      %s211 = smul.u32 32, %s16
      %p212 = scmp.lt.s32.totalorder %s211, 63
      %s213 = scalar_select %p212, %s211, 63
      %s214 = smul.addr %s213, 4
      %s215 = scalar_lea.vmem %s5, %s214
      %s216 = smul.u32 32, %s16
      %p217 = scmp.lt.s32.totalorder %s216, 63
      %s218 = scalar_select %p217, %s216, 63
      %s219 = smul.addr %s218, 4
      %s220 = scalar_lea.vmem %s0, %s219
      %s221 = smul.u32 32, %s16
      %s222 = smul.u32 32, %s16
      %p223 = scmp.lt.s32.totalorder %s222, 63
      %s224 = scalar_select %p223, %s222, 63
      %s225 = smul.addr %s224, 4
      %s226 = scalar_lea.vmem %s5, %s225
      %s227 = smul.u32 32, %s16
      %v229 = vld [vmem:[%s220] sm:$0xf]
      %v230 = vld [vmem:[%s220 + $0x4] sm:$0xf]
      %v231 = vld [vmem:[%s220 + $0x8] sm:$0xf]
      %v232 = vld [vmem:[%s220 + $0xc] sm:$0xf]
      %v233 = vld [vmem:[%s220 + $0x10] sm:$0xf]
      %v234 = vld [vmem:[%s220 + $0x14] sm:$0xf]
      %v235 = vld [vmem:[%s220 + $0x18] sm:$0xf]
      %v236 = vld [vmem:[%s220 + $0x1c] sm:$0xf]
      %v237 = vld [vmem:[%s220 + $0x20] sm:$0xf]
      %v238 = vld [vmem:[%s220 + $0x24] sm:$0xf]
      %v239 = vld [vmem:[%s220 + $0x28] sm:$0xf]
      %v240 = vld [vmem:[%s220 + $0x2c] sm:$0xf]
      %v241 = vld [vmem:[%s220 + $0x30] sm:$0xf]
      %v242 = vld [vmem:[%s220 + $0x34] sm:$0xf]
      %v243 = vld [vmem:[%s220 + $0x38] sm:$0xf]
      %v244 = vld [vmem:[%s220 + $0x3c] sm:$0xf]
      %v245 = vld [vmem:[%s220 + $0x40] sm:$0xf]
      %v246 = vld [vmem:[%s220 + $0x44] sm:$0xf]
      %v247 = vld [vmem:[%s220 + $0x48] sm:$0xf]
      %v248 = vld [vmem:[%s220 + $0x4c] sm:$0xf]
      %v249 = vld [vmem:[%s220 + $0x50] sm:$0xf]
      %v250 = vld [vmem:[%s220 + $0x54] sm:$0xf]
      %v251 = vld [vmem:[%s220 + $0x58] sm:$0xf]
      %v252 = vld [vmem:[%s220 + $0x5c] sm:$0xf]
      %v253 = vld [vmem:[%s220 + $0x60] sm:$0xf]
      %v254 = vld [vmem:[%s220 + $0x64] sm:$0xf]
      %v255 = vld [vmem:[%s220 + $0x68] sm:$0xf]
      %v256 = vld [vmem:[%s220 + $0x6c] sm:$0xf]
      %v257 = vld [vmem:[%s220 + $0x70] sm:$0xf]
      %v258 = vld [vmem:[%s220 + $0x74] sm:$0xf]
      %v259 = vld [vmem:[%s220 + $0x78] sm:$0xf]
      %v260 = vld [vmem:[%s220 + $0x7c] sm:$0xf]
      %v261 = vld [vmem:[%s1] sm:$0xf]
      %v294 = vunpack.c.l.b16 %v229
      %v295 = vunpack.c.l.b16 %v230
      %v296 = vunpack.c.l.b16 %v231
      %v297 = vunpack.c.l.b16 %v232
      %v298 = vunpack.c.l.b16 %v233
      %v299 = vunpack.c.l.b16 %v234
      %v300 = vunpack.c.l.b16 %v235
      %v301 = vunpack.c.l.b16 %v236
      %v302 = vunpack.c.l.b16 %v237
      %v303 = vunpack.c.l.b16 %v238
      %v304 = vunpack.c.l.b16 %v239
      %v305 = vunpack.c.l.b16 %v240
      %v306 = vunpack.c.l.b16 %v241
      %v307 = vunpack.c.l.b16 %v242
      %v308 = vunpack.c.l.b16 %v243
      %v309 = vunpack.c.l.b16 %v244
      %v310 = vunpack.c.l.b16 %v245
      %v311 = vunpack.c.l.b16 %v246
      %v312 = vunpack.c.l.b16 %v247
      %v313 = vunpack.c.l.b16 %v248
      %v314 = vunpack.c.l.b16 %v249
      %v315 = vunpack.c.l.b16 %v250
      %v316 = vunpack.c.l.b16 %v251
      %v317 = vunpack.c.l.b16 %v252
      %v318 = vunpack.c.l.b16 %v253
      %v319 = vunpack.c.l.b16 %v254
      %v320 = vunpack.c.l.b16 %v255
      %v321 = vunpack.c.l.b16 %v256
      %v322 = vunpack.c.l.b16 %v257
      %v323 = vunpack.c.l.b16 %v258
      %v324 = vunpack.c.l.b16 %v259
      %v325 = vunpack.c.l.b16 %v260
      %v326 = vpack.c.b16 %v295, %v294
      %v327 = vpack.c.b16 %v297, %v296
      %v328 = vpack.c.b16 %v299, %v298
      %v329 = vpack.c.b16 %v301, %v300
      %v330 = vpack.c.b16 %v303, %v302
      %v331 = vpack.c.b16 %v305, %v304
      %v332 = vpack.c.b16 %v307, %v306
      %v333 = vpack.c.b16 %v309, %v308
      %v334 = vpack.c.b16 %v311, %v310
      %v335 = vpack.c.b16 %v313, %v312
      %v336 = vpack.c.b16 %v315, %v314
      %v337 = vpack.c.b16 %v317, %v316
      %v338 = vpack.c.b16 %v319, %v318
      %v339 = vpack.c.b16 %v321, %v320
      %v340 = vpack.c.b16 %v323, %v322
      %v341 = vpack.c.b16 %v325, %v324
      %vm342 = vcmask 64512
      %v344 = vsel %vm342, %v326, 0
      %v347 = vsel %vm342, %v327, 0
      %v350 = vsel %vm342, %v328, 0
      %v353 = vsel %vm342, %v329, 0
      %v356 = vsel %vm342, %v330, 0
      %v359 = vsel %vm342, %v331, 0
      %v362 = vsel %vm342, %v332, 0
      %v365 = vsel %vm342, %v333, 0
      %v368 = vsel %vm342, %v334, 0
      %v371 = vsel %vm342, %v335, 0
      %v374 = vsel %vm342, %v336, 0
      %v377 = vsel %vm342, %v337, 0
      %v380 = vsel %vm342, %v338, 0
      %v383 = vsel %vm342, %v339, 0
      %v386 = vsel %vm342, %v340, 0
      %v389 = vsel %vm342, %v341, 0
      %vm391 = vcmask 1043456
      %v393 = vsel %vm391, %v261, 0
      %395 = vmatprep.subr.bf16.mxu0 0
      %396 = vmatpush1.bf16.msra.mxu0 %v393
      %397 = vmatprep.subr.bf16.mxu0 0
      %398 = vmatpush1.bf16.msra.mxu0 0
      %399 = vmatprep.subr.bf16.mxu0 0
      %400 = vmatpush1.bf16.msra.mxu0 0
      %401 = vmatprep.subr.bf16.mxu0 0
      %402 = vmatpush1.bf16.msra.mxu0 0
      %403 = vmatprep.subr.bf16.mxu0 0
      %404 = vmatpush1.bf16.msra.mxu0 0
      %405 = vmatprep.subr.bf16.mxu0 0
      %406 = vmatpush1.bf16.msra.mxu0 0
      %407 = vmatprep.subr.bf16.mxu0 0
      %408 = vmatpush1.bf16.msra.mxu0 0
      %409 = vmatprep.subr.bf16.mxu0 0
      %410 = vmatpush1.bf16.msra.mxu0 0
      %411 = vmatprep.subr.bf16.mxu0 0
      %412 = vmatpush1.bf16.msra.mxu0 0
      %413 = vmatprep.subr.bf16.mxu0 0
      %414 = vmatpush1.bf16.msra.mxu0 0
      %415 = vmatprep.subr.bf16.mxu0 0
      %416 = vmatpush1.bf16.msra.mxu0 0
      %417 = vmatprep.subr.bf16.mxu0 0
      %418 = vmatpush1.bf16.msra.mxu0 0
      %419 = vmatprep.subr.bf16.mxu0 0
      %420 = vmatpush1.bf16.msra.mxu0 0
      %421 = vmatprep.subr.bf16.mxu0 0
      %422 = vmatpush1.bf16.msra.mxu0 0
      %423 = vmatprep.subr.bf16.mxu0 0
      %424 = vmatpush1.bf16.msra.mxu0 0
      %425 = vmatprep.subr.bf16.mxu0 0
      %426 = vmatpush1.bf16.msra.mxu0 0
      %427 = vmatprep.mubr.bf16.mxu0 0
      %428 = vmatmul.mubr.bf16.gmra.mrb[0].mxu0 %v344
      %v429 = vpop.f32.mrb[0].mxu0
      %v430 = vadd.f32 0.0, %v429
      %v431 = vpop.f32.mrb[0].mxu0
      %v432 = vpop.f32.mrb[0].mxu0
      %v433 = vadd.f32 0.0, %v432
      %v434 = vpop.f32.mrb[0].mxu0
      %435 = vmatprep.mubr.bf16.mxu0 0
      %436 = vmatmul.mubr.bf16.gmra.mrb[0].mxu0 %v347
      %v437 = vpop.f32.mrb[0].mxu0
      %v438 = vadd.f32 0.0, %v437
      %v439 = vpop.f32.mrb[0].mxu0
      %v440 = vpop.f32.mrb[0].mxu0
      %v441 = vadd.f32 0.0, %v440
      %v442 = vpop.f32.mrb[0].mxu0
      %443 = vmatprep.mubr.bf16.mxu0 0
      %444 = vmatmul.mubr.bf16.gmra.mrb[0].mxu0 %v350
      %v445 = vpop.f32.mrb[0].mxu0
      %v446 = vadd.f32 0.0, %v445
      %v447 = vpop.f32.mrb[0].mxu0
      %v448 = vpop.f32.mrb[0].mxu0
      %v449 = vadd.f32 0.0, %v448
      %v450 = vpop.f32.mrb[0].mxu0
      %451 = vmatprep.mubr.bf16.mxu0 0
      %452 = vmatmul.mubr.bf16.gmra.mrb[0].mxu0 %v353
      %v453 = vpop.f32.mrb[0].mxu0
      %v454 = vadd.f32 0.0, %v453
      %v455 = vpop.f32.mrb[0].mxu0
      %v456 = vpop.f32.mrb[0].mxu0
      %v457 = vadd.f32 0.0, %v456
      %v458 = vpop.f32.mrb[0].mxu0
      %459 = vmatprep.mubr.bf16.mxu0 0
      %460 = vmatmul.mubr.bf16.gmra.mrb[0].mxu0 %v356
      %v461 = vpop.f32.mrb[0].mxu0
      %v462 = vadd.f32 0.0, %v461
      %v463 = vpop.f32.mrb[0].mxu0
      %v464 = vpop.f32.mrb[0].mxu0
      %v465 = vadd.f32 0.0, %v464
      %v466 = vpop.f32.mrb[0].mxu0
      %467 = vmatprep.mubr.bf16.mxu0 0
      %468 = vmatmul.mubr.bf16.gmra.mrb[0].mxu0 %v359
      %v469 = vpop.f32.mrb[0].mxu0
      %v470 = vadd.f32 0.0, %v469
      %v471 = vpop.f32.mrb[0].mxu0
      %v472 = vpop.f32.mrb[0].mxu0
      %v473 = vadd.f32 0.0, %v472
      %v474 = vpop.f32.mrb[0].mxu0
      %475 = vmatprep.mubr.bf16.mxu0 0
      %476 = vmatmul.mubr.bf16.gmra.mrb[0].mxu0 %v362
      %v477 = vpop.f32.mrb[0].mxu0
      %v478 = vadd.f32 0.0, %v477
      %v479 = vpop.f32.mrb[0].mxu0
      %v480 = vpop.f32.mrb[0].mxu0
      %v481 = vadd.f32 0.0, %v480
      %v482 = vpop.f32.mrb[0].mxu0
      %483 = vmatprep.mubr.bf16.mxu0 0
      %484 = vmatmul.mubr.bf16.gmra.mrb[0].mxu0 %v365
      %v485 = vpop.f32.mrb[0].mxu0
      %v486 = vadd.f32 0.0, %v485
      %v487 = vpop.f32.mrb[0].mxu0
      %v488 = vpop.f32.mrb[0].mxu0
      %v489 = vadd.f32 0.0, %v488
      %v490 = vpop.f32.mrb[0].mxu0
      %491 = vmatprep.mubr.bf16.mxu0 0
      %492 = vmatmul.mubr.bf16.gmra.mrb[0].mxu0 %v368
      %v493 = vpop.f32.mrb[0].mxu0
      %v494 = vadd.f32 0.0, %v493
      %v495 = vpop.f32.mrb[0].mxu0
      %v496 = vpop.f32.mrb[0].mxu0
      %v497 = vadd.f32 0.0, %v496
      %v498 = vpop.f32.mrb[0].mxu0
      %499 = vmatprep.mubr.bf16.mxu0 0
      %500 = vmatmul.mubr.bf16.gmra.mrb[0].mxu0 %v371
      %v501 = vpop.f32.mrb[0].mxu0
      %v502 = vadd.f32 0.0, %v501
      %v503 = vpop.f32.mrb[0].mxu0
      %v504 = vpop.f32.mrb[0].mxu0
      %v505 = vadd.f32 0.0, %v504
      %v506 = vpop.f32.mrb[0].mxu0
      %507 = vmatprep.mubr.bf16.mxu0 0
      %508 = vmatmul.mubr.bf16.gmra.mrb[0].mxu0 %v374
      %v509 = vpop.f32.mrb[0].mxu0
      %v510 = vadd.f32 0.0, %v509
      %v511 = vpop.f32.mrb[0].mxu0
      %v512 = vpop.f32.mrb[0].mxu0
      %v513 = vadd.f32 0.0, %v512
      %v514 = vpop.f32.mrb[0].mxu0
      %515 = vmatprep.mubr.bf16.mxu0 0
      %516 = vmatmul.mubr.bf16.gmra.mrb[0].mxu0 %v377
      %v517 = vpop.f32.mrb[0].mxu0
      %v518 = vadd.f32 0.0, %v517
      %v519 = vpop.f32.mrb[0].mxu0
      %v520 = vpop.f32.mrb[0].mxu0
      %v521 = vadd.f32 0.0, %v520
      %v522 = vpop.f32.mrb[0].mxu0
      %523 = vmatprep.mubr.bf16.mxu0 0
      %524 = vmatmul.mubr.bf16.gmra.mrb[0].mxu0 %v380
      %v525 = vpop.f32.mrb[0].mxu0
      %v526 = vadd.f32 0.0, %v525
      %v527 = vpop.f32.mrb[0].mxu0
      %v528 = vpop.f32.mrb[0].mxu0
      %v529 = vadd.f32 0.0, %v528
      %v530 = vpop.f32.mrb[0].mxu0
      %531 = vmatprep.mubr.bf16.mxu0 0
      %532 = vmatmul.mubr.bf16.gmra.mrb[0].mxu0 %v383
      %v533 = vpop.f32.mrb[0].mxu0
      %v534 = vadd.f32 0.0, %v533
      %v535 = vpop.f32.mrb[0].mxu0
      %v536 = vpop.f32.mrb[0].mxu0
      %v537 = vadd.f32 0.0, %v536
      %v538 = vpop.f32.mrb[0].mxu0
      %539 = vmatprep.mubr.bf16.mxu0 0
      %540 = vmatmul.mubr.bf16.gmra.mrb[0].mxu0 %v386
      %v541 = vpop.f32.mrb[0].mxu0
      %v542 = vadd.f32 0.0, %v541
      %v543 = vpop.f32.mrb[0].mxu0
      %v544 = vpop.f32.mrb[0].mxu0
      %v545 = vadd.f32 0.0, %v544
      %v546 = vpop.f32.mrb[0].mxu0
      %547 = vmatprep.mubr.bf16.mxu0 0
      %548 = vmatmul.mubr.bf16.gmra.mrb[0].mxu0 %v389
      %v549 = vpop.f32.mrb[0].mxu0
      %v550 = vadd.f32 0.0, %v549
      %v551 = vpop.f32.mrb[0].mxu0
      %v552 = vpop.f32.mrb[0].mxu0
      %v553 = vadd.f32 0.0, %v552
      %v554 = vpop.f32.mrb[0].mxu0
      %555 = vdwg.mxu0
      %v556 = vld [vmem:[%s2] sm:$0x1]
      %v558 = vlaneseq
      %v559 = vshrl.u32 %v558, 7
      %v560 = vsub.s32 0, %v559
      %v561 = vrot.slane %v556, %v560
      %v563 = vmul.f32 %v430, %v561
      %v564 = vmul.f32 %v433, %v561
      %v565 = vmul.f32 %v438, %v561
      %v566 = vmul.f32 %v441, %v561
      %v567 = vmul.f32 %v446, %v561
      %v568 = vmul.f32 %v449, %v561
      %v569 = vmul.f32 %v454, %v561
      %v570 = vmul.f32 %v457, %v561
      %v571 = vmul.f32 %v462, %v561
      %v572 = vmul.f32 %v465, %v561
      %v573 = vmul.f32 %v470, %v561
      %v574 = vmul.f32 %v473, %v561
      %v575 = vmul.f32 %v478, %v561
      %v576 = vmul.f32 %v481, %v561
      %v577 = vmul.f32 %v486, %v561
      %v578 = vmul.f32 %v489, %v561
      %v579 = vmul.f32 %v494, %v561
      %v580 = vmul.f32 %v497, %v561
      %v581 = vmul.f32 %v502, %v561
      %v582 = vmul.f32 %v505, %v561
      %v583 = vmul.f32 %v510, %v561
      %v584 = vmul.f32 %v513, %v561
      %v585 = vmul.f32 %v518, %v561
      %v586 = vmul.f32 %v521, %v561
      %v587 = vmul.f32 %v526, %v561
      %v588 = vmul.f32 %v529, %v561
      %v589 = vmul.f32 %v534, %v561
      %v590 = vmul.f32 %v537, %v561
      %v591 = vmul.f32 %v542, %v561
      %v592 = vmul.f32 %v545, %v561
      %v593 = vmul.f32 %v550, %v561
      %v594 = vmul.f32 %v553, %v561
      %v595 = vld [vmem:[%s3] sm:$0x1]
      %v597 = vlaneseq
      %v598 = vshrl.u32 %v597, 7
      %v599 = vsub.s32 0, %v598
      %v600 = vrot.slane %v595, %v599
      %v602 = vadd.f32 %v563, %v600
      %v603 = vadd.f32 %v564, %v600
      %v604 = vadd.f32 %v565, %v600
      %v605 = vadd.f32 %v566, %v600
      %v606 = vadd.f32 %v567, %v600
      %v607 = vadd.f32 %v568, %v600
      %v608 = vadd.f32 %v569, %v600
      %v609 = vadd.f32 %v570, %v600
      %v610 = vadd.f32 %v571, %v600
      %v611 = vadd.f32 %v572, %v600
      %v612 = vadd.f32 %v573, %v600
      %v613 = vadd.f32 %v574, %v600
      %v614 = vadd.f32 %v575, %v600
      %v615 = vadd.f32 %v576, %v600
      %v616 = vadd.f32 %v577, %v600
      %v617 = vadd.f32 %v578, %v600
      %v618 = vadd.f32 %v579, %v600
      %v619 = vadd.f32 %v580, %v600
      %v620 = vadd.f32 %v581, %v600
      %v621 = vadd.f32 %v582, %v600
      %v622 = vadd.f32 %v583, %v600
      %v623 = vadd.f32 %v584, %v600
      %v624 = vadd.f32 %v585, %v600
      %v625 = vadd.f32 %v586, %v600
      %v626 = vadd.f32 %v587, %v600
      %v627 = vadd.f32 %v588, %v600
      %v628 = vadd.f32 %v589, %v600
      %v629 = vadd.f32 %v590, %v600
      %v630 = vadd.f32 %v591, %v600
      %v631 = vadd.f32 %v592, %v600
      %v632 = vadd.f32 %v593, %v600
      %v633 = vadd.f32 %v594, %v600
      %v634 = vld [vmem:[%s4] sm:$0x1]
      %vm635 = vcmp.gt.f32.partialorder %v634, 0.0
      %v636 = vmax.f32 %v602, 0.0
      %v637 = vmax.f32 %v603, 0.0
      %v638 = vmax.f32 %v604, 0.0
      %v639 = vmax.f32 %v605, 0.0
      %v640 = vmax.f32 %v606, 0.0
      %v641 = vmax.f32 %v607, 0.0
      %v642 = vmax.f32 %v608, 0.0
      %v643 = vmax.f32 %v609, 0.0
      %v644 = vmax.f32 %v610, 0.0
      %v645 = vmax.f32 %v611, 0.0
      %v646 = vmax.f32 %v612, 0.0
      %v647 = vmax.f32 %v613, 0.0
      %v648 = vmax.f32 %v614, 0.0
      %v649 = vmax.f32 %v615, 0.0
      %v650 = vmax.f32 %v616, 0.0
      %v651 = vmax.f32 %v617, 0.0
      %v652 = vmax.f32 %v618, 0.0
      %v653 = vmax.f32 %v619, 0.0
      %v654 = vmax.f32 %v620, 0.0
      %v655 = vmax.f32 %v621, 0.0
      %v656 = vmax.f32 %v622, 0.0
      %v657 = vmax.f32 %v623, 0.0
      %v658 = vmax.f32 %v624, 0.0
      %v659 = vmax.f32 %v625, 0.0
      %v660 = vmax.f32 %v626, 0.0
      %v661 = vmax.f32 %v627, 0.0
      %v662 = vmax.f32 %v628, 0.0
      %v663 = vmax.f32 %v629, 0.0
      %v664 = vmax.f32 %v630, 0.0
      %v665 = vmax.f32 %v631, 0.0
      %v666 = vmax.f32 %v632, 0.0
      %v667 = vmax.f32 %v633, 0.0
      %v668 = vsel %vm635, 1, 0
      %v669 = vlaneseq
      %v670 = vshrl.u32 %v669, 7
      %v671 = vsub.s32 0, %v670
      %v672 = vrot.slane %v668, %v671
      %vm673 = vcmp.eq.s32.totalorder %v672, 1
      %v674 = vsel %vm673, %v636, %v602
      %v675 = vsel %vm673, %v637, %v603
      %v676 = vsel %vm673, %v638, %v604
      %v677 = vsel %vm673, %v639, %v605
      %v678 = vsel %vm673, %v640, %v606
      %v679 = vsel %vm673, %v641, %v607
      %v680 = vsel %vm673, %v642, %v608
      %v681 = vsel %vm673, %v643, %v609
      %v682 = vsel %vm673, %v644, %v610
      %v683 = vsel %vm673, %v645, %v611
      %v684 = vsel %vm673, %v646, %v612
      %v685 = vsel %vm673, %v647, %v613
      %v686 = vsel %vm673, %v648, %v614
      %v687 = vsel %vm673, %v649, %v615
      %v688 = vsel %vm673, %v650, %v616
      %v689 = vsel %vm673, %v651, %v617
      %v690 = vsel %vm673, %v652, %v618
      %v691 = vsel %vm673, %v653, %v619
      %v692 = vsel %vm673, %v654, %v620
      %v693 = vsel %vm673, %v655, %v621
      %v694 = vsel %vm673, %v656, %v622
      %v695 = vsel %vm673, %v657, %v623
      %v696 = vsel %vm673, %v658, %v624
      %v697 = vsel %vm673, %v659, %v625
      %v698 = vsel %vm673, %v660, %v626
      %v699 = vsel %vm673, %v661, %v627
      %v700 = vsel %vm673, %v662, %v628
      %v701 = vsel %vm673, %v663, %v629
      %v702 = vsel %vm673, %v664, %v630
      %v703 = vsel %vm673, %v665, %v631
      %v704 = vsel %vm673, %v666, %v632
      %v705 = vsel %vm673, %v667, %v633
      %v706 = vpack.c.bf16 %v675, %v674
      %v707 = vpack.c.bf16 %v677, %v676
      %v708 = vpack.c.bf16 %v679, %v678
      %v709 = vpack.c.bf16 %v681, %v680
      %v710 = vpack.c.bf16 %v683, %v682
      %v711 = vpack.c.bf16 %v685, %v684
      %v712 = vpack.c.bf16 %v687, %v686
      %v713 = vpack.c.bf16 %v689, %v688
      %v714 = vpack.c.bf16 %v691, %v690
      %v715 = vpack.c.bf16 %v693, %v692
      %v716 = vpack.c.bf16 %v695, %v694
      %v717 = vpack.c.bf16 %v697, %v696
      %v718 = vpack.c.bf16 %v699, %v698
      %v719 = vpack.c.bf16 %v701, %v700
      %v720 = vpack.c.bf16 %v703, %v702
      %v721 = vpack.c.bf16 %v705, %v704
      %v738 = vunpack.c.l.b16 %v706
      %v739 = vunpack.c.h.b16 %v706
      %v740 = vunpack.c.l.b16 %v707
      %v741 = vunpack.c.h.b16 %v707
      %v742 = vunpack.c.l.b16 %v708
      %v743 = vunpack.c.h.b16 %v708
      %v744 = vunpack.c.l.b16 %v709
      %v745 = vunpack.c.h.b16 %v709
      %v746 = vunpack.c.l.b16 %v710
      %v747 = vunpack.c.h.b16 %v710
      %v748 = vunpack.c.l.b16 %v711
      %v749 = vunpack.c.h.b16 %v711
      %v750 = vunpack.c.l.b16 %v712
      %v751 = vunpack.c.h.b16 %v712
      %v752 = vunpack.c.l.b16 %v713
      %v753 = vunpack.c.h.b16 %v713
      %v754 = vunpack.c.l.b16 %v714
      %v755 = vunpack.c.h.b16 %v714
      %v756 = vunpack.c.l.b16 %v715
      %v757 = vunpack.c.h.b16 %v715
      %v758 = vunpack.c.l.b16 %v716
      %v759 = vunpack.c.h.b16 %v716
      %v760 = vunpack.c.l.b16 %v717
      %v761 = vunpack.c.h.b16 %v717
      %v762 = vunpack.c.l.b16 %v718
      %v763 = vunpack.c.h.b16 %v718
      %v764 = vunpack.c.l.b16 %v719
      %v765 = vunpack.c.h.b16 %v719
      %v766 = vunpack.c.l.b16 %v720
      %v767 = vunpack.c.h.b16 %v720
      %v768 = vunpack.c.l.b16 %v721
      %v769 = vunpack.c.h.b16 %v721
      %v770 = vpack.c.b16 %v738, %v738
      %v771 = vpack.c.b16 %v739, %v739
      %v772 = vpack.c.b16 %v740, %v740
      %v773 = vpack.c.b16 %v741, %v741
      %v774 = vpack.c.b16 %v742, %v742
      %v775 = vpack.c.b16 %v743, %v743
      %v776 = vpack.c.b16 %v744, %v744
      %v777 = vpack.c.b16 %v745, %v745
      %v778 = vpack.c.b16 %v746, %v746
      %v779 = vpack.c.b16 %v747, %v747
      %v780 = vpack.c.b16 %v748, %v748
      %v781 = vpack.c.b16 %v749, %v749
      %v782 = vpack.c.b16 %v750, %v750
      %v783 = vpack.c.b16 %v751, %v751
      %v784 = vpack.c.b16 %v752, %v752
      %v785 = vpack.c.b16 %v753, %v753
      %v786 = vpack.c.b16 %v754, %v754
      %v787 = vpack.c.b16 %v755, %v755
      %v788 = vpack.c.b16 %v756, %v756
      %v789 = vpack.c.b16 %v757, %v757
      %v790 = vpack.c.b16 %v758, %v758
      %v791 = vpack.c.b16 %v759, %v759
      %v792 = vpack.c.b16 %v760, %v760
      %v793 = vpack.c.b16 %v761, %v761
      %v794 = vpack.c.b16 %v762, %v762
      %v795 = vpack.c.b16 %v763, %v763
      %v796 = vpack.c.b16 %v764, %v764
      %v797 = vpack.c.b16 %v765, %v765
      %v798 = vpack.c.b16 %v766, %v766
      %v799 = vpack.c.b16 %v767, %v767
      %v800 = vpack.c.b16 %v768, %v768
      %v801 = vpack.c.b16 %v769, %v769
      %vm834 = vcmask 453632
      %835 = vst.msk [vmem:[%s226] sm:$0xf] %vm834, %v770
      %836 = vst.msk [vmem:[%s226 + $0x4] sm:$0xf] %vm834, %v771
      %837 = vst.msk [vmem:[%s226 + $0x8] sm:$0xf] %vm834, %v772
      %838 = vst.msk [vmem:[%s226 + $0xc] sm:$0xf] %vm834, %v773
      %839 = vst.msk [vmem:[%s226 + $0x10] sm:$0xf] %vm834, %v774
      %840 = vst.msk [vmem:[%s226 + $0x14] sm:$0xf] %vm834, %v775
      %841 = vst.msk [vmem:[%s226 + $0x18] sm:$0xf] %vm834, %v776
      %842 = vst.msk [vmem:[%s226 + $0x1c] sm:$0xf] %vm834, %v777
      %843 = vst.msk [vmem:[%s226 + $0x20] sm:$0xf] %vm834, %v778
      %844 = vst.msk [vmem:[%s226 + $0x24] sm:$0xf] %vm834, %v779
      %845 = vst.msk [vmem:[%s226 + $0x28] sm:$0xf] %vm834, %v780
      %846 = vst.msk [vmem:[%s226 + $0x2c] sm:$0xf] %vm834, %v781
      %847 = vst.msk [vmem:[%s226 + $0x30] sm:$0xf] %vm834, %v782
      %848 = vst.msk [vmem:[%s226 + $0x34] sm:$0xf] %vm834, %v783
      %849 = vst.msk [vmem:[%s226 + $0x38] sm:$0xf] %vm834, %v784
      %850 = vst.msk [vmem:[%s226 + $0x3c] sm:$0xf] %vm834, %v785
      %851 = vst.msk [vmem:[%s226 + $0x40] sm:$0xf] %vm834, %v786
      %852 = vst.msk [vmem:[%s226 + $0x44] sm:$0xf] %vm834, %v787
      %853 = vst.msk [vmem:[%s226 + $0x48] sm:$0xf] %vm834, %v788
      %854 = vst.msk [vmem:[%s226 + $0x4c] sm:$0xf] %vm834, %v789
      %855 = vst.msk [vmem:[%s226 + $0x50] sm:$0xf] %vm834, %v790
      %856 = vst.msk [vmem:[%s226 + $0x54] sm:$0xf] %vm834, %v791
      %857 = vst.msk [vmem:[%s226 + $0x58] sm:$0xf] %vm834, %v792
      %858 = vst.msk [vmem:[%s226 + $0x5c] sm:$0xf] %vm834, %v793
      %859 = vst.msk [vmem:[%s226 + $0x60] sm:$0xf] %vm834, %v794
      %860 = vst.msk [vmem:[%s226 + $0x64] sm:$0xf] %vm834, %v795
      %861 = vst.msk [vmem:[%s226 + $0x68] sm:$0xf] %vm834, %v796
      %862 = vst.msk [vmem:[%s226 + $0x6c] sm:$0xf] %vm834, %v797
      %863 = vst.msk [vmem:[%s226 + $0x70] sm:$0xf] %vm834, %v798
      %864 = vst.msk [vmem:[%s226 + $0x74] sm:$0xf] %vm834, %v799
      %865 = vst.msk [vmem:[%s226 + $0x78] sm:$0xf] %vm834, %v800
      %866 = vst.msk [vmem:[%s226 + $0x7c] sm:$0xf] %vm834, %v801
      %s867 = smul.u32 32, %s16
      %p868 = scmp.lt.s32.totalorder %s867, 63
      %s869 = scalar_select %p868, %s867, 63
      %s870 = smul.addr %s869, 4
      %s871 = scalar_lea.vmem %s5, %s870
      // Predicated region
      $region41: #{easpp_forward.9} parent=39 // pred_check
        %p872 = pneg %p144
      $region42: #{easpp_forward.9} parent=39 // pred_check_branch
        %874 = sbr.rel (%p872) target = $region44
      $region43: #{easpp_forward.9} parent=39 // pred_region
        %s875 = smul.u32 32, %s16
      $region44: #{easpp_forward.9} parent=39 // pred_fallthru
        _
    $region40: #{easpp_forward.9} parent=5 // pred_fallthru
      _
    %p876 = scmp.le.s32.totalorder 2, %s11
    // Predicated region
    $region45: #{easpp_forward.9} parent=5 // pred_check
      %p877 = pneg %p876
    $region46: #{easpp_forward.9} parent=5 // pred_check_branch
      %879 = sbr.rel (%p877) target = $region48
    $region47: #{easpp_forward.9} parent=5 // pred_region
      %s880 = ssub.s32 %s11, 2
      // Predicated region
      $region49: #{easpp_forward.9} parent=47 // pred_check
        %p881 = pneg %p150
      $region50: #{easpp_forward.9} parent=47 // pred_check_branch
        %883 = sbr.rel (%p881) target = $region52
      $region51: #{easpp_forward.9} parent=47 // pred_region
        %s884 = smul.u32 32, %s17
        %p885 = scmp.lt.s32.totalorder %s884, 63
        %s886 = scalar_select %p885, %s884, 63
        %s887 = smul.addr %s886, 4
        %s888 = scalar_lea.vmem %s5, %s887
      $region52: #{easpp_forward.9} parent=47 // pred_fallthru
        _
    $region48: #{easpp_forward.9} parent=5 // pred_fallthru
      _
  $region6: #{easpp_forward.9} parent=0 // loop_footer
    %s15 = sadd.s32 1, %s11
  $region7: #{easpp_forward.9} parent=0 // loop_footer_branch
    %10 = sbr.rel target = $region3
  $region8: #{easpp_forward.9} parent=0 // loop_exit
    _

// kernel: easpp_forward.14
$region0: #{easpp_forward.14}
  #allocation0 [shape = 'u32[]', space=smem, size = 0x4, offset = 0x4, fixed_abs, tag = 'smem constant byte address 0x4 - core index']
  #allocation1 [shape = 'u32[144,128]{1,0:T(1,128)}', space=vmem, size = 0x12000, scoped, tag = 'internal scratch']
  %s0 = inlined_call_operand.vmem [shape: bf16[2,40,40,8], index: 0, kind: input, shape index: {}]
  %s1 = inlined_call_operand.vmem [shape: bf16[9,8,8], index: 1, kind: input, shape index: {}]
  %s2 = inlined_call_operand.vmem [shape: f32[1,8], index: 2, kind: input, shape index: {}]
  %s3 = inlined_call_operand.vmem [shape: f32[1,8], index: 3, kind: input, shape index: {}]
  %s4 = inlined_call_operand.vmem [shape: bf16[2,16,16,8], index: 4, kind: output, shape index: {}]
  %s5 = sld [smem:[#allocation0]]
  $region49: #{easpp_forward.14} parent=0
    _
  %s7 = ssub.s32 1, %s5
  %s8 = scalar_select 0, %s7, %s5
  loop: start=0, step=1, limit=6
  $region2: #{easpp_forward.14} parent=0 // loop_pre_header
    _
  $region3: #{easpp_forward.14} parent=0 // loop_header
    %s10 = sphi 0, %s14
    %p11 = scmp.ge.s32.totalorder %s10, 6
    %s17 = sphi 0, %s29
    %s18 = sphi 0, %s25
    %s19 = sphi 0, %s17
    %s20 = sphi 0, %s18
    %s21 = sphi 0, %s19
    %s22 = sphi 0, %s20
    %s32 = sphi 0, %s34
    %s35 = sphi 0, %s32
    %s36 = sphi 0, %s35
    %s52 = sphi 0, %s36
    %s56 = sphi 0, %s56
    %s58 = sphi 0, %s56
    %s59 = sphi 0, %s58
    %s73 = sphi 0, %s59
    %s77 = sphi 0, %s77
    %s79 = sphi 0, %s77
    %s80 = sphi 0, %s79
    %s94 = sphi 0, %s80
    %s98 = sphi 0, %s98
    %s100 = sphi 0, %s98
    %s101 = sphi 0, %s100
    %s115 = sphi 0, %s101
    %s123 = sphi 0, %s125
    %s126 = sphi 0, %s123
    %s127 = sphi 0, %s126
    %s143 = sphi 0, %s127
  $region4: #{easpp_forward.14} parent=0 // loop_header_branch
    %13 = sbr.rel (%p11) target = $region8
  $region5: #{easpp_forward.14} parent=0 // loop_body
    %s15 = ssub.s32 %s10, 1
    %s16 = ssub.s32 %s10, 2
    %s23 = sadd.s32 1, %s18
    %p24 = scmp.ge.s32.totalorder %s23, 2
    %s25 = scalar_select %p24, 0, %s23
    %s26 = sadd.s32 1, %s17
    %s27 = scalar_select %p24, %s26, %s17
    %p28 = scmp.ge.s32.totalorder %s27, 2
    %s29 = scalar_select %p28, 0, %s27
    %s30 = ssub.s32 %s17, %s29
    %p31 = scmp.eq.s32.totalorder %s30, 0
    %s33 = sadd.s32 %s32, 1
    %s34 = scalar_select %p31, %s32, %s33
    %p37 = pneg %p31
    %p38 = scmp.eq.s32.totalorder %s10, 3
    %p39 = por %p37, %p38
    %p40 = scmp.ne.s32.totalorder %s32, %s35
    %p41 = scmp.eq.s32.totalorder %s10, 0
    %p42 = por %p40, %p41
    %p43 = scmp.ne.s32.totalorder %s32, %s35
    %p44 = scmp.eq.s32.totalorder %s15, 3
    %p45 = por %p43, %p44
    %p46 = scmp.ne.s32.totalorder %s35, %s36
    %p47 = scmp.eq.s32.totalorder %s15, 0
    %p48 = por %p46, %p47
    %p49 = scmp.ne.s32.totalorder %s35, %s36
    %p50 = scmp.eq.s32.totalorder %s16, 3
    %p51 = por %p49, %p50
    %p53 = scmp.ne.s32.totalorder %s36, %s52
    %p54 = scmp.eq.s32.totalorder %s16, 0
    %p55 = por %p53, %p54
    %s57 = sadd.s32 %s56, 1
    %p60 = scmp.eq.s32.totalorder %s10, 3
    %p61 = scmp.ne.s32.totalorder %s56, %s58
    %p62 = scmp.eq.s32.totalorder %s10, 0
    %p63 = por %p61, %p62
    %p64 = scmp.ne.s32.totalorder %s56, %s58
    %p65 = scmp.eq.s32.totalorder %s15, 3
    %p66 = por %p64, %p65
    %p67 = scmp.ne.s32.totalorder %s58, %s59
    %p68 = scmp.eq.s32.totalorder %s15, 0
    %p69 = por %p67, %p68
    %p70 = scmp.ne.s32.totalorder %s58, %s59
    %p71 = scmp.eq.s32.totalorder %s16, 3
    %p72 = por %p70, %p71
    %p74 = scmp.ne.s32.totalorder %s59, %s73
    %p75 = scmp.eq.s32.totalorder %s16, 0
    %p76 = por %p74, %p75
    %s78 = sadd.s32 %s77, 1
    %p81 = scmp.eq.s32.totalorder %s10, 3
    %p82 = scmp.ne.s32.totalorder %s77, %s79
    %p83 = scmp.eq.s32.totalorder %s10, 0
    %p84 = por %p82, %p83
    %p85 = scmp.ne.s32.totalorder %s77, %s79
    %p86 = scmp.eq.s32.totalorder %s15, 3
    %p87 = por %p85, %p86
    %p88 = scmp.ne.s32.totalorder %s79, %s80
    %p89 = scmp.eq.s32.totalorder %s15, 0
    %p90 = por %p88, %p89
    %p91 = scmp.ne.s32.totalorder %s79, %s80
    %p92 = scmp.eq.s32.totalorder %s16, 3
    %p93 = por %p91, %p92
    %p95 = scmp.ne.s32.totalorder %s80, %s94
    %p96 = scmp.eq.s32.totalorder %s16, 0
    %p97 = por %p95, %p96
    %s99 = sadd.s32 %s98, 1
    %p102 = scmp.eq.s32.totalorder %s10, 3
    %p103 = scmp.ne.s32.totalorder %s98, %s100
    %p104 = scmp.eq.s32.totalorder %s10, 0
    %p105 = por %p103, %p104
    %p106 = scmp.ne.s32.totalorder %s98, %s100
    %p107 = scmp.eq.s32.totalorder %s15, 3
    %p108 = por %p106, %p107
    %p109 = scmp.ne.s32.totalorder %s100, %s101
    %p110 = scmp.eq.s32.totalorder %s15, 0
    %p111 = por %p109, %p110
    %p112 = scmp.ne.s32.totalorder %s100, %s101
    %p113 = scmp.eq.s32.totalorder %s16, 3
    %p114 = por %p112, %p113
    %p116 = scmp.ne.s32.totalorder %s101, %s115
    %p117 = scmp.eq.s32.totalorder %s16, 0
    %p118 = por %p116, %p117
    %s119 = ssub.s32 %s17, %s29
    %s120 = ssub.s32 %s18, %s25
    %s121 = sor.u32 %s119, %s120
    %p122 = scmp.eq.s32.totalorder %s121, 0
    %s124 = sadd.s32 %s123, 1
    %s125 = scalar_select %p122, %s123, %s124
    %p128 = pneg %p122
    %p129 = scmp.eq.s32.totalorder %s10, 3
    %p130 = por %p128, %p129
    %p131 = scmp.ne.s32.totalorder %s123, %s126
    %p132 = scmp.eq.s32.totalorder %s10, 0
    %p133 = por %p131, %p132
    %p134 = scmp.ne.s32.totalorder %s123, %s126
    %p135 = scmp.eq.s32.totalorder %s15, 3
    %p136 = por %p134, %p135
    %p137 = scmp.ne.s32.totalorder %s126, %s127
    %p138 = scmp.eq.s32.totalorder %s15, 0
    %p139 = por %p137, %p138
    %p140 = scmp.ne.s32.totalorder %s126, %s127
    %p141 = scmp.eq.s32.totalorder %s16, 3
    %p142 = por %p140, %p141
    %p144 = scmp.ne.s32.totalorder %s127, %s143
    %p145 = scmp.eq.s32.totalorder %s16, 0
    %p146 = por %p144, %p145
    %p147 = scmp.le.s32.totalorder 1, %s10
    %p148 = scmp.lt.s32.totalorder %s10, 5
    %p149 = pnand %p147, %p148
    %p150 = pneg %p149
    // Predicated region
    $region9: #{easpp_forward.14} parent=5 // pred_check
      _
    $region10: #{easpp_forward.14} parent=5 // pred_check_branch
      %152 = sbr.rel (%p149) target = $region12
    $region11: #{easpp_forward.14} parent=5 // pred_region
      %s153 = ssub.s32 %s10, 1
      // Predicated region
      $region13: #{easpp_forward.14} parent=11 // pred_check
        %p154 = pneg %p69
      $region14: #{easpp_forward.14} parent=11 // pred_check_branch
        %156 = sbr.rel (%p154) target = $region16
      $region15: #{easpp_forward.14} parent=11 // pred_region
        _
      $region16: #{easpp_forward.14} parent=11 // pred_fallthru
        _
      // Predicated region
      $region17: #{easpp_forward.14} parent=11 // pred_check
        %p157 = pneg %p90
      $region18: #{easpp_forward.14} parent=11 // pred_check_branch
        %159 = sbr.rel (%p157) target = $region20
      $region19: #{easpp_forward.14} parent=11 // pred_region
        _
      $region20: #{easpp_forward.14} parent=11 // pred_fallthru
        _
      // Predicated region
      $region21: #{easpp_forward.14} parent=11 // pred_check
        %p160 = pneg %p111
      $region22: #{easpp_forward.14} parent=11 // pred_check_branch
        %162 = sbr.rel (%p160) target = $region24
      $region23: #{easpp_forward.14} parent=11 // pred_region
        _
      $region24: #{easpp_forward.14} parent=11 // pred_fallthru
        _
    $region12: #{easpp_forward.14} parent=5 // pred_fallthru
      _
    %p163 = scmp.lt.s32.totalorder %s10, 4
    // Predicated region
    $region25: #{easpp_forward.14} parent=5 // pred_check
      %p164 = pneg %p163
    $region26: #{easpp_forward.14} parent=5 // pred_check_branch
      %166 = sbr.rel (%p164) target = $region28
    $region27: #{easpp_forward.14} parent=5 // pred_region
      // Predicated region
      $region29: #{easpp_forward.14} parent=27 // pred_check
        %p167 = pneg %p42
      $region30: #{easpp_forward.14} parent=27 // pred_check_branch
        %169 = sbr.rel (%p167) target = $region32
      $region31: #{easpp_forward.14} parent=27 // pred_region
        %p170 = scmp.lt.s32.totalorder %s17, 1
        %s171 = scalar_select %p170, %s17, 1
        %s172 = smul.addr %s171, 200
        %s173 = smul.addr %s172, 4
        %s174 = scalar_lea.vmem %s0, %s173
      $region32: #{easpp_forward.14} parent=27 // pred_fallthru
        _
    $region28: #{easpp_forward.14} parent=5 // pred_fallthru
      _
    %p175 = scmp.le.s32.totalorder 1, %s10
    %p176 = scmp.lt.s32.totalorder %s10, 5
    %p177 = pnand %p175, %p176
    %p178 = pneg %p177
    // Predicated region
    $region33: #{easpp_forward.14} parent=5 // pred_check
      _
    $region34: #{easpp_forward.14} parent=5 // pred_check_branch
      %180 = sbr.rel (%p177) target = $region36
    $region35: #{easpp_forward.14} parent=5 // pred_region
      %s181 = ssub.s32 %s10, 1
      %p182 = scmp.lt.s32.totalorder %s19, 1
      %s183 = scalar_select %p182, %s19, 1
      %s184 = smul.addr %s183, 200
      %s185 = smul.addr %s184, 4
      %s186 = scalar_lea.vmem %s0, %s185
      %p187 = pneg %p48
      %p188 = pneg %p45
      %p189 = pneg %p69
      %p190 = pneg %p66
      %p191 = pneg %p90
      %p192 = pneg %p87
      %p193 = pneg %p111
      %p194 = pneg %p108
      %p195 = pneg %p139
      %p196 = pneg %p136
      %s197 = smul.u32 8, %s20
      %p198 = scmp.lt.s32.totalorder %s19, 1
      %s199 = scalar_select %p198, %s19, 1
      %p200 = scmp.lt.s32.totalorder %s197, 15
      %s201 = scalar_select %p200, %s197, 15
      %s202 = smul.addr %s201, 2
      %s203 = smul.addr %s199, 32
      %s204 = sadd.s32 %s202, %s203
      %s205 = smul.addr %s204, 4
      %s206 = scalar_lea.vmem %s4, %s205
      %p207 = scmp.lt.s32.totalorder %s19, 1
      %s208 = scalar_select %p207, %s19, 1
      %s209 = smul.addr %s208, 200
      %s210 = smul.addr %s209, 4
      %s211 = scalar_lea.vmem %s0, %s210
      %s212 = smul.u32 8, %s20
      %p213 = scmp.lt.s32.totalorder %s19, 1
      %s214 = scalar_select %p213, %s19, 1
      %p215 = scmp.lt.s32.totalorder %s212, 15
      %s216 = scalar_select %p215, %s212, 15
      %s217 = smul.addr %s216, 2
      %s218 = smul.addr %s214, 32
      %s219 = sadd.s32 %s217, %s218
      %s220 = smul.addr %s219, 4
      %s221 = scalar_lea.vmem %s4, %s220
      %s222 = smul.u32 8, %s20
      %s224 = smul.u32 %s20, 8
      %s225 = smul.u32 %s224, 5
      %s226 = smul.addr %s225, 4
      %s227 = scalar_lea.vmem %s211, %s226
      %v228 = vld [vmem:[%s227] sm:$0xf]
      %v229 = vld [vmem:[%s227 + $0x4] sm:$0xf]
      %v230 = vld [vmem:[%s227 + $0x14] sm:$0xf]
      %v231 = vld [vmem:[%s227 + $0x18] sm:$0xf]
      %v232 = vld [vmem:[%s227 + $0x28] sm:$0xf]
      %v233 = vld [vmem:[%s227 + $0x2c] sm:$0xf]
      %v234 = vld [vmem:[%s227 + $0x3c] sm:$0xf]
      %v235 = vld [vmem:[%s227 + $0x40] sm:$0xf]
      %v236 = vld [vmem:[%s227 + $0x50] sm:$0xf]
      %v237 = vld [vmem:[%s227 + $0x54] sm:$0xf]
      %v238 = vld [vmem:[%s227 + $0x64] sm:$0xf]
      %v239 = vld [vmem:[%s227 + $0x68] sm:$0xf]
      %v240 = vld [vmem:[%s227 + $0x78] sm:$0xf]
      %v241 = vld [vmem:[%s227 + $0x7c] sm:$0xf]
      %v242 = vld [vmem:[%s227 + $0x8c] sm:$0xf]
      %v243 = vld [vmem:[%s227 + $0x90] sm:$0xf]
      %v244 = vld [vmem:[%s1] sm:$0xf]
      %v245 = vld [vmem:[%s227 + $0x4] sm:$0xc]
      %v246 = vld [vmem:[%s227 + $0x8] sm:$0xf]
      %v247 = vld [vmem:[%s227 + $0xc] sm:$0x3]
      %v248 = vld [vmem:[%s227 + $0x18] sm:$0xc]
      %v249 = vld [vmem:[%s227 + $0x1c] sm:$0xf]
      %v250 = vld [vmem:[%s227 + $0x20] sm:$0x3]
      %v251 = vld [vmem:[%s227 + $0x2c] sm:$0xc]
      %v252 = vld [vmem:[%s227 + $0x30] sm:$0xf]
      %v253 = vld [vmem:[%s227 + $0x34] sm:$0x3]
      %v254 = vld [vmem:[%s227 + $0x40] sm:$0xc]
      %v255 = vld [vmem:[%s227 + $0x44] sm:$0xf]
      %v256 = vld [vmem:[%s227 + $0x48] sm:$0x3]
      %v257 = vld [vmem:[%s227 + $0x54] sm:$0xc]
      %v258 = vld [vmem:[%s227 + $0x58] sm:$0xf]
      %v259 = vld [vmem:[%s227 + $0x5c] sm:$0x3]
      %v260 = vld [vmem:[%s227 + $0x68] sm:$0xc]
      %v261 = vld [vmem:[%s227 + $0x6c] sm:$0xf]
      %v262 = vld [vmem:[%s227 + $0x70] sm:$0x3]
      %v263 = vld [vmem:[%s227 + $0x7c] sm:$0xc]
      %v264 = vld [vmem:[%s227 + $0x80] sm:$0xf]
      %v265 = vld [vmem:[%s227 + $0x84] sm:$0x3]
      %v266 = vld [vmem:[%s227 + $0x90] sm:$0xc]
      %v267 = vld [vmem:[%s227 + $0x94] sm:$0xf]
      %v268 = vld [vmem:[%s227 + $0x98] sm:$0x3]
      %vm293 = vcmask 1041408
      %vm294 = vcmask 1045508
      %vm295 = vmor %vm293, %vm294
      %v296 = vrot.slane %v245, 6
      %v297 = vrot.slane %v296, 4
      %v298 = vrot.slane %v246, 6
      %v299 = vsel %vm295, %v297, %v298
      %v300 = vrot.slane %v298, 4
      %v301 = vrot.slane %v247, 6
      %v302 = vsel %vm295, %v300, %v301
      %v303 = vrot.slane %v248, 6
      %v304 = vrot.slane %v303, 4
      %v305 = vrot.slane %v249, 6
      %v306 = vsel %vm295, %v304, %v305
      %v307 = vrot.slane %v305, 4
      %v308 = vrot.slane %v250, 6
      %v309 = vsel %vm295, %v307, %v308
      %v310 = vrot.slane %v251, 6
      %v311 = vrot.slane %v310, 4
      %v312 = vrot.slane %v252, 6
      %v313 = vsel %vm295, %v311, %v312
      %v314 = vrot.slane %v312, 4
      %v315 = vrot.slane %v253, 6
      %v316 = vsel %vm295, %v314, %v315
      %v317 = vrot.slane %v254, 6
      %v318 = vrot.slane %v317, 4
      %v319 = vrot.slane %v255, 6
      %v320 = vsel %vm295, %v318, %v319
      %v321 = vrot.slane %v319, 4
      %v322 = vrot.slane %v256, 6
      %v323 = vsel %vm295, %v321, %v322
      %v324 = vrot.slane %v257, 6
      %v325 = vrot.slane %v324, 4
      %v326 = vrot.slane %v258, 6
      %v327 = vsel %vm295, %v325, %v326
      %v328 = vrot.slane %v326, 4
      %v329 = vrot.slane %v259, 6
      %v330 = vsel %vm295, %v328, %v329
      %v331 = vrot.slane %v260, 6
      %v332 = vrot.slane %v331, 4
      %v333 = vrot.slane %v261, 6
      %v334 = vsel %vm295, %v332, %v333
      %v335 = vrot.slane %v333, 4
      %v336 = vrot.slane %v262, 6
      %v337 = vsel %vm295, %v335, %v336
      %v338 = vrot.slane %v263, 6
      %v339 = vrot.slane %v338, 4
      %v340 = vrot.slane %v264, 6
      %v341 = vsel %vm295, %v339, %v340
      %v342 = vrot.slane %v340, 4
      %v343 = vrot.slane %v265, 6
      %v344 = vsel %vm295, %v342, %v343
      %v345 = vrot.slane %v266, 6
      %v346 = vrot.slane %v345, 4
      %v347 = vrot.slane %v267, 6
      %v348 = vsel %vm295, %v346, %v347
      %v349 = vrot.slane %v347, 4
      %v350 = vrot.slane %v268, 6
      %v351 = vsel %vm295, %v349, %v350
      %s352 = scalar_lea.vmem %s1, 4
      %v353 = vld [vmem:[%s352] sm:$0xf]
      %v354 = vunpack.c.l.b16 %v299
      %v355 = vunpack.c.l.b16 %v302
      %v356 = vunpack.c.l.b16 %v306
      %v357 = vunpack.c.l.b16 %v309
      %v358 = vunpack.c.l.b16 %v313
      %v359 = vunpack.c.l.b16 %v316
      %v360 = vunpack.c.l.b16 %v320
      %v361 = vunpack.c.l.b16 %v323
      %v362 = vunpack.c.l.b16 %v327
      %v363 = vunpack.c.l.b16 %v330
      %v364 = vunpack.c.l.b16 %v334
      %v365 = vunpack.c.l.b16 %v337
      %v366 = vunpack.c.l.b16 %v341
      %v367 = vunpack.c.l.b16 %v344
      %v368 = vunpack.c.l.b16 %v348
      %v369 = vunpack.c.l.b16 %v351
      %v370 = vpack.c.b16 %v355, %v354
      %v371 = vpack.c.b16 %v357, %v356
      %v372 = vpack.c.b16 %v359, %v358
      %v373 = vpack.c.b16 %v361, %v360
      %v374 = vpack.c.b16 %v363, %v362
      %v375 = vpack.c.b16 %v365, %v364
      %v376 = vpack.c.b16 %v367, %v366
      %v377 = vpack.c.b16 %v369, %v368
      %vm378 = vcmask 64512
      %v380 = vsel %vm378, %v370, 0
      %v383 = vsel %vm378, %v371, 0
      %v386 = vsel %vm378, %v372, 0
      %v389 = vsel %vm378, %v373, 0
      %v392 = vsel %vm378, %v374, 0
      %v395 = vsel %vm378, %v375, 0
      %v398 = vsel %vm378, %v376, 0
      %v401 = vsel %vm378, %v377, 0
      %vm403 = vcmask 1043456
      %v405 = vsel %vm403, %v353, 0
      %407 = vmatprep.subr.bf16.mxu0 0
      %408 = vmatpush1.bf16.msra.mxu0 %v405
      %409 = vmatprep.subr.bf16.mxu0 0
      %410 = vmatpush1.bf16.msra.mxu0 0
      %411 = vmatprep.subr.bf16.mxu0 0
      %412 = vmatpush1.bf16.msra.mxu0 0
      %413 = vmatprep.subr.bf16.mxu0 0
      %414 = vmatpush1.bf16.msra.mxu0 0
      %415 = vmatprep.subr.bf16.mxu0 0
      %416 = vmatpush1.bf16.msra.mxu0 0
      %417 = vmatprep.subr.bf16.mxu0 0
      %418 = vmatpush1.bf16.msra.mxu0 0
      %419 = vmatprep.subr.bf16.mxu0 0
      %420 = vmatpush1.bf16.msra.mxu0 0
      %421 = vmatprep.subr.bf16.mxu0 0
      %422 = vmatpush1.bf16.msra.mxu0 0
      %423 = vmatprep.subr.bf16.mxu0 0
      %424 = vmatpush1.bf16.msra.mxu0 0
      %425 = vmatprep.subr.bf16.mxu0 0
      %426 = vmatpush1.bf16.msra.mxu0 0
      %427 = vmatprep.subr.bf16.mxu0 0
      %428 = vmatpush1.bf16.msra.mxu0 0
      %429 = vmatprep.subr.bf16.mxu0 0
      %430 = vmatpush1.bf16.msra.mxu0 0
      %431 = vmatprep.subr.bf16.mxu0 0
      %432 = vmatpush1.bf16.msra.mxu0 0
      %433 = vmatprep.subr.bf16.mxu0 0
      %434 = vmatpush1.bf16.msra.mxu0 0
      %435 = vmatprep.subr.bf16.mxu0 0
      %436 = vmatpush1.bf16.msra.mxu0 0
      %437 = vmatprep.subr.bf16.mxu0 0
      %438 = vmatpush1.bf16.msra.mxu0 0
      %439 = vmatprep.mubr.bf16.mxu0 0
      %440 = vmatmul.mubr.bf16.gmra.mrb[0].mxu0 %v380
      %v441 = vpop.f32.mrb[0].mxu0
      %v442 = vadd.f32 0.0, %v441
      %v443 = vpop.f32.mrb[0].mxu0
      %v444 = vpop.f32.mrb[0].mxu0
      %v445 = vadd.f32 0.0, %v444
      %v446 = vpop.f32.mrb[0].mxu0
      %447 = vmatprep.mubr.bf16.mxu0 0
      %448 = vmatmul.mubr.bf16.gmra.mrb[0].mxu0 %v383
      %v449 = vpop.f32.mrb[0].mxu0
      %v450 = vadd.f32 0.0, %v449
      %v451 = vpop.f32.mrb[0].mxu0
      %v452 = vpop.f32.mrb[0].mxu0
      %v453 = vadd.f32 0.0, %v452
      %v454 = vpop.f32.mrb[0].mxu0
      %455 = vmatprep.mubr.bf16.mxu0 0
      %456 = vmatmul.mubr.bf16.gmra.mrb[0].mxu0 %v386
      %v457 = vpop.f32.mrb[0].mxu0
      %v458 = vadd.f32 0.0, %v457
      %v459 = vpop.f32.mrb[0].mxu0
      %v460 = vpop.f32.mrb[0].mxu0
      %v461 = vadd.f32 0.0, %v460
      %v462 = vpop.f32.mrb[0].mxu0
      %463 = vmatprep.mubr.bf16.mxu0 0
      %464 = vmatmul.mubr.bf16.gmra.mrb[0].mxu0 %v389
      %v465 = vpop.f32.mrb[0].mxu0
      %v466 = vadd.f32 0.0, %v465
      %v467 = vpop.f32.mrb[0].mxu0
      %v468 = vpop.f32.mrb[0].mxu0
      %v469 = vadd.f32 0.0, %v468
      %v470 = vpop.f32.mrb[0].mxu0
      %471 = vmatprep.mubr.bf16.mxu0 0
      %472 = vmatmul.mubr.bf16.gmra.mrb[0].mxu0 %v392
      %v473 = vpop.f32.mrb[0].mxu0
      %v474 = vadd.f32 0.0, %v473
      %v475 = vpop.f32.mrb[0].mxu0
      %v476 = vpop.f32.mrb[0].mxu0
      %v477 = vadd.f32 0.0, %v476
      %v478 = vpop.f32.mrb[0].mxu0
      %479 = vmatprep.mubr.bf16.mxu0 0
      %480 = vmatmul.mubr.bf16.gmra.mrb[0].mxu0 %v395
      %v481 = vpop.f32.mrb[0].mxu0
      %v482 = vadd.f32 0.0, %v481
      %v483 = vpop.f32.mrb[0].mxu0
      %v484 = vpop.f32.mrb[0].mxu0
      %v485 = vadd.f32 0.0, %v484
      %v486 = vpop.f32.mrb[0].mxu0
      %487 = vmatprep.mubr.bf16.mxu0 0
      %488 = vmatmul.mubr.bf16.gmra.mrb[0].mxu0 %v398
      %v489 = vpop.f32.mrb[0].mxu0
      %v490 = vadd.f32 0.0, %v489
      %v491 = vpop.f32.mrb[0].mxu0
      %v492 = vpop.f32.mrb[0].mxu0
      %v493 = vadd.f32 0.0, %v492
      %v494 = vpop.f32.mrb[0].mxu0
      %495 = vmatprep.mubr.bf16.mxu0 0
      %496 = vmatmul.mubr.bf16.gmra.mrb[0].mxu0 %v401
      %v497 = vpop.f32.mrb[0].mxu0
      %v498 = vadd.f32 0.0, %v497
      %v499 = vpop.f32.mrb[0].mxu0
      %v500 = vpop.f32.mrb[0].mxu0
      %v501 = vadd.f32 0.0, %v500
      %v502 = vpop.f32.mrb[0].mxu0
      %503 = vdwg.mxu0
      %v520 = vunpack.c.l.b16 %v228
      %v521 = vunpack.c.l.b16 %v229
      %v522 = vunpack.c.l.b16 %v230
      %v523 = vunpack.c.l.b16 %v231
      %v524 = vunpack.c.l.b16 %v232
      %v525 = vunpack.c.l.b16 %v233
      %v526 = vunpack.c.l.b16 %v234
      %v527 = vunpack.c.l.b16 %v235
      %v528 = vunpack.c.l.b16 %v236
      %v529 = vunpack.c.l.b16 %v237
      %v530 = vunpack.c.l.b16 %v238
      %v531 = vunpack.c.l.b16 %v239
      %v532 = vunpack.c.l.b16 %v240
      %v533 = vunpack.c.l.b16 %v241
      %v534 = vunpack.c.l.b16 %v242
      %v535 = vunpack.c.l.b16 %v243
      %v536 = vpack.c.b16 %v521, %v520
      %v537 = vpack.c.b16 %v523, %v522
      %v538 = vpack.c.b16 %v525, %v524
      %v539 = vpack.c.b16 %v527, %v526
      %v540 = vpack.c.b16 %v529, %v528
      %v541 = vpack.c.b16 %v531, %v530
      %v542 = vpack.c.b16 %v533, %v532
      %v543 = vpack.c.b16 %v535, %v534
      %v545 = vsel %vm378, %v536, 0
      %v548 = vsel %vm378, %v537, 0
      %v551 = vsel %vm378, %v538, 0
      %v554 = vsel %vm378, %v539, 0
      %v557 = vsel %vm378, %v540, 0
      %v560 = vsel %vm378, %v541, 0
      %v563 = vsel %vm378, %v542, 0
      %v566 = vsel %vm378, %v543, 0
      %v569 = vsel %vm403, %v244, 0
      %571 = vmatprep.subr.bf16.mxu0 0
      %572 = vmatpush1.bf16.msra.mxu0 %v569
      %573 = vmatprep.subr.bf16.mxu0 0
      %574 = vmatpush1.bf16.msra.mxu0 0
      %575 = vmatprep.subr.bf16.mxu0 0
      %576 = vmatpush1.bf16.msra.mxu0 0
      %577 = vmatprep.subr.bf16.mxu0 0
      %578 = vmatpush1.bf16.msra.mxu0 0
      %579 = vmatprep.subr.bf16.mxu0 0
      %580 = vmatpush1.bf16.msra.mxu0 0
      %581 = vmatprep.subr.bf16.mxu0 0
      %582 = vmatpush1.bf16.msra.mxu0 0
      %583 = vmatprep.subr.bf16.mxu0 0
      %584 = vmatpush1.bf16.msra.mxu0 0
      %585 = vmatprep.subr.bf16.mxu0 0
      %586 = vmatpush1.bf16.msra.mxu0 0
      %587 = vmatprep.subr.bf16.mxu0 0
      %588 = vmatpush1.bf16.msra.mxu0 0
      %589 = vmatprep.subr.bf16.mxu0 0
      %590 = vmatpush1.bf16.msra.mxu0 0
      %591 = vmatprep.subr.bf16.mxu0 0
      %592 = vmatpush1.bf16.msra.mxu0 0
      %593 = vmatprep.subr.bf16.mxu0 0
      %594 = vmatpush1.bf16.msra.mxu0 0
      %595 = vmatprep.subr.bf16.mxu0 0
      %596 = vmatpush1.bf16.msra.mxu0 0
      %597 = vmatprep.subr.bf16.mxu0 0
      %598 = vmatpush1.bf16.msra.mxu0 0
      %599 = vmatprep.subr.bf16.mxu0 0
      %600 = vmatpush1.bf16.msra.mxu0 0
      %601 = vmatprep.subr.bf16.mxu0 0
      %602 = vmatpush1.bf16.msra.mxu0 0
      %603 = vmatprep.mubr.bf16.mxu0 0
      %604 = vmatmul.mubr.bf16.gmra.mrb[0].mxu0 %v545
      %v605 = vpop.f32.mrb[0].mxu0
      %v606 = vadd.f32 %v442, %v605
      %v607 = vpop.f32.mrb[0].mxu0
      %v608 = vpop.f32.mrb[0].mxu0
      %v609 = vadd.f32 %v445, %v608
      %v610 = vpop.f32.mrb[0].mxu0
      %611 = vmatprep.mubr.bf16.mxu0 0
      %612 = vmatmul.mubr.bf16.gmra.mrb[0].mxu0 %v548
      %v613 = vpop.f32.mrb[0].mxu0
      %v614 = vadd.f32 %v450, %v613
      %v615 = vpop.f32.mrb[0].mxu0
      %v616 = vpop.f32.mrb[0].mxu0
      %v617 = vadd.f32 %v453, %v616
      %v618 = vpop.f32.mrb[0].mxu0
      %619 = vmatprep.mubr.bf16.mxu0 0
      %620 = vmatmul.mubr.bf16.gmra.mrb[0].mxu0 %v551
      %v621 = vpop.f32.mrb[0].mxu0
      %v622 = vadd.f32 %v458, %v621
      %v623 = vpop.f32.mrb[0].mxu0
      %v624 = vpop.f32.mrb[0].mxu0
      %v625 = vadd.f32 %v461, %v624
      %v626 = vpop.f32.mrb[0].mxu0
      %627 = vmatprep.mubr.bf16.mxu0 0
      %628 = vmatmul.mubr.bf16.gmra.mrb[0].mxu0 %v554
      %v629 = vpop.f32.mrb[0].mxu0
      %v630 = vadd.f32 %v466, %v629
      %v631 = vpop.f32.mrb[0].mxu0
      %v632 = vpop.f32.mrb[0].mxu0
      %v633 = vadd.f32 %v469, %v632
      %v634 = vpop.f32.mrb[0].mxu0
      %635 = vmatprep.mubr.bf16.mxu0 0
      %636 = vmatmul.mubr.bf16.gmra.mrb[0].mxu0 %v557
      %v637 = vpop.f32.mrb[0].mxu0
      %v638 = vadd.f32 %v474, %v637
      %v639 = vpop.f32.mrb[0].mxu0
      %v640 = vpop.f32.mrb[0].mxu0
      %v641 = vadd.f32 %v477, %v640
      %v642 = vpop.f32.mrb[0].mxu0
      %643 = vmatprep.mubr.bf16.mxu0 0
      %644 = vmatmul.mubr.bf16.gmra.mrb[0].mxu0 %v560
      %v645 = vpop.f32.mrb[0].mxu0
      %v646 = vadd.f32 %v482, %v645
      %v647 = vpop.f32.mrb[0].mxu0
      %v648 = vpop.f32.mrb[0].mxu0
      %v649 = vadd.f32 %v485, %v648
      %v650 = vpop.f32.mrb[0].mxu0
      %651 = vmatprep.mubr.bf16.mxu0 0
      %652 = vmatmul.mubr.bf16.gmra.mrb[0].mxu0 %v563
      %v653 = vpop.f32.mrb[0].mxu0
      %v654 = vadd.f32 %v490, %v653
      %v655 = vpop.f32.mrb[0].mxu0
      %v656 = vpop.f32.mrb[0].mxu0
      %v657 = vadd.f32 %v493, %v656
      %v658 = vpop.f32.mrb[0].mxu0
      %659 = vmatprep.mubr.bf16.mxu0 0
      %660 = vmatmul.mubr.bf16.gmra.mrb[0].mxu0 %v566
      %v661 = vpop.f32.mrb[0].mxu0
      %v662 = vadd.f32 %v498, %v661
      %v663 = vpop.f32.mrb[0].mxu0
      %v664 = vpop.f32.mrb[0].mxu0
      %v665 = vadd.f32 %v501, %v664
      %v666 = vpop.f32.mrb[0].mxu0
      %667 = vdwg.mxu0
      %v668 = vld [vmem:[%s227 + $0xc] sm:$0xf]
      %v669 = vld [vmem:[%s227 + $0x10] sm:$0xf]
      %v670 = vld [vmem:[%s227 + $0x20] sm:$0xf]
      %v671 = vld [vmem:[%s227 + $0x24] sm:$0xf]
      %v672 = vld [vmem:[%s227 + $0x34] sm:$0xf]
      %v673 = vld [vmem:[%s227 + $0x38] sm:$0xf]
      %v674 = vld [vmem:[%s227 + $0x48] sm:$0xf]
      %v675 = vld [vmem:[%s227 + $0x4c] sm:$0xf]
      %v676 = vld [vmem:[%s227 + $0x5c] sm:$0xf]
      %v677 = vld [vmem:[%s227 + $0x60] sm:$0xf]
      %v678 = vld [vmem:[%s227 + $0x70] sm:$0xf]
      %v679 = vld [vmem:[%s227 + $0x74] sm:$0xf]
      %v680 = vld [vmem:[%s227 + $0x84] sm:$0xf]
      %v681 = vld [vmem:[%s227 + $0x88] sm:$0xf]
      %v682 = vld [vmem:[%s227 + $0x98] sm:$0xf]
      %v683 = vld [vmem:[%s227 + $0x9c] sm:$0xf]
      %s684 = scalar_lea.vmem %s1, 8
      %v685 = vld [vmem:[%s684] sm:$0xf]
      %v702 = vunpack.c.l.b16 %v668
      %v703 = vunpack.c.l.b16 %v669
      %v704 = vunpack.c.l.b16 %v670
      %v705 = vunpack.c.l.b16 %v671
      %v706 = vunpack.c.l.b16 %v672
      %v707 = vunpack.c.l.b16 %v673
      %v708 = vunpack.c.l.b16 %v674
      %v709 = vunpack.c.l.b16 %v675
      %v710 = vunpack.c.l.b16 %v676
      %v711 = vunpack.c.l.b16 %v677
      %v712 = vunpack.c.l.b16 %v678
      %v713 = vunpack.c.l.b16 %v679
      %v714 = vunpack.c.l.b16 %v680
      %v715 = vunpack.c.l.b16 %v681
      %v716 = vunpack.c.l.b16 %v682
      %v717 = vunpack.c.l.b16 %v683
      %v718 = vpack.c.b16 %v703, %v702
      %v719 = vpack.c.b16 %v705, %v704
      %v720 = vpack.c.b16 %v707, %v706
      %v721 = vpack.c.b16 %v709, %v708
      %v722 = vpack.c.b16 %v711, %v710
      %v723 = vpack.c.b16 %v713, %v712
      %v724 = vpack.c.b16 %v715, %v714
      %v725 = vpack.c.b16 %v717, %v716
      %v727 = vsel %vm378, %v718, 0
      %v730 = vsel %vm378, %v719, 0
      %v733 = vsel %vm378, %v720, 0
      %v736 = vsel %vm378, %v721, 0
      %v739 = vsel %vm378, %v722, 0
      %v742 = vsel %vm378, %v723, 0
      %v745 = vsel %vm378, %v724, 0
      %v748 = vsel %vm378, %v725, 0
      %v751 = vsel %vm403, %v685, 0
      %753 = vmatprep.subr.bf16.mxu0 0
      %754 = vmatpush1.bf16.msra.mxu0 %v751
      %755 = vmatprep.subr.bf16.mxu0 0
      %756 = vmatpush1.bf16.msra.mxu0 0
      %757 = vmatprep.subr.bf16.mxu0 0
      %758 = vmatpush1.bf16.msra.mxu0 0
      %759 = vmatprep.subr.bf16.mxu0 0
      %760 = vmatpush1.bf16.msra.mxu0 0
      %761 = vmatprep.subr.bf16.mxu0 0
      %762 = vmatpush1.bf16.msra.mxu0 0
      %763 = vmatprep.subr.bf16.mxu0 0
      %764 = vmatpush1.bf16.msra.mxu0 0
      %765 = vmatprep.subr.bf16.mxu0 0
      %766 = vmatpush1.bf16.msra.mxu0 0
      %767 = vmatprep.subr.bf16.mxu0 0
      %768 = vmatpush1.bf16.msra.mxu0 0
      %769 = vmatprep.subr.bf16.mxu0 0
      %770 = vmatpush1.bf16.msra.mxu0 0
      %771 = vmatprep.subr.bf16.mxu0 0
      %772 = vmatpush1.bf16.msra.mxu0 0
      %773 = vmatprep.subr.bf16.mxu0 0
      %774 = vmatpush1.bf16.msra.mxu0 0
      %775 = vmatprep.subr.bf16.mxu0 0
      %776 = vmatpush1.bf16.msra.mxu0 0
      %777 = vmatprep.subr.bf16.mxu0 0
      %778 = vmatpush1.bf16.msra.mxu0 0
      %779 = vmatprep.subr.bf16.mxu0 0
      %780 = vmatpush1.bf16.msra.mxu0 0
      %781 = vmatprep.subr.bf16.mxu0 0
      %782 = vmatpush1.bf16.msra.mxu0 0
      %783 = vmatprep.subr.bf16.mxu0 0
      %784 = vmatpush1.bf16.msra.mxu0 0
      %785 = vmatprep.mubr.bf16.mxu0 0
      %786 = vmatmul.mubr.bf16.gmra.mrb[0].mxu0 %v727
      %v787 = vpop.f32.mrb[0].mxu0
      %v788 = vadd.f32 0.0, %v787
      %v789 = vpop.f32.mrb[0].mxu0
      %v790 = vpop.f32.mrb[0].mxu0
      %v791 = vadd.f32 0.0, %v790
      %v792 = vpop.f32.mrb[0].mxu0
      %793 = vmatprep.mubr.bf16.mxu0 0
      %794 = vmatmul.mubr.bf16.gmra.mrb[0].mxu0 %v730
      %v795 = vpop.f32.mrb[0].mxu0
      %v796 = vadd.f32 0.0, %v795
      %v797 = vpop.f32.mrb[0].mxu0
      %v798 = vpop.f32.mrb[0].mxu0
      %v799 = vadd.f32 0.0, %v798
      %v800 = vpop.f32.mrb[0].mxu0
      %801 = vmatprep.mubr.bf16.mxu0 0
      %802 = vmatmul.mubr.bf16.gmra.mrb[0].mxu0 %v733
      %v803 = vpop.f32.mrb[0].mxu0
      %v804 = vadd.f32 0.0, %v803
      %v805 = vpop.f32.mrb[0].mxu0
      %v806 = vpop.f32.mrb[0].mxu0
      %v807 = vadd.f32 0.0, %v806
      %v808 = vpop.f32.mrb[0].mxu0
      %809 = vmatprep.mubr.bf16.mxu0 0
      %810 = vmatmul.mubr.bf16.gmra.mrb[0].mxu0 %v736
      %v811 = vpop.f32.mrb[0].mxu0
      %v812 = vadd.f32 0.0, %v811
      %v813 = vpop.f32.mrb[0].mxu0
      %v814 = vpop.f32.mrb[0].mxu0
      %v815 = vadd.f32 0.0, %v814
      %v816 = vpop.f32.mrb[0].mxu0
      %817 = vmatprep.mubr.bf16.mxu0 0
      %818 = vmatmul.mubr.bf16.gmra.mrb[0].mxu0 %v739
      %v819 = vpop.f32.mrb[0].mxu0
      %v820 = vadd.f32 0.0, %v819
      %v821 = vpop.f32.mrb[0].mxu0
      %v822 = vpop.f32.mrb[0].mxu0
      %v823 = vadd.f32 0.0, %v822
      %v824 = vpop.f32.mrb[0].mxu0
      %825 = vmatprep.mubr.bf16.mxu0 0
      %826 = vmatmul.mubr.bf16.gmra.mrb[0].mxu0 %v742
      %v827 = vpop.f32.mrb[0].mxu0
      %v828 = vadd.f32 0.0, %v827
      %v829 = vpop.f32.mrb[0].mxu0
      %v830 = vpop.f32.mrb[0].mxu0
      %v831 = vadd.f32 0.0, %v830
      %v832 = vpop.f32.mrb[0].mxu0
      %833 = vmatprep.mubr.bf16.mxu0 0
      %834 = vmatmul.mubr.bf16.gmra.mrb[0].mxu0 %v745
      %v835 = vpop.f32.mrb[0].mxu0
      %v836 = vadd.f32 0.0, %v835
      %v837 = vpop.f32.mrb[0].mxu0
      %v838 = vpop.f32.mrb[0].mxu0
      %v839 = vadd.f32 0.0, %v838
      %v840 = vpop.f32.mrb[0].mxu0
      %841 = vmatprep.mubr.bf16.mxu0 0
      %842 = vmatmul.mubr.bf16.gmra.mrb[0].mxu0 %v748
      %v843 = vpop.f32.mrb[0].mxu0
      %v844 = vadd.f32 0.0, %v843
      %v845 = vpop.f32.mrb[0].mxu0
      %v846 = vpop.f32.mrb[0].mxu0
      %v847 = vadd.f32 0.0, %v846
      %v848 = vpop.f32.mrb[0].mxu0
      %849 = vdwg.mxu0
      %v850 = vadd.f32 %v606, %v788
      %v851 = vadd.f32 %v609, %v791
      %v852 = vadd.f32 %v614, %v796
      %v853 = vadd.f32 %v617, %v799
      %v854 = vadd.f32 %v622, %v804
      %v855 = vadd.f32 %v625, %v807
      %v856 = vadd.f32 %v630, %v812
      %v857 = vadd.f32 %v633, %v815
      %v858 = vadd.f32 %v638, %v820
      %v859 = vadd.f32 %v641, %v823
      %v860 = vadd.f32 %v646, %v828
      %v861 = vadd.f32 %v649, %v831
      %v862 = vadd.f32 %v654, %v836
      %v863 = vadd.f32 %v657, %v839
      %v864 = vadd.f32 %v662, %v844
      %v865 = vadd.f32 %v665, %v847
      %s866 = sadd.s32 %s224, 12
      %s867 = smul.u32 %s866, 5
      %s868 = smul.addr %s867, 4
      %s869 = scalar_lea.vmem %s211, %s868
      %v870 = vld [vmem:[%s869] sm:$0xf]
      %v871 = vld [vmem:[%s869 + $0x4] sm:$0xf]
      %v872 = vld [vmem:[%s869 + $0x14] sm:$0xf]
      %v873 = vld [vmem:[%s869 + $0x18] sm:$0xf]
      %v874 = vld [vmem:[%s869 + $0x28] sm:$0xf]
      %v875 = vld [vmem:[%s869 + $0x2c] sm:$0xf]
      %v876 = vld [vmem:[%s869 + $0x3c] sm:$0xf]
      %v877 = vld [vmem:[%s869 + $0x40] sm:$0xf]
      %v878 = vld [vmem:[%s869 + $0x50] sm:$0xf]
      %v879 = vld [vmem:[%s869 + $0x54] sm:$0xf]
      %v880 = vld [vmem:[%s869 + $0x64] sm:$0xf]
      %v881 = vld [vmem:[%s869 + $0x68] sm:$0xf]
      %v882 = vld [vmem:[%s869 + $0x78] sm:$0xf]
      %v883 = vld [vmem:[%s869 + $0x7c] sm:$0xf]
      %v884 = vld [vmem:[%s869 + $0x8c] sm:$0xf]
      %v885 = vld [vmem:[%s869 + $0x90] sm:$0xf]
      %s886 = scalar_lea.vmem %s1, 12
      %v887 = vld [vmem:[%s886] sm:$0xf]
      %v904 = vunpack.c.l.b16 %v870
      %v905 = vunpack.c.l.b16 %v871
      %v906 = vunpack.c.l.b16 %v872
      %v907 = vunpack.c.l.b16 %v873
      %v908 = vunpack.c.l.b16 %v874
      %v909 = vunpack.c.l.b16 %v875
      %v910 = vunpack.c.l.b16 %v876
      %v911 = vunpack.c.l.b16 %v877
      %v912 = vunpack.c.l.b16 %v878
      %v913 = vunpack.c.l.b16 %v879
      %v914 = vunpack.c.l.b16 %v880
      %v915 = vunpack.c.l.b16 %v881
      %v916 = vunpack.c.l.b16 %v882
      %v917 = vunpack.c.l.b16 %v883
      %v918 = vunpack.c.l.b16 %v884
      %v919 = vunpack.c.l.b16 %v885
      %v920 = vpack.c.b16 %v905, %v904
      %v921 = vpack.c.b16 %v907, %v906
      %v922 = vpack.c.b16 %v909, %v908
      %v923 = vpack.c.b16 %v911, %v910
      %v924 = vpack.c.b16 %v913, %v912
      %v925 = vpack.c.b16 %v915, %v914
      %v926 = vpack.c.b16 %v917, %v916
      %v927 = vpack.c.b16 %v919, %v918
      %v929 = vsel %vm378, %v920, 0
      %v932 = vsel %vm378, %v921, 0
      %v935 = vsel %vm378, %v922, 0
      %v938 = vsel %vm378, %v923, 0
      %v941 = vsel %vm378, %v924, 0
      %v944 = vsel %vm378, %v925, 0
      %v947 = vsel %vm378, %v926, 0
      %v950 = vsel %vm378, %v927, 0
      %v953 = vsel %vm403, %v887, 0
      %955 = vmatprep.subr.bf16.mxu0 0
      %956 = vmatpush1.bf16.msra.mxu0 %v953
      %957 = vmatprep.subr.bf16.mxu0 0
      %958 = vmatpush1.bf16.msra.mxu0 0
      %959 = vmatprep.subr.bf16.mxu0 0
      %960 = vmatpush1.bf16.msra.mxu0 0
      %961 = vmatprep.subr.bf16.mxu0 0
      %962 = vmatpush1.bf16.msra.mxu0 0
      %963 = vmatprep.subr.bf16.mxu0 0
      %964 = vmatpush1.bf16.msra.mxu0 0
      %965 = vmatprep.subr.bf16.mxu0 0
      %966 = vmatpush1.bf16.msra.mxu0 0
      %967 = vmatprep.subr.bf16.mxu0 0
      %968 = vmatpush1.bf16.msra.mxu0 0
      %969 = vmatprep.subr.bf16.mxu0 0
      %970 = vmatpush1.bf16.msra.mxu0 0
      %971 = vmatprep.subr.bf16.mxu0 0
      %972 = vmatpush1.bf16.msra.mxu0 0
      %973 = vmatprep.subr.bf16.mxu0 0
      %974 = vmatpush1.bf16.msra.mxu0 0
      %975 = vmatprep.subr.bf16.mxu0 0
      %976 = vmatpush1.bf16.msra.mxu0 0
      %977 = vmatprep.subr.bf16.mxu0 0
      %978 = vmatpush1.bf16.msra.mxu0 0
      %979 = vmatprep.subr.bf16.mxu0 0
      %980 = vmatpush1.bf16.msra.mxu0 0
      %981 = vmatprep.subr.bf16.mxu0 0
      %982 = vmatpush1.bf16.msra.mxu0 0
      %983 = vmatprep.subr.bf16.mxu0 0
      %984 = vmatpush1.bf16.msra.mxu0 0
      %985 = vmatprep.subr.bf16.mxu0 0
      %986 = vmatpush1.bf16.msra.mxu0 0
      %987 = vmatprep.mubr.bf16.mxu0 0
      %988 = vmatmul.mubr.bf16.gmra.mrb[0].mxu0 %v929
      %v989 = vpop.f32.mrb[0].mxu0
      %v990 = vadd.f32 0.0, %v989
      %v991 = vpop.f32.mrb[0].mxu0
      %v992 = vpop.f32.mrb[0].mxu0
      %v993 = vadd.f32 0.0, %v992
      %v994 = vpop.f32.mrb[0].mxu0
      %995 = vmatprep.mubr.bf16.mxu0 0
      %996 = vmatmul.mubr.bf16.gmra.mrb[0].mxu0 %v932
      %v997 = vpop.f32.mrb[0].mxu0
      %v998 = vadd.f32 0.0, %v997
      %v999 = vpop.f32.mrb[0].mxu0
      %v1000 = vpop.f32.mrb[0].mxu0
      %v1001 = vadd.f32 0.0, %v1000
      %v1002 = vpop.f32.mrb[0].mxu0
      %1003 = vmatprep.mubr.bf16.mxu0 0
      %1004 = vmatmul.mubr.bf16.gmra.mrb[0].mxu0 %v935
      %v1005 = vpop.f32.mrb[0].mxu0
      %v1006 = vadd.f32 0.0, %v1005
      %v1007 = vpop.f32.mrb[0].mxu0
      %v1008 = vpop.f32.mrb[0].mxu0
      %v1009 = vadd.f32 0.0, %v1008
      %v1010 = vpop.f32.mrb[0].mxu0
      %1011 = vmatprep.mubr.bf16.mxu0 0
      %1012 = vmatmul.mubr.bf16.gmra.mrb[0].mxu0 %v938
      %v1013 = vpop.f32.mrb[0].mxu0
      %v1014 = vadd.f32 0.0, %v1013
      %v1015 = vpop.f32.mrb[0].mxu0
      %v1016 = vpop.f32.mrb[0].mxu0
      %v1017 = vadd.f32 0.0, %v1016
      %v1018 = vpop.f32.mrb[0].mxu0
      %1019 = vmatprep.mubr.bf16.mxu0 0
      %1020 = vmatmul.mubr.bf16.gmra.mrb[0].mxu0 %v941
      %v1021 = vpop.f32.mrb[0].mxu0
      %v1022 = vadd.f32 0.0, %v1021
      %v1023 = vpop.f32.mrb[0].mxu0
      %v1024 = vpop.f32.mrb[0].mxu0
      %v1025 = vadd.f32 0.0, %v1024
      %v1026 = vpop.f32.mrb[0].mxu0
      %1027 = vmatprep.mubr.bf16.mxu0 0
      %1028 = vmatmul.mubr.bf16.gmra.mrb[0].mxu0 %v944
      %v1029 = vpop.f32.mrb[0].mxu0
      %v1030 = vadd.f32 0.0, %v1029
      %v1031 = vpop.f32.mrb[0].mxu0
      %v1032 = vpop.f32.mrb[0].mxu0
      %v1033 = vadd.f32 0.0, %v1032
      %v1034 = vpop.f32.mrb[0].mxu0
      %1035 = vmatprep.mubr.bf16.mxu0 0
      %1036 = vmatmul.mubr.bf16.gmra.mrb[0].mxu0 %v947
      %v1037 = vpop.f32.mrb[0].mxu0
      %v1038 = vadd.f32 0.0, %v1037
      %v1039 = vpop.f32.mrb[0].mxu0
      %v1040 = vpop.f32.mrb[0].mxu0
      %v1041 = vadd.f32 0.0, %v1040
      %v1042 = vpop.f32.mrb[0].mxu0
      %1043 = vmatprep.mubr.bf16.mxu0 0
      %1044 = vmatmul.mubr.bf16.gmra.mrb[0].mxu0 %v950
      %v1045 = vpop.f32.mrb[0].mxu0
      %v1046 = vadd.f32 0.0, %v1045
      %v1047 = vpop.f32.mrb[0].mxu0
      %v1048 = vpop.f32.mrb[0].mxu0
      %v1049 = vadd.f32 0.0, %v1048
      %v1050 = vpop.f32.mrb[0].mxu0
      %1051 = vdwg.mxu0
      %v1052 = vadd.f32 %v850, %v990
      %v1053 = vadd.f32 %v851, %v993
      %v1054 = vadd.f32 %v852, %v998
      %v1055 = vadd.f32 %v853, %v1001
      %v1056 = vadd.f32 %v854, %v1006
      %v1057 = vadd.f32 %v855, %v1009
      %v1058 = vadd.f32 %v856, %v1014
      %v1059 = vadd.f32 %v857, %v1017
      %v1060 = vadd.f32 %v858, %v1022
      %v1061 = vadd.f32 %v859, %v1025
      %v1062 = vadd.f32 %v860, %v1030
      %v1063 = vadd.f32 %v861, %v1033
      %v1064 = vadd.f32 %v862, %v1038
      %v1065 = vadd.f32 %v863, %v1041
      %v1066 = vadd.f32 %v864, %v1046
      %v1067 = vadd.f32 %v865, %v1049
      %v1068 = vld [vmem:[%s869 + $0x4] sm:$0xc]
      %v1069 = vld [vmem:[%s869 + $0x8] sm:$0xf]
      %v1070 = vld [vmem:[%s869 + $0xc] sm:$0x3]
      %v1071 = vld [vmem:[%s869 + $0x18] sm:$0xc]
      %v1072 = vld [vmem:[%s869 + $0x1c] sm:$0xf]
      %v1073 = vld [vmem:[%s869 + $0x20] sm:$0x3]
      %v1074 = vld [vmem:[%s869 + $0x2c] sm:$0xc]
      %v1075 = vld [vmem:[%s869 + $0x30] sm:$0xf]
      %v1076 = vld [vmem:[%s869 + $0x34] sm:$0x3]
      %v1077 = vld [vmem:[%s869 + $0x40] sm:$0xc]
      %v1078 = vld [vmem:[%s869 + $0x44] sm:$0xf]
      %v1079 = vld [vmem:[%s869 + $0x48] sm:$0x3]
      %v1080 = vld [vmem:[%s869 + $0x54] sm:$0xc]
      %v1081 = vld [vmem:[%s869 + $0x58] sm:$0xf]
      %v1082 = vld [vmem:[%s869 + $0x5c] sm:$0x3]
      %v1083 = vld [vmem:[%s869 + $0x68] sm:$0xc]
      %v1084 = vld [vmem:[%s869 + $0x6c] sm:$0xf]
      %v1085 = vld [vmem:[%s869 + $0x70] sm:$0x3]
      %v1086 = vld [vmem:[%s869 + $0x7c] sm:$0xc]
      %v1087 = vld [vmem:[%s869 + $0x80] sm:$0xf]
      %v1088 = vld [vmem:[%s869 + $0x84] sm:$0x3]
      %v1089 = vld [vmem:[%s869 + $0x90] sm:$0xc]
      %v1090 = vld [vmem:[%s869 + $0x94] sm:$0xf]
      %v1091 = vld [vmem:[%s869 + $0x98] sm:$0x3]
      %v1116 = vrot.slane %v1068, 6
      %v1117 = vrot.slane %v1116, 4
      %v1118 = vrot.slane %v1069, 6
      %v1119 = vsel %vm295, %v1117, %v1118
      %v1120 = vrot.slane %v1118, 4
      %v1121 = vrot.slane %v1070, 6
      %v1122 = vsel %vm295, %v1120, %v1121
      %v1123 = vrot.slane %v1071, 6
      %v1124 = vrot.slane %v1123, 4
      %v1125 = vrot.slane %v1072, 6
      %v1126 = vsel %vm295, %v1124, %v1125
      %v1127 = vrot.slane %v1125, 4
      %v1128 = vrot.slane %v1073, 6
      %v1129 = vsel %vm295, %v1127, %v1128
      %v1130 = vrot.slane %v1074, 6
      %v1131 = vrot.slane %v1130, 4
      %v1132 = vrot.slane %v1075, 6
      %v1133 = vsel %vm295, %v1131, %v1132
      %v1134 = vrot.slane %v1132, 4
      %v1135 = vrot.slane %v1076, 6
      %v1136 = vsel %vm295, %v1134, %v1135
      %v1137 = vrot.slane %v1077, 6
      %v1138 = vrot.slane %v1137, 4
      %v1139 = vrot.slane %v1078, 6
      %v1140 = vsel %vm295, %v1138, %v1139
      %v1141 = vrot.slane %v1139, 4
      %v1142 = vrot.slane %v1079, 6
      %v1143 = vsel %vm295, %v1141, %v1142
      %v1144 = vrot.slane %v1080, 6
      %v1145 = vrot.slane %v1144, 4
      %v1146 = vrot.slane %v1081, 6
      %v1147 = vsel %vm295, %v1145, %v1146
      %v1148 = vrot.slane %v1146, 4
      %v1149 = vrot.slane %v1082, 6
      %v1150 = vsel %vm295, %v1148, %v1149
      %v1151 = vrot.slane %v1083, 6
      %v1152 = vrot.slane %v1151, 4
      %v1153 = vrot.slane %v1084, 6
      %v1154 = vsel %vm295, %v1152, %v1153
      %v1155 = vrot.slane %v1153, 4
      %v1156 = vrot.slane %v1085, 6
      %v1157 = vsel %vm295, %v1155, %v1156
      %v1158 = vrot.slane %v1086, 6
      %v1159 = vrot.slane %v1158, 4
      %v1160 = vrot.slane %v1087, 6
      %v1161 = vsel %vm295, %v1159, %v1160
      %v1162 = vrot.slane %v1160, 4
      %v1163 = vrot.slane %v1088, 6
      %v1164 = vsel %vm295, %v1162, %v1163
      %v1165 = vrot.slane %v1089, 6
      %v1166 = vrot.slane %v1165, 4
      %v1167 = vrot.slane %v1090, 6
      %v1168 = vsel %vm295, %v1166, %v1167
      %v1169 = vrot.slane %v1167, 4
      %v1170 = vrot.slane %v1091, 6
      %v1171 = vsel %vm295, %v1169, %v1170
      %s1172 = scalar_lea.vmem %s1, 16
      %v1173 = vld [vmem:[%s1172] sm:$0xf]
      %v1174 = vunpack.c.l.b16 %v1119
      %v1175 = vunpack.c.l.b16 %v1122
      %v1176 = vunpack.c.l.b16 %v1126
      %v1177 = vunpack.c.l.b16 %v1129
      %v1178 = vunpack.c.l.b16 %v1133
      %v1179 = vunpack.c.l.b16 %v1136
      %v1180 = vunpack.c.l.b16 %v1140
      %v1181 = vunpack.c.l.b16 %v1143
      %v1182 = vunpack.c.l.b16 %v1147
      %v1183 = vunpack.c.l.b16 %v1150
      %v1184 = vunpack.c.l.b16 %v1154
      %v1185 = vunpack.c.l.b16 %v1157
      %v1186 = vunpack.c.l.b16 %v1161
      %v1187 = vunpack.c.l.b16 %v1164
      %v1188 = vunpack.c.l.b16 %v1168
      %v1189 = vunpack.c.l.b16 %v1171
      %v1190 = vpack.c.b16 %v1175, %v1174
      %v1191 = vpack.c.b16 %v1177, %v1176
      %v1192 = vpack.c.b16 %v1179, %v1178
      %v1193 = vpack.c.b16 %v1181, %v1180
      %v1194 = vpack.c.b16 %v1183, %v1182
      %v1195 = vpack.c.b16 %v1185, %v1184
      %v1196 = vpack.c.b16 %v1187, %v1186
      %v1197 = vpack.c.b16 %v1189, %v1188
      %v1199 = vsel %vm378, %v1190, 0
      %v1202 = vsel %vm378, %v1191, 0
      %v1205 = vsel %vm378, %v1192, 0
      %v1208 = vsel %vm378, %v1193, 0
      %v1211 = vsel %vm378, %v1194, 0
      %v1214 = vsel %vm378, %v1195, 0
      %v1217 = vsel %vm378, %v1196, 0
      %v1220 = vsel %vm378, %v1197, 0
      %v1223 = vsel %vm403, %v1173, 0
      %1225 = vmatprep.subr.bf16.mxu0 0
      %1226 = vmatpush1.bf16.msra.mxu0 %v1223
      %1227 = vmatprep.subr.bf16.mxu0 0
      %1228 = vmatpush1.bf16.msra.mxu0 0
      %1229 = vmatprep.subr.bf16.mxu0 0
      %1230 = vmatpush1.bf16.msra.mxu0 0
      %1231 = vmatprep.subr.bf16.mxu0 0
      %1232 = vmatpush1.bf16.msra.mxu0 0
      %1233 = vmatprep.subr.bf16.mxu0 0
      %1234 = vmatpush1.bf16.msra.mxu0 0
      %1235 = vmatprep.subr.bf16.mxu0 0
      %1236 = vmatpush1.bf16.msra.mxu0 0
      %1237 = vmatprep.subr.bf16.mxu0 0
      %1238 = vmatpush1.bf16.msra.mxu0 0
      %1239 = vmatprep.subr.bf16.mxu0 0
      %1240 = vmatpush1.bf16.msra.mxu0 0
      %1241 = vmatprep.subr.bf16.mxu0 0
      %1242 = vmatpush1.bf16.msra.mxu0 0
      %1243 = vmatprep.subr.bf16.mxu0 0
      %1244 = vmatpush1.bf16.msra.mxu0 0
      %1245 = vmatprep.subr.bf16.mxu0 0
      %1246 = vmatpush1.bf16.msra.mxu0 0
      %1247 = vmatprep.subr.bf16.mxu0 0
      %1248 = vmatpush1.bf16.msra.mxu0 0
      %1249 = vmatprep.subr.bf16.mxu0 0
      %1250 = vmatpush1.bf16.msra.mxu0 0
      %1251 = vmatprep.subr.bf16.mxu0 0
      %1252 = vmatpush1.bf16.msra.mxu0 0
      %1253 = vmatprep.subr.bf16.mxu0 0
      %1254 = vmatpush1.bf16.msra.mxu0 0
      %1255 = vmatprep.subr.bf16.mxu0 0
      %1256 = vmatpush1.bf16.msra.mxu0 0
      %1257 = vmatprep.mubr.bf16.mxu0 0
      %1258 = vmatmul.mubr.bf16.gmra.mrb[0].mxu0 %v1199
      %v1259 = vpop.f32.mrb[0].mxu0
      %v1260 = vadd.f32 0.0, %v1259
      %v1261 = vpop.f32.mrb[0].mxu0
      %v1262 = vpop.f32.mrb[0].mxu0
      %v1263 = vadd.f32 0.0, %v1262
      %v1264 = vpop.f32.mrb[0].mxu0
      %1265 = vmatprep.mubr.bf16.mxu0 0
      %1266 = vmatmul.mubr.bf16.gmra.mrb[0].mxu0 %v1202
      %v1267 = vpop.f32.mrb[0].mxu0
      %v1268 = vadd.f32 0.0, %v1267
      %v1269 = vpop.f32.mrb[0].mxu0
      %v1270 = vpop.f32.mrb[0].mxu0
      %v1271 = vadd.f32 0.0, %v1270
      %v1272 = vpop.f32.mrb[0].mxu0
      %1273 = vmatprep.mubr.bf16.mxu0 0
      %1274 = vmatmul.mubr.bf16.gmra.mrb[0].mxu0 %v1205
      %v1275 = vpop.f32.mrb[0].mxu0
      %v1276 = vadd.f32 0.0, %v1275
      %v1277 = vpop.f32.mrb[0].mxu0
      %v1278 = vpop.f32.mrb[0].mxu0
      %v1279 = vadd.f32 0.0, %v1278
      %v1280 = vpop.f32.mrb[0].mxu0
      %1281 = vmatprep.mubr.bf16.mxu0 0
      %1282 = vmatmul.mubr.bf16.gmra.mrb[0].mxu0 %v1208
      %v1283 = vpop.f32.mrb[0].mxu0
      %v1284 = vadd.f32 0.0, %v1283
      %v1285 = vpop.f32.mrb[0].mxu0
      %v1286 = vpop.f32.mrb[0].mxu0
      %v1287 = vadd.f32 0.0, %v1286
      %v1288 = vpop.f32.mrb[0].mxu0
      %1289 = vmatprep.mubr.bf16.mxu0 0
      %1290 = vmatmul.mubr.bf16.gmra.mrb[0].mxu0 %v1211
      %v1291 = vpop.f32.mrb[0].mxu0
      %v1292 = vadd.f32 0.0, %v1291
      %v1293 = vpop.f32.mrb[0].mxu0
      %v1294 = vpop.f32.mrb[0].mxu0
      %v1295 = vadd.f32 0.0, %v1294
      %v1296 = vpop.f32.mrb[0].mxu0
      %1297 = vmatprep.mubr.bf16.mxu0 0
      %1298 = vmatmul.mubr.bf16.gmra.mrb[0].mxu0 %v1214
      %v1299 = vpop.f32.mrb[0].mxu0
      %v1300 = vadd.f32 0.0, %v1299
      %v1301 = vpop.f32.mrb[0].mxu0
      %v1302 = vpop.f32.mrb[0].mxu0
      %v1303 = vadd.f32 0.0, %v1302
      %v1304 = vpop.f32.mrb[0].mxu0
      %1305 = vmatprep.mubr.bf16.mxu0 0
      %1306 = vmatmul.mubr.bf16.gmra.mrb[0].mxu0 %v1217
      %v1307 = vpop.f32.mrb[0].mxu0
      %v1308 = vadd.f32 0.0, %v1307
      %v1309 = vpop.f32.mrb[0].mxu0
      %v1310 = vpop.f32.mrb[0].mxu0
      %v1311 = vadd.f32 0.0, %v1310
      %v1312 = vpop.f32.mrb[0].mxu0
      %1313 = vmatprep.mubr.bf16.mxu0 0
      %1314 = vmatmul.mubr.bf16.gmra.mrb[0].mxu0 %v1220
      %v1315 = vpop.f32.mrb[0].mxu0
      %v1316 = vadd.f32 0.0, %v1315
      %v1317 = vpop.f32.mrb[0].mxu0
      %v1318 = vpop.f32.mrb[0].mxu0
      %v1319 = vadd.f32 0.0, %v1318
      %v1320 = vpop.f32.mrb[0].mxu0
      %1321 = vdwg.mxu0
      %v1322 = vadd.f32 %v1052, %v1260
      %v1323 = vadd.f32 %v1053, %v1263
      %v1324 = vadd.f32 %v1054, %v1268
      %v1325 = vadd.f32 %v1055, %v1271
      %v1326 = vadd.f32 %v1056, %v1276
      %v1327 = vadd.f32 %v1057, %v1279
      %v1328 = vadd.f32 %v1058, %v1284
      %v1329 = vadd.f32 %v1059, %v1287
      %v1330 = vadd.f32 %v1060, %v1292
      %v1331 = vadd.f32 %v1061, %v1295
      %v1332 = vadd.f32 %v1062, %v1300
      %v1333 = vadd.f32 %v1063, %v1303
      %v1334 = vadd.f32 %v1064, %v1308
      %v1335 = vadd.f32 %v1065, %v1311
      %v1336 = vadd.f32 %v1066, %v1316
      %v1337 = vadd.f32 %v1067, %v1319
      %v1338 = vld [vmem:[%s869 + $0xc] sm:$0xf]
      %v1339 = vld [vmem:[%s869 + $0x10] sm:$0xf]
      %v1340 = vld [vmem:[%s869 + $0x20] sm:$0xf]
      %v1341 = vld [vmem:[%s869 + $0x24] sm:$0xf]
      %v1342 = vld [vmem:[%s869 + $0x34] sm:$0xf]
      %v1343 = vld [vmem:[%s869 + $0x38] sm:$0xf]
      %v1344 = vld [vmem:[%s869 + $0x48] sm:$0xf]
      %v1345 = vld [vmem:[%s869 + $0x4c] sm:$0xf]
      %v1346 = vld [vmem:[%s869 + $0x5c] sm:$0xf]
      %v1347 = vld [vmem:[%s869 + $0x60] sm:$0xf]
      %v1348 = vld [vmem:[%s869 + $0x70] sm:$0xf]
      %v1349 = vld [vmem:[%s869 + $0x74] sm:$0xf]
      %v1350 = vld [vmem:[%s869 + $0x84] sm:$0xf]
      %v1351 = vld [vmem:[%s869 + $0x88] sm:$0xf]
      %v1352 = vld [vmem:[%s869 + $0x98] sm:$0xf]
      %v1353 = vld [vmem:[%s869 + $0x9c] sm:$0xf]
      %s1354 = scalar_lea.vmem %s1, 20
      %v1355 = vld [vmem:[%s1354] sm:$0xf]
      %v1372 = vunpack.c.l.b16 %v1338
      %v1373 = vunpack.c.l.b16 %v1339
      %v1374 = vunpack.c.l.b16 %v1340
      %v1375 = vunpack.c.l.b16 %v1341
      %v1376 = vunpack.c.l.b16 %v1342
      %v1377 = vunpack.c.l.b16 %v1343
      %v1378 = vunpack.c.l.b16 %v1344
      %v1379 = vunpack.c.l.b16 %v1345
      %v1380 = vunpack.c.l.b16 %v1346
      %v1381 = vunpack.c.l.b16 %v1347
      %v1382 = vunpack.c.l.b16 %v1348
      %v1383 = vunpack.c.l.b16 %v1349
      %v1384 = vunpack.c.l.b16 %v1350
      %v1385 = vunpack.c.l.b16 %v1351
      %v1386 = vunpack.c.l.b16 %v1352
      %v1387 = vunpack.c.l.b16 %v1353
      %v1388 = vpack.c.b16 %v1373, %v1372
      %v1389 = vpack.c.b16 %v1375, %v1374
      %v1390 = vpack.c.b16 %v1377, %v1376
      %v1391 = vpack.c.b16 %v1379, %v1378
      %v1392 = vpack.c.b16 %v1381, %v1380
      %v1393 = vpack.c.b16 %v1383, %v1382
      %v1394 = vpack.c.b16 %v1385, %v1384
      %v1395 = vpack.c.b16 %v1387, %v1386
      %v1397 = vsel %vm378, %v1388, 0
      %v1400 = vsel %vm378, %v1389, 0
      %v1403 = vsel %vm378, %v1390, 0
      %v1406 = vsel %vm378, %v1391, 0
      %v1409 = vsel %vm378, %v1392, 0
      %v1412 = vsel %vm378, %v1393, 0
      %v1415 = vsel %vm378, %v1394, 0
      %v1418 = vsel %vm378, %v1395, 0
      %v1421 = vsel %vm403, %v1355, 0
      %1423 = vmatprep.subr.bf16.mxu0 0
      %1424 = vmatpush1.bf16.msra.mxu0 %v1421
      %1425 = vmatprep.subr.bf16.mxu0 0
      %1426 = vmatpush1.bf16.msra.mxu0 0
      %1427 = vmatprep.subr.bf16.mxu0 0
      %1428 = vmatpush1.bf16.msra.mxu0 0
      %1429 = vmatprep.subr.bf16.mxu0 0
      %1430 = vmatpush1.bf16.msra.mxu0 0
      %1431 = vmatprep.subr.bf16.mxu0 0
      %1432 = vmatpush1.bf16.msra.mxu0 0
      %1433 = vmatprep.subr.bf16.mxu0 0
      %1434 = vmatpush1.bf16.msra.mxu0 0
      %1435 = vmatprep.subr.bf16.mxu0 0
      %1436 = vmatpush1.bf16.msra.mxu0 0
      %1437 = vmatprep.subr.bf16.mxu0 0
      %1438 = vmatpush1.bf16.msra.mxu0 0
      %1439 = vmatprep.subr.bf16.mxu0 0
      %1440 = vmatpush1.bf16.msra.mxu0 0
      %1441 = vmatprep.subr.bf16.mxu0 0
      %1442 = vmatpush1.bf16.msra.mxu0 0
      %1443 = vmatprep.subr.bf16.mxu0 0
      %1444 = vmatpush1.bf16.msra.mxu0 0
      %1445 = vmatprep.subr.bf16.mxu0 0
      %1446 = vmatpush1.bf16.msra.mxu0 0
      %1447 = vmatprep.subr.bf16.mxu0 0
      %1448 = vmatpush1.bf16.msra.mxu0 0
      %1449 = vmatprep.subr.bf16.mxu0 0
      %1450 = vmatpush1.bf16.msra.mxu0 0
      %1451 = vmatprep.subr.bf16.mxu0 0
      %1452 = vmatpush1.bf16.msra.mxu0 0
      %1453 = vmatprep.subr.bf16.mxu0 0
      %1454 = vmatpush1.bf16.msra.mxu0 0
      %1455 = vmatprep.mubr.bf16.mxu0 0
      %1456 = vmatmul.mubr.bf16.gmra.mrb[0].mxu0 %v1397
      %v1457 = vpop.f32.mrb[0].mxu0
      %v1458 = vadd.f32 0.0, %v1457
      %v1459 = vpop.f32.mrb[0].mxu0
      %v1460 = vpop.f32.mrb[0].mxu0
      %v1461 = vadd.f32 0.0, %v1460
      %v1462 = vpop.f32.mrb[0].mxu0
      %1463 = vmatprep.mubr.bf16.mxu0 0
      %1464 = vmatmul.mubr.bf16.gmra.mrb[0].mxu0 %v1400
      %v1465 = vpop.f32.mrb[0].mxu0
      %v1466 = vadd.f32 0.0, %v1465
      %v1467 = vpop.f32.mrb[0].mxu0
      %v1468 = vpop.f32.mrb[0].mxu0
      %v1469 = vadd.f32 0.0, %v1468
      %v1470 = vpop.f32.mrb[0].mxu0
      %1471 = vmatprep.mubr.bf16.mxu0 0
      %1472 = vmatmul.mubr.bf16.gmra.mrb[0].mxu0 %v1403
      %v1473 = vpop.f32.mrb[0].mxu0
      %v1474 = vadd.f32 0.0, %v1473
      %v1475 = vpop.f32.mrb[0].mxu0
      %v1476 = vpop.f32.mrb[0].mxu0
      %v1477 = vadd.f32 0.0, %v1476
      %v1478 = vpop.f32.mrb[0].mxu0
      %1479 = vmatprep.mubr.bf16.mxu0 0
      %1480 = vmatmul.mubr.bf16.gmra.mrb[0].mxu0 %v1406
      %v1481 = vpop.f32.mrb[0].mxu0
      %v1482 = vadd.f32 0.0, %v1481
      %v1483 = vpop.f32.mrb[0].mxu0
      %v1484 = vpop.f32.mrb[0].mxu0
      %v1485 = vadd.f32 0.0, %v1484
      %v1486 = vpop.f32.mrb[0].mxu0
      %1487 = vmatprep.mubr.bf16.mxu0 0
      %1488 = vmatmul.mubr.bf16.gmra.mrb[0].mxu0 %v1409
      %v1489 = vpop.f32.mrb[0].mxu0
      %v1490 = vadd.f32 0.0, %v1489
      %v1491 = vpop.f32.mrb[0].mxu0
      %v1492 = vpop.f32.mrb[0].mxu0
      %v1493 = vadd.f32 0.0, %v1492
      %v1494 = vpop.f32.mrb[0].mxu0
      %1495 = vmatprep.mubr.bf16.mxu0 0
      %1496 = vmatmul.mubr.bf16.gmra.mrb[0].mxu0 %v1412
      %v1497 = vpop.f32.mrb[0].mxu0
      %v1498 = vadd.f32 0.0, %v1497
      %v1499 = vpop.f32.mrb[0].mxu0
      %v1500 = vpop.f32.mrb[0].mxu0
      %v1501 = vadd.f32 0.0, %v1500
      %v1502 = vpop.f32.mrb[0].mxu0
      %1503 = vmatprep.mubr.bf16.mxu0 0
      %1504 = vmatmul.mubr.bf16.gmra.mrb[0].mxu0 %v1415
      %v1505 = vpop.f32.mrb[0].mxu0
      %v1506 = vadd.f32 0.0, %v1505
      %v1507 = vpop.f32.mrb[0].mxu0
      %v1508 = vpop.f32.mrb[0].mxu0
      %v1509 = vadd.f32 0.0, %v1508
      %v1510 = vpop.f32.mrb[0].mxu0
      %1511 = vmatprep.mubr.bf16.mxu0 0
      %1512 = vmatmul.mubr.bf16.gmra.mrb[0].mxu0 %v1418
      %v1513 = vpop.f32.mrb[0].mxu0
      %v1514 = vadd.f32 0.0, %v1513
      %v1515 = vpop.f32.mrb[0].mxu0
      %v1516 = vpop.f32.mrb[0].mxu0
      %v1517 = vadd.f32 0.0, %v1516
      %v1518 = vpop.f32.mrb[0].mxu0
      %1519 = vdwg.mxu0
      %v1520 = vadd.f32 %v1322, %v1458
      %v1521 = vadd.f32 %v1323, %v1461
      %v1522 = vadd.f32 %v1324, %v1466
      %v1523 = vadd.f32 %v1325, %v1469
      %v1524 = vadd.f32 %v1326, %v1474
      %v1525 = vadd.f32 %v1327, %v1477
      %v1526 = vadd.f32 %v1328, %v1482
      %v1527 = vadd.f32 %v1329, %v1485
      %v1528 = vadd.f32 %v1330, %v1490
      %v1529 = vadd.f32 %v1331, %v1493
      %v1530 = vadd.f32 %v1332, %v1498
      %v1531 = vadd.f32 %v1333, %v1501
      %v1532 = vadd.f32 %v1334, %v1506
      %v1533 = vadd.f32 %v1335, %v1509
      %v1534 = vadd.f32 %v1336, %v1514
      %v1535 = vadd.f32 %v1337, %v1517
      %s1536 = sadd.s32 %s224, 24
      %s1537 = smul.u32 %s1536, 5
      %s1538 = smul.addr %s1537, 4
      %s1539 = scalar_lea.vmem %s211, %s1538
      %v1540 = vld [vmem:[%s1539] sm:$0xf]
      %v1541 = vld [vmem:[%s1539 + $0x4] sm:$0xf]
      %v1542 = vld [vmem:[%s1539 + $0x14] sm:$0xf]
      %v1543 = vld [vmem:[%s1539 + $0x18] sm:$0xf]
      %v1544 = vld [vmem:[%s1539 + $0x28] sm:$0xf]
      %v1545 = vld [vmem:[%s1539 + $0x2c] sm:$0xf]
      %v1546 = vld [vmem:[%s1539 + $0x3c] sm:$0xf]
      %v1547 = vld [vmem:[%s1539 + $0x40] sm:$0xf]
      %v1548 = vld [vmem:[%s1539 + $0x50] sm:$0xf]
      %v1549 = vld [vmem:[%s1539 + $0x54] sm:$0xf]
      %v1550 = vld [vmem:[%s1539 + $0x64] sm:$0xf]
      %v1551 = vld [vmem:[%s1539 + $0x68] sm:$0xf]
      %v1552 = vld [vmem:[%s1539 + $0x78] sm:$0xf]
      %v1553 = vld [vmem:[%s1539 + $0x7c] sm:$0xf]
      %v1554 = vld [vmem:[%s1539 + $0x8c] sm:$0xf]
      %v1555 = vld [vmem:[%s1539 + $0x90] sm:$0xf]
      %s1556 = scalar_lea.vmem %s1, 24
      %v1557 = vld [vmem:[%s1556] sm:$0xf]
      %v1574 = vunpack.c.l.b16 %v1540
      %v1575 = vunpack.c.l.b16 %v1541
      %v1576 = vunpack.c.l.b16 %v1542
      %v1577 = vunpack.c.l.b16 %v1543
      %v1578 = vunpack.c.l.b16 %v1544
      %v1579 = vunpack.c.l.b16 %v1545
      %v1580 = vunpack.c.l.b16 %v1546
      %v1581 = vunpack.c.l.b16 %v1547
      %v1582 = vunpack.c.l.b16 %v1548
      %v1583 = vunpack.c.l.b16 %v1549
      %v1584 = vunpack.c.l.b16 %v1550
      %v1585 = vunpack.c.l.b16 %v1551
      %v1586 = vunpack.c.l.b16 %v1552
      %v1587 = vunpack.c.l.b16 %v1553
      %v1588 = vunpack.c.l.b16 %v1554
      %v1589 = vunpack.c.l.b16 %v1555
      %v1590 = vpack.c.b16 %v1575, %v1574
      %v1591 = vpack.c.b16 %v1577, %v1576
      %v1592 = vpack.c.b16 %v1579, %v1578
      %v1593 = vpack.c.b16 %v1581, %v1580
      %v1594 = vpack.c.b16 %v1583, %v1582
      %v1595 = vpack.c.b16 %v1585, %v1584
      %v1596 = vpack.c.b16 %v1587, %v1586
      %v1597 = vpack.c.b16 %v1589, %v1588
      %v1599 = vsel %vm378, %v1590, 0
      %v1602 = vsel %vm378, %v1591, 0
      %v1605 = vsel %vm378, %v1592, 0
      %v1608 = vsel %vm378, %v1593, 0
      %v1611 = vsel %vm378, %v1594, 0
      %v1614 = vsel %vm378, %v1595, 0
      %v1617 = vsel %vm378, %v1596, 0
      %v1620 = vsel %vm378, %v1597, 0
      %v1623 = vsel %vm403, %v1557, 0
      %1625 = vmatprep.subr.bf16.mxu0 0
      %1626 = vmatpush1.bf16.msra.mxu0 %v1623
      %1627 = vmatprep.subr.bf16.mxu0 0
      %1628 = vmatpush1.bf16.msra.mxu0 0
      %1629 = vmatprep.subr.bf16.mxu0 0
      %1630 = vmatpush1.bf16.msra.mxu0 0
      %1631 = vmatprep.subr.bf16.mxu0 0
      %1632 = vmatpush1.bf16.msra.mxu0 0
      %1633 = vmatprep.subr.bf16.mxu0 0
      %1634 = vmatpush1.bf16.msra.mxu0 0
      %1635 = vmatprep.subr.bf16.mxu0 0
      %1636 = vmatpush1.bf16.msra.mxu0 0
      %1637 = vmatprep.subr.bf16.mxu0 0
      %1638 = vmatpush1.bf16.msra.mxu0 0
      %1639 = vmatprep.subr.bf16.mxu0 0
      %1640 = vmatpush1.bf16.msra.mxu0 0
      %1641 = vmatprep.subr.bf16.mxu0 0
      %1642 = vmatpush1.bf16.msra.mxu0 0
      %1643 = vmatprep.subr.bf16.mxu0 0
      %1644 = vmatpush1.bf16.msra.mxu0 0
      %1645 = vmatprep.subr.bf16.mxu0 0
      %1646 = vmatpush1.bf16.msra.mxu0 0
      %1647 = vmatprep.subr.bf16.mxu0 0
      %1648 = vmatpush1.bf16.msra.mxu0 0
      %1649 = vmatprep.subr.bf16.mxu0 0
      %1650 = vmatpush1.bf16.msra.mxu0 0
      %1651 = vmatprep.subr.bf16.mxu0 0
      %1652 = vmatpush1.bf16.msra.mxu0 0
      %1653 = vmatprep.subr.bf16.mxu0 0
      %1654 = vmatpush1.bf16.msra.mxu0 0
      %1655 = vmatprep.subr.bf16.mxu0 0
      %1656 = vmatpush1.bf16.msra.mxu0 0
      %1657 = vmatprep.mubr.bf16.mxu0 0
      %1658 = vmatmul.mubr.bf16.gmra.mrb[0].mxu0 %v1599
      %v1659 = vpop.f32.mrb[0].mxu0
      %v1660 = vadd.f32 0.0, %v1659
      %v1661 = vpop.f32.mrb[0].mxu0
      %v1662 = vpop.f32.mrb[0].mxu0
      %v1663 = vadd.f32 0.0, %v1662
      %v1664 = vpop.f32.mrb[0].mxu0
      %1665 = vmatprep.mubr.bf16.mxu0 0
      %1666 = vmatmul.mubr.bf16.gmra.mrb[0].mxu0 %v1602
      %v1667 = vpop.f32.mrb[0].mxu0
      %v1668 = vadd.f32 0.0, %v1667
      %v1669 = vpop.f32.mrb[0].mxu0
      %v1670 = vpop.f32.mrb[0].mxu0
      %v1671 = vadd.f32 0.0, %v1670
      %v1672 = vpop.f32.mrb[0].mxu0
      %1673 = vmatprep.mubr.bf16.mxu0 0
      %1674 = vmatmul.mubr.bf16.gmra.mrb[0].mxu0 %v1605
      %v1675 = vpop.f32.mrb[0].mxu0
      %v1676 = vadd.f32 0.0, %v1675
      %v1677 = vpop.f32.mrb[0].mxu0
      %v1678 = vpop.f32.mrb[0].mxu0
      %v1679 = vadd.f32 0.0, %v1678
      %v1680 = vpop.f32.mrb[0].mxu0
      %1681 = vmatprep.mubr.bf16.mxu0 0
      %1682 = vmatmul.mubr.bf16.gmra.mrb[0].mxu0 %v1608
      %v1683 = vpop.f32.mrb[0].mxu0
      %v1684 = vadd.f32 0.0, %v1683
      %v1685 = vpop.f32.mrb[0].mxu0
      %v1686 = vpop.f32.mrb[0].mxu0
      %v1687 = vadd.f32 0.0, %v1686
      %v1688 = vpop.f32.mrb[0].mxu0
      %1689 = vmatprep.mubr.bf16.mxu0 0
      %1690 = vmatmul.mubr.bf16.gmra.mrb[0].mxu0 %v1611
      %v1691 = vpop.f32.mrb[0].mxu0
      %v1692 = vadd.f32 0.0, %v1691
      %v1693 = vpop.f32.mrb[0].mxu0
      %v1694 = vpop.f32.mrb[0].mxu0
      %v1695 = vadd.f32 0.0, %v1694
      %v1696 = vpop.f32.mrb[0].mxu0
      %1697 = vmatprep.mubr.bf16.mxu0 0
      %1698 = vmatmul.mubr.bf16.gmra.mrb[0].mxu0 %v1614
      %v1699 = vpop.f32.mrb[0].mxu0
      %v1700 = vadd.f32 0.0, %v1699
      %v1701 = vpop.f32.mrb[0].mxu0
      %v1702 = vpop.f32.mrb[0].mxu0
      %v1703 = vadd.f32 0.0, %v1702
      %v1704 = vpop.f32.mrb[0].mxu0
      %1705 = vmatprep.mubr.bf16.mxu0 0
      %1706 = vmatmul.mubr.bf16.gmra.mrb[0].mxu0 %v1617
      %v1707 = vpop.f32.mrb[0].mxu0
      %v1708 = vadd.f32 0.0, %v1707
      %v1709 = vpop.f32.mrb[0].mxu0
      %v1710 = vpop.f32.mrb[0].mxu0
      %v1711 = vadd.f32 0.0, %v1710
      %v1712 = vpop.f32.mrb[0].mxu0
      %1713 = vmatprep.mubr.bf16.mxu0 0
      %1714 = vmatmul.mubr.bf16.gmra.mrb[0].mxu0 %v1620
      %v1715 = vpop.f32.mrb[0].mxu0
      %v1716 = vadd.f32 0.0, %v1715
      %v1717 = vpop.f32.mrb[0].mxu0
      %v1718 = vpop.f32.mrb[0].mxu0
      %v1719 = vadd.f32 0.0, %v1718
      %v1720 = vpop.f32.mrb[0].mxu0
      %1721 = vdwg.mxu0
      %v1722 = vadd.f32 %v1520, %v1660
      %v1723 = vadd.f32 %v1521, %v1663
      %v1724 = vadd.f32 %v1522, %v1668
      %v1725 = vadd.f32 %v1523, %v1671
      %v1726 = vadd.f32 %v1524, %v1676
      %v1727 = vadd.f32 %v1525, %v1679
      %v1728 = vadd.f32 %v1526, %v1684
      %v1729 = vadd.f32 %v1527, %v1687
      %v1730 = vadd.f32 %v1528, %v1692
      %v1731 = vadd.f32 %v1529, %v1695
      %v1732 = vadd.f32 %v1530, %v1700
      %v1733 = vadd.f32 %v1531, %v1703
      %v1734 = vadd.f32 %v1532, %v1708
      %v1735 = vadd.f32 %v1533, %v1711
      %v1736 = vadd.f32 %v1534, %v1716
      %v1737 = vadd.f32 %v1535, %v1719
      %v1738 = vld [vmem:[%s1539 + $0x4] sm:$0xc]
      %v1739 = vld [vmem:[%s1539 + $0x8] sm:$0xf]
      %v1740 = vld [vmem:[%s1539 + $0xc] sm:$0x3]
      %v1741 = vld [vmem:[%s1539 + $0x18] sm:$0xc]
      %v1742 = vld [vmem:[%s1539 + $0x1c] sm:$0xf]
      %v1743 = vld [vmem:[%s1539 + $0x20] sm:$0x3]
      %v1744 = vld [vmem:[%s1539 + $0x2c] sm:$0xc]
      %v1745 = vld [vmem:[%s1539 + $0x30] sm:$0xf]
      %v1746 = vld [vmem:[%s1539 + $0x34] sm:$0x3]
      %v1747 = vld [vmem:[%s1539 + $0x40] sm:$0xc]
      %v1748 = vld [vmem:[%s1539 + $0x44] sm:$0xf]
      %v1749 = vld [vmem:[%s1539 + $0x48] sm:$0x3]
      %v1750 = vld [vmem:[%s1539 + $0x54] sm:$0xc]
      %v1751 = vld [vmem:[%s1539 + $0x58] sm:$0xf]
      %v1752 = vld [vmem:[%s1539 + $0x5c] sm:$0x3]
      %v1753 = vld [vmem:[%s1539 + $0x68] sm:$0xc]
      %v1754 = vld [vmem:[%s1539 + $0x6c] sm:$0xf]
      %v1755 = vld [vmem:[%s1539 + $0x70] sm:$0x3]
      %v1756 = vld [vmem:[%s1539 + $0x7c] sm:$0xc]
      %v1757 = vld [vmem:[%s1539 + $0x80] sm:$0xf]
      %v1758 = vld [vmem:[%s1539 + $0x84] sm:$0x3]
      %v1759 = vld [vmem:[%s1539 + $0x90] sm:$0xc]
      %v1760 = vld [vmem:[%s1539 + $0x94] sm:$0xf]
      %v1761 = vld [vmem:[%s1539 + $0x98] sm:$0x3]
      %v1786 = vrot.slane %v1738, 6
      %v1787 = vrot.slane %v1786, 4
      %v1788 = vrot.slane %v1739, 6
      %v1789 = vsel %vm295, %v1787, %v1788
      %v1790 = vrot.slane %v1788, 4
      %v1791 = vrot.slane %v1740, 6
      %v1792 = vsel %vm295, %v1790, %v1791
      %v1793 = vrot.slane %v1741, 6
      %v1794 = vrot.slane %v1793, 4
      %v1795 = vrot.slane %v1742, 6
      %v1796 = vsel %vm295, %v1794, %v1795
      %v1797 = vrot.slane %v1795, 4
      %v1798 = vrot.slane %v1743, 6
      %v1799 = vsel %vm295, %v1797, %v1798
      %v1800 = vrot.slane %v1744, 6
      %v1801 = vrot.slane %v1800, 4
      %v1802 = vrot.slane %v1745, 6
      %v1803 = vsel %vm295, %v1801, %v1802
      %v1804 = vrot.slane %v1802, 4
      %v1805 = vrot.slane %v1746, 6
      %v1806 = vsel %vm295, %v1804, %v1805
      %v1807 = vrot.slane %v1747, 6
      %v1808 = vrot.slane %v1807, 4
      %v1809 = vrot.slane %v1748, 6
      %v1810 = vsel %vm295, %v1808, %v1809
      %v1811 = vrot.slane %v1809, 4
      %v1812 = vrot.slane %v1749, 6
      %v1813 = vsel %vm295, %v1811, %v1812
      %v1814 = vrot.slane %v1750, 6
      %v1815 = vrot.slane %v1814, 4
      %v1816 = vrot.slane %v1751, 6
      %v1817 = vsel %vm295, %v1815, %v1816
      %v1818 = vrot.slane %v1816, 4
      %v1819 = vrot.slane %v1752, 6
      %v1820 = vsel %vm295, %v1818, %v1819
      %v1821 = vrot.slane %v1753, 6
      %v1822 = vrot.slane %v1821, 4
      %v1823 = vrot.slane %v1754, 6
      %v1824 = vsel %vm295, %v1822, %v1823
      %v1825 = vrot.slane %v1823, 4
      %v1826 = vrot.slane %v1755, 6
      %v1827 = vsel %vm295, %v1825, %v1826
      %v1828 = vrot.slane %v1756, 6
      %v1829 = vrot.slane %v1828, 4
      %v1830 = vrot.slane %v1757, 6
      %v1831 = vsel %vm295, %v1829, %v1830
      %v1832 = vrot.slane %v1830, 4
      %v1833 = vrot.slane %v1758, 6
      %v1834 = vsel %vm295, %v1832, %v1833
      %v1835 = vrot.slane %v1759, 6
      %v1836 = vrot.slane %v1835, 4
      %v1837 = vrot.slane %v1760, 6
      %v1838 = vsel %vm295, %v1836, %v1837
      %v1839 = vrot.slane %v1837, 4
      %v1840 = vrot.slane %v1761, 6
      %v1841 = vsel %vm295, %v1839, %v1840
      %s1842 = scalar_lea.vmem %s1, 28
      %v1843 = vld [vmem:[%s1842] sm:$0xf]
      %v1844 = vunpack.c.l.b16 %v1789
      %v1845 = vunpack.c.l.b16 %v1792
      %v1846 = vunpack.c.l.b16 %v1796
      %v1847 = vunpack.c.l.b16 %v1799
      %v1848 = vunpack.c.l.b16 %v1803
      %v1849 = vunpack.c.l.b16 %v1806
      %v1850 = vunpack.c.l.b16 %v1810
      %v1851 = vunpack.c.l.b16 %v1813
      %v1852 = vunpack.c.l.b16 %v1817
      %v1853 = vunpack.c.l.b16 %v1820
      %v1854 = vunpack.c.l.b16 %v1824
      %v1855 = vunpack.c.l.b16 %v1827
      %v1856 = vunpack.c.l.b16 %v1831
      %v1857 = vunpack.c.l.b16 %v1834
      %v1858 = vunpack.c.l.b16 %v1838
      %v1859 = vunpack.c.l.b16 %v1841
      %v1860 = vpack.c.b16 %v1845, %v1844
      %v1861 = vpack.c.b16 %v1847, %v1846
      %v1862 = vpack.c.b16 %v1849, %v1848
      %v1863 = vpack.c.b16 %v1851, %v1850
      %v1864 = vpack.c.b16 %v1853, %v1852
      %v1865 = vpack.c.b16 %v1855, %v1854
      %v1866 = vpack.c.b16 %v1857, %v1856
      %v1867 = vpack.c.b16 %v1859, %v1858
      %v1869 = vsel %vm378, %v1860, 0
      %v1872 = vsel %vm378, %v1861, 0
      %v1875 = vsel %vm378, %v1862, 0
      %v1878 = vsel %vm378, %v1863, 0
      %v1881 = vsel %vm378, %v1864, 0
      %v1884 = vsel %vm378, %v1865, 0
      %v1887 = vsel %vm378, %v1866, 0
      %v1890 = vsel %vm378, %v1867, 0
      %v1893 = vsel %vm403, %v1843, 0
      %1895 = vmatprep.subr.bf16.mxu0 0
      %1896 = vmatpush1.bf16.msra.mxu0 %v1893
      %1897 = vmatprep.subr.bf16.mxu0 0
      %1898 = vmatpush1.bf16.msra.mxu0 0
      %1899 = vmatprep.subr.bf16.mxu0 0
      %1900 = vmatpush1.bf16.msra.mxu0 0
      %1901 = vmatprep.subr.bf16.mxu0 0
      %1902 = vmatpush1.bf16.msra.mxu0 0
      %1903 = vmatprep.subr.bf16.mxu0 0
      %1904 = vmatpush1.bf16.msra.mxu0 0
      %1905 = vmatprep.subr.bf16.mxu0 0
      %1906 = vmatpush1.bf16.msra.mxu0 0
      %1907 = vmatprep.subr.bf16.mxu0 0
      %1908 = vmatpush1.bf16.msra.mxu0 0
      %1909 = vmatprep.subr.bf16.mxu0 0
      %1910 = vmatpush1.bf16.msra.mxu0 0
      %1911 = vmatprep.subr.bf16.mxu0 0
      %1912 = vmatpush1.bf16.msra.mxu0 0
      %1913 = vmatprep.subr.bf16.mxu0 0
      %1914 = vmatpush1.bf16.msra.mxu0 0
      %1915 = vmatprep.subr.bf16.mxu0 0
      %1916 = vmatpush1.bf16.msra.mxu0 0
      %1917 = vmatprep.subr.bf16.mxu0 0
      %1918 = vmatpush1.bf16.msra.mxu0 0
      %1919 = vmatprep.subr.bf16.mxu0 0
      %1920 = vmatpush1.bf16.msra.mxu0 0
      %1921 = vmatprep.subr.bf16.mxu0 0
      %1922 = vmatpush1.bf16.msra.mxu0 0
      %1923 = vmatprep.subr.bf16.mxu0 0
      %1924 = vmatpush1.bf16.msra.mxu0 0
      %1925 = vmatprep.subr.bf16.mxu0 0
      %1926 = vmatpush1.bf16.msra.mxu0 0
      %1927 = vmatprep.mubr.bf16.mxu0 0
      %1928 = vmatmul.mubr.bf16.gmra.mrb[0].mxu0 %v1869
      %v1929 = vpop.f32.mrb[0].mxu0
      %v1930 = vadd.f32 0.0, %v1929
      %v1931 = vpop.f32.mrb[0].mxu0
      %v1932 = vpop.f32.mrb[0].mxu0
      %v1933 = vadd.f32 0.0, %v1932
      %v1934 = vpop.f32.mrb[0].mxu0
      %1935 = vmatprep.mubr.bf16.mxu0 0
      %1936 = vmatmul.mubr.bf16.gmra.mrb[0].mxu0 %v1872
      %v1937 = vpop.f32.mrb[0].mxu0
      %v1938 = vadd.f32 0.0, %v1937
      %v1939 = vpop.f32.mrb[0].mxu0
      %v1940 = vpop.f32.mrb[0].mxu0
      %v1941 = vadd.f32 0.0, %v1940
      %v1942 = vpop.f32.mrb[0].mxu0
      %1943 = vmatprep.mubr.bf16.mxu0 0
      %1944 = vmatmul.mubr.bf16.gmra.mrb[0].mxu0 %v1875
      %v1945 = vpop.f32.mrb[0].mxu0
      %v1946 = vadd.f32 0.0, %v1945
      %v1947 = vpop.f32.mrb[0].mxu0
      %v1948 = vpop.f32.mrb[0].mxu0
      %v1949 = vadd.f32 0.0, %v1948
      %v1950 = vpop.f32.mrb[0].mxu0
      %1951 = vmatprep.mubr.bf16.mxu0 0
      %1952 = vmatmul.mubr.bf16.gmra.mrb[0].mxu0 %v1878
      %v1953 = vpop.f32.mrb[0].mxu0
      %v1954 = vadd.f32 0.0, %v1953
      %v1955 = vpop.f32.mrb[0].mxu0
      %v1956 = vpop.f32.mrb[0].mxu0
      %v1957 = vadd.f32 0.0, %v1956
      %v1958 = vpop.f32.mrb[0].mxu0
      %1959 = vmatprep.mubr.bf16.mxu0 0
      %1960 = vmatmul.mubr.bf16.gmra.mrb[0].mxu0 %v1881
      %v1961 = vpop.f32.mrb[0].mxu0
      %v1962 = vadd.f32 0.0, %v1961
      %v1963 = vpop.f32.mrb[0].mxu0
      %v1964 = vpop.f32.mrb[0].mxu0
      %v1965 = vadd.f32 0.0, %v1964
      %v1966 = vpop.f32.mrb[0].mxu0
      %1967 = vmatprep.mubr.bf16.mxu0 0
      %1968 = vmatmul.mubr.bf16.gmra.mrb[0].mxu0 %v1884
      %v1969 = vpop.f32.mrb[0].mxu0
      %v1970 = vadd.f32 0.0, %v1969
      %v1971 = vpop.f32.mrb[0].mxu0
      %v1972 = vpop.f32.mrb[0].mxu0
      %v1973 = vadd.f32 0.0, %v1972
      %v1974 = vpop.f32.mrb[0].mxu0
      %1975 = vmatprep.mubr.bf16.mxu0 0
      %1976 = vmatmul.mubr.bf16.gmra.mrb[0].mxu0 %v1887
      %v1977 = vpop.f32.mrb[0].mxu0
      %v1978 = vadd.f32 0.0, %v1977
      %v1979 = vpop.f32.mrb[0].mxu0
      %v1980 = vpop.f32.mrb[0].mxu0
      %v1981 = vadd.f32 0.0, %v1980
      %v1982 = vpop.f32.mrb[0].mxu0
      %1983 = vmatprep.mubr.bf16.mxu0 0
      %1984 = vmatmul.mubr.bf16.gmra.mrb[0].mxu0 %v1890
      %v1985 = vpop.f32.mrb[0].mxu0
      %v1986 = vadd.f32 0.0, %v1985
      %v1987 = vpop.f32.mrb[0].mxu0
      %v1988 = vpop.f32.mrb[0].mxu0
      %v1989 = vadd.f32 0.0, %v1988
      %v1990 = vpop.f32.mrb[0].mxu0
      %1991 = vdwg.mxu0
      %v1992 = vadd.f32 %v1722, %v1930
      %v1993 = vadd.f32 %v1723, %v1933
      %v1994 = vadd.f32 %v1724, %v1938
      %v1995 = vadd.f32 %v1725, %v1941
      %v1996 = vadd.f32 %v1726, %v1946
      %v1997 = vadd.f32 %v1727, %v1949
      %v1998 = vadd.f32 %v1728, %v1954
      %v1999 = vadd.f32 %v1729, %v1957
      %v2000 = vadd.f32 %v1730, %v1962
      %v2001 = vadd.f32 %v1731, %v1965
      %v2002 = vadd.f32 %v1732, %v1970
      %v2003 = vadd.f32 %v1733, %v1973
      %v2004 = vadd.f32 %v1734, %v1978
      %v2005 = vadd.f32 %v1735, %v1981
      %v2006 = vadd.f32 %v1736, %v1986
      %v2007 = vadd.f32 %v1737, %v1989
      %v2008 = vld [vmem:[%s1539 + $0xc] sm:$0xf]
      %v2009 = vld [vmem:[%s1539 + $0x10] sm:$0xf]
      %v2010 = vld [vmem:[%s1539 + $0x20] sm:$0xf]
      %v2011 = vld [vmem:[%s1539 + $0x24] sm:$0xf]
      %v2012 = vld [vmem:[%s1539 + $0x34] sm:$0xf]
      %v2013 = vld [vmem:[%s1539 + $0x38] sm:$0xf]
      %v2014 = vld [vmem:[%s1539 + $0x48] sm:$0xf]
      %v2015 = vld [vmem:[%s1539 + $0x4c] sm:$0xf]
      %v2016 = vld [vmem:[%s1539 + $0x5c] sm:$0xf]
      %v2017 = vld [vmem:[%s1539 + $0x60] sm:$0xf]
      %v2018 = vld [vmem:[%s1539 + $0x70] sm:$0xf]
      %v2019 = vld [vmem:[%s1539 + $0x74] sm:$0xf]
      %v2020 = vld [vmem:[%s1539 + $0x84] sm:$0xf]
      %v2021 = vld [vmem:[%s1539 + $0x88] sm:$0xf]
      %v2022 = vld [vmem:[%s1539 + $0x98] sm:$0xf]
      %v2023 = vld [vmem:[%s1539 + $0x9c] sm:$0xf]
      %s2024 = scalar_lea.vmem %s1, 32
      %v2025 = vld [vmem:[%s2024] sm:$0xf]
      %v2042 = vunpack.c.l.b16 %v2008
      %v2043 = vunpack.c.l.b16 %v2009
      %v2044 = vunpack.c.l.b16 %v2010
      %v2045 = vunpack.c.l.b16 %v2011
      %v2046 = vunpack.c.l.b16 %v2012
      %v2047 = vunpack.c.l.b16 %v2013
      %v2048 = vunpack.c.l.b16 %v2014
      %v2049 = vunpack.c.l.b16 %v2015
      %v2050 = vunpack.c.l.b16 %v2016
      %v2051 = vunpack.c.l.b16 %v2017
      %v2052 = vunpack.c.l.b16 %v2018
      %v2053 = vunpack.c.l.b16 %v2019
      %v2054 = vunpack.c.l.b16 %v2020
      %v2055 = vunpack.c.l.b16 %v2021
      %v2056 = vunpack.c.l.b16 %v2022
      %v2057 = vunpack.c.l.b16 %v2023
      %v2058 = vpack.c.b16 %v2043, %v2042
      %v2059 = vpack.c.b16 %v2045, %v2044
      %v2060 = vpack.c.b16 %v2047, %v2046
      %v2061 = vpack.c.b16 %v2049, %v2048
      %v2062 = vpack.c.b16 %v2051, %v2050
      %v2063 = vpack.c.b16 %v2053, %v2052
      %v2064 = vpack.c.b16 %v2055, %v2054
      %v2065 = vpack.c.b16 %v2057, %v2056
      %v2067 = vsel %vm378, %v2058, 0
      %v2070 = vsel %vm378, %v2059, 0
      %v2073 = vsel %vm378, %v2060, 0
      %v2076 = vsel %vm378, %v2061, 0
      %v2079 = vsel %vm378, %v2062, 0
      %v2082 = vsel %vm378, %v2063, 0
      %v2085 = vsel %vm378, %v2064, 0
      %v2088 = vsel %vm378, %v2065, 0
      %v2091 = vsel %vm403, %v2025, 0
      %2093 = vmatprep.subr.bf16.mxu0 0
      %2094 = vmatpush1.bf16.msra.mxu0 %v2091
      %2095 = vmatprep.subr.bf16.mxu0 0
      %2096 = vmatpush1.bf16.msra.mxu0 0
      %2097 = vmatprep.subr.bf16.mxu0 0
      %2098 = vmatpush1.bf16.msra.mxu0 0
      %2099 = vmatprep.subr.bf16.mxu0 0
      %2100 = vmatpush1.bf16.msra.mxu0 0
      %2101 = vmatprep.subr.bf16.mxu0 0
      %2102 = vmatpush1.bf16.msra.mxu0 0
      %2103 = vmatprep.subr.bf16.mxu0 0
      %2104 = vmatpush1.bf16.msra.mxu0 0
      %2105 = vmatprep.subr.bf16.mxu0 0
      %2106 = vmatpush1.bf16.msra.mxu0 0
      %2107 = vmatprep.subr.bf16.mxu0 0
      %2108 = vmatpush1.bf16.msra.mxu0 0
      %2109 = vmatprep.subr.bf16.mxu0 0
      %2110 = vmatpush1.bf16.msra.mxu0 0
      %2111 = vmatprep.subr.bf16.mxu0 0
      %2112 = vmatpush1.bf16.msra.mxu0 0
      %2113 = vmatprep.subr.bf16.mxu0 0
      %2114 = vmatpush1.bf16.msra.mxu0 0
      %2115 = vmatprep.subr.bf16.mxu0 0
      %2116 = vmatpush1.bf16.msra.mxu0 0
      %2117 = vmatprep.subr.bf16.mxu0 0
      %2118 = vmatpush1.bf16.msra.mxu0 0
      %2119 = vmatprep.subr.bf16.mxu0 0
      %2120 = vmatpush1.bf16.msra.mxu0 0
      %2121 = vmatprep.subr.bf16.mxu0 0
      %2122 = vmatpush1.bf16.msra.mxu0 0
      %2123 = vmatprep.subr.bf16.mxu0 0
      %2124 = vmatpush1.bf16.msra.mxu0 0
      %2125 = vmatprep.mubr.bf16.mxu0 0
      %2126 = vmatmul.mubr.bf16.gmra.mrb[0].mxu0 %v2067
      %v2127 = vpop.f32.mrb[0].mxu0
      %v2128 = vadd.f32 0.0, %v2127
      %v2129 = vpop.f32.mrb[0].mxu0
      %v2130 = vpop.f32.mrb[0].mxu0
      %v2131 = vadd.f32 0.0, %v2130
      %v2132 = vpop.f32.mrb[0].mxu0
      %2133 = vmatprep.mubr.bf16.mxu0 0
      %2134 = vmatmul.mubr.bf16.gmra.mrb[0].mxu0 %v2070
      %v2135 = vpop.f32.mrb[0].mxu0
      %v2136 = vadd.f32 0.0, %v2135
      %v2137 = vpop.f32.mrb[0].mxu0
      %v2138 = vpop.f32.mrb[0].mxu0
      %v2139 = vadd.f32 0.0, %v2138
      %v2140 = vpop.f32.mrb[0].mxu0
      %2141 = vmatprep.mubr.bf16.mxu0 0
      %2142 = vmatmul.mubr.bf16.gmra.mrb[0].mxu0 %v2073
      %v2143 = vpop.f32.mrb[0].mxu0
      %v2144 = vadd.f32 0.0, %v2143
      %v2145 = vpop.f32.mrb[0].mxu0
      %v2146 = vpop.f32.mrb[0].mxu0
      %v2147 = vadd.f32 0.0, %v2146
      %v2148 = vpop.f32.mrb[0].mxu0
      %2149 = vmatprep.mubr.bf16.mxu0 0
      %2150 = vmatmul.mubr.bf16.gmra.mrb[0].mxu0 %v2076
      %v2151 = vpop.f32.mrb[0].mxu0
      %v2152 = vadd.f32 0.0, %v2151
      %v2153 = vpop.f32.mrb[0].mxu0
      %v2154 = vpop.f32.mrb[0].mxu0
      %v2155 = vadd.f32 0.0, %v2154
      %v2156 = vpop.f32.mrb[0].mxu0
      %2157 = vmatprep.mubr.bf16.mxu0 0
      %2158 = vmatmul.mubr.bf16.gmra.mrb[0].mxu0 %v2079
      %v2159 = vpop.f32.mrb[0].mxu0
      %v2160 = vadd.f32 0.0, %v2159
      %v2161 = vpop.f32.mrb[0].mxu0
      %v2162 = vpop.f32.mrb[0].mxu0
      %v2163 = vadd.f32 0.0, %v2162
      %v2164 = vpop.f32.mrb[0].mxu0
      %2165 = vmatprep.mubr.bf16.mxu0 0
      %2166 = vmatmul.mubr.bf16.gmra.mrb[0].mxu0 %v2082
      %v2167 = vpop.f32.mrb[0].mxu0
      %v2168 = vadd.f32 0.0, %v2167
      %v2169 = vpop.f32.mrb[0].mxu0
      %v2170 = vpop.f32.mrb[0].mxu0
      %v2171 = vadd.f32 0.0, %v2170
      %v2172 = vpop.f32.mrb[0].mxu0
      %2173 = vmatprep.mubr.bf16.mxu0 0
      %2174 = vmatmul.mubr.bf16.gmra.mrb[0].mxu0 %v2085
      %v2175 = vpop.f32.mrb[0].mxu0
      %v2176 = vadd.f32 0.0, %v2175
      %v2177 = vpop.f32.mrb[0].mxu0
      %v2178 = vpop.f32.mrb[0].mxu0
      %v2179 = vadd.f32 0.0, %v2178
      %v2180 = vpop.f32.mrb[0].mxu0
      %2181 = vmatprep.mubr.bf16.mxu0 0
      %2182 = vmatmul.mubr.bf16.gmra.mrb[0].mxu0 %v2088
      %v2183 = vpop.f32.mrb[0].mxu0
      %v2184 = vadd.f32 0.0, %v2183
      %v2185 = vpop.f32.mrb[0].mxu0
      %v2186 = vpop.f32.mrb[0].mxu0
      %v2187 = vadd.f32 0.0, %v2186
      %v2188 = vpop.f32.mrb[0].mxu0
      %2189 = vdwg.mxu0
      %v2190 = vadd.f32 %v1992, %v2128
      %v2191 = vadd.f32 %v1993, %v2131
      %v2192 = vadd.f32 %v1994, %v2136
      %v2193 = vadd.f32 %v1995, %v2139
      %v2194 = vadd.f32 %v1996, %v2144
      %v2195 = vadd.f32 %v1997, %v2147
      %v2196 = vadd.f32 %v1998, %v2152
      %v2197 = vadd.f32 %v1999, %v2155
      %v2198 = vadd.f32 %v2000, %v2160
      %v2199 = vadd.f32 %v2001, %v2163
      %v2200 = vadd.f32 %v2002, %v2168
      %v2201 = vadd.f32 %v2003, %v2171
      %v2202 = vadd.f32 %v2004, %v2176
      %v2203 = vadd.f32 %v2005, %v2179
      %v2204 = vadd.f32 %v2006, %v2184
      %v2205 = vadd.f32 %v2007, %v2187
      %v2206 = vld [vmem:[%s2] sm:$0x1]
      %v2208 = vlaneseq
      %v2209 = vshrl.u32 %v2208, 7
      %v2210 = vsub.s32 0, %v2209
      %v2211 = vrot.slane %v2206, %v2210
      %v2213 = vmul.f32 %v2190, %v2211
      %v2214 = vmul.f32 %v2191, %v2211
      %v2215 = vmul.f32 %v2192, %v2211
      %v2216 = vmul.f32 %v2193, %v2211
      %v2217 = vmul.f32 %v2194, %v2211
      %v2218 = vmul.f32 %v2195, %v2211
      %v2219 = vmul.f32 %v2196, %v2211
      %v2220 = vmul.f32 %v2197, %v2211
      %v2221 = vmul.f32 %v2198, %v2211
      %v2222 = vmul.f32 %v2199, %v2211
      %v2223 = vmul.f32 %v2200, %v2211
      %v2224 = vmul.f32 %v2201, %v2211
      %v2225 = vmul.f32 %v2202, %v2211
      %v2226 = vmul.f32 %v2203, %v2211
      %v2227 = vmul.f32 %v2204, %v2211
      %v2228 = vmul.f32 %v2205, %v2211
      %v2229 = vld [vmem:[%s3] sm:$0x1]
      %v2231 = vlaneseq
      %v2232 = vshrl.u32 %v2231, 7
      %v2233 = vsub.s32 0, %v2232
      %v2234 = vrot.slane %v2229, %v2233
      %v2236 = vadd.f32 %v2213, %v2234
      %v2237 = vadd.f32 %v2214, %v2234
      %v2238 = vadd.f32 %v2215, %v2234
      %v2239 = vadd.f32 %v2216, %v2234
      %v2240 = vadd.f32 %v2217, %v2234
      %v2241 = vadd.f32 %v2218, %v2234
      %v2242 = vadd.f32 %v2219, %v2234
      %v2243 = vadd.f32 %v2220, %v2234
      %v2244 = vadd.f32 %v2221, %v2234
      %v2245 = vadd.f32 %v2222, %v2234
      %v2246 = vadd.f32 %v2223, %v2234
      %v2247 = vadd.f32 %v2224, %v2234
      %v2248 = vadd.f32 %v2225, %v2234
      %v2249 = vadd.f32 %v2226, %v2234
      %v2250 = vadd.f32 %v2227, %v2234
      %v2251 = vadd.f32 %v2228, %v2234
      %v2252 = vmax.f32 %v2236, 0.0
      %v2253 = vmax.f32 %v2237, 0.0
      %v2254 = vmax.f32 %v2238, 0.0
      %v2255 = vmax.f32 %v2239, 0.0
      %v2256 = vmax.f32 %v2240, 0.0
      %v2257 = vmax.f32 %v2241, 0.0
      %v2258 = vmax.f32 %v2242, 0.0
      %v2259 = vmax.f32 %v2243, 0.0
      %v2260 = vmax.f32 %v2244, 0.0
      %v2261 = vmax.f32 %v2245, 0.0
      %v2262 = vmax.f32 %v2246, 0.0
      %v2263 = vmax.f32 %v2247, 0.0
      %v2264 = vmax.f32 %v2248, 0.0
      %v2265 = vmax.f32 %v2249, 0.0
      %v2266 = vmax.f32 %v2250, 0.0
      %v2267 = vmax.f32 %v2251, 0.0
      %v2268 = vpack.c.bf16 %v2253, %v2252
      %v2269 = vpack.c.bf16 %v2255, %v2254
      %v2270 = vpack.c.bf16 %v2257, %v2256
      %v2271 = vpack.c.bf16 %v2259, %v2258
      %v2272 = vpack.c.bf16 %v2261, %v2260
      %v2273 = vpack.c.bf16 %v2263, %v2262
      %v2274 = vpack.c.bf16 %v2265, %v2264
      %v2275 = vpack.c.bf16 %v2267, %v2266
      %v2284 = vunpack.c.l.b16 %v2268
      %v2285 = vunpack.c.h.b16 %v2268
      %v2286 = vunpack.c.l.b16 %v2269
      %v2287 = vunpack.c.h.b16 %v2269
      %v2288 = vunpack.c.l.b16 %v2270
      %v2289 = vunpack.c.h.b16 %v2270
      %v2290 = vunpack.c.l.b16 %v2271
      %v2291 = vunpack.c.h.b16 %v2271
      %v2292 = vunpack.c.l.b16 %v2272
      %v2293 = vunpack.c.h.b16 %v2272
      %v2294 = vunpack.c.l.b16 %v2273
      %v2295 = vunpack.c.h.b16 %v2273
      %v2296 = vunpack.c.l.b16 %v2274
      %v2297 = vunpack.c.h.b16 %v2274
      %v2298 = vunpack.c.l.b16 %v2275
      %v2299 = vunpack.c.h.b16 %v2275
      %v2300 = vpack.c.b16 %v2284, %v2284
      %v2301 = vpack.c.b16 %v2285, %v2285
      %v2302 = vpack.c.b16 %v2286, %v2286
      %v2303 = vpack.c.b16 %v2287, %v2287
      %v2304 = vpack.c.b16 %v2288, %v2288
      %v2305 = vpack.c.b16 %v2289, %v2289
      %v2306 = vpack.c.b16 %v2290, %v2290
      %v2307 = vpack.c.b16 %v2291, %v2291
      %v2308 = vpack.c.b16 %v2292, %v2292
      %v2309 = vpack.c.b16 %v2293, %v2293
      %v2310 = vpack.c.b16 %v2294, %v2294
      %v2311 = vpack.c.b16 %v2295, %v2295
      %v2312 = vpack.c.b16 %v2296, %v2296
      %v2313 = vpack.c.b16 %v2297, %v2297
      %v2314 = vpack.c.b16 %v2298, %v2298
      %v2315 = vpack.c.b16 %v2299, %v2299
      %vm2332 = vcmask 60416
      %2333 = vst.msk [vmem:[%s221] sm:$0xf] %vm2332, %v2300
      %2334 = vst.msk [vmem:[%s221 + $0x4] sm:$0xf] %vm2332, %v2301
      %2335 = vst.msk [vmem:[%s221 + $0x8] sm:$0xf] %vm2332, %v2302
      %2336 = vst.msk [vmem:[%s221 + $0xc] sm:$0xf] %vm2332, %v2303
      %2337 = vst.msk [vmem:[%s221 + $0x10] sm:$0xf] %vm2332, %v2304
      %2338 = vst.msk [vmem:[%s221 + $0x14] sm:$0xf] %vm2332, %v2305
      %2339 = vst.msk [vmem:[%s221 + $0x18] sm:$0xf] %vm2332, %v2306
      %2340 = vst.msk [vmem:[%s221 + $0x1c] sm:$0xf] %vm2332, %v2307
      %2341 = vst.msk [vmem:[%s221 + $0x20] sm:$0xf] %vm2332, %v2308
      %2342 = vst.msk [vmem:[%s221 + $0x24] sm:$0xf] %vm2332, %v2309
      %2343 = vst.msk [vmem:[%s221 + $0x28] sm:$0xf] %vm2332, %v2310
      %2344 = vst.msk [vmem:[%s221 + $0x2c] sm:$0xf] %vm2332, %v2311
      %2345 = vst.msk [vmem:[%s221 + $0x30] sm:$0xf] %vm2332, %v2312
      %2346 = vst.msk [vmem:[%s221 + $0x34] sm:$0xf] %vm2332, %v2313
      %2347 = vst.msk [vmem:[%s221 + $0x38] sm:$0xf] %vm2332, %v2314
      %2348 = vst.msk [vmem:[%s221 + $0x3c] sm:$0xf] %vm2332, %v2315
      %s2349 = smul.u32 8, %s20
      %p2350 = scmp.lt.s32.totalorder %s19, 1
      %s2351 = scalar_select %p2350, %s19, 1
      %p2352 = scmp.lt.s32.totalorder %s2349, 15
      %s2353 = scalar_select %p2352, %s2349, 15
      %s2354 = smul.addr %s2353, 2
      %s2355 = smul.addr %s2351, 32
      %s2356 = sadd.s32 %s2354, %s2355
      %s2357 = smul.addr %s2356, 4
      %s2358 = scalar_lea.vmem %s4, %s2357
      // Predicated region
      $region37: #{easpp_forward.14} parent=35 // pred_check
        %p2359 = pneg %p136
      $region38: #{easpp_forward.14} parent=35 // pred_check_branch
        %2361 = sbr.rel (%p2359) target = $region40
      $region39: #{easpp_forward.14} parent=35 // pred_region
        %s2362 = smul.u32 8, %s20
      $region40: #{easpp_forward.14} parent=35 // pred_fallthru
        _
    $region36: #{easpp_forward.14} parent=5 // pred_fallthru
      _
    %p2363 = scmp.le.s32.totalorder 2, %s10
    // Predicated region
    $region41: #{easpp_forward.14} parent=5 // pred_check
      %p2364 = pneg %p2363
    $region42: #{easpp_forward.14} parent=5 // pred_check_branch
      %2366 = sbr.rel (%p2364) target = $region44
    $region43: #{easpp_forward.14} parent=5 // pred_region
      %s2367 = ssub.s32 %s10, 2
      // Predicated region
      $region45: #{easpp_forward.14} parent=43 // pred_check
        %p2368 = pneg %p142
      $region46: #{easpp_forward.14} parent=43 // pred_check_branch
        %2370 = sbr.rel (%p2368) target = $region48
      $region47: #{easpp_forward.14} parent=43 // pred_region
        %s2371 = smul.u32 8, %s22
        %p2372 = scmp.lt.s32.totalorder %s21, 1
        %s2373 = scalar_select %p2372, %s21, 1
        %p2374 = scmp.lt.s32.totalorder %s2371, 15
        %s2375 = scalar_select %p2374, %s2371, 15
        %s2376 = smul.addr %s2375, 2
        %s2377 = smul.addr %s2373, 32
        %s2378 = sadd.s32 %s2376, %s2377
        %s2379 = smul.addr %s2378, 4
        %s2380 = scalar_lea.vmem %s4, %s2379
      $region48: #{easpp_forward.14} parent=43 // pred_fallthru
        _
    $region44: #{easpp_forward.14} parent=5 // pred_fallthru
      _
  $region6: #{easpp_forward.14} parent=0 // loop_footer
    %s14 = sadd.s32 1, %s10
  $region7: #{easpp_forward.14} parent=0 // loop_footer_branch
    %9 = sbr.rel target = $region3
  $region8: #{easpp_forward.14} parent=0 // loop_exit
    _

// kernel: easpp_forward.12
$region0: #{easpp_forward.12}
  #allocation0 [shape = 'u32[]', space=smem, size = 0x4, offset = 0x4, fixed_abs, tag = 'smem constant byte address 0x4 - core index']
  #allocation1 [shape = 'u32[144,128]{1,0:T(1,128)}', space=vmem, size = 0x12000, scoped, tag = 'internal scratch']
  %s0 = inlined_call_operand.vmem [shape: bf16[2,28,28,8], index: 0, kind: input, shape index: {}]
  %s1 = inlined_call_operand.vmem [shape: bf16[9,8,8], index: 1, kind: input, shape index: {}]
  %s2 = inlined_call_operand.vmem [shape: f32[1,8], index: 2, kind: input, shape index: {}]
  %s3 = inlined_call_operand.vmem [shape: f32[1,8], index: 3, kind: input, shape index: {}]
  %s4 = inlined_call_operand.vmem [shape: bf16[2,16,16,8], index: 4, kind: output, shape index: {}]
  %s5 = sld [smem:[#allocation0]]
  $region49: #{easpp_forward.12} parent=0
    _
  %s7 = ssub.s32 1, %s5
  %s8 = scalar_select 0, %s7, %s5
  loop: start=0, step=1, limit=6
  $region2: #{easpp_forward.12} parent=0 // loop_pre_header
    _
  $region3: #{easpp_forward.12} parent=0 // loop_header
    %s10 = sphi 0, %s14
    %p11 = scmp.ge.s32.totalorder %s10, 6
    %s17 = sphi 0, %s29
    %s18 = sphi 0, %s25
    %s19 = sphi 0, %s17
    %s20 = sphi 0, %s18
    %s21 = sphi 0, %s19
    %s22 = sphi 0, %s20
    %s32 = sphi 0, %s34
    %s35 = sphi 0, %s32
    %s36 = sphi 0, %s35
    %s52 = sphi 0, %s36
    %s56 = sphi 0, %s56
    %s58 = sphi 0, %s56
    %s59 = sphi 0, %s58
    %s73 = sphi 0, %s59
    %s77 = sphi 0, %s77
    %s79 = sphi 0, %s77
    %s80 = sphi 0, %s79
    %s94 = sphi 0, %s80
    %s98 = sphi 0, %s98
    %s100 = sphi 0, %s98
    %s101 = sphi 0, %s100
    %s115 = sphi 0, %s101
    %s123 = sphi 0, %s125
    %s126 = sphi 0, %s123
    %s127 = sphi 0, %s126
    %s143 = sphi 0, %s127
  $region4: #{easpp_forward.12} parent=0 // loop_header_branch
    %13 = sbr.rel (%p11) target = $region8
  $region5: #{easpp_forward.12} parent=0 // loop_body
    %s15 = ssub.s32 %s10, 1
    %s16 = ssub.s32 %s10, 2
    %s23 = sadd.s32 1, %s18
    %p24 = scmp.ge.s32.totalorder %s23, 2
    %s25 = scalar_select %p24, 0, %s23
    %s26 = sadd.s32 1, %s17
    %s27 = scalar_select %p24, %s26, %s17
    %p28 = scmp.ge.s32.totalorder %s27, 2
    %s29 = scalar_select %p28, 0, %s27
    %s30 = ssub.s32 %s17, %s29
    %p31 = scmp.eq.s32.totalorder %s30, 0
    %s33 = sadd.s32 %s32, 1
    %s34 = scalar_select %p31, %s32, %s33
    %p37 = pneg %p31
    %p38 = scmp.eq.s32.totalorder %s10, 3
    %p39 = por %p37, %p38
    %p40 = scmp.ne.s32.totalorder %s32, %s35
    %p41 = scmp.eq.s32.totalorder %s10, 0
    %p42 = por %p40, %p41
    %p43 = scmp.ne.s32.totalorder %s32, %s35
    %p44 = scmp.eq.s32.totalorder %s15, 3
    %p45 = por %p43, %p44
    %p46 = scmp.ne.s32.totalorder %s35, %s36
    %p47 = scmp.eq.s32.totalorder %s15, 0
    %p48 = por %p46, %p47
    %p49 = scmp.ne.s32.totalorder %s35, %s36
    %p50 = scmp.eq.s32.totalorder %s16, 3
    %p51 = por %p49, %p50
    %p53 = scmp.ne.s32.totalorder %s36, %s52
    %p54 = scmp.eq.s32.totalorder %s16, 0
    %p55 = por %p53, %p54
    %s57 = sadd.s32 %s56, 1
    %p60 = scmp.eq.s32.totalorder %s10, 3
    %p61 = scmp.ne.s32.totalorder %s56, %s58
    %p62 = scmp.eq.s32.totalorder %s10, 0
    %p63 = por %p61, %p62
    %p64 = scmp.ne.s32.totalorder %s56, %s58
    %p65 = scmp.eq.s32.totalorder %s15, 3
    %p66 = por %p64, %p65
    %p67 = scmp.ne.s32.totalorder %s58, %s59
    %p68 = scmp.eq.s32.totalorder %s15, 0
    %p69 = por %p67, %p68
    %p70 = scmp.ne.s32.totalorder %s58, %s59
    %p71 = scmp.eq.s32.totalorder %s16, 3
    %p72 = por %p70, %p71
    %p74 = scmp.ne.s32.totalorder %s59, %s73
    %p75 = scmp.eq.s32.totalorder %s16, 0
    %p76 = por %p74, %p75
    %s78 = sadd.s32 %s77, 1
    %p81 = scmp.eq.s32.totalorder %s10, 3
    %p82 = scmp.ne.s32.totalorder %s77, %s79
    %p83 = scmp.eq.s32.totalorder %s10, 0
    %p84 = por %p82, %p83
    %p85 = scmp.ne.s32.totalorder %s77, %s79
    %p86 = scmp.eq.s32.totalorder %s15, 3
    %p87 = por %p85, %p86
    %p88 = scmp.ne.s32.totalorder %s79, %s80
    %p89 = scmp.eq.s32.totalorder %s15, 0
    %p90 = por %p88, %p89
    %p91 = scmp.ne.s32.totalorder %s79, %s80
    %p92 = scmp.eq.s32.totalorder %s16, 3
    %p93 = por %p91, %p92
    %p95 = scmp.ne.s32.totalorder %s80, %s94
    %p96 = scmp.eq.s32.totalorder %s16, 0
    %p97 = por %p95, %p96
    %s99 = sadd.s32 %s98, 1
    %p102 = scmp.eq.s32.totalorder %s10, 3
    %p103 = scmp.ne.s32.totalorder %s98, %s100
    %p104 = scmp.eq.s32.totalorder %s10, 0
    %p105 = por %p103, %p104
    %p106 = scmp.ne.s32.totalorder %s98, %s100
    %p107 = scmp.eq.s32.totalorder %s15, 3
    %p108 = por %p106, %p107
    %p109 = scmp.ne.s32.totalorder %s100, %s101
    %p110 = scmp.eq.s32.totalorder %s15, 0
    %p111 = por %p109, %p110
    %p112 = scmp.ne.s32.totalorder %s100, %s101
    %p113 = scmp.eq.s32.totalorder %s16, 3
    %p114 = por %p112, %p113
    %p116 = scmp.ne.s32.totalorder %s101, %s115
    %p117 = scmp.eq.s32.totalorder %s16, 0
    %p118 = por %p116, %p117
    %s119 = ssub.s32 %s17, %s29
    %s120 = ssub.s32 %s18, %s25
    %s121 = sor.u32 %s119, %s120
    %p122 = scmp.eq.s32.totalorder %s121, 0
    %s124 = sadd.s32 %s123, 1
    %s125 = scalar_select %p122, %s123, %s124
    %p128 = pneg %p122
    %p129 = scmp.eq.s32.totalorder %s10, 3
    %p130 = por %p128, %p129
    %p131 = scmp.ne.s32.totalorder %s123, %s126
    %p132 = scmp.eq.s32.totalorder %s10, 0
    %p133 = por %p131, %p132
    %p134 = scmp.ne.s32.totalorder %s123, %s126
    %p135 = scmp.eq.s32.totalorder %s15, 3
    %p136 = por %p134, %p135
    %p137 = scmp.ne.s32.totalorder %s126, %s127
    %p138 = scmp.eq.s32.totalorder %s15, 0
    %p139 = por %p137, %p138
    %p140 = scmp.ne.s32.totalorder %s126, %s127
    %p141 = scmp.eq.s32.totalorder %s16, 3
    %p142 = por %p140, %p141
    %p144 = scmp.ne.s32.totalorder %s127, %s143
    %p145 = scmp.eq.s32.totalorder %s16, 0
    %p146 = por %p144, %p145
    %p147 = scmp.le.s32.totalorder 1, %s10
    %p148 = scmp.lt.s32.totalorder %s10, 5
    %p149 = pnand %p147, %p148
    %p150 = pneg %p149
    // Predicated region
    $region9: #{easpp_forward.12} parent=5 // pred_check
      _
    $region10: #{easpp_forward.12} parent=5 // pred_check_branch
      %152 = sbr.rel (%p149) target = $region12
    $region11: #{easpp_forward.12} parent=5 // pred_region
      %s153 = ssub.s32 %s10, 1
      // Predicated region
      $region13: #{easpp_forward.12} parent=11 // pred_check
        %p154 = pneg %p69
      $region14: #{easpp_forward.12} parent=11 // pred_check_branch
        %156 = sbr.rel (%p154) target = $region16
      $region15: #{easpp_forward.12} parent=11 // pred_region
        _
      $region16: #{easpp_forward.12} parent=11 // pred_fallthru
        _
      // Predicated region
      $region17: #{easpp_forward.12} parent=11 // pred_check
        %p157 = pneg %p90
      $region18: #{easpp_forward.12} parent=11 // pred_check_branch
        %159 = sbr.rel (%p157) target = $region20
      $region19: #{easpp_forward.12} parent=11 // pred_region
        _
      $region20: #{easpp_forward.12} parent=11 // pred_fallthru
        _
      // Predicated region
      $region21: #{easpp_forward.12} parent=11 // pred_check
        %p160 = pneg %p111
      $region22: #{easpp_forward.12} parent=11 // pred_check_branch
        %162 = sbr.rel (%p160) target = $region24
      $region23: #{easpp_forward.12} parent=11 // pred_region
        _
      $region24: #{easpp_forward.12} parent=11 // pred_fallthru
        _
    $region12: #{easpp_forward.12} parent=5 // pred_fallthru
      _
    %p163 = scmp.lt.s32.totalorder %s10, 4
    // Predicated region
    $region25: #{easpp_forward.12} parent=5 // pred_check
      %p164 = pneg %p163
    $region26: #{easpp_forward.12} parent=5 // pred_check_branch
      %166 = sbr.rel (%p164) target = $region28
    $region27: #{easpp_forward.12} parent=5 // pred_region
      // Predicated region
      $region29: #{easpp_forward.12} parent=27 // pred_check
        %p167 = pneg %p42
      $region30: #{easpp_forward.12} parent=27 // pred_check_branch
        %169 = sbr.rel (%p167) target = $region32
      $region31: #{easpp_forward.12} parent=27 // pred_region
        %p170 = scmp.lt.s32.totalorder %s17, 1
        %s171 = scalar_select %p170, %s17, 1
        %s172 = smul.addr %s171, 112
        %s173 = smul.addr %s172, 4
        %s174 = scalar_lea.vmem %s0, %s173
      $region32: #{easpp_forward.12} parent=27 // pred_fallthru
        _
    $region28: #{easpp_forward.12} parent=5 // pred_fallthru
      _
    %p175 = scmp.le.s32.totalorder 1, %s10
    %p176 = scmp.lt.s32.totalorder %s10, 5
    %p177 = pnand %p175, %p176
    %p178 = pneg %p177
    // Predicated region
    $region33: #{easpp_forward.12} parent=5 // pred_check
      _
    $region34: #{easpp_forward.12} parent=5 // pred_check_branch
      %180 = sbr.rel (%p177) target = $region36
    $region35: #{easpp_forward.12} parent=5 // pred_region
      %s181 = ssub.s32 %s10, 1
      %p182 = scmp.lt.s32.totalorder %s19, 1
      %s183 = scalar_select %p182, %s19, 1
      %s184 = smul.addr %s183, 112
      %s185 = smul.addr %s184, 4
      %s186 = scalar_lea.vmem %s0, %s185
      %p187 = pneg %p48
      %p188 = pneg %p45
      %p189 = pneg %p69
      %p190 = pneg %p66
      %p191 = pneg %p90
      %p192 = pneg %p87
      %p193 = pneg %p111
      %p194 = pneg %p108
      %p195 = pneg %p139
      %p196 = pneg %p136
      %s197 = smul.u32 8, %s20
      %p198 = scmp.lt.s32.totalorder %s19, 1
      %s199 = scalar_select %p198, %s19, 1
      %p200 = scmp.lt.s32.totalorder %s197, 15
      %s201 = scalar_select %p200, %s197, 15
      %s202 = smul.addr %s201, 2
      %s203 = smul.addr %s199, 32
      %s204 = sadd.s32 %s202, %s203
      %s205 = smul.addr %s204, 4
      %s206 = scalar_lea.vmem %s4, %s205
      %p207 = scmp.lt.s32.totalorder %s19, 1
      %s208 = scalar_select %p207, %s19, 1
      %s209 = smul.addr %s208, 112
      %s210 = smul.addr %s209, 4
      %s211 = scalar_lea.vmem %s0, %s210
      %s212 = smul.u32 8, %s20
      %p213 = scmp.lt.s32.totalorder %s19, 1
      %s214 = scalar_select %p213, %s19, 1
      %p215 = scmp.lt.s32.totalorder %s212, 15
      %s216 = scalar_select %p215, %s212, 15
      %s217 = smul.addr %s216, 2
      %s218 = smul.addr %s214, 32
      %s219 = sadd.s32 %s217, %s218
      %s220 = smul.addr %s219, 4
      %s221 = scalar_lea.vmem %s4, %s220
      %s222 = smul.u32 8, %s20
      %s224 = smul.u32 %s20, 8
      %s225 = smul.u32 %s224, 4
      %s226 = smul.addr %s225, 4
      %s227 = scalar_lea.vmem %s211, %s226
      %v228 = vld [vmem:[%s227] sm:$0xf]
      %v229 = vld [vmem:[%s227 + $0x4] sm:$0xf]
      %v230 = vld [vmem:[%s227 + $0x10] sm:$0xf]
      %v231 = vld [vmem:[%s227 + $0x14] sm:$0xf]
      %v232 = vld [vmem:[%s227 + $0x20] sm:$0xf]
      %v233 = vld [vmem:[%s227 + $0x24] sm:$0xf]
      %v234 = vld [vmem:[%s227 + $0x30] sm:$0xf]
      %v235 = vld [vmem:[%s227 + $0x34] sm:$0xf]
      %v236 = vld [vmem:[%s227 + $0x40] sm:$0xf]
      %v237 = vld [vmem:[%s227 + $0x44] sm:$0xf]
      %v238 = vld [vmem:[%s227 + $0x50] sm:$0xf]
      %v239 = vld [vmem:[%s227 + $0x54] sm:$0xf]
      %v240 = vld [vmem:[%s227 + $0x60] sm:$0xf]
      %v241 = vld [vmem:[%s227 + $0x64] sm:$0xf]
      %v242 = vld [vmem:[%s227 + $0x70] sm:$0xf]
      %v243 = vld [vmem:[%s227 + $0x74] sm:$0xf]
      %v244 = vld [vmem:[%s1] sm:$0xf]
      %v245 = vld [vmem:[%s227] sm:$0x8]
      %v246 = vld [vmem:[%s227 + $0x8] sm:$0x7]
      %v247 = vld [vmem:[%s227 + $0x10] sm:$0x8]
      %v248 = vld [vmem:[%s227 + $0x18] sm:$0x7]
      %v249 = vld [vmem:[%s227 + $0x20] sm:$0x8]
      %v250 = vld [vmem:[%s227 + $0x28] sm:$0x7]
      %v251 = vld [vmem:[%s227 + $0x30] sm:$0x8]
      %v252 = vld [vmem:[%s227 + $0x38] sm:$0x7]
      %v253 = vld [vmem:[%s227 + $0x40] sm:$0x8]
      %v254 = vld [vmem:[%s227 + $0x48] sm:$0x7]
      %v255 = vld [vmem:[%s227 + $0x50] sm:$0x8]
      %v256 = vld [vmem:[%s227 + $0x58] sm:$0x7]
      %v257 = vld [vmem:[%s227 + $0x60] sm:$0x8]
      %v258 = vld [vmem:[%s227 + $0x68] sm:$0x7]
      %v259 = vld [vmem:[%s227 + $0x70] sm:$0x8]
      %v260 = vld [vmem:[%s227 + $0x78] sm:$0x7]
      %vm285 = vcmask 1040384
      %vm286 = vcmask 1044484
      %vm287 = vmor %vm285, %vm286
      %v288 = vrot.slane %v245, 7
      %v289 = vrot.slane %v288, 4
      %v290 = vrot.slane %v229, 7
      %v291 = vsel %vm287, %v289, %v290
      %v292 = vrot.slane %v290, 4
      %v293 = vrot.slane %v246, 7
      %v294 = vsel %vm287, %v292, %v293
      %v295 = vrot.slane %v247, 7
      %v296 = vrot.slane %v295, 4
      %v297 = vrot.slane %v231, 7
      %v298 = vsel %vm287, %v296, %v297
      %v299 = vrot.slane %v297, 4
      %v300 = vrot.slane %v248, 7
      %v301 = vsel %vm287, %v299, %v300
      %v302 = vrot.slane %v249, 7
      %v303 = vrot.slane %v302, 4
      %v304 = vrot.slane %v233, 7
      %v305 = vsel %vm287, %v303, %v304
      %v306 = vrot.slane %v304, 4
      %v307 = vrot.slane %v250, 7
      %v308 = vsel %vm287, %v306, %v307
      %v309 = vrot.slane %v251, 7
      %v310 = vrot.slane %v309, 4
      %v311 = vrot.slane %v235, 7
      %v312 = vsel %vm287, %v310, %v311
      %v313 = vrot.slane %v311, 4
      %v314 = vrot.slane %v252, 7
      %v315 = vsel %vm287, %v313, %v314
      %v316 = vrot.slane %v253, 7
      %v317 = vrot.slane %v316, 4
      %v318 = vrot.slane %v237, 7
      %v319 = vsel %vm287, %v317, %v318
      %v320 = vrot.slane %v318, 4
      %v321 = vrot.slane %v254, 7
      %v322 = vsel %vm287, %v320, %v321
      %v323 = vrot.slane %v255, 7
      %v324 = vrot.slane %v323, 4
      %v325 = vrot.slane %v239, 7
      %v326 = vsel %vm287, %v324, %v325
      %v327 = vrot.slane %v325, 4
      %v328 = vrot.slane %v256, 7
      %v329 = vsel %vm287, %v327, %v328
      %v330 = vrot.slane %v257, 7
      %v331 = vrot.slane %v330, 4
      %v332 = vrot.slane %v241, 7
      %v333 = vsel %vm287, %v331, %v332
      %v334 = vrot.slane %v332, 4
      %v335 = vrot.slane %v258, 7
      %v336 = vsel %vm287, %v334, %v335
      %v337 = vrot.slane %v259, 7
      %v338 = vrot.slane %v337, 4
      %v339 = vrot.slane %v243, 7
      %v340 = vsel %vm287, %v338, %v339
      %v341 = vrot.slane %v339, 4
      %v342 = vrot.slane %v260, 7
      %v343 = vsel %vm287, %v341, %v342
      %s344 = scalar_lea.vmem %s1, 4
      %v345 = vld [vmem:[%s344] sm:$0xf]
      %v346 = vunpack.c.l.b16 %v291
      %v347 = vunpack.c.l.b16 %v294
      %v348 = vunpack.c.l.b16 %v298
      %v349 = vunpack.c.l.b16 %v301
      %v350 = vunpack.c.l.b16 %v305
      %v351 = vunpack.c.l.b16 %v308
      %v352 = vunpack.c.l.b16 %v312
      %v353 = vunpack.c.l.b16 %v315
      %v354 = vunpack.c.l.b16 %v319
      %v355 = vunpack.c.l.b16 %v322
      %v356 = vunpack.c.l.b16 %v326
      %v357 = vunpack.c.l.b16 %v329
      %v358 = vunpack.c.l.b16 %v333
      %v359 = vunpack.c.l.b16 %v336
      %v360 = vunpack.c.l.b16 %v340
      %v361 = vunpack.c.l.b16 %v343
      %v362 = vpack.c.b16 %v347, %v346
      %v363 = vpack.c.b16 %v349, %v348
      %v364 = vpack.c.b16 %v351, %v350
      %v365 = vpack.c.b16 %v353, %v352
      %v366 = vpack.c.b16 %v355, %v354
      %v367 = vpack.c.b16 %v357, %v356
      %v368 = vpack.c.b16 %v359, %v358
      %v369 = vpack.c.b16 %v361, %v360
      %vm370 = vcmask 64512
      %v372 = vsel %vm370, %v362, 0
      %v375 = vsel %vm370, %v363, 0
      %v378 = vsel %vm370, %v364, 0
      %v381 = vsel %vm370, %v365, 0
      %v384 = vsel %vm370, %v366, 0
      %v387 = vsel %vm370, %v367, 0
      %v390 = vsel %vm370, %v368, 0
      %v393 = vsel %vm370, %v369, 0
      %vm395 = vcmask 1043456
      %v397 = vsel %vm395, %v345, 0
      %399 = vmatprep.subr.bf16.mxu0 0
      %400 = vmatpush1.bf16.msra.mxu0 %v397
      %401 = vmatprep.subr.bf16.mxu0 0
      %402 = vmatpush1.bf16.msra.mxu0 0
      %403 = vmatprep.subr.bf16.mxu0 0
      %404 = vmatpush1.bf16.msra.mxu0 0
      %405 = vmatprep.subr.bf16.mxu0 0
      %406 = vmatpush1.bf16.msra.mxu0 0
      %407 = vmatprep.subr.bf16.mxu0 0
      %408 = vmatpush1.bf16.msra.mxu0 0
      %409 = vmatprep.subr.bf16.mxu0 0
      %410 = vmatpush1.bf16.msra.mxu0 0
      %411 = vmatprep.subr.bf16.mxu0 0
      %412 = vmatpush1.bf16.msra.mxu0 0
      %413 = vmatprep.subr.bf16.mxu0 0
      %414 = vmatpush1.bf16.msra.mxu0 0
      %415 = vmatprep.subr.bf16.mxu0 0
      %416 = vmatpush1.bf16.msra.mxu0 0
      %417 = vmatprep.subr.bf16.mxu0 0
      %418 = vmatpush1.bf16.msra.mxu0 0
      %419 = vmatprep.subr.bf16.mxu0 0
      %420 = vmatpush1.bf16.msra.mxu0 0
      %421 = vmatprep.subr.bf16.mxu0 0
      %422 = vmatpush1.bf16.msra.mxu0 0
      %423 = vmatprep.subr.bf16.mxu0 0
      %424 = vmatpush1.bf16.msra.mxu0 0
      %425 = vmatprep.subr.bf16.mxu0 0
      %426 = vmatpush1.bf16.msra.mxu0 0
      %427 = vmatprep.subr.bf16.mxu0 0
      %428 = vmatpush1.bf16.msra.mxu0 0
      %429 = vmatprep.subr.bf16.mxu0 0
      %430 = vmatpush1.bf16.msra.mxu0 0
      %431 = vmatprep.mubr.bf16.mxu0 0
      %432 = vmatmul.mubr.bf16.gmra.mrb[0].mxu0 %v372
      %v433 = vpop.f32.mrb[0].mxu0
      %v434 = vadd.f32 0.0, %v433
      %v435 = vpop.f32.mrb[0].mxu0
      %v436 = vpop.f32.mrb[0].mxu0
      %v437 = vadd.f32 0.0, %v436
      %v438 = vpop.f32.mrb[0].mxu0
      %439 = vmatprep.mubr.bf16.mxu0 0
      %440 = vmatmul.mubr.bf16.gmra.mrb[0].mxu0 %v375
      %v441 = vpop.f32.mrb[0].mxu0
      %v442 = vadd.f32 0.0, %v441
      %v443 = vpop.f32.mrb[0].mxu0
      %v444 = vpop.f32.mrb[0].mxu0
      %v445 = vadd.f32 0.0, %v444
      %v446 = vpop.f32.mrb[0].mxu0
      %447 = vmatprep.mubr.bf16.mxu0 0
      %448 = vmatmul.mubr.bf16.gmra.mrb[0].mxu0 %v378
      %v449 = vpop.f32.mrb[0].mxu0
      %v450 = vadd.f32 0.0, %v449
      %v451 = vpop.f32.mrb[0].mxu0
      %v452 = vpop.f32.mrb[0].mxu0
      %v453 = vadd.f32 0.0, %v452
      %v454 = vpop.f32.mrb[0].mxu0
      %455 = vmatprep.mubr.bf16.mxu0 0
      %456 = vmatmul.mubr.bf16.gmra.mrb[0].mxu0 %v381
      %v457 = vpop.f32.mrb[0].mxu0
      %v458 = vadd.f32 0.0, %v457
      %v459 = vpop.f32.mrb[0].mxu0
      %v460 = vpop.f32.mrb[0].mxu0
      %v461 = vadd.f32 0.0, %v460
      %v462 = vpop.f32.mrb[0].mxu0
      %463 = vmatprep.mubr.bf16.mxu0 0
      %464 = vmatmul.mubr.bf16.gmra.mrb[0].mxu0 %v384
      %v465 = vpop.f32.mrb[0].mxu0
      %v466 = vadd.f32 0.0, %v465
      %v467 = vpop.f32.mrb[0].mxu0
      %v468 = vpop.f32.mrb[0].mxu0
      %v469 = vadd.f32 0.0, %v468
      %v470 = vpop.f32.mrb[0].mxu0
      %471 = vmatprep.mubr.bf16.mxu0 0
      %472 = vmatmul.mubr.bf16.gmra.mrb[0].mxu0 %v387
      %v473 = vpop.f32.mrb[0].mxu0
      %v474 = vadd.f32 0.0, %v473
      %v475 = vpop.f32.mrb[0].mxu0
      %v476 = vpop.f32.mrb[0].mxu0
      %v477 = vadd.f32 0.0, %v476
      %v478 = vpop.f32.mrb[0].mxu0
      %479 = vmatprep.mubr.bf16.mxu0 0
      %480 = vmatmul.mubr.bf16.gmra.mrb[0].mxu0 %v390
      %v481 = vpop.f32.mrb[0].mxu0
      %v482 = vadd.f32 0.0, %v481
      %v483 = vpop.f32.mrb[0].mxu0
      %v484 = vpop.f32.mrb[0].mxu0
      %v485 = vadd.f32 0.0, %v484
      %v486 = vpop.f32.mrb[0].mxu0
      %487 = vmatprep.mubr.bf16.mxu0 0
      %488 = vmatmul.mubr.bf16.gmra.mrb[0].mxu0 %v393
      %v489 = vpop.f32.mrb[0].mxu0
      %v490 = vadd.f32 0.0, %v489
      %v491 = vpop.f32.mrb[0].mxu0
      %v492 = vpop.f32.mrb[0].mxu0
      %v493 = vadd.f32 0.0, %v492
      %v494 = vpop.f32.mrb[0].mxu0
      %495 = vdwg.mxu0
      %v504 = vunpack.c.l.b16 %v228
      %v505 = vunpack.c.l.b16 %v229
      %v506 = vunpack.c.l.b16 %v230
      %v507 = vunpack.c.l.b16 %v231
      %v508 = vunpack.c.l.b16 %v232
      %v509 = vunpack.c.l.b16 %v233
      %v510 = vunpack.c.l.b16 %v234
      %v511 = vunpack.c.l.b16 %v235
      %v512 = vunpack.c.l.b16 %v236
      %v513 = vunpack.c.l.b16 %v237
      %v514 = vunpack.c.l.b16 %v238
      %v515 = vunpack.c.l.b16 %v239
      %v516 = vunpack.c.l.b16 %v240
      %v517 = vunpack.c.l.b16 %v241
      %v518 = vunpack.c.l.b16 %v242
      %v519 = vunpack.c.l.b16 %v243
      %v520 = vpack.c.b16 %v505, %v504
      %v521 = vpack.c.b16 %v507, %v506
      %v522 = vpack.c.b16 %v509, %v508
      %v523 = vpack.c.b16 %v511, %v510
      %v524 = vpack.c.b16 %v513, %v512
      %v525 = vpack.c.b16 %v515, %v514
      %v526 = vpack.c.b16 %v517, %v516
      %v527 = vpack.c.b16 %v519, %v518
      %v529 = vsel %vm370, %v520, 0
      %v532 = vsel %vm370, %v521, 0
      %v535 = vsel %vm370, %v522, 0
      %v538 = vsel %vm370, %v523, 0
      %v541 = vsel %vm370, %v524, 0
      %v544 = vsel %vm370, %v525, 0
      %v547 = vsel %vm370, %v526, 0
      %v550 = vsel %vm370, %v527, 0
      %v553 = vsel %vm395, %v244, 0
      %555 = vmatprep.subr.bf16.mxu0 0
      %556 = vmatpush1.bf16.msra.mxu0 %v553
      %557 = vmatprep.subr.bf16.mxu0 0
      %558 = vmatpush1.bf16.msra.mxu0 0
      %559 = vmatprep.subr.bf16.mxu0 0
      %560 = vmatpush1.bf16.msra.mxu0 0
      %561 = vmatprep.subr.bf16.mxu0 0
      %562 = vmatpush1.bf16.msra.mxu0 0
      %563 = vmatprep.subr.bf16.mxu0 0
      %564 = vmatpush1.bf16.msra.mxu0 0
      %565 = vmatprep.subr.bf16.mxu0 0
      %566 = vmatpush1.bf16.msra.mxu0 0
      %567 = vmatprep.subr.bf16.mxu0 0
      %568 = vmatpush1.bf16.msra.mxu0 0
      %569 = vmatprep.subr.bf16.mxu0 0
      %570 = vmatpush1.bf16.msra.mxu0 0
      %571 = vmatprep.subr.bf16.mxu0 0
      %572 = vmatpush1.bf16.msra.mxu0 0
      %573 = vmatprep.subr.bf16.mxu0 0
      %574 = vmatpush1.bf16.msra.mxu0 0
      %575 = vmatprep.subr.bf16.mxu0 0
      %576 = vmatpush1.bf16.msra.mxu0 0
      %577 = vmatprep.subr.bf16.mxu0 0
      %578 = vmatpush1.bf16.msra.mxu0 0
      %579 = vmatprep.subr.bf16.mxu0 0
      %580 = vmatpush1.bf16.msra.mxu0 0
      %581 = vmatprep.subr.bf16.mxu0 0
      %582 = vmatpush1.bf16.msra.mxu0 0
      %583 = vmatprep.subr.bf16.mxu0 0
      %584 = vmatpush1.bf16.msra.mxu0 0
      %585 = vmatprep.subr.bf16.mxu0 0
      %586 = vmatpush1.bf16.msra.mxu0 0
      %587 = vmatprep.mubr.bf16.mxu0 0
      %588 = vmatmul.mubr.bf16.gmra.mrb[0].mxu0 %v529
      %v589 = vpop.f32.mrb[0].mxu0
      %v590 = vadd.f32 %v434, %v589
      %v591 = vpop.f32.mrb[0].mxu0
      %v592 = vpop.f32.mrb[0].mxu0
      %v593 = vadd.f32 %v437, %v592
      %v594 = vpop.f32.mrb[0].mxu0
      %595 = vmatprep.mubr.bf16.mxu0 0
      %596 = vmatmul.mubr.bf16.gmra.mrb[0].mxu0 %v532
      %v597 = vpop.f32.mrb[0].mxu0
      %v598 = vadd.f32 %v442, %v597
      %v599 = vpop.f32.mrb[0].mxu0
      %v600 = vpop.f32.mrb[0].mxu0
      %v601 = vadd.f32 %v445, %v600
      %v602 = vpop.f32.mrb[0].mxu0
      %603 = vmatprep.mubr.bf16.mxu0 0
      %604 = vmatmul.mubr.bf16.gmra.mrb[0].mxu0 %v535
      %v605 = vpop.f32.mrb[0].mxu0
      %v606 = vadd.f32 %v450, %v605
      %v607 = vpop.f32.mrb[0].mxu0
      %v608 = vpop.f32.mrb[0].mxu0
      %v609 = vadd.f32 %v453, %v608
      %v610 = vpop.f32.mrb[0].mxu0
      %611 = vmatprep.mubr.bf16.mxu0 0
      %612 = vmatmul.mubr.bf16.gmra.mrb[0].mxu0 %v538
      %v613 = vpop.f32.mrb[0].mxu0
      %v614 = vadd.f32 %v458, %v613
      %v615 = vpop.f32.mrb[0].mxu0
      %v616 = vpop.f32.mrb[0].mxu0
      %v617 = vadd.f32 %v461, %v616
      %v618 = vpop.f32.mrb[0].mxu0
      %619 = vmatprep.mubr.bf16.mxu0 0
      %620 = vmatmul.mubr.bf16.gmra.mrb[0].mxu0 %v541
      %v621 = vpop.f32.mrb[0].mxu0
      %v622 = vadd.f32 %v466, %v621
      %v623 = vpop.f32.mrb[0].mxu0
      %v624 = vpop.f32.mrb[0].mxu0
      %v625 = vadd.f32 %v469, %v624
      %v626 = vpop.f32.mrb[0].mxu0
      %627 = vmatprep.mubr.bf16.mxu0 0
      %628 = vmatmul.mubr.bf16.gmra.mrb[0].mxu0 %v544
      %v629 = vpop.f32.mrb[0].mxu0
      %v630 = vadd.f32 %v474, %v629
      %v631 = vpop.f32.mrb[0].mxu0
      %v632 = vpop.f32.mrb[0].mxu0
      %v633 = vadd.f32 %v477, %v632
      %v634 = vpop.f32.mrb[0].mxu0
      %635 = vmatprep.mubr.bf16.mxu0 0
      %636 = vmatmul.mubr.bf16.gmra.mrb[0].mxu0 %v547
      %v637 = vpop.f32.mrb[0].mxu0
      %v638 = vadd.f32 %v482, %v637
      %v639 = vpop.f32.mrb[0].mxu0
      %v640 = vpop.f32.mrb[0].mxu0
      %v641 = vadd.f32 %v485, %v640
      %v642 = vpop.f32.mrb[0].mxu0
      %643 = vmatprep.mubr.bf16.mxu0 0
      %644 = vmatmul.mubr.bf16.gmra.mrb[0].mxu0 %v550
      %v645 = vpop.f32.mrb[0].mxu0
      %v646 = vadd.f32 %v490, %v645
      %v647 = vpop.f32.mrb[0].mxu0
      %v648 = vpop.f32.mrb[0].mxu0
      %v649 = vadd.f32 %v493, %v648
      %v650 = vpop.f32.mrb[0].mxu0
      %651 = vdwg.mxu0
      %v652 = vld [vmem:[%s227 + $0x4] sm:$0xc]
      %v653 = vld [vmem:[%s227 + $0x8] sm:$0xf]
      %v654 = vld [vmem:[%s227 + $0xc] sm:$0x3]
      %v655 = vld [vmem:[%s227 + $0x14] sm:$0xc]
      %v656 = vld [vmem:[%s227 + $0x18] sm:$0xf]
      %v657 = vld [vmem:[%s227 + $0x1c] sm:$0x3]
      %v658 = vld [vmem:[%s227 + $0x24] sm:$0xc]
      %v659 = vld [vmem:[%s227 + $0x28] sm:$0xf]
      %v660 = vld [vmem:[%s227 + $0x2c] sm:$0x3]
      %v661 = vld [vmem:[%s227 + $0x34] sm:$0xc]
      %v662 = vld [vmem:[%s227 + $0x38] sm:$0xf]
      %v663 = vld [vmem:[%s227 + $0x3c] sm:$0x3]
      %v664 = vld [vmem:[%s227 + $0x44] sm:$0xc]
      %v665 = vld [vmem:[%s227 + $0x48] sm:$0xf]
      %v666 = vld [vmem:[%s227 + $0x4c] sm:$0x3]
      %v667 = vld [vmem:[%s227 + $0x54] sm:$0xc]
      %v668 = vld [vmem:[%s227 + $0x58] sm:$0xf]
      %v669 = vld [vmem:[%s227 + $0x5c] sm:$0x3]
      %v670 = vld [vmem:[%s227 + $0x64] sm:$0xc]
      %v671 = vld [vmem:[%s227 + $0x68] sm:$0xf]
      %v672 = vld [vmem:[%s227 + $0x6c] sm:$0x3]
      %v673 = vld [vmem:[%s227 + $0x74] sm:$0xc]
      %v674 = vld [vmem:[%s227 + $0x78] sm:$0xf]
      %v675 = vld [vmem:[%s227 + $0x7c] sm:$0x3]
      %vm700 = vcmask 1041408
      %vm701 = vcmask 1045508
      %vm702 = vmor %vm700, %vm701
      %v703 = vrot.slane %v652, 6
      %v704 = vrot.slane %v703, 4
      %v705 = vrot.slane %v653, 6
      %v706 = vsel %vm702, %v704, %v705
      %v707 = vrot.slane %v705, 4
      %v708 = vrot.slane %v654, 6
      %v709 = vsel %vm702, %v707, %v708
      %v710 = vrot.slane %v655, 6
      %v711 = vrot.slane %v710, 4
      %v712 = vrot.slane %v656, 6
      %v713 = vsel %vm702, %v711, %v712
      %v714 = vrot.slane %v712, 4
      %v715 = vrot.slane %v657, 6
      %v716 = vsel %vm702, %v714, %v715
      %v717 = vrot.slane %v658, 6
      %v718 = vrot.slane %v717, 4
      %v719 = vrot.slane %v659, 6
      %v720 = vsel %vm702, %v718, %v719
      %v721 = vrot.slane %v719, 4
      %v722 = vrot.slane %v660, 6
      %v723 = vsel %vm702, %v721, %v722
      %v724 = vrot.slane %v661, 6
      %v725 = vrot.slane %v724, 4
      %v726 = vrot.slane %v662, 6
      %v727 = vsel %vm702, %v725, %v726
      %v728 = vrot.slane %v726, 4
      %v729 = vrot.slane %v663, 6
      %v730 = vsel %vm702, %v728, %v729
      %v731 = vrot.slane %v664, 6
      %v732 = vrot.slane %v731, 4
      %v733 = vrot.slane %v665, 6
      %v734 = vsel %vm702, %v732, %v733
      %v735 = vrot.slane %v733, 4
      %v736 = vrot.slane %v666, 6
      %v737 = vsel %vm702, %v735, %v736
      %v738 = vrot.slane %v667, 6
      %v739 = vrot.slane %v738, 4
      %v740 = vrot.slane %v668, 6
      %v741 = vsel %vm702, %v739, %v740
      %v742 = vrot.slane %v740, 4
      %v743 = vrot.slane %v669, 6
      %v744 = vsel %vm702, %v742, %v743
      %v745 = vrot.slane %v670, 6
      %v746 = vrot.slane %v745, 4
      %v747 = vrot.slane %v671, 6
      %v748 = vsel %vm702, %v746, %v747
      %v749 = vrot.slane %v747, 4
      %v750 = vrot.slane %v672, 6
      %v751 = vsel %vm702, %v749, %v750
      %v752 = vrot.slane %v673, 6
      %v753 = vrot.slane %v752, 4
      %v754 = vrot.slane %v674, 6
      %v755 = vsel %vm702, %v753, %v754
      %v756 = vrot.slane %v754, 4
      %v757 = vrot.slane %v675, 6
      %v758 = vsel %vm702, %v756, %v757
      %s759 = scalar_lea.vmem %s1, 8
      %v760 = vld [vmem:[%s759] sm:$0xf]
      %v761 = vunpack.c.l.b16 %v706
      %v762 = vunpack.c.l.b16 %v709
      %v763 = vunpack.c.l.b16 %v713
      %v764 = vunpack.c.l.b16 %v716
      %v765 = vunpack.c.l.b16 %v720
      %v766 = vunpack.c.l.b16 %v723
      %v767 = vunpack.c.l.b16 %v727
      %v768 = vunpack.c.l.b16 %v730
      %v769 = vunpack.c.l.b16 %v734
      %v770 = vunpack.c.l.b16 %v737
      %v771 = vunpack.c.l.b16 %v741
      %v772 = vunpack.c.l.b16 %v744
      %v773 = vunpack.c.l.b16 %v748
      %v774 = vunpack.c.l.b16 %v751
      %v775 = vunpack.c.l.b16 %v755
      %v776 = vunpack.c.l.b16 %v758
      %v777 = vpack.c.b16 %v762, %v761
      %v778 = vpack.c.b16 %v764, %v763
      %v779 = vpack.c.b16 %v766, %v765
      %v780 = vpack.c.b16 %v768, %v767
      %v781 = vpack.c.b16 %v770, %v769
      %v782 = vpack.c.b16 %v772, %v771
      %v783 = vpack.c.b16 %v774, %v773
      %v784 = vpack.c.b16 %v776, %v775
      %v786 = vsel %vm370, %v777, 0
      %v789 = vsel %vm370, %v778, 0
      %v792 = vsel %vm370, %v779, 0
      %v795 = vsel %vm370, %v780, 0
      %v798 = vsel %vm370, %v781, 0
      %v801 = vsel %vm370, %v782, 0
      %v804 = vsel %vm370, %v783, 0
      %v807 = vsel %vm370, %v784, 0
      %v810 = vsel %vm395, %v760, 0
      %812 = vmatprep.subr.bf16.mxu0 0
      %813 = vmatpush1.bf16.msra.mxu0 %v810
      %814 = vmatprep.subr.bf16.mxu0 0
      %815 = vmatpush1.bf16.msra.mxu0 0
      %816 = vmatprep.subr.bf16.mxu0 0
      %817 = vmatpush1.bf16.msra.mxu0 0
      %818 = vmatprep.subr.bf16.mxu0 0
      %819 = vmatpush1.bf16.msra.mxu0 0
      %820 = vmatprep.subr.bf16.mxu0 0
      %821 = vmatpush1.bf16.msra.mxu0 0
      %822 = vmatprep.subr.bf16.mxu0 0
      %823 = vmatpush1.bf16.msra.mxu0 0
      %824 = vmatprep.subr.bf16.mxu0 0
      %825 = vmatpush1.bf16.msra.mxu0 0
      %826 = vmatprep.subr.bf16.mxu0 0
      %827 = vmatpush1.bf16.msra.mxu0 0
      %828 = vmatprep.subr.bf16.mxu0 0
      %829 = vmatpush1.bf16.msra.mxu0 0
      %830 = vmatprep.subr.bf16.mxu0 0
      %831 = vmatpush1.bf16.msra.mxu0 0
      %832 = vmatprep.subr.bf16.mxu0 0
      %833 = vmatpush1.bf16.msra.mxu0 0
      %834 = vmatprep.subr.bf16.mxu0 0
      %835 = vmatpush1.bf16.msra.mxu0 0
      %836 = vmatprep.subr.bf16.mxu0 0
      %837 = vmatpush1.bf16.msra.mxu0 0
      %838 = vmatprep.subr.bf16.mxu0 0
      %839 = vmatpush1.bf16.msra.mxu0 0
      %840 = vmatprep.subr.bf16.mxu0 0
      %841 = vmatpush1.bf16.msra.mxu0 0
      %842 = vmatprep.subr.bf16.mxu0 0
      %843 = vmatpush1.bf16.msra.mxu0 0
      %844 = vmatprep.mubr.bf16.mxu0 0
      %845 = vmatmul.mubr.bf16.gmra.mrb[0].mxu0 %v786
      %v846 = vpop.f32.mrb[0].mxu0
      %v847 = vadd.f32 0.0, %v846
      %v848 = vpop.f32.mrb[0].mxu0
      %v849 = vpop.f32.mrb[0].mxu0
      %v850 = vadd.f32 0.0, %v849
      %v851 = vpop.f32.mrb[0].mxu0
      %852 = vmatprep.mubr.bf16.mxu0 0
      %853 = vmatmul.mubr.bf16.gmra.mrb[0].mxu0 %v789
      %v854 = vpop.f32.mrb[0].mxu0
      %v855 = vadd.f32 0.0, %v854
      %v856 = vpop.f32.mrb[0].mxu0
      %v857 = vpop.f32.mrb[0].mxu0
      %v858 = vadd.f32 0.0, %v857
      %v859 = vpop.f32.mrb[0].mxu0
      %860 = vmatprep.mubr.bf16.mxu0 0
      %861 = vmatmul.mubr.bf16.gmra.mrb[0].mxu0 %v792
      %v862 = vpop.f32.mrb[0].mxu0
      %v863 = vadd.f32 0.0, %v862
      %v864 = vpop.f32.mrb[0].mxu0
      %v865 = vpop.f32.mrb[0].mxu0
      %v866 = vadd.f32 0.0, %v865
      %v867 = vpop.f32.mrb[0].mxu0
      %868 = vmatprep.mubr.bf16.mxu0 0
      %869 = vmatmul.mubr.bf16.gmra.mrb[0].mxu0 %v795
      %v870 = vpop.f32.mrb[0].mxu0
      %v871 = vadd.f32 0.0, %v870
      %v872 = vpop.f32.mrb[0].mxu0
      %v873 = vpop.f32.mrb[0].mxu0
      %v874 = vadd.f32 0.0, %v873
      %v875 = vpop.f32.mrb[0].mxu0
      %876 = vmatprep.mubr.bf16.mxu0 0
      %877 = vmatmul.mubr.bf16.gmra.mrb[0].mxu0 %v798
      %v878 = vpop.f32.mrb[0].mxu0
      %v879 = vadd.f32 0.0, %v878
      %v880 = vpop.f32.mrb[0].mxu0
      %v881 = vpop.f32.mrb[0].mxu0
      %v882 = vadd.f32 0.0, %v881
      %v883 = vpop.f32.mrb[0].mxu0
      %884 = vmatprep.mubr.bf16.mxu0 0
      %885 = vmatmul.mubr.bf16.gmra.mrb[0].mxu0 %v801
      %v886 = vpop.f32.mrb[0].mxu0
      %v887 = vadd.f32 0.0, %v886
      %v888 = vpop.f32.mrb[0].mxu0
      %v889 = vpop.f32.mrb[0].mxu0
      %v890 = vadd.f32 0.0, %v889
      %v891 = vpop.f32.mrb[0].mxu0
      %892 = vmatprep.mubr.bf16.mxu0 0
      %893 = vmatmul.mubr.bf16.gmra.mrb[0].mxu0 %v804
      %v894 = vpop.f32.mrb[0].mxu0
      %v895 = vadd.f32 0.0, %v894
      %v896 = vpop.f32.mrb[0].mxu0
      %v897 = vpop.f32.mrb[0].mxu0
      %v898 = vadd.f32 0.0, %v897
      %v899 = vpop.f32.mrb[0].mxu0
      %900 = vmatprep.mubr.bf16.mxu0 0
      %901 = vmatmul.mubr.bf16.gmra.mrb[0].mxu0 %v807
      %v902 = vpop.f32.mrb[0].mxu0
      %v903 = vadd.f32 0.0, %v902
      %v904 = vpop.f32.mrb[0].mxu0
      %v905 = vpop.f32.mrb[0].mxu0
      %v906 = vadd.f32 0.0, %v905
      %v907 = vpop.f32.mrb[0].mxu0
      %908 = vdwg.mxu0
      %v909 = vadd.f32 %v590, %v847
      %v910 = vadd.f32 %v593, %v850
      %v911 = vadd.f32 %v598, %v855
      %v912 = vadd.f32 %v601, %v858
      %v913 = vadd.f32 %v606, %v863
      %v914 = vadd.f32 %v609, %v866
      %v915 = vadd.f32 %v614, %v871
      %v916 = vadd.f32 %v617, %v874
      %v917 = vadd.f32 %v622, %v879
      %v918 = vadd.f32 %v625, %v882
      %v919 = vadd.f32 %v630, %v887
      %v920 = vadd.f32 %v633, %v890
      %v921 = vadd.f32 %v638, %v895
      %v922 = vadd.f32 %v641, %v898
      %v923 = vadd.f32 %v646, %v903
      %v924 = vadd.f32 %v649, %v906
      %s925 = sadd.s32 %s224, 6
      %s926 = smul.u32 %s925, 4
      %s927 = smul.addr %s926, 4
      %s928 = scalar_lea.vmem %s211, %s927
      %v929 = vld [vmem:[%s928] sm:$0xf]
      %v930 = vld [vmem:[%s928 + $0x4] sm:$0xf]
      %v931 = vld [vmem:[%s928 + $0x10] sm:$0xf]
      %v932 = vld [vmem:[%s928 + $0x14] sm:$0xf]
      %v933 = vld [vmem:[%s928 + $0x20] sm:$0xf]
      %v934 = vld [vmem:[%s928 + $0x24] sm:$0xf]
      %v935 = vld [vmem:[%s928 + $0x30] sm:$0xf]
      %v936 = vld [vmem:[%s928 + $0x34] sm:$0xf]
      %v937 = vld [vmem:[%s928 + $0x40] sm:$0xf]
      %v938 = vld [vmem:[%s928 + $0x44] sm:$0xf]
      %v939 = vld [vmem:[%s928 + $0x50] sm:$0xf]
      %v940 = vld [vmem:[%s928 + $0x54] sm:$0xf]
      %v941 = vld [vmem:[%s928 + $0x60] sm:$0xf]
      %v942 = vld [vmem:[%s928 + $0x64] sm:$0xf]
      %v943 = vld [vmem:[%s928 + $0x70] sm:$0xf]
      %v944 = vld [vmem:[%s928 + $0x74] sm:$0xf]
      %s945 = scalar_lea.vmem %s1, 12
      %v946 = vld [vmem:[%s945] sm:$0xf]
      %v963 = vunpack.c.l.b16 %v929
      %v964 = vunpack.c.l.b16 %v930
      %v965 = vunpack.c.l.b16 %v931
      %v966 = vunpack.c.l.b16 %v932
      %v967 = vunpack.c.l.b16 %v933
      %v968 = vunpack.c.l.b16 %v934
      %v969 = vunpack.c.l.b16 %v935
      %v970 = vunpack.c.l.b16 %v936
      %v971 = vunpack.c.l.b16 %v937
      %v972 = vunpack.c.l.b16 %v938
      %v973 = vunpack.c.l.b16 %v939
      %v974 = vunpack.c.l.b16 %v940
      %v975 = vunpack.c.l.b16 %v941
      %v976 = vunpack.c.l.b16 %v942
      %v977 = vunpack.c.l.b16 %v943
      %v978 = vunpack.c.l.b16 %v944
      %v979 = vpack.c.b16 %v964, %v963
      %v980 = vpack.c.b16 %v966, %v965
      %v981 = vpack.c.b16 %v968, %v967
      %v982 = vpack.c.b16 %v970, %v969
      %v983 = vpack.c.b16 %v972, %v971
      %v984 = vpack.c.b16 %v974, %v973
      %v985 = vpack.c.b16 %v976, %v975
      %v986 = vpack.c.b16 %v978, %v977
      %v988 = vsel %vm370, %v979, 0
      %v991 = vsel %vm370, %v980, 0
      %v994 = vsel %vm370, %v981, 0
      %v997 = vsel %vm370, %v982, 0
      %v1000 = vsel %vm370, %v983, 0
      %v1003 = vsel %vm370, %v984, 0
      %v1006 = vsel %vm370, %v985, 0
      %v1009 = vsel %vm370, %v986, 0
      %v1012 = vsel %vm395, %v946, 0
      %1014 = vmatprep.subr.bf16.mxu0 0
      %1015 = vmatpush1.bf16.msra.mxu0 %v1012
      %1016 = vmatprep.subr.bf16.mxu0 0
      %1017 = vmatpush1.bf16.msra.mxu0 0
      %1018 = vmatprep.subr.bf16.mxu0 0
      %1019 = vmatpush1.bf16.msra.mxu0 0
      %1020 = vmatprep.subr.bf16.mxu0 0
      %1021 = vmatpush1.bf16.msra.mxu0 0
      %1022 = vmatprep.subr.bf16.mxu0 0
      %1023 = vmatpush1.bf16.msra.mxu0 0
      %1024 = vmatprep.subr.bf16.mxu0 0
      %1025 = vmatpush1.bf16.msra.mxu0 0
      %1026 = vmatprep.subr.bf16.mxu0 0
      %1027 = vmatpush1.bf16.msra.mxu0 0
      %1028 = vmatprep.subr.bf16.mxu0 0
      %1029 = vmatpush1.bf16.msra.mxu0 0
      %1030 = vmatprep.subr.bf16.mxu0 0
      %1031 = vmatpush1.bf16.msra.mxu0 0
      %1032 = vmatprep.subr.bf16.mxu0 0
      %1033 = vmatpush1.bf16.msra.mxu0 0
      %1034 = vmatprep.subr.bf16.mxu0 0
      %1035 = vmatpush1.bf16.msra.mxu0 0
      %1036 = vmatprep.subr.bf16.mxu0 0
      %1037 = vmatpush1.bf16.msra.mxu0 0
      %1038 = vmatprep.subr.bf16.mxu0 0
      %1039 = vmatpush1.bf16.msra.mxu0 0
      %1040 = vmatprep.subr.bf16.mxu0 0
      %1041 = vmatpush1.bf16.msra.mxu0 0
      %1042 = vmatprep.subr.bf16.mxu0 0
      %1043 = vmatpush1.bf16.msra.mxu0 0
      %1044 = vmatprep.subr.bf16.mxu0 0
      %1045 = vmatpush1.bf16.msra.mxu0 0
      %1046 = vmatprep.mubr.bf16.mxu0 0
      %1047 = vmatmul.mubr.bf16.gmra.mrb[0].mxu0 %v988
      %v1048 = vpop.f32.mrb[0].mxu0
      %v1049 = vadd.f32 0.0, %v1048
      %v1050 = vpop.f32.mrb[0].mxu0
      %v1051 = vpop.f32.mrb[0].mxu0
      %v1052 = vadd.f32 0.0, %v1051
      %v1053 = vpop.f32.mrb[0].mxu0
      %1054 = vmatprep.mubr.bf16.mxu0 0
      %1055 = vmatmul.mubr.bf16.gmra.mrb[0].mxu0 %v991
      %v1056 = vpop.f32.mrb[0].mxu0
      %v1057 = vadd.f32 0.0, %v1056
      %v1058 = vpop.f32.mrb[0].mxu0
      %v1059 = vpop.f32.mrb[0].mxu0
      %v1060 = vadd.f32 0.0, %v1059
      %v1061 = vpop.f32.mrb[0].mxu0
      %1062 = vmatprep.mubr.bf16.mxu0 0
      %1063 = vmatmul.mubr.bf16.gmra.mrb[0].mxu0 %v994
      %v1064 = vpop.f32.mrb[0].mxu0
      %v1065 = vadd.f32 0.0, %v1064
      %v1066 = vpop.f32.mrb[0].mxu0
      %v1067 = vpop.f32.mrb[0].mxu0
      %v1068 = vadd.f32 0.0, %v1067
      %v1069 = vpop.f32.mrb[0].mxu0
      %1070 = vmatprep.mubr.bf16.mxu0 0
      %1071 = vmatmul.mubr.bf16.gmra.mrb[0].mxu0 %v997
      %v1072 = vpop.f32.mrb[0].mxu0
      %v1073 = vadd.f32 0.0, %v1072
      %v1074 = vpop.f32.mrb[0].mxu0
      %v1075 = vpop.f32.mrb[0].mxu0
      %v1076 = vadd.f32 0.0, %v1075
      %v1077 = vpop.f32.mrb[0].mxu0
      %1078 = vmatprep.mubr.bf16.mxu0 0
      %1079 = vmatmul.mubr.bf16.gmra.mrb[0].mxu0 %v1000
      %v1080 = vpop.f32.mrb[0].mxu0
      %v1081 = vadd.f32 0.0, %v1080
      %v1082 = vpop.f32.mrb[0].mxu0
      %v1083 = vpop.f32.mrb[0].mxu0
      %v1084 = vadd.f32 0.0, %v1083
      %v1085 = vpop.f32.mrb[0].mxu0
      %1086 = vmatprep.mubr.bf16.mxu0 0
      %1087 = vmatmul.mubr.bf16.gmra.mrb[0].mxu0 %v1003
      %v1088 = vpop.f32.mrb[0].mxu0
      %v1089 = vadd.f32 0.0, %v1088
      %v1090 = vpop.f32.mrb[0].mxu0
      %v1091 = vpop.f32.mrb[0].mxu0
      %v1092 = vadd.f32 0.0, %v1091
      %v1093 = vpop.f32.mrb[0].mxu0
      %1094 = vmatprep.mubr.bf16.mxu0 0
      %1095 = vmatmul.mubr.bf16.gmra.mrb[0].mxu0 %v1006
      %v1096 = vpop.f32.mrb[0].mxu0
      %v1097 = vadd.f32 0.0, %v1096
      %v1098 = vpop.f32.mrb[0].mxu0
      %v1099 = vpop.f32.mrb[0].mxu0
      %v1100 = vadd.f32 0.0, %v1099
      %v1101 = vpop.f32.mrb[0].mxu0
      %1102 = vmatprep.mubr.bf16.mxu0 0
      %1103 = vmatmul.mubr.bf16.gmra.mrb[0].mxu0 %v1009
      %v1104 = vpop.f32.mrb[0].mxu0
      %v1105 = vadd.f32 0.0, %v1104
      %v1106 = vpop.f32.mrb[0].mxu0
      %v1107 = vpop.f32.mrb[0].mxu0
      %v1108 = vadd.f32 0.0, %v1107
      %v1109 = vpop.f32.mrb[0].mxu0
      %1110 = vdwg.mxu0
      %v1111 = vadd.f32 %v909, %v1049
      %v1112 = vadd.f32 %v910, %v1052
      %v1113 = vadd.f32 %v911, %v1057
      %v1114 = vadd.f32 %v912, %v1060
      %v1115 = vadd.f32 %v913, %v1065
      %v1116 = vadd.f32 %v914, %v1068
      %v1117 = vadd.f32 %v915, %v1073
      %v1118 = vadd.f32 %v916, %v1076
      %v1119 = vadd.f32 %v917, %v1081
      %v1120 = vadd.f32 %v918, %v1084
      %v1121 = vadd.f32 %v919, %v1089
      %v1122 = vadd.f32 %v920, %v1092
      %v1123 = vadd.f32 %v921, %v1097
      %v1124 = vadd.f32 %v922, %v1100
      %v1125 = vadd.f32 %v923, %v1105
      %v1126 = vadd.f32 %v924, %v1108
      %v1127 = vld [vmem:[%s928] sm:$0x8]
      %v1128 = vld [vmem:[%s928 + $0x4] sm:$0xf]
      %v1129 = vld [vmem:[%s928 + $0x8] sm:$0x7]
      %v1130 = vld [vmem:[%s928 + $0x10] sm:$0x8]
      %v1131 = vld [vmem:[%s928 + $0x14] sm:$0xf]
      %v1132 = vld [vmem:[%s928 + $0x18] sm:$0x7]
      %v1133 = vld [vmem:[%s928 + $0x20] sm:$0x8]
      %v1134 = vld [vmem:[%s928 + $0x24] sm:$0xf]
      %v1135 = vld [vmem:[%s928 + $0x28] sm:$0x7]
      %v1136 = vld [vmem:[%s928 + $0x30] sm:$0x8]
      %v1137 = vld [vmem:[%s928 + $0x34] sm:$0xf]
      %v1138 = vld [vmem:[%s928 + $0x38] sm:$0x7]
      %v1139 = vld [vmem:[%s928 + $0x40] sm:$0x8]
      %v1140 = vld [vmem:[%s928 + $0x44] sm:$0xf]
      %v1141 = vld [vmem:[%s928 + $0x48] sm:$0x7]
      %v1142 = vld [vmem:[%s928 + $0x50] sm:$0x8]
      %v1143 = vld [vmem:[%s928 + $0x54] sm:$0xf]
      %v1144 = vld [vmem:[%s928 + $0x58] sm:$0x7]
      %v1145 = vld [vmem:[%s928 + $0x60] sm:$0x8]
      %v1146 = vld [vmem:[%s928 + $0x64] sm:$0xf]
      %v1147 = vld [vmem:[%s928 + $0x68] sm:$0x7]
      %v1148 = vld [vmem:[%s928 + $0x70] sm:$0x8]
      %v1149 = vld [vmem:[%s928 + $0x74] sm:$0xf]
      %v1150 = vld [vmem:[%s928 + $0x78] sm:$0x7]
      %v1175 = vrot.slane %v1127, 7
      %v1176 = vrot.slane %v1175, 4
      %v1177 = vrot.slane %v1128, 7
      %v1178 = vsel %vm287, %v1176, %v1177
      %v1179 = vrot.slane %v1177, 4
      %v1180 = vrot.slane %v1129, 7
      %v1181 = vsel %vm287, %v1179, %v1180
      %v1182 = vrot.slane %v1130, 7
      %v1183 = vrot.slane %v1182, 4
      %v1184 = vrot.slane %v1131, 7
      %v1185 = vsel %vm287, %v1183, %v1184
      %v1186 = vrot.slane %v1184, 4
      %v1187 = vrot.slane %v1132, 7
      %v1188 = vsel %vm287, %v1186, %v1187
      %v1189 = vrot.slane %v1133, 7
      %v1190 = vrot.slane %v1189, 4
      %v1191 = vrot.slane %v1134, 7
      %v1192 = vsel %vm287, %v1190, %v1191
      %v1193 = vrot.slane %v1191, 4
      %v1194 = vrot.slane %v1135, 7
      %v1195 = vsel %vm287, %v1193, %v1194
      %v1196 = vrot.slane %v1136, 7
      %v1197 = vrot.slane %v1196, 4
      %v1198 = vrot.slane %v1137, 7
      %v1199 = vsel %vm287, %v1197, %v1198
      %v1200 = vrot.slane %v1198, 4
      %v1201 = vrot.slane %v1138, 7
      %v1202 = vsel %vm287, %v1200, %v1201
      %v1203 = vrot.slane %v1139, 7
      %v1204 = vrot.slane %v1203, 4
      %v1205 = vrot.slane %v1140, 7
      %v1206 = vsel %vm287, %v1204, %v1205
      %v1207 = vrot.slane %v1205, 4
      %v1208 = vrot.slane %v1141, 7
      %v1209 = vsel %vm287, %v1207, %v1208
      %v1210 = vrot.slane %v1142, 7
      %v1211 = vrot.slane %v1210, 4
      %v1212 = vrot.slane %v1143, 7
      %v1213 = vsel %vm287, %v1211, %v1212
      %v1214 = vrot.slane %v1212, 4
      %v1215 = vrot.slane %v1144, 7
      %v1216 = vsel %vm287, %v1214, %v1215
      %v1217 = vrot.slane %v1145, 7
      %v1218 = vrot.slane %v1217, 4
      %v1219 = vrot.slane %v1146, 7
      %v1220 = vsel %vm287, %v1218, %v1219
      %v1221 = vrot.slane %v1219, 4
      %v1222 = vrot.slane %v1147, 7
      %v1223 = vsel %vm287, %v1221, %v1222
      %v1224 = vrot.slane %v1148, 7
      %v1225 = vrot.slane %v1224, 4
      %v1226 = vrot.slane %v1149, 7
      %v1227 = vsel %vm287, %v1225, %v1226
      %v1228 = vrot.slane %v1226, 4
      %v1229 = vrot.slane %v1150, 7
      %v1230 = vsel %vm287, %v1228, %v1229
      %s1231 = scalar_lea.vmem %s1, 16
      %v1232 = vld [vmem:[%s1231] sm:$0xf]
      %v1233 = vunpack.c.l.b16 %v1178
      %v1234 = vunpack.c.l.b16 %v1181
      %v1235 = vunpack.c.l.b16 %v1185
      %v1236 = vunpack.c.l.b16 %v1188
      %v1237 = vunpack.c.l.b16 %v1192
      %v1238 = vunpack.c.l.b16 %v1195
      %v1239 = vunpack.c.l.b16 %v1199
      %v1240 = vunpack.c.l.b16 %v1202
      %v1241 = vunpack.c.l.b16 %v1206
      %v1242 = vunpack.c.l.b16 %v1209
      %v1243 = vunpack.c.l.b16 %v1213
      %v1244 = vunpack.c.l.b16 %v1216
      %v1245 = vunpack.c.l.b16 %v1220
      %v1246 = vunpack.c.l.b16 %v1223
      %v1247 = vunpack.c.l.b16 %v1227
      %v1248 = vunpack.c.l.b16 %v1230
      %v1249 = vpack.c.b16 %v1234, %v1233
      %v1250 = vpack.c.b16 %v1236, %v1235
      %v1251 = vpack.c.b16 %v1238, %v1237
      %v1252 = vpack.c.b16 %v1240, %v1239
      %v1253 = vpack.c.b16 %v1242, %v1241
      %v1254 = vpack.c.b16 %v1244, %v1243
      %v1255 = vpack.c.b16 %v1246, %v1245
      %v1256 = vpack.c.b16 %v1248, %v1247
      %v1258 = vsel %vm370, %v1249, 0
      %v1261 = vsel %vm370, %v1250, 0
      %v1264 = vsel %vm370, %v1251, 0
      %v1267 = vsel %vm370, %v1252, 0
      %v1270 = vsel %vm370, %v1253, 0
      %v1273 = vsel %vm370, %v1254, 0
      %v1276 = vsel %vm370, %v1255, 0
      %v1279 = vsel %vm370, %v1256, 0
      %v1282 = vsel %vm395, %v1232, 0
      %1284 = vmatprep.subr.bf16.mxu0 0
      %1285 = vmatpush1.bf16.msra.mxu0 %v1282
      %1286 = vmatprep.subr.bf16.mxu0 0
      %1287 = vmatpush1.bf16.msra.mxu0 0
      %1288 = vmatprep.subr.bf16.mxu0 0
      %1289 = vmatpush1.bf16.msra.mxu0 0
      %1290 = vmatprep.subr.bf16.mxu0 0
      %1291 = vmatpush1.bf16.msra.mxu0 0
      %1292 = vmatprep.subr.bf16.mxu0 0
      %1293 = vmatpush1.bf16.msra.mxu0 0
      %1294 = vmatprep.subr.bf16.mxu0 0
      %1295 = vmatpush1.bf16.msra.mxu0 0
      %1296 = vmatprep.subr.bf16.mxu0 0
      %1297 = vmatpush1.bf16.msra.mxu0 0
      %1298 = vmatprep.subr.bf16.mxu0 0
      %1299 = vmatpush1.bf16.msra.mxu0 0
      %1300 = vmatprep.subr.bf16.mxu0 0
      %1301 = vmatpush1.bf16.msra.mxu0 0
      %1302 = vmatprep.subr.bf16.mxu0 0
      %1303 = vmatpush1.bf16.msra.mxu0 0
      %1304 = vmatprep.subr.bf16.mxu0 0
      %1305 = vmatpush1.bf16.msra.mxu0 0
      %1306 = vmatprep.subr.bf16.mxu0 0
      %1307 = vmatpush1.bf16.msra.mxu0 0
      %1308 = vmatprep.subr.bf16.mxu0 0
      %1309 = vmatpush1.bf16.msra.mxu0 0
      %1310 = vmatprep.subr.bf16.mxu0 0
      %1311 = vmatpush1.bf16.msra.mxu0 0
      %1312 = vmatprep.subr.bf16.mxu0 0
      %1313 = vmatpush1.bf16.msra.mxu0 0
      %1314 = vmatprep.subr.bf16.mxu0 0
      %1315 = vmatpush1.bf16.msra.mxu0 0
      %1316 = vmatprep.mubr.bf16.mxu0 0
      %1317 = vmatmul.mubr.bf16.gmra.mrb[0].mxu0 %v1258
      %v1318 = vpop.f32.mrb[0].mxu0
      %v1319 = vadd.f32 0.0, %v1318
      %v1320 = vpop.f32.mrb[0].mxu0
      %v1321 = vpop.f32.mrb[0].mxu0
      %v1322 = vadd.f32 0.0, %v1321
      %v1323 = vpop.f32.mrb[0].mxu0
      %1324 = vmatprep.mubr.bf16.mxu0 0
      %1325 = vmatmul.mubr.bf16.gmra.mrb[0].mxu0 %v1261
      %v1326 = vpop.f32.mrb[0].mxu0
      %v1327 = vadd.f32 0.0, %v1326
      %v1328 = vpop.f32.mrb[0].mxu0
      %v1329 = vpop.f32.mrb[0].mxu0
      %v1330 = vadd.f32 0.0, %v1329
      %v1331 = vpop.f32.mrb[0].mxu0
      %1332 = vmatprep.mubr.bf16.mxu0 0
      %1333 = vmatmul.mubr.bf16.gmra.mrb[0].mxu0 %v1264
      %v1334 = vpop.f32.mrb[0].mxu0
      %v1335 = vadd.f32 0.0, %v1334
      %v1336 = vpop.f32.mrb[0].mxu0
      %v1337 = vpop.f32.mrb[0].mxu0
      %v1338 = vadd.f32 0.0, %v1337
      %v1339 = vpop.f32.mrb[0].mxu0
      %1340 = vmatprep.mubr.bf16.mxu0 0
      %1341 = vmatmul.mubr.bf16.gmra.mrb[0].mxu0 %v1267
      %v1342 = vpop.f32.mrb[0].mxu0
      %v1343 = vadd.f32 0.0, %v1342
      %v1344 = vpop.f32.mrb[0].mxu0
      %v1345 = vpop.f32.mrb[0].mxu0
      %v1346 = vadd.f32 0.0, %v1345
      %v1347 = vpop.f32.mrb[0].mxu0
      %1348 = vmatprep.mubr.bf16.mxu0 0
      %1349 = vmatmul.mubr.bf16.gmra.mrb[0].mxu0 %v1270
      %v1350 = vpop.f32.mrb[0].mxu0
      %v1351 = vadd.f32 0.0, %v1350
      %v1352 = vpop.f32.mrb[0].mxu0
      %v1353 = vpop.f32.mrb[0].mxu0
      %v1354 = vadd.f32 0.0, %v1353
      %v1355 = vpop.f32.mrb[0].mxu0
      %1356 = vmatprep.mubr.bf16.mxu0 0
      %1357 = vmatmul.mubr.bf16.gmra.mrb[0].mxu0 %v1273
      %v1358 = vpop.f32.mrb[0].mxu0
      %v1359 = vadd.f32 0.0, %v1358
      %v1360 = vpop.f32.mrb[0].mxu0
      %v1361 = vpop.f32.mrb[0].mxu0
      %v1362 = vadd.f32 0.0, %v1361
      %v1363 = vpop.f32.mrb[0].mxu0
      %1364 = vmatprep.mubr.bf16.mxu0 0
      %1365 = vmatmul.mubr.bf16.gmra.mrb[0].mxu0 %v1276
      %v1366 = vpop.f32.mrb[0].mxu0
      %v1367 = vadd.f32 0.0, %v1366
      %v1368 = vpop.f32.mrb[0].mxu0
      %v1369 = vpop.f32.mrb[0].mxu0
      %v1370 = vadd.f32 0.0, %v1369
      %v1371 = vpop.f32.mrb[0].mxu0
      %1372 = vmatprep.mubr.bf16.mxu0 0
      %1373 = vmatmul.mubr.bf16.gmra.mrb[0].mxu0 %v1279
      %v1374 = vpop.f32.mrb[0].mxu0
      %v1375 = vadd.f32 0.0, %v1374
      %v1376 = vpop.f32.mrb[0].mxu0
      %v1377 = vpop.f32.mrb[0].mxu0
      %v1378 = vadd.f32 0.0, %v1377
      %v1379 = vpop.f32.mrb[0].mxu0
      %1380 = vdwg.mxu0
      %v1381 = vadd.f32 %v1111, %v1319
      %v1382 = vadd.f32 %v1112, %v1322
      %v1383 = vadd.f32 %v1113, %v1327
      %v1384 = vadd.f32 %v1114, %v1330
      %v1385 = vadd.f32 %v1115, %v1335
      %v1386 = vadd.f32 %v1116, %v1338
      %v1387 = vadd.f32 %v1117, %v1343
      %v1388 = vadd.f32 %v1118, %v1346
      %v1389 = vadd.f32 %v1119, %v1351
      %v1390 = vadd.f32 %v1120, %v1354
      %v1391 = vadd.f32 %v1121, %v1359
      %v1392 = vadd.f32 %v1122, %v1362
      %v1393 = vadd.f32 %v1123, %v1367
      %v1394 = vadd.f32 %v1124, %v1370
      %v1395 = vadd.f32 %v1125, %v1375
      %v1396 = vadd.f32 %v1126, %v1378
      %v1397 = vld [vmem:[%s928 + $0x4] sm:$0xc]
      %v1398 = vld [vmem:[%s928 + $0x8] sm:$0xf]
      %v1399 = vld [vmem:[%s928 + $0xc] sm:$0x3]
      %v1400 = vld [vmem:[%s928 + $0x14] sm:$0xc]
      %v1401 = vld [vmem:[%s928 + $0x18] sm:$0xf]
      %v1402 = vld [vmem:[%s928 + $0x1c] sm:$0x3]
      %v1403 = vld [vmem:[%s928 + $0x24] sm:$0xc]
      %v1404 = vld [vmem:[%s928 + $0x28] sm:$0xf]
      %v1405 = vld [vmem:[%s928 + $0x2c] sm:$0x3]
      %v1406 = vld [vmem:[%s928 + $0x34] sm:$0xc]
      %v1407 = vld [vmem:[%s928 + $0x38] sm:$0xf]
      %v1408 = vld [vmem:[%s928 + $0x3c] sm:$0x3]
      %v1409 = vld [vmem:[%s928 + $0x44] sm:$0xc]
      %v1410 = vld [vmem:[%s928 + $0x48] sm:$0xf]
      %v1411 = vld [vmem:[%s928 + $0x4c] sm:$0x3]
      %v1412 = vld [vmem:[%s928 + $0x54] sm:$0xc]
      %v1413 = vld [vmem:[%s928 + $0x58] sm:$0xf]
      %v1414 = vld [vmem:[%s928 + $0x5c] sm:$0x3]
      %v1415 = vld [vmem:[%s928 + $0x64] sm:$0xc]
      %v1416 = vld [vmem:[%s928 + $0x68] sm:$0xf]
      %v1417 = vld [vmem:[%s928 + $0x6c] sm:$0x3]
      %v1418 = vld [vmem:[%s928 + $0x74] sm:$0xc]
      %v1419 = vld [vmem:[%s928 + $0x78] sm:$0xf]
      %v1420 = vld [vmem:[%s928 + $0x7c] sm:$0x3]
      %v1445 = vrot.slane %v1397, 6
      %v1446 = vrot.slane %v1445, 4
      %v1447 = vrot.slane %v1398, 6
      %v1448 = vsel %vm702, %v1446, %v1447
      %v1449 = vrot.slane %v1447, 4
      %v1450 = vrot.slane %v1399, 6
      %v1451 = vsel %vm702, %v1449, %v1450
      %v1452 = vrot.slane %v1400, 6
      %v1453 = vrot.slane %v1452, 4
      %v1454 = vrot.slane %v1401, 6
      %v1455 = vsel %vm702, %v1453, %v1454
      %v1456 = vrot.slane %v1454, 4
      %v1457 = vrot.slane %v1402, 6
      %v1458 = vsel %vm702, %v1456, %v1457
      %v1459 = vrot.slane %v1403, 6
      %v1460 = vrot.slane %v1459, 4
      %v1461 = vrot.slane %v1404, 6
      %v1462 = vsel %vm702, %v1460, %v1461
      %v1463 = vrot.slane %v1461, 4
      %v1464 = vrot.slane %v1405, 6
      %v1465 = vsel %vm702, %v1463, %v1464
      %v1466 = vrot.slane %v1406, 6
      %v1467 = vrot.slane %v1466, 4
      %v1468 = vrot.slane %v1407, 6
      %v1469 = vsel %vm702, %v1467, %v1468
      %v1470 = vrot.slane %v1468, 4
      %v1471 = vrot.slane %v1408, 6
      %v1472 = vsel %vm702, %v1470, %v1471
      %v1473 = vrot.slane %v1409, 6
      %v1474 = vrot.slane %v1473, 4
      %v1475 = vrot.slane %v1410, 6
      %v1476 = vsel %vm702, %v1474, %v1475
      %v1477 = vrot.slane %v1475, 4
      %v1478 = vrot.slane %v1411, 6
      %v1479 = vsel %vm702, %v1477, %v1478
      %v1480 = vrot.slane %v1412, 6
      %v1481 = vrot.slane %v1480, 4
      %v1482 = vrot.slane %v1413, 6
      %v1483 = vsel %vm702, %v1481, %v1482
      %v1484 = vrot.slane %v1482, 4
      %v1485 = vrot.slane %v1414, 6
      %v1486 = vsel %vm702, %v1484, %v1485
      %v1487 = vrot.slane %v1415, 6
      %v1488 = vrot.slane %v1487, 4
      %v1489 = vrot.slane %v1416, 6
      %v1490 = vsel %vm702, %v1488, %v1489
      %v1491 = vrot.slane %v1489, 4
      %v1492 = vrot.slane %v1417, 6
      %v1493 = vsel %vm702, %v1491, %v1492
      %v1494 = vrot.slane %v1418, 6
      %v1495 = vrot.slane %v1494, 4
      %v1496 = vrot.slane %v1419, 6
      %v1497 = vsel %vm702, %v1495, %v1496
      %v1498 = vrot.slane %v1496, 4
      %v1499 = vrot.slane %v1420, 6
      %v1500 = vsel %vm702, %v1498, %v1499
      %s1501 = scalar_lea.vmem %s1, 20
      %v1502 = vld [vmem:[%s1501] sm:$0xf]
      %v1503 = vunpack.c.l.b16 %v1448
      %v1504 = vunpack.c.l.b16 %v1451
      %v1505 = vunpack.c.l.b16 %v1455
      %v1506 = vunpack.c.l.b16 %v1458
      %v1507 = vunpack.c.l.b16 %v1462
      %v1508 = vunpack.c.l.b16 %v1465
      %v1509 = vunpack.c.l.b16 %v1469
      %v1510 = vunpack.c.l.b16 %v1472
      %v1511 = vunpack.c.l.b16 %v1476
      %v1512 = vunpack.c.l.b16 %v1479
      %v1513 = vunpack.c.l.b16 %v1483
      %v1514 = vunpack.c.l.b16 %v1486
      %v1515 = vunpack.c.l.b16 %v1490
      %v1516 = vunpack.c.l.b16 %v1493
      %v1517 = vunpack.c.l.b16 %v1497
      %v1518 = vunpack.c.l.b16 %v1500
      %v1519 = vpack.c.b16 %v1504, %v1503
      %v1520 = vpack.c.b16 %v1506, %v1505
      %v1521 = vpack.c.b16 %v1508, %v1507
      %v1522 = vpack.c.b16 %v1510, %v1509
      %v1523 = vpack.c.b16 %v1512, %v1511
      %v1524 = vpack.c.b16 %v1514, %v1513
      %v1525 = vpack.c.b16 %v1516, %v1515
      %v1526 = vpack.c.b16 %v1518, %v1517
      %v1528 = vsel %vm370, %v1519, 0
      %v1531 = vsel %vm370, %v1520, 0
      %v1534 = vsel %vm370, %v1521, 0
      %v1537 = vsel %vm370, %v1522, 0
      %v1540 = vsel %vm370, %v1523, 0
      %v1543 = vsel %vm370, %v1524, 0
      %v1546 = vsel %vm370, %v1525, 0
      %v1549 = vsel %vm370, %v1526, 0
      %v1552 = vsel %vm395, %v1502, 0
      %1554 = vmatprep.subr.bf16.mxu0 0
      %1555 = vmatpush1.bf16.msra.mxu0 %v1552
      %1556 = vmatprep.subr.bf16.mxu0 0
      %1557 = vmatpush1.bf16.msra.mxu0 0
      %1558 = vmatprep.subr.bf16.mxu0 0
      %1559 = vmatpush1.bf16.msra.mxu0 0
      %1560 = vmatprep.subr.bf16.mxu0 0
      %1561 = vmatpush1.bf16.msra.mxu0 0
      %1562 = vmatprep.subr.bf16.mxu0 0
      %1563 = vmatpush1.bf16.msra.mxu0 0
      %1564 = vmatprep.subr.bf16.mxu0 0
      %1565 = vmatpush1.bf16.msra.mxu0 0
      %1566 = vmatprep.subr.bf16.mxu0 0
      %1567 = vmatpush1.bf16.msra.mxu0 0
      %1568 = vmatprep.subr.bf16.mxu0 0
      %1569 = vmatpush1.bf16.msra.mxu0 0
      %1570 = vmatprep.subr.bf16.mxu0 0
      %1571 = vmatpush1.bf16.msra.mxu0 0
      %1572 = vmatprep.subr.bf16.mxu0 0
      %1573 = vmatpush1.bf16.msra.mxu0 0
      %1574 = vmatprep.subr.bf16.mxu0 0
      %1575 = vmatpush1.bf16.msra.mxu0 0
      %1576 = vmatprep.subr.bf16.mxu0 0
      %1577 = vmatpush1.bf16.msra.mxu0 0
      %1578 = vmatprep.subr.bf16.mxu0 0
      %1579 = vmatpush1.bf16.msra.mxu0 0
      %1580 = vmatprep.subr.bf16.mxu0 0
      %1581 = vmatpush1.bf16.msra.mxu0 0
      %1582 = vmatprep.subr.bf16.mxu0 0
      %1583 = vmatpush1.bf16.msra.mxu0 0
      %1584 = vmatprep.subr.bf16.mxu0 0
      %1585 = vmatpush1.bf16.msra.mxu0 0
      %1586 = vmatprep.mubr.bf16.mxu0 0
      %1587 = vmatmul.mubr.bf16.gmra.mrb[0].mxu0 %v1528
      %v1588 = vpop.f32.mrb[0].mxu0
      %v1589 = vadd.f32 0.0, %v1588
      %v1590 = vpop.f32.mrb[0].mxu0
      %v1591 = vpop.f32.mrb[0].mxu0
      %v1592 = vadd.f32 0.0, %v1591
      %v1593 = vpop.f32.mrb[0].mxu0
      %1594 = vmatprep.mubr.bf16.mxu0 0
      %1595 = vmatmul.mubr.bf16.gmra.mrb[0].mxu0 %v1531
      %v1596 = vpop.f32.mrb[0].mxu0
      %v1597 = vadd.f32 0.0, %v1596
      %v1598 = vpop.f32.mrb[0].mxu0
      %v1599 = vpop.f32.mrb[0].mxu0
      %v1600 = vadd.f32 0.0, %v1599
      %v1601 = vpop.f32.mrb[0].mxu0
      %1602 = vmatprep.mubr.bf16.mxu0 0
      %1603 = vmatmul.mubr.bf16.gmra.mrb[0].mxu0 %v1534
      %v1604 = vpop.f32.mrb[0].mxu0
      %v1605 = vadd.f32 0.0, %v1604
      %v1606 = vpop.f32.mrb[0].mxu0
      %v1607 = vpop.f32.mrb[0].mxu0
      %v1608 = vadd.f32 0.0, %v1607
      %v1609 = vpop.f32.mrb[0].mxu0
      %1610 = vmatprep.mubr.bf16.mxu0 0
      %1611 = vmatmul.mubr.bf16.gmra.mrb[0].mxu0 %v1537
      %v1612 = vpop.f32.mrb[0].mxu0
      %v1613 = vadd.f32 0.0, %v1612
      %v1614 = vpop.f32.mrb[0].mxu0
      %v1615 = vpop.f32.mrb[0].mxu0
      %v1616 = vadd.f32 0.0, %v1615
      %v1617 = vpop.f32.mrb[0].mxu0
      %1618 = vmatprep.mubr.bf16.mxu0 0
      %1619 = vmatmul.mubr.bf16.gmra.mrb[0].mxu0 %v1540
      %v1620 = vpop.f32.mrb[0].mxu0
      %v1621 = vadd.f32 0.0, %v1620
      %v1622 = vpop.f32.mrb[0].mxu0
      %v1623 = vpop.f32.mrb[0].mxu0
      %v1624 = vadd.f32 0.0, %v1623
      %v1625 = vpop.f32.mrb[0].mxu0
      %1626 = vmatprep.mubr.bf16.mxu0 0
      %1627 = vmatmul.mubr.bf16.gmra.mrb[0].mxu0 %v1543
      %v1628 = vpop.f32.mrb[0].mxu0
      %v1629 = vadd.f32 0.0, %v1628
      %v1630 = vpop.f32.mrb[0].mxu0
      %v1631 = vpop.f32.mrb[0].mxu0
      %v1632 = vadd.f32 0.0, %v1631
      %v1633 = vpop.f32.mrb[0].mxu0
      %1634 = vmatprep.mubr.bf16.mxu0 0
      %1635 = vmatmul.mubr.bf16.gmra.mrb[0].mxu0 %v1546
      %v1636 = vpop.f32.mrb[0].mxu0
      %v1637 = vadd.f32 0.0, %v1636
      %v1638 = vpop.f32.mrb[0].mxu0
      %v1639 = vpop.f32.mrb[0].mxu0
      %v1640 = vadd.f32 0.0, %v1639
      %v1641 = vpop.f32.mrb[0].mxu0
      %1642 = vmatprep.mubr.bf16.mxu0 0
      %1643 = vmatmul.mubr.bf16.gmra.mrb[0].mxu0 %v1549
      %v1644 = vpop.f32.mrb[0].mxu0
      %v1645 = vadd.f32 0.0, %v1644
      %v1646 = vpop.f32.mrb[0].mxu0
      %v1647 = vpop.f32.mrb[0].mxu0
      %v1648 = vadd.f32 0.0, %v1647
      %v1649 = vpop.f32.mrb[0].mxu0
      %1650 = vdwg.mxu0
      %v1651 = vadd.f32 %v1381, %v1589
      %v1652 = vadd.f32 %v1382, %v1592
      %v1653 = vadd.f32 %v1383, %v1597
      %v1654 = vadd.f32 %v1384, %v1600
      %v1655 = vadd.f32 %v1385, %v1605
      %v1656 = vadd.f32 %v1386, %v1608
      %v1657 = vadd.f32 %v1387, %v1613
      %v1658 = vadd.f32 %v1388, %v1616
      %v1659 = vadd.f32 %v1389, %v1621
      %v1660 = vadd.f32 %v1390, %v1624
      %v1661 = vadd.f32 %v1391, %v1629
      %v1662 = vadd.f32 %v1392, %v1632
      %v1663 = vadd.f32 %v1393, %v1637
      %v1664 = vadd.f32 %v1394, %v1640
      %v1665 = vadd.f32 %v1395, %v1645
      %v1666 = vadd.f32 %v1396, %v1648
      %s1667 = sadd.s32 %s224, 12
      %s1668 = smul.u32 %s1667, 4
      %s1669 = smul.addr %s1668, 4
      %s1670 = scalar_lea.vmem %s211, %s1669
      %v1671 = vld [vmem:[%s1670] sm:$0xf]
      %v1672 = vld [vmem:[%s1670 + $0x4] sm:$0xf]
      %v1673 = vld [vmem:[%s1670 + $0x10] sm:$0xf]
      %v1674 = vld [vmem:[%s1670 + $0x14] sm:$0xf]
      %v1675 = vld [vmem:[%s1670 + $0x20] sm:$0xf]
      %v1676 = vld [vmem:[%s1670 + $0x24] sm:$0xf]
      %v1677 = vld [vmem:[%s1670 + $0x30] sm:$0xf]
      %v1678 = vld [vmem:[%s1670 + $0x34] sm:$0xf]
      %v1679 = vld [vmem:[%s1670 + $0x40] sm:$0xf]
      %v1680 = vld [vmem:[%s1670 + $0x44] sm:$0xf]
      %v1681 = vld [vmem:[%s1670 + $0x50] sm:$0xf]
      %v1682 = vld [vmem:[%s1670 + $0x54] sm:$0xf]
      %v1683 = vld [vmem:[%s1670 + $0x60] sm:$0xf]
      %v1684 = vld [vmem:[%s1670 + $0x64] sm:$0xf]
      %v1685 = vld [vmem:[%s1670 + $0x70] sm:$0xf]
      %v1686 = vld [vmem:[%s1670 + $0x74] sm:$0xf]
      %s1687 = scalar_lea.vmem %s1, 24
      %v1688 = vld [vmem:[%s1687] sm:$0xf]
      %v1705 = vunpack.c.l.b16 %v1671
      %v1706 = vunpack.c.l.b16 %v1672
      %v1707 = vunpack.c.l.b16 %v1673
      %v1708 = vunpack.c.l.b16 %v1674
      %v1709 = vunpack.c.l.b16 %v1675
      %v1710 = vunpack.c.l.b16 %v1676
      %v1711 = vunpack.c.l.b16 %v1677
      %v1712 = vunpack.c.l.b16 %v1678
      %v1713 = vunpack.c.l.b16 %v1679
      %v1714 = vunpack.c.l.b16 %v1680
      %v1715 = vunpack.c.l.b16 %v1681
      %v1716 = vunpack.c.l.b16 %v1682
      %v1717 = vunpack.c.l.b16 %v1683
      %v1718 = vunpack.c.l.b16 %v1684
      %v1719 = vunpack.c.l.b16 %v1685
      %v1720 = vunpack.c.l.b16 %v1686
      %v1721 = vpack.c.b16 %v1706, %v1705
      %v1722 = vpack.c.b16 %v1708, %v1707
      %v1723 = vpack.c.b16 %v1710, %v1709
      %v1724 = vpack.c.b16 %v1712, %v1711
      %v1725 = vpack.c.b16 %v1714, %v1713
      %v1726 = vpack.c.b16 %v1716, %v1715
      %v1727 = vpack.c.b16 %v1718, %v1717
      %v1728 = vpack.c.b16 %v1720, %v1719
      %v1730 = vsel %vm370, %v1721, 0
      %v1733 = vsel %vm370, %v1722, 0
      %v1736 = vsel %vm370, %v1723, 0
      %v1739 = vsel %vm370, %v1724, 0
      %v1742 = vsel %vm370, %v1725, 0
      %v1745 = vsel %vm370, %v1726, 0
      %v1748 = vsel %vm370, %v1727, 0
      %v1751 = vsel %vm370, %v1728, 0
      %v1754 = vsel %vm395, %v1688, 0
      %1756 = vmatprep.subr.bf16.mxu0 0
      %1757 = vmatpush1.bf16.msra.mxu0 %v1754
      %1758 = vmatprep.subr.bf16.mxu0 0
      %1759 = vmatpush1.bf16.msra.mxu0 0
      %1760 = vmatprep.subr.bf16.mxu0 0
      %1761 = vmatpush1.bf16.msra.mxu0 0
      %1762 = vmatprep.subr.bf16.mxu0 0
      %1763 = vmatpush1.bf16.msra.mxu0 0
      %1764 = vmatprep.subr.bf16.mxu0 0
      %1765 = vmatpush1.bf16.msra.mxu0 0
      %1766 = vmatprep.subr.bf16.mxu0 0
      %1767 = vmatpush1.bf16.msra.mxu0 0
      %1768 = vmatprep.subr.bf16.mxu0 0
      %1769 = vmatpush1.bf16.msra.mxu0 0
      %1770 = vmatprep.subr.bf16.mxu0 0
      %1771 = vmatpush1.bf16.msra.mxu0 0
      %1772 = vmatprep.subr.bf16.mxu0 0
      %1773 = vmatpush1.bf16.msra.mxu0 0
      %1774 = vmatprep.subr.bf16.mxu0 0
      %1775 = vmatpush1.bf16.msra.mxu0 0
      %1776 = vmatprep.subr.bf16.mxu0 0
      %1777 = vmatpush1.bf16.msra.mxu0 0
      %1778 = vmatprep.subr.bf16.mxu0 0
      %1779 = vmatpush1.bf16.msra.mxu0 0
      %1780 = vmatprep.subr.bf16.mxu0 0
      %1781 = vmatpush1.bf16.msra.mxu0 0
      %1782 = vmatprep.subr.bf16.mxu0 0
      %1783 = vmatpush1.bf16.msra.mxu0 0
      %1784 = vmatprep.subr.bf16.mxu0 0
      %1785 = vmatpush1.bf16.msra.mxu0 0
      %1786 = vmatprep.subr.bf16.mxu0 0
      %1787 = vmatpush1.bf16.msra.mxu0 0
      %1788 = vmatprep.mubr.bf16.mxu0 0
      %1789 = vmatmul.mubr.bf16.gmra.mrb[0].mxu0 %v1730
      %v1790 = vpop.f32.mrb[0].mxu0
      %v1791 = vadd.f32 0.0, %v1790
      %v1792 = vpop.f32.mrb[0].mxu0
      %v1793 = vpop.f32.mrb[0].mxu0
      %v1794 = vadd.f32 0.0, %v1793
      %v1795 = vpop.f32.mrb[0].mxu0
      %1796 = vmatprep.mubr.bf16.mxu0 0
      %1797 = vmatmul.mubr.bf16.gmra.mrb[0].mxu0 %v1733
      %v1798 = vpop.f32.mrb[0].mxu0
      %v1799 = vadd.f32 0.0, %v1798
      %v1800 = vpop.f32.mrb[0].mxu0
      %v1801 = vpop.f32.mrb[0].mxu0
      %v1802 = vadd.f32 0.0, %v1801
      %v1803 = vpop.f32.mrb[0].mxu0
      %1804 = vmatprep.mubr.bf16.mxu0 0
      %1805 = vmatmul.mubr.bf16.gmra.mrb[0].mxu0 %v1736
      %v1806 = vpop.f32.mrb[0].mxu0
      %v1807 = vadd.f32 0.0, %v1806
      %v1808 = vpop.f32.mrb[0].mxu0
      %v1809 = vpop.f32.mrb[0].mxu0
      %v1810 = vadd.f32 0.0, %v1809
      %v1811 = vpop.f32.mrb[0].mxu0
      %1812 = vmatprep.mubr.bf16.mxu0 0
      %1813 = vmatmul.mubr.bf16.gmra.mrb[0].mxu0 %v1739
      %v1814 = vpop.f32.mrb[0].mxu0
      %v1815 = vadd.f32 0.0, %v1814
      %v1816 = vpop.f32.mrb[0].mxu0
      %v1817 = vpop.f32.mrb[0].mxu0
      %v1818 = vadd.f32 0.0, %v1817
      %v1819 = vpop.f32.mrb[0].mxu0
      %1820 = vmatprep.mubr.bf16.mxu0 0
      %1821 = vmatmul.mubr.bf16.gmra.mrb[0].mxu0 %v1742
      %v1822 = vpop.f32.mrb[0].mxu0
      %v1823 = vadd.f32 0.0, %v1822
      %v1824 = vpop.f32.mrb[0].mxu0
      %v1825 = vpop.f32.mrb[0].mxu0
      %v1826 = vadd.f32 0.0, %v1825
      %v1827 = vpop.f32.mrb[0].mxu0
      %1828 = vmatprep.mubr.bf16.mxu0 0
      %1829 = vmatmul.mubr.bf16.gmra.mrb[0].mxu0 %v1745
      %v1830 = vpop.f32.mrb[0].mxu0
      %v1831 = vadd.f32 0.0, %v1830
      %v1832 = vpop.f32.mrb[0].mxu0
      %v1833 = vpop.f32.mrb[0].mxu0
      %v1834 = vadd.f32 0.0, %v1833
      %v1835 = vpop.f32.mrb[0].mxu0
      %1836 = vmatprep.mubr.bf16.mxu0 0
      %1837 = vmatmul.mubr.bf16.gmra.mrb[0].mxu0 %v1748
      %v1838 = vpop.f32.mrb[0].mxu0
      %v1839 = vadd.f32 0.0, %v1838
      %v1840 = vpop.f32.mrb[0].mxu0
      %v1841 = vpop.f32.mrb[0].mxu0
      %v1842 = vadd.f32 0.0, %v1841
      %v1843 = vpop.f32.mrb[0].mxu0
      %1844 = vmatprep.mubr.bf16.mxu0 0
      %1845 = vmatmul.mubr.bf16.gmra.mrb[0].mxu0 %v1751
      %v1846 = vpop.f32.mrb[0].mxu0
      %v1847 = vadd.f32 0.0, %v1846
      %v1848 = vpop.f32.mrb[0].mxu0
      %v1849 = vpop.f32.mrb[0].mxu0
      %v1850 = vadd.f32 0.0, %v1849
      %v1851 = vpop.f32.mrb[0].mxu0
      %1852 = vdwg.mxu0
      %v1853 = vadd.f32 %v1651, %v1791
      %v1854 = vadd.f32 %v1652, %v1794
      %v1855 = vadd.f32 %v1653, %v1799
      %v1856 = vadd.f32 %v1654, %v1802
      %v1857 = vadd.f32 %v1655, %v1807
      %v1858 = vadd.f32 %v1656, %v1810
      %v1859 = vadd.f32 %v1657, %v1815
      %v1860 = vadd.f32 %v1658, %v1818
      %v1861 = vadd.f32 %v1659, %v1823
      %v1862 = vadd.f32 %v1660, %v1826
      %v1863 = vadd.f32 %v1661, %v1831
      %v1864 = vadd.f32 %v1662, %v1834
      %v1865 = vadd.f32 %v1663, %v1839
      %v1866 = vadd.f32 %v1664, %v1842
      %v1867 = vadd.f32 %v1665, %v1847
      %v1868 = vadd.f32 %v1666, %v1850
      %v1869 = vld [vmem:[%s1670] sm:$0x8]
      %v1870 = vld [vmem:[%s1670 + $0x4] sm:$0xf]
      %v1871 = vld [vmem:[%s1670 + $0x8] sm:$0x7]
      %v1872 = vld [vmem:[%s1670 + $0x10] sm:$0x8]
      %v1873 = vld [vmem:[%s1670 + $0x14] sm:$0xf]
      %v1874 = vld [vmem:[%s1670 + $0x18] sm:$0x7]
      %v1875 = vld [vmem:[%s1670 + $0x20] sm:$0x8]
      %v1876 = vld [vmem:[%s1670 + $0x24] sm:$0xf]
      %v1877 = vld [vmem:[%s1670 + $0x28] sm:$0x7]
      %v1878 = vld [vmem:[%s1670 + $0x30] sm:$0x8]
      %v1879 = vld [vmem:[%s1670 + $0x34] sm:$0xf]
      %v1880 = vld [vmem:[%s1670 + $0x38] sm:$0x7]
      %v1881 = vld [vmem:[%s1670 + $0x40] sm:$0x8]
      %v1882 = vld [vmem:[%s1670 + $0x44] sm:$0xf]
      %v1883 = vld [vmem:[%s1670 + $0x48] sm:$0x7]
      %v1884 = vld [vmem:[%s1670 + $0x50] sm:$0x8]
      %v1885 = vld [vmem:[%s1670 + $0x54] sm:$0xf]
      %v1886 = vld [vmem:[%s1670 + $0x58] sm:$0x7]
      %v1887 = vld [vmem:[%s1670 + $0x60] sm:$0x8]
      %v1888 = vld [vmem:[%s1670 + $0x64] sm:$0xf]
      %v1889 = vld [vmem:[%s1670 + $0x68] sm:$0x7]
      %v1890 = vld [vmem:[%s1670 + $0x70] sm:$0x8]
      %v1891 = vld [vmem:[%s1670 + $0x74] sm:$0xf]
      %v1892 = vld [vmem:[%s1670 + $0x78] sm:$0x7]
      %v1917 = vrot.slane %v1869, 7
      %v1918 = vrot.slane %v1917, 4
      %v1919 = vrot.slane %v1870, 7
      %v1920 = vsel %vm287, %v1918, %v1919
      %v1921 = vrot.slane %v1919, 4
      %v1922 = vrot.slane %v1871, 7
      %v1923 = vsel %vm287, %v1921, %v1922
      %v1924 = vrot.slane %v1872, 7
      %v1925 = vrot.slane %v1924, 4
      %v1926 = vrot.slane %v1873, 7
      %v1927 = vsel %vm287, %v1925, %v1926
      %v1928 = vrot.slane %v1926, 4
      %v1929 = vrot.slane %v1874, 7
      %v1930 = vsel %vm287, %v1928, %v1929
      %v1931 = vrot.slane %v1875, 7
      %v1932 = vrot.slane %v1931, 4
      %v1933 = vrot.slane %v1876, 7
      %v1934 = vsel %vm287, %v1932, %v1933
      %v1935 = vrot.slane %v1933, 4
      %v1936 = vrot.slane %v1877, 7
      %v1937 = vsel %vm287, %v1935, %v1936
      %v1938 = vrot.slane %v1878, 7
      %v1939 = vrot.slane %v1938, 4
      %v1940 = vrot.slane %v1879, 7
      %v1941 = vsel %vm287, %v1939, %v1940
      %v1942 = vrot.slane %v1940, 4
      %v1943 = vrot.slane %v1880, 7
      %v1944 = vsel %vm287, %v1942, %v1943
      %v1945 = vrot.slane %v1881, 7
      %v1946 = vrot.slane %v1945, 4
      %v1947 = vrot.slane %v1882, 7
      %v1948 = vsel %vm287, %v1946, %v1947
      %v1949 = vrot.slane %v1947, 4
      %v1950 = vrot.slane %v1883, 7
      %v1951 = vsel %vm287, %v1949, %v1950
      %v1952 = vrot.slane %v1884, 7
      %v1953 = vrot.slane %v1952, 4
      %v1954 = vrot.slane %v1885, 7
      %v1955 = vsel %vm287, %v1953, %v1954
      %v1956 = vrot.slane %v1954, 4
      %v1957 = vrot.slane %v1886, 7
      %v1958 = vsel %vm287, %v1956, %v1957
      %v1959 = vrot.slane %v1887, 7
      %v1960 = vrot.slane %v1959, 4
      %v1961 = vrot.slane %v1888, 7
      %v1962 = vsel %vm287, %v1960, %v1961
      %v1963 = vrot.slane %v1961, 4
      %v1964 = vrot.slane %v1889, 7
      %v1965 = vsel %vm287, %v1963, %v1964
      %v1966 = vrot.slane %v1890, 7
      %v1967 = vrot.slane %v1966, 4
      %v1968 = vrot.slane %v1891, 7
      %v1969 = vsel %vm287, %v1967, %v1968
      %v1970 = vrot.slane %v1968, 4
      %v1971 = vrot.slane %v1892, 7
      %v1972 = vsel %vm287, %v1970, %v1971
      %s1973 = scalar_lea.vmem %s1, 28
      %v1974 = vld [vmem:[%s1973] sm:$0xf]
      %v1975 = vunpack.c.l.b16 %v1920
      %v1976 = vunpack.c.l.b16 %v1923
      %v1977 = vunpack.c.l.b16 %v1927
      %v1978 = vunpack.c.l.b16 %v1930
      %v1979 = vunpack.c.l.b16 %v1934
      %v1980 = vunpack.c.l.b16 %v1937
      %v1981 = vunpack.c.l.b16 %v1941
      %v1982 = vunpack.c.l.b16 %v1944
      %v1983 = vunpack.c.l.b16 %v1948
      %v1984 = vunpack.c.l.b16 %v1951
      %v1985 = vunpack.c.l.b16 %v1955
      %v1986 = vunpack.c.l.b16 %v1958
      %v1987 = vunpack.c.l.b16 %v1962
      %v1988 = vunpack.c.l.b16 %v1965
      %v1989 = vunpack.c.l.b16 %v1969
      %v1990 = vunpack.c.l.b16 %v1972
      %v1991 = vpack.c.b16 %v1976, %v1975
      %v1992 = vpack.c.b16 %v1978, %v1977
      %v1993 = vpack.c.b16 %v1980, %v1979
      %v1994 = vpack.c.b16 %v1982, %v1981
      %v1995 = vpack.c.b16 %v1984, %v1983
      %v1996 = vpack.c.b16 %v1986, %v1985
      %v1997 = vpack.c.b16 %v1988, %v1987
      %v1998 = vpack.c.b16 %v1990, %v1989
      %v2000 = vsel %vm370, %v1991, 0
      %v2003 = vsel %vm370, %v1992, 0
      %v2006 = vsel %vm370, %v1993, 0
      %v2009 = vsel %vm370, %v1994, 0
      %v2012 = vsel %vm370, %v1995, 0
      %v2015 = vsel %vm370, %v1996, 0
      %v2018 = vsel %vm370, %v1997, 0
      %v2021 = vsel %vm370, %v1998, 0
      %v2024 = vsel %vm395, %v1974, 0
      %2026 = vmatprep.subr.bf16.mxu0 0
      %2027 = vmatpush1.bf16.msra.mxu0 %v2024
      %2028 = vmatprep.subr.bf16.mxu0 0
      %2029 = vmatpush1.bf16.msra.mxu0 0
      %2030 = vmatprep.subr.bf16.mxu0 0
      %2031 = vmatpush1.bf16.msra.mxu0 0
      %2032 = vmatprep.subr.bf16.mxu0 0
      %2033 = vmatpush1.bf16.msra.mxu0 0
      %2034 = vmatprep.subr.bf16.mxu0 0
      %2035 = vmatpush1.bf16.msra.mxu0 0
      %2036 = vmatprep.subr.bf16.mxu0 0
      %2037 = vmatpush1.bf16.msra.mxu0 0
      %2038 = vmatprep.subr.bf16.mxu0 0
      %2039 = vmatpush1.bf16.msra.mxu0 0
      %2040 = vmatprep.subr.bf16.mxu0 0
      %2041 = vmatpush1.bf16.msra.mxu0 0
      %2042 = vmatprep.subr.bf16.mxu0 0
      %2043 = vmatpush1.bf16.msra.mxu0 0
      %2044 = vmatprep.subr.bf16.mxu0 0
      %2045 = vmatpush1.bf16.msra.mxu0 0
      %2046 = vmatprep.subr.bf16.mxu0 0
      %2047 = vmatpush1.bf16.msra.mxu0 0
      %2048 = vmatprep.subr.bf16.mxu0 0
      %2049 = vmatpush1.bf16.msra.mxu0 0
      %2050 = vmatprep.subr.bf16.mxu0 0
      %2051 = vmatpush1.bf16.msra.mxu0 0
      %2052 = vmatprep.subr.bf16.mxu0 0
      %2053 = vmatpush1.bf16.msra.mxu0 0
      %2054 = vmatprep.subr.bf16.mxu0 0
      %2055 = vmatpush1.bf16.msra.mxu0 0
      %2056 = vmatprep.subr.bf16.mxu0 0
      %2057 = vmatpush1.bf16.msra.mxu0 0
      %2058 = vmatprep.mubr.bf16.mxu0 0
      %2059 = vmatmul.mubr.bf16.gmra.mrb[0].mxu0 %v2000
      %v2060 = vpop.f32.mrb[0].mxu0
      %v2061 = vadd.f32 0.0, %v2060
      %v2062 = vpop.f32.mrb[0].mxu0
      %v2063 = vpop.f32.mrb[0].mxu0
      %v2064 = vadd.f32 0.0, %v2063
      %v2065 = vpop.f32.mrb[0].mxu0
      %2066 = vmatprep.mubr.bf16.mxu0 0
      %2067 = vmatmul.mubr.bf16.gmra.mrb[0].mxu0 %v2003
      %v2068 = vpop.f32.mrb[0].mxu0
      %v2069 = vadd.f32 0.0, %v2068
      %v2070 = vpop.f32.mrb[0].mxu0
      %v2071 = vpop.f32.mrb[0].mxu0
      %v2072 = vadd.f32 0.0, %v2071
      %v2073 = vpop.f32.mrb[0].mxu0
      %2074 = vmatprep.mubr.bf16.mxu0 0
      %2075 = vmatmul.mubr.bf16.gmra.mrb[0].mxu0 %v2006
      %v2076 = vpop.f32.mrb[0].mxu0
      %v2077 = vadd.f32 0.0, %v2076
      %v2078 = vpop.f32.mrb[0].mxu0
      %v2079 = vpop.f32.mrb[0].mxu0
      %v2080 = vadd.f32 0.0, %v2079
      %v2081 = vpop.f32.mrb[0].mxu0
      %2082 = vmatprep.mubr.bf16.mxu0 0
      %2083 = vmatmul.mubr.bf16.gmra.mrb[0].mxu0 %v2009
      %v2084 = vpop.f32.mrb[0].mxu0
      %v2085 = vadd.f32 0.0, %v2084
      %v2086 = vpop.f32.mrb[0].mxu0
      %v2087 = vpop.f32.mrb[0].mxu0
      %v2088 = vadd.f32 0.0, %v2087
      %v2089 = vpop.f32.mrb[0].mxu0
      %2090 = vmatprep.mubr.bf16.mxu0 0
      %2091 = vmatmul.mubr.bf16.gmra.mrb[0].mxu0 %v2012
      %v2092 = vpop.f32.mrb[0].mxu0
      %v2093 = vadd.f32 0.0, %v2092
      %v2094 = vpop.f32.mrb[0].mxu0
      %v2095 = vpop.f32.mrb[0].mxu0
      %v2096 = vadd.f32 0.0, %v2095
      %v2097 = vpop.f32.mrb[0].mxu0
      %2098 = vmatprep.mubr.bf16.mxu0 0
      %2099 = vmatmul.mubr.bf16.gmra.mrb[0].mxu0 %v2015
      %v2100 = vpop.f32.mrb[0].mxu0
      %v2101 = vadd.f32 0.0, %v2100
      %v2102 = vpop.f32.mrb[0].mxu0
      %v2103 = vpop.f32.mrb[0].mxu0
      %v2104 = vadd.f32 0.0, %v2103
      %v2105 = vpop.f32.mrb[0].mxu0
      %2106 = vmatprep.mubr.bf16.mxu0 0
      %2107 = vmatmul.mubr.bf16.gmra.mrb[0].mxu0 %v2018
      %v2108 = vpop.f32.mrb[0].mxu0
      %v2109 = vadd.f32 0.0, %v2108
      %v2110 = vpop.f32.mrb[0].mxu0
      %v2111 = vpop.f32.mrb[0].mxu0
      %v2112 = vadd.f32 0.0, %v2111
      %v2113 = vpop.f32.mrb[0].mxu0
      %2114 = vmatprep.mubr.bf16.mxu0 0
      %2115 = vmatmul.mubr.bf16.gmra.mrb[0].mxu0 %v2021
      %v2116 = vpop.f32.mrb[0].mxu0
      %v2117 = vadd.f32 0.0, %v2116
      %v2118 = vpop.f32.mrb[0].mxu0
      %v2119 = vpop.f32.mrb[0].mxu0
      %v2120 = vadd.f32 0.0, %v2119
      %v2121 = vpop.f32.mrb[0].mxu0
      %2122 = vdwg.mxu0
      %v2123 = vadd.f32 %v1853, %v2061
      %v2124 = vadd.f32 %v1854, %v2064
      %v2125 = vadd.f32 %v1855, %v2069
      %v2126 = vadd.f32 %v1856, %v2072
      %v2127 = vadd.f32 %v1857, %v2077
      %v2128 = vadd.f32 %v1858, %v2080
      %v2129 = vadd.f32 %v1859, %v2085
      %v2130 = vadd.f32 %v1860, %v2088
      %v2131 = vadd.f32 %v1861, %v2093
      %v2132 = vadd.f32 %v1862, %v2096
      %v2133 = vadd.f32 %v1863, %v2101
      %v2134 = vadd.f32 %v1864, %v2104
      %v2135 = vadd.f32 %v1865, %v2109
      %v2136 = vadd.f32 %v1866, %v2112
      %v2137 = vadd.f32 %v1867, %v2117
      %v2138 = vadd.f32 %v1868, %v2120
      %v2139 = vld [vmem:[%s1670 + $0x4] sm:$0xc]
      %v2140 = vld [vmem:[%s1670 + $0x8] sm:$0xf]
      %v2141 = vld [vmem:[%s1670 + $0xc] sm:$0x3]
      %v2142 = vld [vmem:[%s1670 + $0x14] sm:$0xc]
      %v2143 = vld [vmem:[%s1670 + $0x18] sm:$0xf]
      %v2144 = vld [vmem:[%s1670 + $0x1c] sm:$0x3]
      %v2145 = vld [vmem:[%s1670 + $0x24] sm:$0xc]
      %v2146 = vld [vmem:[%s1670 + $0x28] sm:$0xf]
      %v2147 = vld [vmem:[%s1670 + $0x2c] sm:$0x3]
      %v2148 = vld [vmem:[%s1670 + $0x34] sm:$0xc]
      %v2149 = vld [vmem:[%s1670 + $0x38] sm:$0xf]
      %v2150 = vld [vmem:[%s1670 + $0x3c] sm:$0x3]
      %v2151 = vld [vmem:[%s1670 + $0x44] sm:$0xc]
      %v2152 = vld [vmem:[%s1670 + $0x48] sm:$0xf]
      %v2153 = vld [vmem:[%s1670 + $0x4c] sm:$0x3]
      %v2154 = vld [vmem:[%s1670 + $0x54] sm:$0xc]
      %v2155 = vld [vmem:[%s1670 + $0x58] sm:$0xf]
      %v2156 = vld [vmem:[%s1670 + $0x5c] sm:$0x3]
      %v2157 = vld [vmem:[%s1670 + $0x64] sm:$0xc]
      %v2158 = vld [vmem:[%s1670 + $0x68] sm:$0xf]
      %v2159 = vld [vmem:[%s1670 + $0x6c] sm:$0x3]
      %v2160 = vld [vmem:[%s1670 + $0x74] sm:$0xc]
      %v2161 = vld [vmem:[%s1670 + $0x78] sm:$0xf]
      %v2162 = vld [vmem:[%s1670 + $0x7c] sm:$0x3]
      %v2187 = vrot.slane %v2139, 6
      %v2188 = vrot.slane %v2187, 4
      %v2189 = vrot.slane %v2140, 6
      %v2190 = vsel %vm702, %v2188, %v2189
      %v2191 = vrot.slane %v2189, 4
      %v2192 = vrot.slane %v2141, 6
      %v2193 = vsel %vm702, %v2191, %v2192
      %v2194 = vrot.slane %v2142, 6
      %v2195 = vrot.slane %v2194, 4
      %v2196 = vrot.slane %v2143, 6
      %v2197 = vsel %vm702, %v2195, %v2196
      %v2198 = vrot.slane %v2196, 4
      %v2199 = vrot.slane %v2144, 6
      %v2200 = vsel %vm702, %v2198, %v2199
      %v2201 = vrot.slane %v2145, 6
      %v2202 = vrot.slane %v2201, 4
      %v2203 = vrot.slane %v2146, 6
      %v2204 = vsel %vm702, %v2202, %v2203
      %v2205 = vrot.slane %v2203, 4
      %v2206 = vrot.slane %v2147, 6
      %v2207 = vsel %vm702, %v2205, %v2206
      %v2208 = vrot.slane %v2148, 6
      %v2209 = vrot.slane %v2208, 4
      %v2210 = vrot.slane %v2149, 6
      %v2211 = vsel %vm702, %v2209, %v2210
      %v2212 = vrot.slane %v2210, 4
      %v2213 = vrot.slane %v2150, 6
      %v2214 = vsel %vm702, %v2212, %v2213
      %v2215 = vrot.slane %v2151, 6
      %v2216 = vrot.slane %v2215, 4
      %v2217 = vrot.slane %v2152, 6
      %v2218 = vsel %vm702, %v2216, %v2217
      %v2219 = vrot.slane %v2217, 4
      %v2220 = vrot.slane %v2153, 6
      %v2221 = vsel %vm702, %v2219, %v2220
      %v2222 = vrot.slane %v2154, 6
      %v2223 = vrot.slane %v2222, 4
      %v2224 = vrot.slane %v2155, 6
      %v2225 = vsel %vm702, %v2223, %v2224
      %v2226 = vrot.slane %v2224, 4
      %v2227 = vrot.slane %v2156, 6
      %v2228 = vsel %vm702, %v2226, %v2227
      %v2229 = vrot.slane %v2157, 6
      %v2230 = vrot.slane %v2229, 4
      %v2231 = vrot.slane %v2158, 6
      %v2232 = vsel %vm702, %v2230, %v2231
      %v2233 = vrot.slane %v2231, 4
      %v2234 = vrot.slane %v2159, 6
      %v2235 = vsel %vm702, %v2233, %v2234
      %v2236 = vrot.slane %v2160, 6
      %v2237 = vrot.slane %v2236, 4
      %v2238 = vrot.slane %v2161, 6
      %v2239 = vsel %vm702, %v2237, %v2238
      %v2240 = vrot.slane %v2238, 4
      %v2241 = vrot.slane %v2162, 6
      %v2242 = vsel %vm702, %v2240, %v2241
      %s2243 = scalar_lea.vmem %s1, 32
      %v2244 = vld [vmem:[%s2243] sm:$0xf]
      %v2245 = vunpack.c.l.b16 %v2190
      %v2246 = vunpack.c.l.b16 %v2193
      %v2247 = vunpack.c.l.b16 %v2197
      %v2248 = vunpack.c.l.b16 %v2200
      %v2249 = vunpack.c.l.b16 %v2204
      %v2250 = vunpack.c.l.b16 %v2207
      %v2251 = vunpack.c.l.b16 %v2211
      %v2252 = vunpack.c.l.b16 %v2214
      %v2253 = vunpack.c.l.b16 %v2218
      %v2254 = vunpack.c.l.b16 %v2221
      %v2255 = vunpack.c.l.b16 %v2225
      %v2256 = vunpack.c.l.b16 %v2228
      %v2257 = vunpack.c.l.b16 %v2232
      %v2258 = vunpack.c.l.b16 %v2235
      %v2259 = vunpack.c.l.b16 %v2239
      %v2260 = vunpack.c.l.b16 %v2242
      %v2261 = vpack.c.b16 %v2246, %v2245
      %v2262 = vpack.c.b16 %v2248, %v2247
      %v2263 = vpack.c.b16 %v2250, %v2249
      %v2264 = vpack.c.b16 %v2252, %v2251
      %v2265 = vpack.c.b16 %v2254, %v2253
      %v2266 = vpack.c.b16 %v2256, %v2255
      %v2267 = vpack.c.b16 %v2258, %v2257
      %v2268 = vpack.c.b16 %v2260, %v2259
      %v2270 = vsel %vm370, %v2261, 0
      %v2273 = vsel %vm370, %v2262, 0
      %v2276 = vsel %vm370, %v2263, 0
      %v2279 = vsel %vm370, %v2264, 0
      %v2282 = vsel %vm370, %v2265, 0
      %v2285 = vsel %vm370, %v2266, 0
      %v2288 = vsel %vm370, %v2267, 0
      %v2291 = vsel %vm370, %v2268, 0
      %v2294 = vsel %vm395, %v2244, 0
      %2296 = vmatprep.subr.bf16.mxu0 0
      %2297 = vmatpush1.bf16.msra.mxu0 %v2294
      %2298 = vmatprep.subr.bf16.mxu0 0
      %2299 = vmatpush1.bf16.msra.mxu0 0
      %2300 = vmatprep.subr.bf16.mxu0 0
      %2301 = vmatpush1.bf16.msra.mxu0 0
      %2302 = vmatprep.subr.bf16.mxu0 0
      %2303 = vmatpush1.bf16.msra.mxu0 0
      %2304 = vmatprep.subr.bf16.mxu0 0
      %2305 = vmatpush1.bf16.msra.mxu0 0
      %2306 = vmatprep.subr.bf16.mxu0 0
      %2307 = vmatpush1.bf16.msra.mxu0 0
      %2308 = vmatprep.subr.bf16.mxu0 0
      %2309 = vmatpush1.bf16.msra.mxu0 0
      %2310 = vmatprep.subr.bf16.mxu0 0
      %2311 = vmatpush1.bf16.msra.mxu0 0
      %2312 = vmatprep.subr.bf16.mxu0 0
      %2313 = vmatpush1.bf16.msra.mxu0 0
      %2314 = vmatprep.subr.bf16.mxu0 0
      %2315 = vmatpush1.bf16.msra.mxu0 0
      %2316 = vmatprep.subr.bf16.mxu0 0
      %2317 = vmatpush1.bf16.msra.mxu0 0
      %2318 = vmatprep.subr.bf16.mxu0 0
      %2319 = vmatpush1.bf16.msra.mxu0 0
      %2320 = vmatprep.subr.bf16.mxu0 0
      %2321 = vmatpush1.bf16.msra.mxu0 0
      %2322 = vmatprep.subr.bf16.mxu0 0
      %2323 = vmatpush1.bf16.msra.mxu0 0
      %2324 = vmatprep.subr.bf16.mxu0 0
      %2325 = vmatpush1.bf16.msra.mxu0 0
      %2326 = vmatprep.subr.bf16.mxu0 0
      %2327 = vmatpush1.bf16.msra.mxu0 0
      %2328 = vmatprep.mubr.bf16.mxu0 0
      %2329 = vmatmul.mubr.bf16.gmra.mrb[0].mxu0 %v2270
      %v2330 = vpop.f32.mrb[0].mxu0
      %v2331 = vadd.f32 0.0, %v2330
      %v2332 = vpop.f32.mrb[0].mxu0
      %v2333 = vpop.f32.mrb[0].mxu0
      %v2334 = vadd.f32 0.0, %v2333
      %v2335 = vpop.f32.mrb[0].mxu0
      %2336 = vmatprep.mubr.bf16.mxu0 0
      %2337 = vmatmul.mubr.bf16.gmra.mrb[0].mxu0 %v2273
      %v2338 = vpop.f32.mrb[0].mxu0
      %v2339 = vadd.f32 0.0, %v2338
      %v2340 = vpop.f32.mrb[0].mxu0
      %v2341 = vpop.f32.mrb[0].mxu0
      %v2342 = vadd.f32 0.0, %v2341
      %v2343 = vpop.f32.mrb[0].mxu0
      %2344 = vmatprep.mubr.bf16.mxu0 0
      %2345 = vmatmul.mubr.bf16.gmra.mrb[0].mxu0 %v2276
      %v2346 = vpop.f32.mrb[0].mxu0
      %v2347 = vadd.f32 0.0, %v2346
      %v2348 = vpop.f32.mrb[0].mxu0
      %v2349 = vpop.f32.mrb[0].mxu0
      %v2350 = vadd.f32 0.0, %v2349
      %v2351 = vpop.f32.mrb[0].mxu0
      %2352 = vmatprep.mubr.bf16.mxu0 0
      %2353 = vmatmul.mubr.bf16.gmra.mrb[0].mxu0 %v2279
      %v2354 = vpop.f32.mrb[0].mxu0
      %v2355 = vadd.f32 0.0, %v2354
      %v2356 = vpop.f32.mrb[0].mxu0
      %v2357 = vpop.f32.mrb[0].mxu0
      %v2358 = vadd.f32 0.0, %v2357
      %v2359 = vpop.f32.mrb[0].mxu0
      %2360 = vmatprep.mubr.bf16.mxu0 0
      %2361 = vmatmul.mubr.bf16.gmra.mrb[0].mxu0 %v2282
      %v2362 = vpop.f32.mrb[0].mxu0
      %v2363 = vadd.f32 0.0, %v2362
      %v2364 = vpop.f32.mrb[0].mxu0
      %v2365 = vpop.f32.mrb[0].mxu0
      %v2366 = vadd.f32 0.0, %v2365
      %v2367 = vpop.f32.mrb[0].mxu0
      %2368 = vmatprep.mubr.bf16.mxu0 0
      %2369 = vmatmul.mubr.bf16.gmra.mrb[0].mxu0 %v2285
      %v2370 = vpop.f32.mrb[0].mxu0
      %v2371 = vadd.f32 0.0, %v2370
      %v2372 = vpop.f32.mrb[0].mxu0
      %v2373 = vpop.f32.mrb[0].mxu0
      %v2374 = vadd.f32 0.0, %v2373
      %v2375 = vpop.f32.mrb[0].mxu0
      %2376 = vmatprep.mubr.bf16.mxu0 0
      %2377 = vmatmul.mubr.bf16.gmra.mrb[0].mxu0 %v2288
      %v2378 = vpop.f32.mrb[0].mxu0
      %v2379 = vadd.f32 0.0, %v2378
      %v2380 = vpop.f32.mrb[0].mxu0
      %v2381 = vpop.f32.mrb[0].mxu0
      %v2382 = vadd.f32 0.0, %v2381
      %v2383 = vpop.f32.mrb[0].mxu0
      %2384 = vmatprep.mubr.bf16.mxu0 0
      %2385 = vmatmul.mubr.bf16.gmra.mrb[0].mxu0 %v2291
      %v2386 = vpop.f32.mrb[0].mxu0
      %v2387 = vadd.f32 0.0, %v2386
      %v2388 = vpop.f32.mrb[0].mxu0
      %v2389 = vpop.f32.mrb[0].mxu0
      %v2390 = vadd.f32 0.0, %v2389
      %v2391 = vpop.f32.mrb[0].mxu0
      %2392 = vdwg.mxu0
      %v2393 = vadd.f32 %v2123, %v2331
      %v2394 = vadd.f32 %v2124, %v2334
      %v2395 = vadd.f32 %v2125, %v2339
      %v2396 = vadd.f32 %v2126, %v2342
      %v2397 = vadd.f32 %v2127, %v2347
      %v2398 = vadd.f32 %v2128, %v2350
      %v2399 = vadd.f32 %v2129, %v2355
      %v2400 = vadd.f32 %v2130, %v2358
      %v2401 = vadd.f32 %v2131, %v2363
      %v2402 = vadd.f32 %v2132, %v2366
      %v2403 = vadd.f32 %v2133, %v2371
      %v2404 = vadd.f32 %v2134, %v2374
      %v2405 = vadd.f32 %v2135, %v2379
      %v2406 = vadd.f32 %v2136, %v2382
      %v2407 = vadd.f32 %v2137, %v2387
      %v2408 = vadd.f32 %v2138, %v2390
      %v2409 = vld [vmem:[%s2] sm:$0x1]
      %v2411 = vlaneseq
      %v2412 = vshrl.u32 %v2411, 7
      %v2413 = vsub.s32 0, %v2412
      %v2414 = vrot.slane %v2409, %v2413
      %v2416 = vmul.f32 %v2393, %v2414
      %v2417 = vmul.f32 %v2394, %v2414
      %v2418 = vmul.f32 %v2395, %v2414
      %v2419 = vmul.f32 %v2396, %v2414
      %v2420 = vmul.f32 %v2397, %v2414
      %v2421 = vmul.f32 %v2398, %v2414
      %v2422 = vmul.f32 %v2399, %v2414
      %v2423 = vmul.f32 %v2400, %v2414
      %v2424 = vmul.f32 %v2401, %v2414
      %v2425 = vmul.f32 %v2402, %v2414
      %v2426 = vmul.f32 %v2403, %v2414
      %v2427 = vmul.f32 %v2404, %v2414
      %v2428 = vmul.f32 %v2405, %v2414
      %v2429 = vmul.f32 %v2406, %v2414
      %v2430 = vmul.f32 %v2407, %v2414
      %v2431 = vmul.f32 %v2408, %v2414
      %v2432 = vld [vmem:[%s3] sm:$0x1]
      %v2434 = vlaneseq
      %v2435 = vshrl.u32 %v2434, 7
      %v2436 = vsub.s32 0, %v2435
      %v2437 = vrot.slane %v2432, %v2436
      %v2439 = vadd.f32 %v2416, %v2437
      %v2440 = vadd.f32 %v2417, %v2437
      %v2441 = vadd.f32 %v2418, %v2437
      %v2442 = vadd.f32 %v2419, %v2437
      %v2443 = vadd.f32 %v2420, %v2437
      %v2444 = vadd.f32 %v2421, %v2437
      %v2445 = vadd.f32 %v2422, %v2437
      %v2446 = vadd.f32 %v2423, %v2437
      %v2447 = vadd.f32 %v2424, %v2437
      %v2448 = vadd.f32 %v2425, %v2437
      %v2449 = vadd.f32 %v2426, %v2437
      %v2450 = vadd.f32 %v2427, %v2437
      %v2451 = vadd.f32 %v2428, %v2437
      %v2452 = vadd.f32 %v2429, %v2437
      %v2453 = vadd.f32 %v2430, %v2437
      %v2454 = vadd.f32 %v2431, %v2437
      %v2455 = vmax.f32 %v2439, 0.0
      %v2456 = vmax.f32 %v2440, 0.0
      %v2457 = vmax.f32 %v2441, 0.0
      %v2458 = vmax.f32 %v2442, 0.0
      %v2459 = vmax.f32 %v2443, 0.0
      %v2460 = vmax.f32 %v2444, 0.0
      %v2461 = vmax.f32 %v2445, 0.0
      %v2462 = vmax.f32 %v2446, 0.0
      %v2463 = vmax.f32 %v2447, 0.0
      %v2464 = vmax.f32 %v2448, 0.0
      %v2465 = vmax.f32 %v2449, 0.0
      %v2466 = vmax.f32 %v2450, 0.0
      %v2467 = vmax.f32 %v2451, 0.0
      %v2468 = vmax.f32 %v2452, 0.0
      %v2469 = vmax.f32 %v2453, 0.0
      %v2470 = vmax.f32 %v2454, 0.0
      %v2471 = vpack.c.bf16 %v2456, %v2455
      %v2472 = vpack.c.bf16 %v2458, %v2457
      %v2473 = vpack.c.bf16 %v2460, %v2459
      %v2474 = vpack.c.bf16 %v2462, %v2461
      %v2475 = vpack.c.bf16 %v2464, %v2463
      %v2476 = vpack.c.bf16 %v2466, %v2465
      %v2477 = vpack.c.bf16 %v2468, %v2467
      %v2478 = vpack.c.bf16 %v2470, %v2469
      %v2487 = vunpack.c.l.b16 %v2471
      %v2488 = vunpack.c.h.b16 %v2471
      %v2489 = vunpack.c.l.b16 %v2472
      %v2490 = vunpack.c.h.b16 %v2472
      %v2491 = vunpack.c.l.b16 %v2473
      %v2492 = vunpack.c.h.b16 %v2473
      %v2493 = vunpack.c.l.b16 %v2474
      %v2494 = vunpack.c.h.b16 %v2474
      %v2495 = vunpack.c.l.b16 %v2475
      %v2496 = vunpack.c.h.b16 %v2475
      %v2497 = vunpack.c.l.b16 %v2476
      %v2498 = vunpack.c.h.b16 %v2476
      %v2499 = vunpack.c.l.b16 %v2477
      %v2500 = vunpack.c.h.b16 %v2477
      %v2501 = vunpack.c.l.b16 %v2478
      %v2502 = vunpack.c.h.b16 %v2478
      %v2503 = vpack.c.b16 %v2487, %v2487
      %v2504 = vpack.c.b16 %v2488, %v2488
      %v2505 = vpack.c.b16 %v2489, %v2489
      %v2506 = vpack.c.b16 %v2490, %v2490
      %v2507 = vpack.c.b16 %v2491, %v2491
      %v2508 = vpack.c.b16 %v2492, %v2492
      %v2509 = vpack.c.b16 %v2493, %v2493
      %v2510 = vpack.c.b16 %v2494, %v2494
      %v2511 = vpack.c.b16 %v2495, %v2495
      %v2512 = vpack.c.b16 %v2496, %v2496
      %v2513 = vpack.c.b16 %v2497, %v2497
      %v2514 = vpack.c.b16 %v2498, %v2498
      %v2515 = vpack.c.b16 %v2499, %v2499
      %v2516 = vpack.c.b16 %v2500, %v2500
      %v2517 = vpack.c.b16 %v2501, %v2501
      %v2518 = vpack.c.b16 %v2502, %v2502
      %vm2535 = vcmask 60416
      %2536 = vst.msk [vmem:[%s221] sm:$0xf] %vm2535, %v2503
      %2537 = vst.msk [vmem:[%s221 + $0x4] sm:$0xf] %vm2535, %v2504
      %2538 = vst.msk [vmem:[%s221 + $0x8] sm:$0xf] %vm2535, %v2505
      %2539 = vst.msk [vmem:[%s221 + $0xc] sm:$0xf] %vm2535, %v2506
      %2540 = vst.msk [vmem:[%s221 + $0x10] sm:$0xf] %vm2535, %v2507
      %2541 = vst.msk [vmem:[%s221 + $0x14] sm:$0xf] %vm2535, %v2508
      %2542 = vst.msk [vmem:[%s221 + $0x18] sm:$0xf] %vm2535, %v2509
      %2543 = vst.msk [vmem:[%s221 + $0x1c] sm:$0xf] %vm2535, %v2510
      %2544 = vst.msk [vmem:[%s221 + $0x20] sm:$0xf] %vm2535, %v2511
      %2545 = vst.msk [vmem:[%s221 + $0x24] sm:$0xf] %vm2535, %v2512
      %2546 = vst.msk [vmem:[%s221 + $0x28] sm:$0xf] %vm2535, %v2513
      %2547 = vst.msk [vmem:[%s221 + $0x2c] sm:$0xf] %vm2535, %v2514
      %2548 = vst.msk [vmem:[%s221 + $0x30] sm:$0xf] %vm2535, %v2515
      %2549 = vst.msk [vmem:[%s221 + $0x34] sm:$0xf] %vm2535, %v2516
      %2550 = vst.msk [vmem:[%s221 + $0x38] sm:$0xf] %vm2535, %v2517
      %2551 = vst.msk [vmem:[%s221 + $0x3c] sm:$0xf] %vm2535, %v2518
      %s2552 = smul.u32 8, %s20
      %p2553 = scmp.lt.s32.totalorder %s19, 1
      %s2554 = scalar_select %p2553, %s19, 1
      %p2555 = scmp.lt.s32.totalorder %s2552, 15
      %s2556 = scalar_select %p2555, %s2552, 15
      %s2557 = smul.addr %s2556, 2
      %s2558 = smul.addr %s2554, 32
      %s2559 = sadd.s32 %s2557, %s2558
      %s2560 = smul.addr %s2559, 4
      %s2561 = scalar_lea.vmem %s4, %s2560
      // Predicated region
      $region37: #{easpp_forward.12} parent=35 // pred_check
        %p2562 = pneg %p136
      $region38: #{easpp_forward.12} parent=35 // pred_check_branch
        %2564 = sbr.rel (%p2562) target = $region40
      $region39: #{easpp_forward.12} parent=35 // pred_region
        %s2565 = smul.u32 8, %s20
      $region40: #{easpp_forward.12} parent=35 // pred_fallthru
        _
    $region36: #{easpp_forward.12} parent=5 // pred_fallthru
      _
    %p2566 = scmp.le.s32.totalorder 2, %s10
    // Predicated region
    $region41: #{easpp_forward.12} parent=5 // pred_check
      %p2567 = pneg %p2566
    $region42: #{easpp_forward.12} parent=5 // pred_check_branch
      %2569 = sbr.rel (%p2567) target = $region44
    $region43: #{easpp_forward.12} parent=5 // pred_region
      %s2570 = ssub.s32 %s10, 2
      // Predicated region
      $region45: #{easpp_forward.12} parent=43 // pred_check
        %p2571 = pneg %p142
      $region46: #{easpp_forward.12} parent=43 // pred_check_branch
        %2573 = sbr.rel (%p2571) target = $region48
      $region47: #{easpp_forward.12} parent=43 // pred_region
        %s2574 = smul.u32 8, %s22
        %p2575 = scmp.lt.s32.totalorder %s21, 1
        %s2576 = scalar_select %p2575, %s21, 1
        %p2577 = scmp.lt.s32.totalorder %s2574, 15
        %s2578 = scalar_select %p2577, %s2574, 15
        %s2579 = smul.addr %s2578, 2
        %s2580 = smul.addr %s2576, 32
        %s2581 = sadd.s32 %s2579, %s2580
        %s2582 = smul.addr %s2581, 4
        %s2583 = scalar_lea.vmem %s4, %s2582
      $region48: #{easpp_forward.12} parent=43 // pred_fallthru
        _
    $region44: #{easpp_forward.12} parent=5 // pred_fallthru
      _
  $region6: #{easpp_forward.12} parent=0 // loop_footer
    %s14 = sadd.s32 1, %s10
  $region7: #{easpp_forward.12} parent=0 // loop_footer_branch
    %9 = sbr.rel target = $region3
  $region8: #{easpp_forward.12} parent=0 // loop_exit
    _

// kernel: easpp_forward.10
$region0: #{easpp_forward.10}
  #allocation0 [shape = 'u32[]', space=smem, size = 0x4, offset = 0x4, fixed_abs, tag = 'smem constant byte address 0x4 - core index']
  #allocation1 [shape = 'u32[144,128]{1,0:T(1,128)}', space=vmem, size = 0x12000, scoped, tag = 'internal scratch']
  %s0 = inlined_call_operand.vmem [shape: bf16[2,22,22,8], index: 0, kind: input, shape index: {}]
  %s1 = inlined_call_operand.vmem [shape: bf16[9,8,8], index: 1, kind: input, shape index: {}]
  %s2 = inlined_call_operand.vmem [shape: f32[1,8], index: 2, kind: input, shape index: {}]
  %s3 = inlined_call_operand.vmem [shape: f32[1,8], index: 3, kind: input, shape index: {}]
  %s4 = inlined_call_operand.vmem [shape: bf16[2,16,16,8], index: 4, kind: output, shape index: {}]
  %s5 = sld [smem:[#allocation0]]
  $region49: #{easpp_forward.10} parent=0
    _
  %s7 = ssub.s32 1, %s5
  %s8 = scalar_select 0, %s7, %s5
  loop: start=0, step=1, limit=6
  $region2: #{easpp_forward.10} parent=0 // loop_pre_header
    _
  $region3: #{easpp_forward.10} parent=0 // loop_header
    %s10 = sphi 0, %s14
    %p11 = scmp.ge.s32.totalorder %s10, 6
    %s17 = sphi 0, %s29
    %s18 = sphi 0, %s25
    %s19 = sphi 0, %s17
    %s20 = sphi 0, %s18
    %s21 = sphi 0, %s19
    %s22 = sphi 0, %s20
    %s32 = sphi 0, %s34
    %s35 = sphi 0, %s32
    %s36 = sphi 0, %s35
    %s52 = sphi 0, %s36
    %s56 = sphi 0, %s56
    %s58 = sphi 0, %s56
    %s59 = sphi 0, %s58
    %s73 = sphi 0, %s59
    %s77 = sphi 0, %s77
    %s79 = sphi 0, %s77
    %s80 = sphi 0, %s79
    %s94 = sphi 0, %s80
    %s98 = sphi 0, %s98
    %s100 = sphi 0, %s98
    %s101 = sphi 0, %s100
    %s115 = sphi 0, %s101
    %s123 = sphi 0, %s125
    %s126 = sphi 0, %s123
    %s127 = sphi 0, %s126
    %s143 = sphi 0, %s127
  $region4: #{easpp_forward.10} parent=0 // loop_header_branch
    %13 = sbr.rel (%p11) target = $region8
  $region5: #{easpp_forward.10} parent=0 // loop_body
    %s15 = ssub.s32 %s10, 1
    %s16 = ssub.s32 %s10, 2
    %s23 = sadd.s32 1, %s18
    %p24 = scmp.ge.s32.totalorder %s23, 2
    %s25 = scalar_select %p24, 0, %s23
    %s26 = sadd.s32 1, %s17
    %s27 = scalar_select %p24, %s26, %s17
    %p28 = scmp.ge.s32.totalorder %s27, 2
    %s29 = scalar_select %p28, 0, %s27
    %s30 = ssub.s32 %s17, %s29
    %p31 = scmp.eq.s32.totalorder %s30, 0
    %s33 = sadd.s32 %s32, 1
    %s34 = scalar_select %p31, %s32, %s33
    %p37 = pneg %p31
    %p38 = scmp.eq.s32.totalorder %s10, 3
    %p39 = por %p37, %p38
    %p40 = scmp.ne.s32.totalorder %s32, %s35
    %p41 = scmp.eq.s32.totalorder %s10, 0
    %p42 = por %p40, %p41
    %p43 = scmp.ne.s32.totalorder %s32, %s35
    %p44 = scmp.eq.s32.totalorder %s15, 3
    %p45 = por %p43, %p44
    %p46 = scmp.ne.s32.totalorder %s35, %s36
    %p47 = scmp.eq.s32.totalorder %s15, 0
    %p48 = por %p46, %p47
    %p49 = scmp.ne.s32.totalorder %s35, %s36
    %p50 = scmp.eq.s32.totalorder %s16, 3
    %p51 = por %p49, %p50
    %p53 = scmp.ne.s32.totalorder %s36, %s52
    %p54 = scmp.eq.s32.totalorder %s16, 0
    %p55 = por %p53, %p54
    %s57 = sadd.s32 %s56, 1
    %p60 = scmp.eq.s32.totalorder %s10, 3
    %p61 = scmp.ne.s32.totalorder %s56, %s58
    %p62 = scmp.eq.s32.totalorder %s10, 0
    %p63 = por %p61, %p62
    %p64 = scmp.ne.s32.totalorder %s56, %s58
    %p65 = scmp.eq.s32.totalorder %s15, 3
    %p66 = por %p64, %p65
    %p67 = scmp.ne.s32.totalorder %s58, %s59
    %p68 = scmp.eq.s32.totalorder %s15, 0
    %p69 = por %p67, %p68
    %p70 = scmp.ne.s32.totalorder %s58, %s59
    %p71 = scmp.eq.s32.totalorder %s16, 3
    %p72 = por %p70, %p71
    %p74 = scmp.ne.s32.totalorder %s59, %s73
    %p75 = scmp.eq.s32.totalorder %s16, 0
    %p76 = por %p74, %p75
    %s78 = sadd.s32 %s77, 1
    %p81 = scmp.eq.s32.totalorder %s10, 3
    %p82 = scmp.ne.s32.totalorder %s77, %s79
    %p83 = scmp.eq.s32.totalorder %s10, 0
    %p84 = por %p82, %p83
    %p85 = scmp.ne.s32.totalorder %s77, %s79
    %p86 = scmp.eq.s32.totalorder %s15, 3
    %p87 = por %p85, %p86
    %p88 = scmp.ne.s32.totalorder %s79, %s80
    %p89 = scmp.eq.s32.totalorder %s15, 0
    %p90 = por %p88, %p89
    %p91 = scmp.ne.s32.totalorder %s79, %s80
    %p92 = scmp.eq.s32.totalorder %s16, 3
    %p93 = por %p91, %p92
    %p95 = scmp.ne.s32.totalorder %s80, %s94
    %p96 = scmp.eq.s32.totalorder %s16, 0
    %p97 = por %p95, %p96
    %s99 = sadd.s32 %s98, 1
    %p102 = scmp.eq.s32.totalorder %s10, 3
    %p103 = scmp.ne.s32.totalorder %s98, %s100
    %p104 = scmp.eq.s32.totalorder %s10, 0
    %p105 = por %p103, %p104
    %p106 = scmp.ne.s32.totalorder %s98, %s100
    %p107 = scmp.eq.s32.totalorder %s15, 3
    %p108 = por %p106, %p107
    %p109 = scmp.ne.s32.totalorder %s100, %s101
    %p110 = scmp.eq.s32.totalorder %s15, 0
    %p111 = por %p109, %p110
    %p112 = scmp.ne.s32.totalorder %s100, %s101
    %p113 = scmp.eq.s32.totalorder %s16, 3
    %p114 = por %p112, %p113
    %p116 = scmp.ne.s32.totalorder %s101, %s115
    %p117 = scmp.eq.s32.totalorder %s16, 0
    %p118 = por %p116, %p117
    %s119 = ssub.s32 %s17, %s29
    %s120 = ssub.s32 %s18, %s25
    %s121 = sor.u32 %s119, %s120
    %p122 = scmp.eq.s32.totalorder %s121, 0
    %s124 = sadd.s32 %s123, 1
    %s125 = scalar_select %p122, %s123, %s124
    %p128 = pneg %p122
    %p129 = scmp.eq.s32.totalorder %s10, 3
    %p130 = por %p128, %p129
    %p131 = scmp.ne.s32.totalorder %s123, %s126
    %p132 = scmp.eq.s32.totalorder %s10, 0
    %p133 = por %p131, %p132
    %p134 = scmp.ne.s32.totalorder %s123, %s126
    %p135 = scmp.eq.s32.totalorder %s15, 3
    %p136 = por %p134, %p135
    %p137 = scmp.ne.s32.totalorder %s126, %s127
    %p138 = scmp.eq.s32.totalorder %s15, 0
    %p139 = por %p137, %p138
    %p140 = scmp.ne.s32.totalorder %s126, %s127
    %p141 = scmp.eq.s32.totalorder %s16, 3
    %p142 = por %p140, %p141
    %p144 = scmp.ne.s32.totalorder %s127, %s143
    %p145 = scmp.eq.s32.totalorder %s16, 0
    %p146 = por %p144, %p145
    %p147 = scmp.le.s32.totalorder 1, %s10
    %p148 = scmp.lt.s32.totalorder %s10, 5
    %p149 = pnand %p147, %p148
    %p150 = pneg %p149
    // Predicated region
    $region9: #{easpp_forward.10} parent=5 // pred_check
      _
    $region10: #{easpp_forward.10} parent=5 // pred_check_branch
      %152 = sbr.rel (%p149) target = $region12
    $region11: #{easpp_forward.10} parent=5 // pred_region
      %s153 = ssub.s32 %s10, 1
      // Predicated region
      $region13: #{easpp_forward.10} parent=11 // pred_check
        %p154 = pneg %p69
      $region14: #{easpp_forward.10} parent=11 // pred_check_branch
        %156 = sbr.rel (%p154) target = $region16
      $region15: #{easpp_forward.10} parent=11 // pred_region
        _
      $region16: #{easpp_forward.10} parent=11 // pred_fallthru
        _
      // Predicated region
      $region17: #{easpp_forward.10} parent=11 // pred_check
        %p157 = pneg %p90
      $region18: #{easpp_forward.10} parent=11 // pred_check_branch
        %159 = sbr.rel (%p157) target = $region20
      $region19: #{easpp_forward.10} parent=11 // pred_region
        _
      $region20: #{easpp_forward.10} parent=11 // pred_fallthru
        _
      // Predicated region
      $region21: #{easpp_forward.10} parent=11 // pred_check
        %p160 = pneg %p111
      $region22: #{easpp_forward.10} parent=11 // pred_check_branch
        %162 = sbr.rel (%p160) target = $region24
      $region23: #{easpp_forward.10} parent=11 // pred_region
        _
      $region24: #{easpp_forward.10} parent=11 // pred_fallthru
        _
    $region12: #{easpp_forward.10} parent=5 // pred_fallthru
      _
    %p163 = scmp.lt.s32.totalorder %s10, 4
    // Predicated region
    $region25: #{easpp_forward.10} parent=5 // pred_check
      %p164 = pneg %p163
    $region26: #{easpp_forward.10} parent=5 // pred_check_branch
      %166 = sbr.rel (%p164) target = $region28
    $region27: #{easpp_forward.10} parent=5 // pred_region
      // Predicated region
      $region29: #{easpp_forward.10} parent=27 // pred_check
        %p167 = pneg %p42
      $region30: #{easpp_forward.10} parent=27 // pred_check_branch
        %169 = sbr.rel (%p167) target = $region32
      $region31: #{easpp_forward.10} parent=27 // pred_region
        %p170 = scmp.lt.s32.totalorder %s17, 1
        %s171 = scalar_select %p170, %s17, 1
        %s172 = smul.addr %s171, 66
        %s173 = smul.addr %s172, 4
        %s174 = scalar_lea.vmem %s0, %s173
      $region32: #{easpp_forward.10} parent=27 // pred_fallthru
        _
    $region28: #{easpp_forward.10} parent=5 // pred_fallthru
      _
    %p175 = scmp.le.s32.totalorder 1, %s10
    %p176 = scmp.lt.s32.totalorder %s10, 5
    %p177 = pnand %p175, %p176
    %p178 = pneg %p177
    // Predicated region
    $region33: #{easpp_forward.10} parent=5 // pred_check
      _
    $region34: #{easpp_forward.10} parent=5 // pred_check_branch
      %180 = sbr.rel (%p177) target = $region36
    $region35: #{easpp_forward.10} parent=5 // pred_region
      %s181 = ssub.s32 %s10, 1
      %p182 = scmp.lt.s32.totalorder %s19, 1
      %s183 = scalar_select %p182, %s19, 1
      %s184 = smul.addr %s183, 66
      %s185 = smul.addr %s184, 4
      %s186 = scalar_lea.vmem %s0, %s185
      %p187 = pneg %p48
      %p188 = pneg %p45
      %p189 = pneg %p69
      %p190 = pneg %p66
      %p191 = pneg %p90
      %p192 = pneg %p87
      %p193 = pneg %p111
      %p194 = pneg %p108
      %p195 = pneg %p139
      %p196 = pneg %p136
      %s197 = smul.u32 8, %s20
      %p198 = scmp.lt.s32.totalorder %s19, 1
      %s199 = scalar_select %p198, %s19, 1
      %p200 = scmp.lt.s32.totalorder %s197, 15
      %s201 = scalar_select %p200, %s197, 15
      %s202 = smul.addr %s201, 2
      %s203 = smul.addr %s199, 32
      %s204 = sadd.s32 %s202, %s203
      %s205 = smul.addr %s204, 4
      %s206 = scalar_lea.vmem %s4, %s205
      %p207 = scmp.lt.s32.totalorder %s19, 1
      %s208 = scalar_select %p207, %s19, 1
      %s209 = smul.addr %s208, 66
      %s210 = smul.addr %s209, 4
      %s211 = scalar_lea.vmem %s0, %s210
      %s212 = smul.u32 8, %s20
      %p213 = scmp.lt.s32.totalorder %s19, 1
      %s214 = scalar_select %p213, %s19, 1
      %p215 = scmp.lt.s32.totalorder %s212, 15
      %s216 = scalar_select %p215, %s212, 15
      %s217 = smul.addr %s216, 2
      %s218 = smul.addr %s214, 32
      %s219 = sadd.s32 %s217, %s218
      %s220 = smul.addr %s219, 4
      %s221 = scalar_lea.vmem %s4, %s220
      %s222 = smul.u32 8, %s20
      %s224 = smul.u32 %s20, 8
      %s225 = smul.u32 %s224, 3
      %s226 = smul.addr %s225, 4
      %s227 = scalar_lea.vmem %s211, %s226
      %v228 = vld [vmem:[%s227] sm:$0xf]
      %v229 = vld [vmem:[%s227 + $0x4] sm:$0xf]
      %v230 = vld [vmem:[%s227 + $0xc] sm:$0xf]
      %v231 = vld [vmem:[%s227 + $0x10] sm:$0xf]
      %v232 = vld [vmem:[%s227 + $0x18] sm:$0xf]
      %v233 = vld [vmem:[%s227 + $0x1c] sm:$0xf]
      %v234 = vld [vmem:[%s227 + $0x24] sm:$0xf]
      %v235 = vld [vmem:[%s227 + $0x28] sm:$0xf]
      %v236 = vld [vmem:[%s227 + $0x30] sm:$0xf]
      %v237 = vld [vmem:[%s227 + $0x34] sm:$0xf]
      %v238 = vld [vmem:[%s227 + $0x3c] sm:$0xf]
      %v239 = vld [vmem:[%s227 + $0x40] sm:$0xf]
      %v240 = vld [vmem:[%s227 + $0x48] sm:$0xf]
      %v241 = vld [vmem:[%s227 + $0x4c] sm:$0xf]
      %v242 = vld [vmem:[%s227 + $0x54] sm:$0xf]
      %v243 = vld [vmem:[%s227 + $0x58] sm:$0xf]
      %v244 = vld [vmem:[%s1] sm:$0xf]
      %v245 = vld [vmem:[%s227] sm:$0xe]
      %v246 = vld [vmem:[%s227 + $0x8] sm:$0x3]
      %v247 = vld [vmem:[%s227 + $0xc] sm:$0xe]
      %v248 = vld [vmem:[%s227 + $0x14] sm:$0x3]
      %v249 = vld [vmem:[%s227 + $0x18] sm:$0xe]
      %v250 = vld [vmem:[%s227 + $0x20] sm:$0x3]
      %v251 = vld [vmem:[%s227 + $0x24] sm:$0xe]
      %v252 = vld [vmem:[%s227 + $0x2c] sm:$0x3]
      %v253 = vld [vmem:[%s227 + $0x30] sm:$0xe]
      %v254 = vld [vmem:[%s227 + $0x38] sm:$0x3]
      %v255 = vld [vmem:[%s227 + $0x3c] sm:$0xe]
      %v256 = vld [vmem:[%s227 + $0x44] sm:$0x3]
      %v257 = vld [vmem:[%s227 + $0x48] sm:$0xe]
      %v258 = vld [vmem:[%s227 + $0x50] sm:$0x3]
      %v259 = vld [vmem:[%s227 + $0x54] sm:$0xe]
      %v260 = vld [vmem:[%s227 + $0x5c] sm:$0x3]
      %vm261 = vsmask.f32 2304
      %vm262 = vsmask.f32 6416
      %vm263 = vmor %vm261, %vm262
      %v265 = vshrl.u32 %v245, 16
      %v267 = vrot.slane %v265, 5
      %v268 = vshll.u32 %v245, 16
      %v270 = vrot.slane %v268, 6
      %v271 = vor.u32 %v267, %v270
      %v272 = vrot.slane %v271, 4
      %v274 = vshrl.u32 %v229, 16
      %v276 = vrot.slane %v274, 5
      %v277 = vshll.u32 %v229, 16
      %v279 = vrot.slane %v277, 6
      %v280 = vor.u32 %v276, %v279
      %v281 = vsel %vm263, %v272, %v280
      %v282 = vrot.slane %v280, 4
      %v284 = vshrl.u32 %v246, 16
      %v286 = vrot.slane %v284, 5
      %v287 = vshll.u32 %v246, 16
      %v289 = vrot.slane %v287, 6
      %v290 = vor.u32 %v286, %v289
      %v291 = vsel %vm263, %v282, %v290
      %v293 = vshrl.u32 %v247, 16
      %v295 = vrot.slane %v293, 5
      %v296 = vshll.u32 %v247, 16
      %v298 = vrot.slane %v296, 6
      %v299 = vor.u32 %v295, %v298
      %v300 = vrot.slane %v299, 4
      %v302 = vshrl.u32 %v231, 16
      %v304 = vrot.slane %v302, 5
      %v305 = vshll.u32 %v231, 16
      %v307 = vrot.slane %v305, 6
      %v308 = vor.u32 %v304, %v307
      %v309 = vsel %vm263, %v300, %v308
      %v310 = vrot.slane %v308, 4
      %v312 = vshrl.u32 %v248, 16
      %v314 = vrot.slane %v312, 5
      %v315 = vshll.u32 %v248, 16
      %v317 = vrot.slane %v315, 6
      %v318 = vor.u32 %v314, %v317
      %v319 = vsel %vm263, %v310, %v318
      %v321 = vshrl.u32 %v249, 16
      %v323 = vrot.slane %v321, 5
      %v324 = vshll.u32 %v249, 16
      %v326 = vrot.slane %v324, 6
      %v327 = vor.u32 %v323, %v326
      %v328 = vrot.slane %v327, 4
      %v330 = vshrl.u32 %v233, 16
      %v332 = vrot.slane %v330, 5
      %v333 = vshll.u32 %v233, 16
      %v335 = vrot.slane %v333, 6
      %v336 = vor.u32 %v332, %v335
      %v337 = vsel %vm263, %v328, %v336
      %v338 = vrot.slane %v336, 4
      %v340 = vshrl.u32 %v250, 16
      %v342 = vrot.slane %v340, 5
      %v343 = vshll.u32 %v250, 16
      %v345 = vrot.slane %v343, 6
      %v346 = vor.u32 %v342, %v345
      %v347 = vsel %vm263, %v338, %v346
      %v349 = vshrl.u32 %v251, 16
      %v351 = vrot.slane %v349, 5
      %v352 = vshll.u32 %v251, 16
      %v354 = vrot.slane %v352, 6
      %v355 = vor.u32 %v351, %v354
      %v356 = vrot.slane %v355, 4
      %v358 = vshrl.u32 %v235, 16
      %v360 = vrot.slane %v358, 5
      %v361 = vshll.u32 %v235, 16
      %v363 = vrot.slane %v361, 6
      %v364 = vor.u32 %v360, %v363
      %v365 = vsel %vm263, %v356, %v364
      %v366 = vrot.slane %v364, 4
      %v368 = vshrl.u32 %v252, 16
      %v370 = vrot.slane %v368, 5
      %v371 = vshll.u32 %v252, 16
      %v373 = vrot.slane %v371, 6
      %v374 = vor.u32 %v370, %v373
      %v375 = vsel %vm263, %v366, %v374
      %v377 = vshrl.u32 %v253, 16
      %v379 = vrot.slane %v377, 5
      %v380 = vshll.u32 %v253, 16
      %v382 = vrot.slane %v380, 6
      %v383 = vor.u32 %v379, %v382
      %v384 = vrot.slane %v383, 4
      %v386 = vshrl.u32 %v237, 16
      %v388 = vrot.slane %v386, 5
      %v389 = vshll.u32 %v237, 16
      %v391 = vrot.slane %v389, 6
      %v392 = vor.u32 %v388, %v391
      %v393 = vsel %vm263, %v384, %v392
      %v394 = vrot.slane %v392, 4
      %v396 = vshrl.u32 %v254, 16
      %v398 = vrot.slane %v396, 5
      %v399 = vshll.u32 %v254, 16
      %v401 = vrot.slane %v399, 6
      %v402 = vor.u32 %v398, %v401
      %v403 = vsel %vm263, %v394, %v402
      %v405 = vshrl.u32 %v255, 16
      %v407 = vrot.slane %v405, 5
      %v408 = vshll.u32 %v255, 16
      %v410 = vrot.slane %v408, 6
      %v411 = vor.u32 %v407, %v410
      %v412 = vrot.slane %v411, 4
      %v414 = vshrl.u32 %v239, 16
      %v416 = vrot.slane %v414, 5
      %v417 = vshll.u32 %v239, 16
      %v419 = vrot.slane %v417, 6
      %v420 = vor.u32 %v416, %v419
      %v421 = vsel %vm263, %v412, %v420
      %v422 = vrot.slane %v420, 4
      %v424 = vshrl.u32 %v256, 16
      %v426 = vrot.slane %v424, 5
      %v427 = vshll.u32 %v256, 16
      %v429 = vrot.slane %v427, 6
      %v430 = vor.u32 %v426, %v429
      %v431 = vsel %vm263, %v422, %v430
      %v433 = vshrl.u32 %v257, 16
      %v435 = vrot.slane %v433, 5
      %v436 = vshll.u32 %v257, 16
      %v438 = vrot.slane %v436, 6
      %v439 = vor.u32 %v435, %v438
      %v440 = vrot.slane %v439, 4
      %v442 = vshrl.u32 %v241, 16
      %v444 = vrot.slane %v442, 5
      %v445 = vshll.u32 %v241, 16
      %v447 = vrot.slane %v445, 6
      %v448 = vor.u32 %v444, %v447
      %v449 = vsel %vm263, %v440, %v448
      %v450 = vrot.slane %v448, 4
      %v452 = vshrl.u32 %v258, 16
      %v454 = vrot.slane %v452, 5
      %v455 = vshll.u32 %v258, 16
      %v457 = vrot.slane %v455, 6
      %v458 = vor.u32 %v454, %v457
      %v459 = vsel %vm263, %v450, %v458
      %v461 = vshrl.u32 %v259, 16
      %v463 = vrot.slane %v461, 5
      %v464 = vshll.u32 %v259, 16
      %v466 = vrot.slane %v464, 6
      %v467 = vor.u32 %v463, %v466
      %v468 = vrot.slane %v467, 4
      %v470 = vshrl.u32 %v243, 16
      %v472 = vrot.slane %v470, 5
      %v473 = vshll.u32 %v243, 16
      %v475 = vrot.slane %v473, 6
      %v476 = vor.u32 %v472, %v475
      %v477 = vsel %vm263, %v468, %v476
      %v478 = vrot.slane %v476, 4
      %v480 = vshrl.u32 %v260, 16
      %v482 = vrot.slane %v480, 5
      %v483 = vshll.u32 %v260, 16
      %v485 = vrot.slane %v483, 6
      %v486 = vor.u32 %v482, %v485
      %v487 = vsel %vm263, %v478, %v486
      %s488 = scalar_lea.vmem %s1, 4
      %v489 = vld [vmem:[%s488] sm:$0xf]
      %v490 = vunpack.c.l.b16 %v281
      %v491 = vunpack.c.l.b16 %v291
      %v492 = vunpack.c.l.b16 %v309
      %v493 = vunpack.c.l.b16 %v319
      %v494 = vunpack.c.l.b16 %v337
      %v495 = vunpack.c.l.b16 %v347
      %v496 = vunpack.c.l.b16 %v365
      %v497 = vunpack.c.l.b16 %v375
      %v498 = vunpack.c.l.b16 %v393
      %v499 = vunpack.c.l.b16 %v403
      %v500 = vunpack.c.l.b16 %v421
      %v501 = vunpack.c.l.b16 %v431
      %v502 = vunpack.c.l.b16 %v449
      %v503 = vunpack.c.l.b16 %v459
      %v504 = vunpack.c.l.b16 %v477
      %v505 = vunpack.c.l.b16 %v487
      %v506 = vpack.c.b16 %v491, %v490
      %v507 = vpack.c.b16 %v493, %v492
      %v508 = vpack.c.b16 %v495, %v494
      %v509 = vpack.c.b16 %v497, %v496
      %v510 = vpack.c.b16 %v499, %v498
      %v511 = vpack.c.b16 %v501, %v500
      %v512 = vpack.c.b16 %v503, %v502
      %v513 = vpack.c.b16 %v505, %v504
      %vm514 = vcmask 64512
      %v516 = vsel %vm514, %v506, 0
      %v519 = vsel %vm514, %v507, 0
      %v522 = vsel %vm514, %v508, 0
      %v525 = vsel %vm514, %v509, 0
      %v528 = vsel %vm514, %v510, 0
      %v531 = vsel %vm514, %v511, 0
      %v534 = vsel %vm514, %v512, 0
      %v537 = vsel %vm514, %v513, 0
      %vm539 = vcmask 1043456
      %v541 = vsel %vm539, %v489, 0
      %543 = vmatprep.subr.bf16.mxu0 0
      %544 = vmatpush1.bf16.msra.mxu0 %v541
      %545 = vmatprep.subr.bf16.mxu0 0
      %546 = vmatpush1.bf16.msra.mxu0 0
      %547 = vmatprep.subr.bf16.mxu0 0
      %548 = vmatpush1.bf16.msra.mxu0 0
      %549 = vmatprep.subr.bf16.mxu0 0
      %550 = vmatpush1.bf16.msra.mxu0 0
      %551 = vmatprep.subr.bf16.mxu0 0
      %552 = vmatpush1.bf16.msra.mxu0 0
      %553 = vmatprep.subr.bf16.mxu0 0
      %554 = vmatpush1.bf16.msra.mxu0 0
      %555 = vmatprep.subr.bf16.mxu0 0
      %556 = vmatpush1.bf16.msra.mxu0 0
      %557 = vmatprep.subr.bf16.mxu0 0
      %558 = vmatpush1.bf16.msra.mxu0 0
      %559 = vmatprep.subr.bf16.mxu0 0
      %560 = vmatpush1.bf16.msra.mxu0 0
      %561 = vmatprep.subr.bf16.mxu0 0
      %562 = vmatpush1.bf16.msra.mxu0 0
      %563 = vmatprep.subr.bf16.mxu0 0
      %564 = vmatpush1.bf16.msra.mxu0 0
      %565 = vmatprep.subr.bf16.mxu0 0
      %566 = vmatpush1.bf16.msra.mxu0 0
      %567 = vmatprep.subr.bf16.mxu0 0
      %568 = vmatpush1.bf16.msra.mxu0 0
      %569 = vmatprep.subr.bf16.mxu0 0
      %570 = vmatpush1.bf16.msra.mxu0 0
      %571 = vmatprep.subr.bf16.mxu0 0
      %572 = vmatpush1.bf16.msra.mxu0 0
      %573 = vmatprep.subr.bf16.mxu0 0
      %574 = vmatpush1.bf16.msra.mxu0 0
      %575 = vmatprep.mubr.bf16.mxu0 0
      %576 = vmatmul.mubr.bf16.gmra.mrb[0].mxu0 %v516
      %v577 = vpop.f32.mrb[0].mxu0
      %v578 = vadd.f32 0.0, %v577
      %v579 = vpop.f32.mrb[0].mxu0
      %v580 = vpop.f32.mrb[0].mxu0
      %v581 = vadd.f32 0.0, %v580
      %v582 = vpop.f32.mrb[0].mxu0
      %583 = vmatprep.mubr.bf16.mxu0 0
      %584 = vmatmul.mubr.bf16.gmra.mrb[0].mxu0 %v519
      %v585 = vpop.f32.mrb[0].mxu0
      %v586 = vadd.f32 0.0, %v585
      %v587 = vpop.f32.mrb[0].mxu0
      %v588 = vpop.f32.mrb[0].mxu0
      %v589 = vadd.f32 0.0, %v588
      %v590 = vpop.f32.mrb[0].mxu0
      %591 = vmatprep.mubr.bf16.mxu0 0
      %592 = vmatmul.mubr.bf16.gmra.mrb[0].mxu0 %v522
      %v593 = vpop.f32.mrb[0].mxu0
      %v594 = vadd.f32 0.0, %v593
      %v595 = vpop.f32.mrb[0].mxu0
      %v596 = vpop.f32.mrb[0].mxu0
      %v597 = vadd.f32 0.0, %v596
      %v598 = vpop.f32.mrb[0].mxu0
      %599 = vmatprep.mubr.bf16.mxu0 0
      %600 = vmatmul.mubr.bf16.gmra.mrb[0].mxu0 %v525
      %v601 = vpop.f32.mrb[0].mxu0
      %v602 = vadd.f32 0.0, %v601
      %v603 = vpop.f32.mrb[0].mxu0
      %v604 = vpop.f32.mrb[0].mxu0
      %v605 = vadd.f32 0.0, %v604
      %v606 = vpop.f32.mrb[0].mxu0
      %607 = vmatprep.mubr.bf16.mxu0 0
      %608 = vmatmul.mubr.bf16.gmra.mrb[0].mxu0 %v528
      %v609 = vpop.f32.mrb[0].mxu0
      %v610 = vadd.f32 0.0, %v609
      %v611 = vpop.f32.mrb[0].mxu0
      %v612 = vpop.f32.mrb[0].mxu0
      %v613 = vadd.f32 0.0, %v612
      %v614 = vpop.f32.mrb[0].mxu0
      %615 = vmatprep.mubr.bf16.mxu0 0
      %616 = vmatmul.mubr.bf16.gmra.mrb[0].mxu0 %v531
      %v617 = vpop.f32.mrb[0].mxu0
      %v618 = vadd.f32 0.0, %v617
      %v619 = vpop.f32.mrb[0].mxu0
      %v620 = vpop.f32.mrb[0].mxu0
      %v621 = vadd.f32 0.0, %v620
      %v622 = vpop.f32.mrb[0].mxu0
      %623 = vmatprep.mubr.bf16.mxu0 0
      %624 = vmatmul.mubr.bf16.gmra.mrb[0].mxu0 %v534
      %v625 = vpop.f32.mrb[0].mxu0
      %v626 = vadd.f32 0.0, %v625
      %v627 = vpop.f32.mrb[0].mxu0
      %v628 = vpop.f32.mrb[0].mxu0
      %v629 = vadd.f32 0.0, %v628
      %v630 = vpop.f32.mrb[0].mxu0
      %631 = vmatprep.mubr.bf16.mxu0 0
      %632 = vmatmul.mubr.bf16.gmra.mrb[0].mxu0 %v537
      %v633 = vpop.f32.mrb[0].mxu0
      %v634 = vadd.f32 0.0, %v633
      %v635 = vpop.f32.mrb[0].mxu0
      %v636 = vpop.f32.mrb[0].mxu0
      %v637 = vadd.f32 0.0, %v636
      %v638 = vpop.f32.mrb[0].mxu0
      %639 = vdwg.mxu0
      %v656 = vunpack.c.l.b16 %v228
      %v657 = vunpack.c.l.b16 %v229
      %v658 = vunpack.c.l.b16 %v230
      %v659 = vunpack.c.l.b16 %v231
      %v660 = vunpack.c.l.b16 %v232
      %v661 = vunpack.c.l.b16 %v233
      %v662 = vunpack.c.l.b16 %v234
      %v663 = vunpack.c.l.b16 %v235
      %v664 = vunpack.c.l.b16 %v236
      %v665 = vunpack.c.l.b16 %v237
      %v666 = vunpack.c.l.b16 %v238
      %v667 = vunpack.c.l.b16 %v239
      %v668 = vunpack.c.l.b16 %v240
      %v669 = vunpack.c.l.b16 %v241
      %v670 = vunpack.c.l.b16 %v242
      %v671 = vunpack.c.l.b16 %v243
      %v672 = vpack.c.b16 %v657, %v656
      %v673 = vpack.c.b16 %v659, %v658
      %v674 = vpack.c.b16 %v661, %v660
      %v675 = vpack.c.b16 %v663, %v662
      %v676 = vpack.c.b16 %v665, %v664
      %v677 = vpack.c.b16 %v667, %v666
      %v678 = vpack.c.b16 %v669, %v668
      %v679 = vpack.c.b16 %v671, %v670
      %v681 = vsel %vm514, %v672, 0
      %v684 = vsel %vm514, %v673, 0
      %v687 = vsel %vm514, %v674, 0
      %v690 = vsel %vm514, %v675, 0
      %v693 = vsel %vm514, %v676, 0
      %v696 = vsel %vm514, %v677, 0
      %v699 = vsel %vm514, %v678, 0
      %v702 = vsel %vm514, %v679, 0
      %v705 = vsel %vm539, %v244, 0
      %707 = vmatprep.subr.bf16.mxu0 0
      %708 = vmatpush1.bf16.msra.mxu0 %v705
      %709 = vmatprep.subr.bf16.mxu0 0
      %710 = vmatpush1.bf16.msra.mxu0 0
      %711 = vmatprep.subr.bf16.mxu0 0
      %712 = vmatpush1.bf16.msra.mxu0 0
      %713 = vmatprep.subr.bf16.mxu0 0
      %714 = vmatpush1.bf16.msra.mxu0 0
      %715 = vmatprep.subr.bf16.mxu0 0
      %716 = vmatpush1.bf16.msra.mxu0 0
      %717 = vmatprep.subr.bf16.mxu0 0
      %718 = vmatpush1.bf16.msra.mxu0 0
      %719 = vmatprep.subr.bf16.mxu0 0
      %720 = vmatpush1.bf16.msra.mxu0 0
      %721 = vmatprep.subr.bf16.mxu0 0
      %722 = vmatpush1.bf16.msra.mxu0 0
      %723 = vmatprep.subr.bf16.mxu0 0
      %724 = vmatpush1.bf16.msra.mxu0 0
      %725 = vmatprep.subr.bf16.mxu0 0
      %726 = vmatpush1.bf16.msra.mxu0 0
      %727 = vmatprep.subr.bf16.mxu0 0
      %728 = vmatpush1.bf16.msra.mxu0 0
      %729 = vmatprep.subr.bf16.mxu0 0
      %730 = vmatpush1.bf16.msra.mxu0 0
      %731 = vmatprep.subr.bf16.mxu0 0
      %732 = vmatpush1.bf16.msra.mxu0 0
      %733 = vmatprep.subr.bf16.mxu0 0
      %734 = vmatpush1.bf16.msra.mxu0 0
      %735 = vmatprep.subr.bf16.mxu0 0
      %736 = vmatpush1.bf16.msra.mxu0 0
      %737 = vmatprep.subr.bf16.mxu0 0
      %738 = vmatpush1.bf16.msra.mxu0 0
      %739 = vmatprep.mubr.bf16.mxu0 0
      %740 = vmatmul.mubr.bf16.gmra.mrb[0].mxu0 %v681
      %v741 = vpop.f32.mrb[0].mxu0
      %v742 = vadd.f32 %v578, %v741
      %v743 = vpop.f32.mrb[0].mxu0
      %v744 = vpop.f32.mrb[0].mxu0
      %v745 = vadd.f32 %v581, %v744
      %v746 = vpop.f32.mrb[0].mxu0
      %747 = vmatprep.mubr.bf16.mxu0 0
      %748 = vmatmul.mubr.bf16.gmra.mrb[0].mxu0 %v684
      %v749 = vpop.f32.mrb[0].mxu0
      %v750 = vadd.f32 %v586, %v749
      %v751 = vpop.f32.mrb[0].mxu0
      %v752 = vpop.f32.mrb[0].mxu0
      %v753 = vadd.f32 %v589, %v752
      %v754 = vpop.f32.mrb[0].mxu0
      %755 = vmatprep.mubr.bf16.mxu0 0
      %756 = vmatmul.mubr.bf16.gmra.mrb[0].mxu0 %v687
      %v757 = vpop.f32.mrb[0].mxu0
      %v758 = vadd.f32 %v594, %v757
      %v759 = vpop.f32.mrb[0].mxu0
      %v760 = vpop.f32.mrb[0].mxu0
      %v761 = vadd.f32 %v597, %v760
      %v762 = vpop.f32.mrb[0].mxu0
      %763 = vmatprep.mubr.bf16.mxu0 0
      %764 = vmatmul.mubr.bf16.gmra.mrb[0].mxu0 %v690
      %v765 = vpop.f32.mrb[0].mxu0
      %v766 = vadd.f32 %v602, %v765
      %v767 = vpop.f32.mrb[0].mxu0
      %v768 = vpop.f32.mrb[0].mxu0
      %v769 = vadd.f32 %v605, %v768
      %v770 = vpop.f32.mrb[0].mxu0
      %771 = vmatprep.mubr.bf16.mxu0 0
      %772 = vmatmul.mubr.bf16.gmra.mrb[0].mxu0 %v693
      %v773 = vpop.f32.mrb[0].mxu0
      %v774 = vadd.f32 %v610, %v773
      %v775 = vpop.f32.mrb[0].mxu0
      %v776 = vpop.f32.mrb[0].mxu0
      %v777 = vadd.f32 %v613, %v776
      %v778 = vpop.f32.mrb[0].mxu0
      %779 = vmatprep.mubr.bf16.mxu0 0
      %780 = vmatmul.mubr.bf16.gmra.mrb[0].mxu0 %v696
      %v781 = vpop.f32.mrb[0].mxu0
      %v782 = vadd.f32 %v618, %v781
      %v783 = vpop.f32.mrb[0].mxu0
      %v784 = vpop.f32.mrb[0].mxu0
      %v785 = vadd.f32 %v621, %v784
      %v786 = vpop.f32.mrb[0].mxu0
      %787 = vmatprep.mubr.bf16.mxu0 0
      %788 = vmatmul.mubr.bf16.gmra.mrb[0].mxu0 %v699
      %v789 = vpop.f32.mrb[0].mxu0
      %v790 = vadd.f32 %v626, %v789
      %v791 = vpop.f32.mrb[0].mxu0
      %v792 = vpop.f32.mrb[0].mxu0
      %v793 = vadd.f32 %v629, %v792
      %v794 = vpop.f32.mrb[0].mxu0
      %795 = vmatprep.mubr.bf16.mxu0 0
      %796 = vmatmul.mubr.bf16.gmra.mrb[0].mxu0 %v702
      %v797 = vpop.f32.mrb[0].mxu0
      %v798 = vadd.f32 %v634, %v797
      %v799 = vpop.f32.mrb[0].mxu0
      %v800 = vpop.f32.mrb[0].mxu0
      %v801 = vadd.f32 %v637, %v800
      %v802 = vpop.f32.mrb[0].mxu0
      %803 = vdwg.mxu0
      %v804 = vld [vmem:[%s227] sm:$0x8]
      %v805 = vld [vmem:[%s227 + $0x8] sm:$0x7]
      %v806 = vld [vmem:[%s227 + $0xc] sm:$0x8]
      %v807 = vld [vmem:[%s227 + $0x14] sm:$0x7]
      %v808 = vld [vmem:[%s227 + $0x18] sm:$0x8]
      %v809 = vld [vmem:[%s227 + $0x20] sm:$0x7]
      %v810 = vld [vmem:[%s227 + $0x24] sm:$0x8]
      %v811 = vld [vmem:[%s227 + $0x2c] sm:$0x7]
      %v812 = vld [vmem:[%s227 + $0x30] sm:$0x8]
      %v813 = vld [vmem:[%s227 + $0x38] sm:$0x7]
      %v814 = vld [vmem:[%s227 + $0x3c] sm:$0x8]
      %v815 = vld [vmem:[%s227 + $0x44] sm:$0x7]
      %v816 = vld [vmem:[%s227 + $0x48] sm:$0x8]
      %v817 = vld [vmem:[%s227 + $0x50] sm:$0x7]
      %v818 = vld [vmem:[%s227 + $0x54] sm:$0x8]
      %v819 = vld [vmem:[%s227 + $0x5c] sm:$0x7]
      %vm836 = vcmask 1040384
      %vm837 = vcmask 1044484
      %vm838 = vmor %vm836, %vm837
      %v839 = vrot.slane %v804, 7
      %v840 = vrot.slane %v839, 4
      %v841 = vrot.slane %v229, 7
      %v842 = vsel %vm838, %v840, %v841
      %v843 = vrot.slane %v841, 4
      %v844 = vrot.slane %v805, 7
      %v845 = vsel %vm838, %v843, %v844
      %v846 = vrot.slane %v806, 7
      %v847 = vrot.slane %v846, 4
      %v848 = vrot.slane %v231, 7
      %v849 = vsel %vm838, %v847, %v848
      %v850 = vrot.slane %v848, 4
      %v851 = vrot.slane %v807, 7
      %v852 = vsel %vm838, %v850, %v851
      %v853 = vrot.slane %v808, 7
      %v854 = vrot.slane %v853, 4
      %v855 = vrot.slane %v233, 7
      %v856 = vsel %vm838, %v854, %v855
      %v857 = vrot.slane %v855, 4
      %v858 = vrot.slane %v809, 7
      %v859 = vsel %vm838, %v857, %v858
      %v860 = vrot.slane %v810, 7
      %v861 = vrot.slane %v860, 4
      %v862 = vrot.slane %v235, 7
      %v863 = vsel %vm838, %v861, %v862
      %v864 = vrot.slane %v862, 4
      %v865 = vrot.slane %v811, 7
      %v866 = vsel %vm838, %v864, %v865
      %v867 = vrot.slane %v812, 7
      %v868 = vrot.slane %v867, 4
      %v869 = vrot.slane %v237, 7
      %v870 = vsel %vm838, %v868, %v869
      %v871 = vrot.slane %v869, 4
      %v872 = vrot.slane %v813, 7
      %v873 = vsel %vm838, %v871, %v872
      %v874 = vrot.slane %v814, 7
      %v875 = vrot.slane %v874, 4
      %v876 = vrot.slane %v239, 7
      %v877 = vsel %vm838, %v875, %v876
      %v878 = vrot.slane %v876, 4
      %v879 = vrot.slane %v815, 7
      %v880 = vsel %vm838, %v878, %v879
      %v881 = vrot.slane %v816, 7
      %v882 = vrot.slane %v881, 4
      %v883 = vrot.slane %v241, 7
      %v884 = vsel %vm838, %v882, %v883
      %v885 = vrot.slane %v883, 4
      %v886 = vrot.slane %v817, 7
      %v887 = vsel %vm838, %v885, %v886
      %v888 = vrot.slane %v818, 7
      %v889 = vrot.slane %v888, 4
      %v890 = vrot.slane %v243, 7
      %v891 = vsel %vm838, %v889, %v890
      %v892 = vrot.slane %v890, 4
      %v893 = vrot.slane %v819, 7
      %v894 = vsel %vm838, %v892, %v893
      %s895 = scalar_lea.vmem %s1, 8
      %v896 = vld [vmem:[%s895] sm:$0xf]
      %v897 = vunpack.c.l.b16 %v842
      %v898 = vunpack.c.l.b16 %v845
      %v899 = vunpack.c.l.b16 %v849
      %v900 = vunpack.c.l.b16 %v852
      %v901 = vunpack.c.l.b16 %v856
      %v902 = vunpack.c.l.b16 %v859
      %v903 = vunpack.c.l.b16 %v863
      %v904 = vunpack.c.l.b16 %v866
      %v905 = vunpack.c.l.b16 %v870
      %v906 = vunpack.c.l.b16 %v873
      %v907 = vunpack.c.l.b16 %v877
      %v908 = vunpack.c.l.b16 %v880
      %v909 = vunpack.c.l.b16 %v884
      %v910 = vunpack.c.l.b16 %v887
      %v911 = vunpack.c.l.b16 %v891
      %v912 = vunpack.c.l.b16 %v894
      %v913 = vpack.c.b16 %v898, %v897
      %v914 = vpack.c.b16 %v900, %v899
      %v915 = vpack.c.b16 %v902, %v901
      %v916 = vpack.c.b16 %v904, %v903
      %v917 = vpack.c.b16 %v906, %v905
      %v918 = vpack.c.b16 %v908, %v907
      %v919 = vpack.c.b16 %v910, %v909
      %v920 = vpack.c.b16 %v912, %v911
      %v922 = vsel %vm514, %v913, 0
      %v925 = vsel %vm514, %v914, 0
      %v928 = vsel %vm514, %v915, 0
      %v931 = vsel %vm514, %v916, 0
      %v934 = vsel %vm514, %v917, 0
      %v937 = vsel %vm514, %v918, 0
      %v940 = vsel %vm514, %v919, 0
      %v943 = vsel %vm514, %v920, 0
      %v946 = vsel %vm539, %v896, 0
      %948 = vmatprep.subr.bf16.mxu0 0
      %949 = vmatpush1.bf16.msra.mxu0 %v946
      %950 = vmatprep.subr.bf16.mxu0 0
      %951 = vmatpush1.bf16.msra.mxu0 0
      %952 = vmatprep.subr.bf16.mxu0 0
      %953 = vmatpush1.bf16.msra.mxu0 0
      %954 = vmatprep.subr.bf16.mxu0 0
      %955 = vmatpush1.bf16.msra.mxu0 0
      %956 = vmatprep.subr.bf16.mxu0 0
      %957 = vmatpush1.bf16.msra.mxu0 0
      %958 = vmatprep.subr.bf16.mxu0 0
      %959 = vmatpush1.bf16.msra.mxu0 0
      %960 = vmatprep.subr.bf16.mxu0 0
      %961 = vmatpush1.bf16.msra.mxu0 0
      %962 = vmatprep.subr.bf16.mxu0 0
      %963 = vmatpush1.bf16.msra.mxu0 0
      %964 = vmatprep.subr.bf16.mxu0 0
      %965 = vmatpush1.bf16.msra.mxu0 0
      %966 = vmatprep.subr.bf16.mxu0 0
      %967 = vmatpush1.bf16.msra.mxu0 0
      %968 = vmatprep.subr.bf16.mxu0 0
      %969 = vmatpush1.bf16.msra.mxu0 0
      %970 = vmatprep.subr.bf16.mxu0 0
      %971 = vmatpush1.bf16.msra.mxu0 0
      %972 = vmatprep.subr.bf16.mxu0 0
      %973 = vmatpush1.bf16.msra.mxu0 0
      %974 = vmatprep.subr.bf16.mxu0 0
      %975 = vmatpush1.bf16.msra.mxu0 0
      %976 = vmatprep.subr.bf16.mxu0 0
      %977 = vmatpush1.bf16.msra.mxu0 0
      %978 = vmatprep.subr.bf16.mxu0 0
      %979 = vmatpush1.bf16.msra.mxu0 0
      %980 = vmatprep.mubr.bf16.mxu0 0
      %981 = vmatmul.mubr.bf16.gmra.mrb[0].mxu0 %v922
      %v982 = vpop.f32.mrb[0].mxu0
      %v983 = vadd.f32 0.0, %v982
      %v984 = vpop.f32.mrb[0].mxu0
      %v985 = vpop.f32.mrb[0].mxu0
      %v986 = vadd.f32 0.0, %v985
      %v987 = vpop.f32.mrb[0].mxu0
      %988 = vmatprep.mubr.bf16.mxu0 0
      %989 = vmatmul.mubr.bf16.gmra.mrb[0].mxu0 %v925
      %v990 = vpop.f32.mrb[0].mxu0
      %v991 = vadd.f32 0.0, %v990
      %v992 = vpop.f32.mrb[0].mxu0
      %v993 = vpop.f32.mrb[0].mxu0
      %v994 = vadd.f32 0.0, %v993
      %v995 = vpop.f32.mrb[0].mxu0
      %996 = vmatprep.mubr.bf16.mxu0 0
      %997 = vmatmul.mubr.bf16.gmra.mrb[0].mxu0 %v928
      %v998 = vpop.f32.mrb[0].mxu0
      %v999 = vadd.f32 0.0, %v998
      %v1000 = vpop.f32.mrb[0].mxu0
      %v1001 = vpop.f32.mrb[0].mxu0
      %v1002 = vadd.f32 0.0, %v1001
      %v1003 = vpop.f32.mrb[0].mxu0
      %1004 = vmatprep.mubr.bf16.mxu0 0
      %1005 = vmatmul.mubr.bf16.gmra.mrb[0].mxu0 %v931
      %v1006 = vpop.f32.mrb[0].mxu0
      %v1007 = vadd.f32 0.0, %v1006
      %v1008 = vpop.f32.mrb[0].mxu0
      %v1009 = vpop.f32.mrb[0].mxu0
      %v1010 = vadd.f32 0.0, %v1009
      %v1011 = vpop.f32.mrb[0].mxu0
      %1012 = vmatprep.mubr.bf16.mxu0 0
      %1013 = vmatmul.mubr.bf16.gmra.mrb[0].mxu0 %v934
      %v1014 = vpop.f32.mrb[0].mxu0
      %v1015 = vadd.f32 0.0, %v1014
      %v1016 = vpop.f32.mrb[0].mxu0
      %v1017 = vpop.f32.mrb[0].mxu0
      %v1018 = vadd.f32 0.0, %v1017
      %v1019 = vpop.f32.mrb[0].mxu0
      %1020 = vmatprep.mubr.bf16.mxu0 0
      %1021 = vmatmul.mubr.bf16.gmra.mrb[0].mxu0 %v937
      %v1022 = vpop.f32.mrb[0].mxu0
      %v1023 = vadd.f32 0.0, %v1022
      %v1024 = vpop.f32.mrb[0].mxu0
      %v1025 = vpop.f32.mrb[0].mxu0
      %v1026 = vadd.f32 0.0, %v1025
      %v1027 = vpop.f32.mrb[0].mxu0
      %1028 = vmatprep.mubr.bf16.mxu0 0
      %1029 = vmatmul.mubr.bf16.gmra.mrb[0].mxu0 %v940
      %v1030 = vpop.f32.mrb[0].mxu0
      %v1031 = vadd.f32 0.0, %v1030
      %v1032 = vpop.f32.mrb[0].mxu0
      %v1033 = vpop.f32.mrb[0].mxu0
      %v1034 = vadd.f32 0.0, %v1033
      %v1035 = vpop.f32.mrb[0].mxu0
      %1036 = vmatprep.mubr.bf16.mxu0 0
      %1037 = vmatmul.mubr.bf16.gmra.mrb[0].mxu0 %v943
      %v1038 = vpop.f32.mrb[0].mxu0
      %v1039 = vadd.f32 0.0, %v1038
      %v1040 = vpop.f32.mrb[0].mxu0
      %v1041 = vpop.f32.mrb[0].mxu0
      %v1042 = vadd.f32 0.0, %v1041
      %v1043 = vpop.f32.mrb[0].mxu0
      %1044 = vdwg.mxu0
      %v1045 = vadd.f32 %v742, %v983
      %v1046 = vadd.f32 %v745, %v986
      %v1047 = vadd.f32 %v750, %v991
      %v1048 = vadd.f32 %v753, %v994
      %v1049 = vadd.f32 %v758, %v999
      %v1050 = vadd.f32 %v761, %v1002
      %v1051 = vadd.f32 %v766, %v1007
      %v1052 = vadd.f32 %v769, %v1010
      %v1053 = vadd.f32 %v774, %v1015
      %v1054 = vadd.f32 %v777, %v1018
      %v1055 = vadd.f32 %v782, %v1023
      %v1056 = vadd.f32 %v785, %v1026
      %v1057 = vadd.f32 %v790, %v1031
      %v1058 = vadd.f32 %v793, %v1034
      %v1059 = vadd.f32 %v798, %v1039
      %v1060 = vadd.f32 %v801, %v1042
      %s1061 = sadd.s32 %s224, 3
      %s1062 = smul.u32 %s1061, 3
      %s1063 = smul.addr %s1062, 4
      %s1064 = scalar_lea.vmem %s211, %s1063
      %v1065 = vld [vmem:[%s1064] sm:$0xf]
      %v1066 = vld [vmem:[%s1064 + $0x4] sm:$0xf]
      %v1067 = vld [vmem:[%s1064 + $0xc] sm:$0xf]
      %v1068 = vld [vmem:[%s1064 + $0x10] sm:$0xf]
      %v1069 = vld [vmem:[%s1064 + $0x18] sm:$0xf]
      %v1070 = vld [vmem:[%s1064 + $0x1c] sm:$0xf]
      %v1071 = vld [vmem:[%s1064 + $0x24] sm:$0xf]
      %v1072 = vld [vmem:[%s1064 + $0x28] sm:$0xf]
      %v1073 = vld [vmem:[%s1064 + $0x30] sm:$0xf]
      %v1074 = vld [vmem:[%s1064 + $0x34] sm:$0xf]
      %v1075 = vld [vmem:[%s1064 + $0x3c] sm:$0xf]
      %v1076 = vld [vmem:[%s1064 + $0x40] sm:$0xf]
      %v1077 = vld [vmem:[%s1064 + $0x48] sm:$0xf]
      %v1078 = vld [vmem:[%s1064 + $0x4c] sm:$0xf]
      %v1079 = vld [vmem:[%s1064 + $0x54] sm:$0xf]
      %v1080 = vld [vmem:[%s1064 + $0x58] sm:$0xf]
      %s1081 = scalar_lea.vmem %s1, 12
      %v1082 = vld [vmem:[%s1081] sm:$0xf]
      %v1099 = vunpack.c.l.b16 %v1065
      %v1100 = vunpack.c.l.b16 %v1066
      %v1101 = vunpack.c.l.b16 %v1067
      %v1102 = vunpack.c.l.b16 %v1068
      %v1103 = vunpack.c.l.b16 %v1069
      %v1104 = vunpack.c.l.b16 %v1070
      %v1105 = vunpack.c.l.b16 %v1071
      %v1106 = vunpack.c.l.b16 %v1072
      %v1107 = vunpack.c.l.b16 %v1073
      %v1108 = vunpack.c.l.b16 %v1074
      %v1109 = vunpack.c.l.b16 %v1075
      %v1110 = vunpack.c.l.b16 %v1076
      %v1111 = vunpack.c.l.b16 %v1077
      %v1112 = vunpack.c.l.b16 %v1078
      %v1113 = vunpack.c.l.b16 %v1079
      %v1114 = vunpack.c.l.b16 %v1080
      %v1115 = vpack.c.b16 %v1100, %v1099
      %v1116 = vpack.c.b16 %v1102, %v1101
      %v1117 = vpack.c.b16 %v1104, %v1103
      %v1118 = vpack.c.b16 %v1106, %v1105
      %v1119 = vpack.c.b16 %v1108, %v1107
      %v1120 = vpack.c.b16 %v1110, %v1109
      %v1121 = vpack.c.b16 %v1112, %v1111
      %v1122 = vpack.c.b16 %v1114, %v1113
      %v1124 = vsel %vm514, %v1115, 0
      %v1127 = vsel %vm514, %v1116, 0
      %v1130 = vsel %vm514, %v1117, 0
      %v1133 = vsel %vm514, %v1118, 0
      %v1136 = vsel %vm514, %v1119, 0
      %v1139 = vsel %vm514, %v1120, 0
      %v1142 = vsel %vm514, %v1121, 0
      %v1145 = vsel %vm514, %v1122, 0
      %v1148 = vsel %vm539, %v1082, 0
      %1150 = vmatprep.subr.bf16.mxu0 0
      %1151 = vmatpush1.bf16.msra.mxu0 %v1148
      %1152 = vmatprep.subr.bf16.mxu0 0
      %1153 = vmatpush1.bf16.msra.mxu0 0
      %1154 = vmatprep.subr.bf16.mxu0 0
      %1155 = vmatpush1.bf16.msra.mxu0 0
      %1156 = vmatprep.subr.bf16.mxu0 0
      %1157 = vmatpush1.bf16.msra.mxu0 0
      %1158 = vmatprep.subr.bf16.mxu0 0
      %1159 = vmatpush1.bf16.msra.mxu0 0
      %1160 = vmatprep.subr.bf16.mxu0 0
      %1161 = vmatpush1.bf16.msra.mxu0 0
      %1162 = vmatprep.subr.bf16.mxu0 0
      %1163 = vmatpush1.bf16.msra.mxu0 0
      %1164 = vmatprep.subr.bf16.mxu0 0
      %1165 = vmatpush1.bf16.msra.mxu0 0
      %1166 = vmatprep.subr.bf16.mxu0 0
      %1167 = vmatpush1.bf16.msra.mxu0 0
      %1168 = vmatprep.subr.bf16.mxu0 0
      %1169 = vmatpush1.bf16.msra.mxu0 0
      %1170 = vmatprep.subr.bf16.mxu0 0
      %1171 = vmatpush1.bf16.msra.mxu0 0
      %1172 = vmatprep.subr.bf16.mxu0 0
      %1173 = vmatpush1.bf16.msra.mxu0 0
      %1174 = vmatprep.subr.bf16.mxu0 0
      %1175 = vmatpush1.bf16.msra.mxu0 0
      %1176 = vmatprep.subr.bf16.mxu0 0
      %1177 = vmatpush1.bf16.msra.mxu0 0
      %1178 = vmatprep.subr.bf16.mxu0 0
      %1179 = vmatpush1.bf16.msra.mxu0 0
      %1180 = vmatprep.subr.bf16.mxu0 0
      %1181 = vmatpush1.bf16.msra.mxu0 0
      %1182 = vmatprep.mubr.bf16.mxu0 0
      %1183 = vmatmul.mubr.bf16.gmra.mrb[0].mxu0 %v1124
      %v1184 = vpop.f32.mrb[0].mxu0
      %v1185 = vadd.f32 0.0, %v1184
      %v1186 = vpop.f32.mrb[0].mxu0
      %v1187 = vpop.f32.mrb[0].mxu0
      %v1188 = vadd.f32 0.0, %v1187
      %v1189 = vpop.f32.mrb[0].mxu0
      %1190 = vmatprep.mubr.bf16.mxu0 0
      %1191 = vmatmul.mubr.bf16.gmra.mrb[0].mxu0 %v1127
      %v1192 = vpop.f32.mrb[0].mxu0
      %v1193 = vadd.f32 0.0, %v1192
      %v1194 = vpop.f32.mrb[0].mxu0
      %v1195 = vpop.f32.mrb[0].mxu0
      %v1196 = vadd.f32 0.0, %v1195
      %v1197 = vpop.f32.mrb[0].mxu0
      %1198 = vmatprep.mubr.bf16.mxu0 0
      %1199 = vmatmul.mubr.bf16.gmra.mrb[0].mxu0 %v1130
      %v1200 = vpop.f32.mrb[0].mxu0
      %v1201 = vadd.f32 0.0, %v1200
      %v1202 = vpop.f32.mrb[0].mxu0
      %v1203 = vpop.f32.mrb[0].mxu0
      %v1204 = vadd.f32 0.0, %v1203
      %v1205 = vpop.f32.mrb[0].mxu0
      %1206 = vmatprep.mubr.bf16.mxu0 0
      %1207 = vmatmul.mubr.bf16.gmra.mrb[0].mxu0 %v1133
      %v1208 = vpop.f32.mrb[0].mxu0
      %v1209 = vadd.f32 0.0, %v1208
      %v1210 = vpop.f32.mrb[0].mxu0
      %v1211 = vpop.f32.mrb[0].mxu0
      %v1212 = vadd.f32 0.0, %v1211
      %v1213 = vpop.f32.mrb[0].mxu0
      %1214 = vmatprep.mubr.bf16.mxu0 0
      %1215 = vmatmul.mubr.bf16.gmra.mrb[0].mxu0 %v1136
      %v1216 = vpop.f32.mrb[0].mxu0
      %v1217 = vadd.f32 0.0, %v1216
      %v1218 = vpop.f32.mrb[0].mxu0
      %v1219 = vpop.f32.mrb[0].mxu0
      %v1220 = vadd.f32 0.0, %v1219
      %v1221 = vpop.f32.mrb[0].mxu0
      %1222 = vmatprep.mubr.bf16.mxu0 0
      %1223 = vmatmul.mubr.bf16.gmra.mrb[0].mxu0 %v1139
      %v1224 = vpop.f32.mrb[0].mxu0
      %v1225 = vadd.f32 0.0, %v1224
      %v1226 = vpop.f32.mrb[0].mxu0
      %v1227 = vpop.f32.mrb[0].mxu0
      %v1228 = vadd.f32 0.0, %v1227
      %v1229 = vpop.f32.mrb[0].mxu0
      %1230 = vmatprep.mubr.bf16.mxu0 0
      %1231 = vmatmul.mubr.bf16.gmra.mrb[0].mxu0 %v1142
      %v1232 = vpop.f32.mrb[0].mxu0
      %v1233 = vadd.f32 0.0, %v1232
      %v1234 = vpop.f32.mrb[0].mxu0
      %v1235 = vpop.f32.mrb[0].mxu0
      %v1236 = vadd.f32 0.0, %v1235
      %v1237 = vpop.f32.mrb[0].mxu0
      %1238 = vmatprep.mubr.bf16.mxu0 0
      %1239 = vmatmul.mubr.bf16.gmra.mrb[0].mxu0 %v1145
      %v1240 = vpop.f32.mrb[0].mxu0
      %v1241 = vadd.f32 0.0, %v1240
      %v1242 = vpop.f32.mrb[0].mxu0
      %v1243 = vpop.f32.mrb[0].mxu0
      %v1244 = vadd.f32 0.0, %v1243
      %v1245 = vpop.f32.mrb[0].mxu0
      %1246 = vdwg.mxu0
      %v1247 = vadd.f32 %v1045, %v1185
      %v1248 = vadd.f32 %v1046, %v1188
      %v1249 = vadd.f32 %v1047, %v1193
      %v1250 = vadd.f32 %v1048, %v1196
      %v1251 = vadd.f32 %v1049, %v1201
      %v1252 = vadd.f32 %v1050, %v1204
      %v1253 = vadd.f32 %v1051, %v1209
      %v1254 = vadd.f32 %v1052, %v1212
      %v1255 = vadd.f32 %v1053, %v1217
      %v1256 = vadd.f32 %v1054, %v1220
      %v1257 = vadd.f32 %v1055, %v1225
      %v1258 = vadd.f32 %v1056, %v1228
      %v1259 = vadd.f32 %v1057, %v1233
      %v1260 = vadd.f32 %v1058, %v1236
      %v1261 = vadd.f32 %v1059, %v1241
      %v1262 = vadd.f32 %v1060, %v1244
      %v1263 = vld [vmem:[%s1064] sm:$0xe]
      %v1264 = vld [vmem:[%s1064 + $0x4] sm:$0xf]
      %v1265 = vld [vmem:[%s1064 + $0x8] sm:$0x3]
      %v1266 = vld [vmem:[%s1064 + $0xc] sm:$0xe]
      %v1267 = vld [vmem:[%s1064 + $0x10] sm:$0xf]
      %v1268 = vld [vmem:[%s1064 + $0x14] sm:$0x3]
      %v1269 = vld [vmem:[%s1064 + $0x18] sm:$0xe]
      %v1270 = vld [vmem:[%s1064 + $0x1c] sm:$0xf]
      %v1271 = vld [vmem:[%s1064 + $0x20] sm:$0x3]
      %v1272 = vld [vmem:[%s1064 + $0x24] sm:$0xe]
      %v1273 = vld [vmem:[%s1064 + $0x28] sm:$0xf]
      %v1274 = vld [vmem:[%s1064 + $0x2c] sm:$0x3]
      %v1275 = vld [vmem:[%s1064 + $0x30] sm:$0xe]
      %v1276 = vld [vmem:[%s1064 + $0x34] sm:$0xf]
      %v1277 = vld [vmem:[%s1064 + $0x38] sm:$0x3]
      %v1278 = vld [vmem:[%s1064 + $0x3c] sm:$0xe]
      %v1279 = vld [vmem:[%s1064 + $0x40] sm:$0xf]
      %v1280 = vld [vmem:[%s1064 + $0x44] sm:$0x3]
      %v1281 = vld [vmem:[%s1064 + $0x48] sm:$0xe]
      %v1282 = vld [vmem:[%s1064 + $0x4c] sm:$0xf]
      %v1283 = vld [vmem:[%s1064 + $0x50] sm:$0x3]
      %v1284 = vld [vmem:[%s1064 + $0x54] sm:$0xe]
      %v1285 = vld [vmem:[%s1064 + $0x58] sm:$0xf]
      %v1286 = vld [vmem:[%s1064 + $0x5c] sm:$0x3]
      %v1288 = vshrl.u32 %v1263, 16
      %v1290 = vrot.slane %v1288, 5
      %v1291 = vshll.u32 %v1263, 16
      %v1293 = vrot.slane %v1291, 6
      %v1294 = vor.u32 %v1290, %v1293
      %v1295 = vrot.slane %v1294, 4
      %v1297 = vshrl.u32 %v1264, 16
      %v1299 = vrot.slane %v1297, 5
      %v1300 = vshll.u32 %v1264, 16
      %v1302 = vrot.slane %v1300, 6
      %v1303 = vor.u32 %v1299, %v1302
      %v1304 = vsel %vm263, %v1295, %v1303
      %v1305 = vrot.slane %v1303, 4
      %v1307 = vshrl.u32 %v1265, 16
      %v1309 = vrot.slane %v1307, 5
      %v1310 = vshll.u32 %v1265, 16
      %v1312 = vrot.slane %v1310, 6
      %v1313 = vor.u32 %v1309, %v1312
      %v1314 = vsel %vm263, %v1305, %v1313
      %v1316 = vshrl.u32 %v1266, 16
      %v1318 = vrot.slane %v1316, 5
      %v1319 = vshll.u32 %v1266, 16
      %v1321 = vrot.slane %v1319, 6
      %v1322 = vor.u32 %v1318, %v1321
      %v1323 = vrot.slane %v1322, 4
      %v1325 = vshrl.u32 %v1267, 16
      %v1327 = vrot.slane %v1325, 5
      %v1328 = vshll.u32 %v1267, 16
      %v1330 = vrot.slane %v1328, 6
      %v1331 = vor.u32 %v1327, %v1330
      %v1332 = vsel %vm263, %v1323, %v1331
      %v1333 = vrot.slane %v1331, 4
      %v1335 = vshrl.u32 %v1268, 16
      %v1337 = vrot.slane %v1335, 5
      %v1338 = vshll.u32 %v1268, 16
      %v1340 = vrot.slane %v1338, 6
      %v1341 = vor.u32 %v1337, %v1340
      %v1342 = vsel %vm263, %v1333, %v1341
      %v1344 = vshrl.u32 %v1269, 16
      %v1346 = vrot.slane %v1344, 5
      %v1347 = vshll.u32 %v1269, 16
      %v1349 = vrot.slane %v1347, 6
      %v1350 = vor.u32 %v1346, %v1349
      %v1351 = vrot.slane %v1350, 4
      %v1353 = vshrl.u32 %v1270, 16
      %v1355 = vrot.slane %v1353, 5
      %v1356 = vshll.u32 %v1270, 16
      %v1358 = vrot.slane %v1356, 6
      %v1359 = vor.u32 %v1355, %v1358
      %v1360 = vsel %vm263, %v1351, %v1359
      %v1361 = vrot.slane %v1359, 4
      %v1363 = vshrl.u32 %v1271, 16
      %v1365 = vrot.slane %v1363, 5
      %v1366 = vshll.u32 %v1271, 16
      %v1368 = vrot.slane %v1366, 6
      %v1369 = vor.u32 %v1365, %v1368
      %v1370 = vsel %vm263, %v1361, %v1369
      %v1372 = vshrl.u32 %v1272, 16
      %v1374 = vrot.slane %v1372, 5
      %v1375 = vshll.u32 %v1272, 16
      %v1377 = vrot.slane %v1375, 6
      %v1378 = vor.u32 %v1374, %v1377
      %v1379 = vrot.slane %v1378, 4
      %v1381 = vshrl.u32 %v1273, 16
      %v1383 = vrot.slane %v1381, 5
      %v1384 = vshll.u32 %v1273, 16
      %v1386 = vrot.slane %v1384, 6
      %v1387 = vor.u32 %v1383, %v1386
      %v1388 = vsel %vm263, %v1379, %v1387
      %v1389 = vrot.slane %v1387, 4
      %v1391 = vshrl.u32 %v1274, 16
      %v1393 = vrot.slane %v1391, 5
      %v1394 = vshll.u32 %v1274, 16
      %v1396 = vrot.slane %v1394, 6
      %v1397 = vor.u32 %v1393, %v1396
      %v1398 = vsel %vm263, %v1389, %v1397
      %v1400 = vshrl.u32 %v1275, 16
      %v1402 = vrot.slane %v1400, 5
      %v1403 = vshll.u32 %v1275, 16
      %v1405 = vrot.slane %v1403, 6
      %v1406 = vor.u32 %v1402, %v1405
      %v1407 = vrot.slane %v1406, 4
      %v1409 = vshrl.u32 %v1276, 16
      %v1411 = vrot.slane %v1409, 5
      %v1412 = vshll.u32 %v1276, 16
      %v1414 = vrot.slane %v1412, 6
      %v1415 = vor.u32 %v1411, %v1414
      %v1416 = vsel %vm263, %v1407, %v1415
      %v1417 = vrot.slane %v1415, 4
      %v1419 = vshrl.u32 %v1277, 16
      %v1421 = vrot.slane %v1419, 5
      %v1422 = vshll.u32 %v1277, 16
      %v1424 = vrot.slane %v1422, 6
      %v1425 = vor.u32 %v1421, %v1424
      %v1426 = vsel %vm263, %v1417, %v1425
      %v1428 = vshrl.u32 %v1278, 16
      %v1430 = vrot.slane %v1428, 5
      %v1431 = vshll.u32 %v1278, 16
      %v1433 = vrot.slane %v1431, 6
      %v1434 = vor.u32 %v1430, %v1433
      %v1435 = vrot.slane %v1434, 4
      %v1437 = vshrl.u32 %v1279, 16
      %v1439 = vrot.slane %v1437, 5
      %v1440 = vshll.u32 %v1279, 16
      %v1442 = vrot.slane %v1440, 6
      %v1443 = vor.u32 %v1439, %v1442
      %v1444 = vsel %vm263, %v1435, %v1443
      %v1445 = vrot.slane %v1443, 4
      %v1447 = vshrl.u32 %v1280, 16
      %v1449 = vrot.slane %v1447, 5
      %v1450 = vshll.u32 %v1280, 16
      %v1452 = vrot.slane %v1450, 6
      %v1453 = vor.u32 %v1449, %v1452
      %v1454 = vsel %vm263, %v1445, %v1453
      %v1456 = vshrl.u32 %v1281, 16
      %v1458 = vrot.slane %v1456, 5
      %v1459 = vshll.u32 %v1281, 16
      %v1461 = vrot.slane %v1459, 6
      %v1462 = vor.u32 %v1458, %v1461
      %v1463 = vrot.slane %v1462, 4
      %v1465 = vshrl.u32 %v1282, 16
      %v1467 = vrot.slane %v1465, 5
      %v1468 = vshll.u32 %v1282, 16
      %v1470 = vrot.slane %v1468, 6
      %v1471 = vor.u32 %v1467, %v1470
      %v1472 = vsel %vm263, %v1463, %v1471
      %v1473 = vrot.slane %v1471, 4
      %v1475 = vshrl.u32 %v1283, 16
      %v1477 = vrot.slane %v1475, 5
      %v1478 = vshll.u32 %v1283, 16
      %v1480 = vrot.slane %v1478, 6
      %v1481 = vor.u32 %v1477, %v1480
      %v1482 = vsel %vm263, %v1473, %v1481
      %v1484 = vshrl.u32 %v1284, 16
      %v1486 = vrot.slane %v1484, 5
      %v1487 = vshll.u32 %v1284, 16
      %v1489 = vrot.slane %v1487, 6
      %v1490 = vor.u32 %v1486, %v1489
      %v1491 = vrot.slane %v1490, 4
      %v1493 = vshrl.u32 %v1285, 16
      %v1495 = vrot.slane %v1493, 5
      %v1496 = vshll.u32 %v1285, 16
      %v1498 = vrot.slane %v1496, 6
      %v1499 = vor.u32 %v1495, %v1498
      %v1500 = vsel %vm263, %v1491, %v1499
      %v1501 = vrot.slane %v1499, 4
      %v1503 = vshrl.u32 %v1286, 16
      %v1505 = vrot.slane %v1503, 5
      %v1506 = vshll.u32 %v1286, 16
      %v1508 = vrot.slane %v1506, 6
      %v1509 = vor.u32 %v1505, %v1508
      %v1510 = vsel %vm263, %v1501, %v1509
      %s1511 = scalar_lea.vmem %s1, 16
      %v1512 = vld [vmem:[%s1511] sm:$0xf]
      %v1513 = vunpack.c.l.b16 %v1304
      %v1514 = vunpack.c.l.b16 %v1314
      %v1515 = vunpack.c.l.b16 %v1332
      %v1516 = vunpack.c.l.b16 %v1342
      %v1517 = vunpack.c.l.b16 %v1360
      %v1518 = vunpack.c.l.b16 %v1370
      %v1519 = vunpack.c.l.b16 %v1388
      %v1520 = vunpack.c.l.b16 %v1398
      %v1521 = vunpack.c.l.b16 %v1416
      %v1522 = vunpack.c.l.b16 %v1426
      %v1523 = vunpack.c.l.b16 %v1444
      %v1524 = vunpack.c.l.b16 %v1454
      %v1525 = vunpack.c.l.b16 %v1472
      %v1526 = vunpack.c.l.b16 %v1482
      %v1527 = vunpack.c.l.b16 %v1500
      %v1528 = vunpack.c.l.b16 %v1510
      %v1529 = vpack.c.b16 %v1514, %v1513
      %v1530 = vpack.c.b16 %v1516, %v1515
      %v1531 = vpack.c.b16 %v1518, %v1517
      %v1532 = vpack.c.b16 %v1520, %v1519
      %v1533 = vpack.c.b16 %v1522, %v1521
      %v1534 = vpack.c.b16 %v1524, %v1523
      %v1535 = vpack.c.b16 %v1526, %v1525
      %v1536 = vpack.c.b16 %v1528, %v1527
      %v1538 = vsel %vm514, %v1529, 0
      %v1541 = vsel %vm514, %v1530, 0
      %v1544 = vsel %vm514, %v1531, 0
      %v1547 = vsel %vm514, %v1532, 0
      %v1550 = vsel %vm514, %v1533, 0
      %v1553 = vsel %vm514, %v1534, 0
      %v1556 = vsel %vm514, %v1535, 0
      %v1559 = vsel %vm514, %v1536, 0
      %v1562 = vsel %vm539, %v1512, 0
      %1564 = vmatprep.subr.bf16.mxu0 0
      %1565 = vmatpush1.bf16.msra.mxu0 %v1562
      %1566 = vmatprep.subr.bf16.mxu0 0
      %1567 = vmatpush1.bf16.msra.mxu0 0
      %1568 = vmatprep.subr.bf16.mxu0 0
      %1569 = vmatpush1.bf16.msra.mxu0 0
      %1570 = vmatprep.subr.bf16.mxu0 0
      %1571 = vmatpush1.bf16.msra.mxu0 0
      %1572 = vmatprep.subr.bf16.mxu0 0
      %1573 = vmatpush1.bf16.msra.mxu0 0
      %1574 = vmatprep.subr.bf16.mxu0 0
      %1575 = vmatpush1.bf16.msra.mxu0 0
      %1576 = vmatprep.subr.bf16.mxu0 0
      %1577 = vmatpush1.bf16.msra.mxu0 0
      %1578 = vmatprep.subr.bf16.mxu0 0
      %1579 = vmatpush1.bf16.msra.mxu0 0
      %1580 = vmatprep.subr.bf16.mxu0 0
      %1581 = vmatpush1.bf16.msra.mxu0 0
      %1582 = vmatprep.subr.bf16.mxu0 0
      %1583 = vmatpush1.bf16.msra.mxu0 0
      %1584 = vmatprep.subr.bf16.mxu0 0
      %1585 = vmatpush1.bf16.msra.mxu0 0
      %1586 = vmatprep.subr.bf16.mxu0 0
      %1587 = vmatpush1.bf16.msra.mxu0 0
      %1588 = vmatprep.subr.bf16.mxu0 0
      %1589 = vmatpush1.bf16.msra.mxu0 0
      %1590 = vmatprep.subr.bf16.mxu0 0
      %1591 = vmatpush1.bf16.msra.mxu0 0
      %1592 = vmatprep.subr.bf16.mxu0 0
      %1593 = vmatpush1.bf16.msra.mxu0 0
      %1594 = vmatprep.subr.bf16.mxu0 0
      %1595 = vmatpush1.bf16.msra.mxu0 0
      %1596 = vmatprep.mubr.bf16.mxu0 0
      %1597 = vmatmul.mubr.bf16.gmra.mrb[0].mxu0 %v1538
      %v1598 = vpop.f32.mrb[0].mxu0
      %v1599 = vadd.f32 0.0, %v1598
      %v1600 = vpop.f32.mrb[0].mxu0
      %v1601 = vpop.f32.mrb[0].mxu0
      %v1602 = vadd.f32 0.0, %v1601
      %v1603 = vpop.f32.mrb[0].mxu0
      %1604 = vmatprep.mubr.bf16.mxu0 0
      %1605 = vmatmul.mubr.bf16.gmra.mrb[0].mxu0 %v1541
      %v1606 = vpop.f32.mrb[0].mxu0
      %v1607 = vadd.f32 0.0, %v1606
      %v1608 = vpop.f32.mrb[0].mxu0
      %v1609 = vpop.f32.mrb[0].mxu0
      %v1610 = vadd.f32 0.0, %v1609
      %v1611 = vpop.f32.mrb[0].mxu0
      %1612 = vmatprep.mubr.bf16.mxu0 0
      %1613 = vmatmul.mubr.bf16.gmra.mrb[0].mxu0 %v1544
      %v1614 = vpop.f32.mrb[0].mxu0
      %v1615 = vadd.f32 0.0, %v1614
      %v1616 = vpop.f32.mrb[0].mxu0
      %v1617 = vpop.f32.mrb[0].mxu0
      %v1618 = vadd.f32 0.0, %v1617
      %v1619 = vpop.f32.mrb[0].mxu0
      %1620 = vmatprep.mubr.bf16.mxu0 0
      %1621 = vmatmul.mubr.bf16.gmra.mrb[0].mxu0 %v1547
      %v1622 = vpop.f32.mrb[0].mxu0
      %v1623 = vadd.f32 0.0, %v1622
      %v1624 = vpop.f32.mrb[0].mxu0
      %v1625 = vpop.f32.mrb[0].mxu0
      %v1626 = vadd.f32 0.0, %v1625
      %v1627 = vpop.f32.mrb[0].mxu0
      %1628 = vmatprep.mubr.bf16.mxu0 0
      %1629 = vmatmul.mubr.bf16.gmra.mrb[0].mxu0 %v1550
      %v1630 = vpop.f32.mrb[0].mxu0
      %v1631 = vadd.f32 0.0, %v1630
      %v1632 = vpop.f32.mrb[0].mxu0
      %v1633 = vpop.f32.mrb[0].mxu0
      %v1634 = vadd.f32 0.0, %v1633
      %v1635 = vpop.f32.mrb[0].mxu0
      %1636 = vmatprep.mubr.bf16.mxu0 0
      %1637 = vmatmul.mubr.bf16.gmra.mrb[0].mxu0 %v1553
      %v1638 = vpop.f32.mrb[0].mxu0
      %v1639 = vadd.f32 0.0, %v1638
      %v1640 = vpop.f32.mrb[0].mxu0
      %v1641 = vpop.f32.mrb[0].mxu0
      %v1642 = vadd.f32 0.0, %v1641
      %v1643 = vpop.f32.mrb[0].mxu0
      %1644 = vmatprep.mubr.bf16.mxu0 0
      %1645 = vmatmul.mubr.bf16.gmra.mrb[0].mxu0 %v1556
      %v1646 = vpop.f32.mrb[0].mxu0
      %v1647 = vadd.f32 0.0, %v1646
      %v1648 = vpop.f32.mrb[0].mxu0
      %v1649 = vpop.f32.mrb[0].mxu0
      %v1650 = vadd.f32 0.0, %v1649
      %v1651 = vpop.f32.mrb[0].mxu0
      %1652 = vmatprep.mubr.bf16.mxu0 0
      %1653 = vmatmul.mubr.bf16.gmra.mrb[0].mxu0 %v1559
      %v1654 = vpop.f32.mrb[0].mxu0
      %v1655 = vadd.f32 0.0, %v1654
      %v1656 = vpop.f32.mrb[0].mxu0
      %v1657 = vpop.f32.mrb[0].mxu0
      %v1658 = vadd.f32 0.0, %v1657
      %v1659 = vpop.f32.mrb[0].mxu0
      %1660 = vdwg.mxu0
      %v1661 = vadd.f32 %v1247, %v1599
      %v1662 = vadd.f32 %v1248, %v1602
      %v1663 = vadd.f32 %v1249, %v1607
      %v1664 = vadd.f32 %v1250, %v1610
      %v1665 = vadd.f32 %v1251, %v1615
      %v1666 = vadd.f32 %v1252, %v1618
      %v1667 = vadd.f32 %v1253, %v1623
      %v1668 = vadd.f32 %v1254, %v1626
      %v1669 = vadd.f32 %v1255, %v1631
      %v1670 = vadd.f32 %v1256, %v1634
      %v1671 = vadd.f32 %v1257, %v1639
      %v1672 = vadd.f32 %v1258, %v1642
      %v1673 = vadd.f32 %v1259, %v1647
      %v1674 = vadd.f32 %v1260, %v1650
      %v1675 = vadd.f32 %v1261, %v1655
      %v1676 = vadd.f32 %v1262, %v1658
      %v1677 = vld [vmem:[%s1064] sm:$0x8]
      %v1678 = vld [vmem:[%s1064 + $0x8] sm:$0x7]
      %v1679 = vld [vmem:[%s1064 + $0xc] sm:$0x8]
      %v1680 = vld [vmem:[%s1064 + $0x14] sm:$0x7]
      %v1681 = vld [vmem:[%s1064 + $0x18] sm:$0x8]
      %v1682 = vld [vmem:[%s1064 + $0x20] sm:$0x7]
      %v1683 = vld [vmem:[%s1064 + $0x24] sm:$0x8]
      %v1684 = vld [vmem:[%s1064 + $0x2c] sm:$0x7]
      %v1685 = vld [vmem:[%s1064 + $0x30] sm:$0x8]
      %v1686 = vld [vmem:[%s1064 + $0x38] sm:$0x7]
      %v1687 = vld [vmem:[%s1064 + $0x3c] sm:$0x8]
      %v1688 = vld [vmem:[%s1064 + $0x44] sm:$0x7]
      %v1689 = vld [vmem:[%s1064 + $0x48] sm:$0x8]
      %v1690 = vld [vmem:[%s1064 + $0x50] sm:$0x7]
      %v1691 = vld [vmem:[%s1064 + $0x54] sm:$0x8]
      %v1692 = vld [vmem:[%s1064 + $0x5c] sm:$0x7]
      %v1717 = vrot.slane %v1677, 7
      %v1718 = vrot.slane %v1717, 4
      %v1719 = vrot.slane %v1264, 7
      %v1720 = vsel %vm838, %v1718, %v1719
      %v1721 = vrot.slane %v1719, 4
      %v1722 = vrot.slane %v1678, 7
      %v1723 = vsel %vm838, %v1721, %v1722
      %v1724 = vrot.slane %v1679, 7
      %v1725 = vrot.slane %v1724, 4
      %v1726 = vrot.slane %v1267, 7
      %v1727 = vsel %vm838, %v1725, %v1726
      %v1728 = vrot.slane %v1726, 4
      %v1729 = vrot.slane %v1680, 7
      %v1730 = vsel %vm838, %v1728, %v1729
      %v1731 = vrot.slane %v1681, 7
      %v1732 = vrot.slane %v1731, 4
      %v1733 = vrot.slane %v1270, 7
      %v1734 = vsel %vm838, %v1732, %v1733
      %v1735 = vrot.slane %v1733, 4
      %v1736 = vrot.slane %v1682, 7
      %v1737 = vsel %vm838, %v1735, %v1736
      %v1738 = vrot.slane %v1683, 7
      %v1739 = vrot.slane %v1738, 4
      %v1740 = vrot.slane %v1273, 7
      %v1741 = vsel %vm838, %v1739, %v1740
      %v1742 = vrot.slane %v1740, 4
      %v1743 = vrot.slane %v1684, 7
      %v1744 = vsel %vm838, %v1742, %v1743
      %v1745 = vrot.slane %v1685, 7
      %v1746 = vrot.slane %v1745, 4
      %v1747 = vrot.slane %v1276, 7
      %v1748 = vsel %vm838, %v1746, %v1747
      %v1749 = vrot.slane %v1747, 4
      %v1750 = vrot.slane %v1686, 7
      %v1751 = vsel %vm838, %v1749, %v1750
      %v1752 = vrot.slane %v1687, 7
      %v1753 = vrot.slane %v1752, 4
      %v1754 = vrot.slane %v1279, 7
      %v1755 = vsel %vm838, %v1753, %v1754
      %v1756 = vrot.slane %v1754, 4
      %v1757 = vrot.slane %v1688, 7
      %v1758 = vsel %vm838, %v1756, %v1757
      %v1759 = vrot.slane %v1689, 7
      %v1760 = vrot.slane %v1759, 4
      %v1761 = vrot.slane %v1282, 7
      %v1762 = vsel %vm838, %v1760, %v1761
      %v1763 = vrot.slane %v1761, 4
      %v1764 = vrot.slane %v1690, 7
      %v1765 = vsel %vm838, %v1763, %v1764
      %v1766 = vrot.slane %v1691, 7
      %v1767 = vrot.slane %v1766, 4
      %v1768 = vrot.slane %v1285, 7
      %v1769 = vsel %vm838, %v1767, %v1768
      %v1770 = vrot.slane %v1768, 4
      %v1771 = vrot.slane %v1692, 7
      %v1772 = vsel %vm838, %v1770, %v1771
      %s1773 = scalar_lea.vmem %s1, 20
      %v1774 = vld [vmem:[%s1773] sm:$0xf]
      %v1775 = vunpack.c.l.b16 %v1720
      %v1776 = vunpack.c.l.b16 %v1723
      %v1777 = vunpack.c.l.b16 %v1727
      %v1778 = vunpack.c.l.b16 %v1730
      %v1779 = vunpack.c.l.b16 %v1734
      %v1780 = vunpack.c.l.b16 %v1737
      %v1781 = vunpack.c.l.b16 %v1741
      %v1782 = vunpack.c.l.b16 %v1744
      %v1783 = vunpack.c.l.b16 %v1748
      %v1784 = vunpack.c.l.b16 %v1751
      %v1785 = vunpack.c.l.b16 %v1755
      %v1786 = vunpack.c.l.b16 %v1758
      %v1787 = vunpack.c.l.b16 %v1762
      %v1788 = vunpack.c.l.b16 %v1765
      %v1789 = vunpack.c.l.b16 %v1769
      %v1790 = vunpack.c.l.b16 %v1772
      %v1791 = vpack.c.b16 %v1776, %v1775
      %v1792 = vpack.c.b16 %v1778, %v1777
      %v1793 = vpack.c.b16 %v1780, %v1779
      %v1794 = vpack.c.b16 %v1782, %v1781
      %v1795 = vpack.c.b16 %v1784, %v1783
      %v1796 = vpack.c.b16 %v1786, %v1785
      %v1797 = vpack.c.b16 %v1788, %v1787
      %v1798 = vpack.c.b16 %v1790, %v1789
      %v1800 = vsel %vm514, %v1791, 0
      %v1803 = vsel %vm514, %v1792, 0
      %v1806 = vsel %vm514, %v1793, 0
      %v1809 = vsel %vm514, %v1794, 0
      %v1812 = vsel %vm514, %v1795, 0
      %v1815 = vsel %vm514, %v1796, 0
      %v1818 = vsel %vm514, %v1797, 0
      %v1821 = vsel %vm514, %v1798, 0
      %v1824 = vsel %vm539, %v1774, 0
      %1826 = vmatprep.subr.bf16.mxu0 0
      %1827 = vmatpush1.bf16.msra.mxu0 %v1824
      %1828 = vmatprep.subr.bf16.mxu0 0
      %1829 = vmatpush1.bf16.msra.mxu0 0
      %1830 = vmatprep.subr.bf16.mxu0 0
      %1831 = vmatpush1.bf16.msra.mxu0 0
      %1832 = vmatprep.subr.bf16.mxu0 0
      %1833 = vmatpush1.bf16.msra.mxu0 0
      %1834 = vmatprep.subr.bf16.mxu0 0
      %1835 = vmatpush1.bf16.msra.mxu0 0
      %1836 = vmatprep.subr.bf16.mxu0 0
      %1837 = vmatpush1.bf16.msra.mxu0 0
      %1838 = vmatprep.subr.bf16.mxu0 0
      %1839 = vmatpush1.bf16.msra.mxu0 0
      %1840 = vmatprep.subr.bf16.mxu0 0
      %1841 = vmatpush1.bf16.msra.mxu0 0
      %1842 = vmatprep.subr.bf16.mxu0 0
      %1843 = vmatpush1.bf16.msra.mxu0 0
      %1844 = vmatprep.subr.bf16.mxu0 0
      %1845 = vmatpush1.bf16.msra.mxu0 0
      %1846 = vmatprep.subr.bf16.mxu0 0
      %1847 = vmatpush1.bf16.msra.mxu0 0
      %1848 = vmatprep.subr.bf16.mxu0 0
      %1849 = vmatpush1.bf16.msra.mxu0 0
      %1850 = vmatprep.subr.bf16.mxu0 0
      %1851 = vmatpush1.bf16.msra.mxu0 0
      %1852 = vmatprep.subr.bf16.mxu0 0
      %1853 = vmatpush1.bf16.msra.mxu0 0
      %1854 = vmatprep.subr.bf16.mxu0 0
      %1855 = vmatpush1.bf16.msra.mxu0 0
      %1856 = vmatprep.subr.bf16.mxu0 0
      %1857 = vmatpush1.bf16.msra.mxu0 0
      %1858 = vmatprep.mubr.bf16.mxu0 0
      %1859 = vmatmul.mubr.bf16.gmra.mrb[0].mxu0 %v1800
      %v1860 = vpop.f32.mrb[0].mxu0
      %v1861 = vadd.f32 0.0, %v1860
      %v1862 = vpop.f32.mrb[0].mxu0
      %v1863 = vpop.f32.mrb[0].mxu0
      %v1864 = vadd.f32 0.0, %v1863
      %v1865 = vpop.f32.mrb[0].mxu0
      %1866 = vmatprep.mubr.bf16.mxu0 0
      %1867 = vmatmul.mubr.bf16.gmra.mrb[0].mxu0 %v1803
      %v1868 = vpop.f32.mrb[0].mxu0
      %v1869 = vadd.f32 0.0, %v1868
      %v1870 = vpop.f32.mrb[0].mxu0
      %v1871 = vpop.f32.mrb[0].mxu0
      %v1872 = vadd.f32 0.0, %v1871
      %v1873 = vpop.f32.mrb[0].mxu0
      %1874 = vmatprep.mubr.bf16.mxu0 0
      %1875 = vmatmul.mubr.bf16.gmra.mrb[0].mxu0 %v1806
      %v1876 = vpop.f32.mrb[0].mxu0
      %v1877 = vadd.f32 0.0, %v1876
      %v1878 = vpop.f32.mrb[0].mxu0
      %v1879 = vpop.f32.mrb[0].mxu0
      %v1880 = vadd.f32 0.0, %v1879
      %v1881 = vpop.f32.mrb[0].mxu0
      %1882 = vmatprep.mubr.bf16.mxu0 0
      %1883 = vmatmul.mubr.bf16.gmra.mrb[0].mxu0 %v1809
      %v1884 = vpop.f32.mrb[0].mxu0
      %v1885 = vadd.f32 0.0, %v1884
      %v1886 = vpop.f32.mrb[0].mxu0
      %v1887 = vpop.f32.mrb[0].mxu0
      %v1888 = vadd.f32 0.0, %v1887
      %v1889 = vpop.f32.mrb[0].mxu0
      %1890 = vmatprep.mubr.bf16.mxu0 0
      %1891 = vmatmul.mubr.bf16.gmra.mrb[0].mxu0 %v1812
      %v1892 = vpop.f32.mrb[0].mxu0
      %v1893 = vadd.f32 0.0, %v1892
      %v1894 = vpop.f32.mrb[0].mxu0
      %v1895 = vpop.f32.mrb[0].mxu0
      %v1896 = vadd.f32 0.0, %v1895
      %v1897 = vpop.f32.mrb[0].mxu0
      %1898 = vmatprep.mubr.bf16.mxu0 0
      %1899 = vmatmul.mubr.bf16.gmra.mrb[0].mxu0 %v1815
      %v1900 = vpop.f32.mrb[0].mxu0
      %v1901 = vadd.f32 0.0, %v1900
      %v1902 = vpop.f32.mrb[0].mxu0
      %v1903 = vpop.f32.mrb[0].mxu0
      %v1904 = vadd.f32 0.0, %v1903
      %v1905 = vpop.f32.mrb[0].mxu0
      %1906 = vmatprep.mubr.bf16.mxu0 0
      %1907 = vmatmul.mubr.bf16.gmra.mrb[0].mxu0 %v1818
      %v1908 = vpop.f32.mrb[0].mxu0
      %v1909 = vadd.f32 0.0, %v1908
      %v1910 = vpop.f32.mrb[0].mxu0
      %v1911 = vpop.f32.mrb[0].mxu0
      %v1912 = vadd.f32 0.0, %v1911
      %v1913 = vpop.f32.mrb[0].mxu0
      %1914 = vmatprep.mubr.bf16.mxu0 0
      %1915 = vmatmul.mubr.bf16.gmra.mrb[0].mxu0 %v1821
      %v1916 = vpop.f32.mrb[0].mxu0
      %v1917 = vadd.f32 0.0, %v1916
      %v1918 = vpop.f32.mrb[0].mxu0
      %v1919 = vpop.f32.mrb[0].mxu0
      %v1920 = vadd.f32 0.0, %v1919
      %v1921 = vpop.f32.mrb[0].mxu0
      %1922 = vdwg.mxu0
      %v1923 = vadd.f32 %v1661, %v1861
      %v1924 = vadd.f32 %v1662, %v1864
      %v1925 = vadd.f32 %v1663, %v1869
      %v1926 = vadd.f32 %v1664, %v1872
      %v1927 = vadd.f32 %v1665, %v1877
      %v1928 = vadd.f32 %v1666, %v1880
      %v1929 = vadd.f32 %v1667, %v1885
      %v1930 = vadd.f32 %v1668, %v1888
      %v1931 = vadd.f32 %v1669, %v1893
      %v1932 = vadd.f32 %v1670, %v1896
      %v1933 = vadd.f32 %v1671, %v1901
      %v1934 = vadd.f32 %v1672, %v1904
      %v1935 = vadd.f32 %v1673, %v1909
      %v1936 = vadd.f32 %v1674, %v1912
      %v1937 = vadd.f32 %v1675, %v1917
      %v1938 = vadd.f32 %v1676, %v1920
      %s1939 = sadd.s32 %s224, 6
      %s1940 = smul.u32 %s1939, 3
      %s1941 = smul.addr %s1940, 4
      %s1942 = scalar_lea.vmem %s211, %s1941
      %v1943 = vld [vmem:[%s1942] sm:$0xf]
      %v1944 = vld [vmem:[%s1942 + $0x4] sm:$0xf]
      %v1945 = vld [vmem:[%s1942 + $0xc] sm:$0xf]
      %v1946 = vld [vmem:[%s1942 + $0x10] sm:$0xf]
      %v1947 = vld [vmem:[%s1942 + $0x18] sm:$0xf]
      %v1948 = vld [vmem:[%s1942 + $0x1c] sm:$0xf]
      %v1949 = vld [vmem:[%s1942 + $0x24] sm:$0xf]
      %v1950 = vld [vmem:[%s1942 + $0x28] sm:$0xf]
      %v1951 = vld [vmem:[%s1942 + $0x30] sm:$0xf]
      %v1952 = vld [vmem:[%s1942 + $0x34] sm:$0xf]
      %v1953 = vld [vmem:[%s1942 + $0x3c] sm:$0xf]
      %v1954 = vld [vmem:[%s1942 + $0x40] sm:$0xf]
      %v1955 = vld [vmem:[%s1942 + $0x48] sm:$0xf]
      %v1956 = vld [vmem:[%s1942 + $0x4c] sm:$0xf]
      %v1957 = vld [vmem:[%s1942 + $0x54] sm:$0xf]
      %v1958 = vld [vmem:[%s1942 + $0x58] sm:$0xf]
      %s1959 = scalar_lea.vmem %s1, 24
      %v1960 = vld [vmem:[%s1959] sm:$0xf]
      %v1977 = vunpack.c.l.b16 %v1943
      %v1978 = vunpack.c.l.b16 %v1944
      %v1979 = vunpack.c.l.b16 %v1945
      %v1980 = vunpack.c.l.b16 %v1946
      %v1981 = vunpack.c.l.b16 %v1947
      %v1982 = vunpack.c.l.b16 %v1948
      %v1983 = vunpack.c.l.b16 %v1949
      %v1984 = vunpack.c.l.b16 %v1950
      %v1985 = vunpack.c.l.b16 %v1951
      %v1986 = vunpack.c.l.b16 %v1952
      %v1987 = vunpack.c.l.b16 %v1953
      %v1988 = vunpack.c.l.b16 %v1954
      %v1989 = vunpack.c.l.b16 %v1955
      %v1990 = vunpack.c.l.b16 %v1956
      %v1991 = vunpack.c.l.b16 %v1957
      %v1992 = vunpack.c.l.b16 %v1958
      %v1993 = vpack.c.b16 %v1978, %v1977
      %v1994 = vpack.c.b16 %v1980, %v1979
      %v1995 = vpack.c.b16 %v1982, %v1981
      %v1996 = vpack.c.b16 %v1984, %v1983
      %v1997 = vpack.c.b16 %v1986, %v1985
      %v1998 = vpack.c.b16 %v1988, %v1987
      %v1999 = vpack.c.b16 %v1990, %v1989
      %v2000 = vpack.c.b16 %v1992, %v1991
      %v2002 = vsel %vm514, %v1993, 0
      %v2005 = vsel %vm514, %v1994, 0
      %v2008 = vsel %vm514, %v1995, 0
      %v2011 = vsel %vm514, %v1996, 0
      %v2014 = vsel %vm514, %v1997, 0
      %v2017 = vsel %vm514, %v1998, 0
      %v2020 = vsel %vm514, %v1999, 0
      %v2023 = vsel %vm514, %v2000, 0
      %v2026 = vsel %vm539, %v1960, 0
      %2028 = vmatprep.subr.bf16.mxu0 0
      %2029 = vmatpush1.bf16.msra.mxu0 %v2026
      %2030 = vmatprep.subr.bf16.mxu0 0
      %2031 = vmatpush1.bf16.msra.mxu0 0
      %2032 = vmatprep.subr.bf16.mxu0 0
      %2033 = vmatpush1.bf16.msra.mxu0 0
      %2034 = vmatprep.subr.bf16.mxu0 0
      %2035 = vmatpush1.bf16.msra.mxu0 0
      %2036 = vmatprep.subr.bf16.mxu0 0
      %2037 = vmatpush1.bf16.msra.mxu0 0
      %2038 = vmatprep.subr.bf16.mxu0 0
      %2039 = vmatpush1.bf16.msra.mxu0 0
      %2040 = vmatprep.subr.bf16.mxu0 0
      %2041 = vmatpush1.bf16.msra.mxu0 0
      %2042 = vmatprep.subr.bf16.mxu0 0
      %2043 = vmatpush1.bf16.msra.mxu0 0
      %2044 = vmatprep.subr.bf16.mxu0 0
      %2045 = vmatpush1.bf16.msra.mxu0 0
      %2046 = vmatprep.subr.bf16.mxu0 0
      %2047 = vmatpush1.bf16.msra.mxu0 0
      %2048 = vmatprep.subr.bf16.mxu0 0
      %2049 = vmatpush1.bf16.msra.mxu0 0
      %2050 = vmatprep.subr.bf16.mxu0 0
      %2051 = vmatpush1.bf16.msra.mxu0 0
      %2052 = vmatprep.subr.bf16.mxu0 0
      %2053 = vmatpush1.bf16.msra.mxu0 0
      %2054 = vmatprep.subr.bf16.mxu0 0
      %2055 = vmatpush1.bf16.msra.mxu0 0
      %2056 = vmatprep.subr.bf16.mxu0 0
      %2057 = vmatpush1.bf16.msra.mxu0 0
      %2058 = vmatprep.subr.bf16.mxu0 0
      %2059 = vmatpush1.bf16.msra.mxu0 0
      %2060 = vmatprep.mubr.bf16.mxu0 0
      %2061 = vmatmul.mubr.bf16.gmra.mrb[0].mxu0 %v2002
      %v2062 = vpop.f32.mrb[0].mxu0
      %v2063 = vadd.f32 0.0, %v2062
      %v2064 = vpop.f32.mrb[0].mxu0
      %v2065 = vpop.f32.mrb[0].mxu0
      %v2066 = vadd.f32 0.0, %v2065
      %v2067 = vpop.f32.mrb[0].mxu0
      %2068 = vmatprep.mubr.bf16.mxu0 0
      %2069 = vmatmul.mubr.bf16.gmra.mrb[0].mxu0 %v2005
      %v2070 = vpop.f32.mrb[0].mxu0
      %v2071 = vadd.f32 0.0, %v2070
      %v2072 = vpop.f32.mrb[0].mxu0
      %v2073 = vpop.f32.mrb[0].mxu0
      %v2074 = vadd.f32 0.0, %v2073
      %v2075 = vpop.f32.mrb[0].mxu0
      %2076 = vmatprep.mubr.bf16.mxu0 0
      %2077 = vmatmul.mubr.bf16.gmra.mrb[0].mxu0 %v2008
      %v2078 = vpop.f32.mrb[0].mxu0
      %v2079 = vadd.f32 0.0, %v2078
      %v2080 = vpop.f32.mrb[0].mxu0
      %v2081 = vpop.f32.mrb[0].mxu0
      %v2082 = vadd.f32 0.0, %v2081
      %v2083 = vpop.f32.mrb[0].mxu0
      %2084 = vmatprep.mubr.bf16.mxu0 0
      %2085 = vmatmul.mubr.bf16.gmra.mrb[0].mxu0 %v2011
      %v2086 = vpop.f32.mrb[0].mxu0
      %v2087 = vadd.f32 0.0, %v2086
      %v2088 = vpop.f32.mrb[0].mxu0
      %v2089 = vpop.f32.mrb[0].mxu0
      %v2090 = vadd.f32 0.0, %v2089
      %v2091 = vpop.f32.mrb[0].mxu0
      %2092 = vmatprep.mubr.bf16.mxu0 0
      %2093 = vmatmul.mubr.bf16.gmra.mrb[0].mxu0 %v2014
      %v2094 = vpop.f32.mrb[0].mxu0
      %v2095 = vadd.f32 0.0, %v2094
      %v2096 = vpop.f32.mrb[0].mxu0
      %v2097 = vpop.f32.mrb[0].mxu0
      %v2098 = vadd.f32 0.0, %v2097
      %v2099 = vpop.f32.mrb[0].mxu0
      %2100 = vmatprep.mubr.bf16.mxu0 0
      %2101 = vmatmul.mubr.bf16.gmra.mrb[0].mxu0 %v2017
      %v2102 = vpop.f32.mrb[0].mxu0
      %v2103 = vadd.f32 0.0, %v2102
      %v2104 = vpop.f32.mrb[0].mxu0
      %v2105 = vpop.f32.mrb[0].mxu0
      %v2106 = vadd.f32 0.0, %v2105
      %v2107 = vpop.f32.mrb[0].mxu0
      %2108 = vmatprep.mubr.bf16.mxu0 0
      %2109 = vmatmul.mubr.bf16.gmra.mrb[0].mxu0 %v2020
      %v2110 = vpop.f32.mrb[0].mxu0
      %v2111 = vadd.f32 0.0, %v2110
      %v2112 = vpop.f32.mrb[0].mxu0
      %v2113 = vpop.f32.mrb[0].mxu0
      %v2114 = vadd.f32 0.0, %v2113
      %v2115 = vpop.f32.mrb[0].mxu0
      %2116 = vmatprep.mubr.bf16.mxu0 0
      %2117 = vmatmul.mubr.bf16.gmra.mrb[0].mxu0 %v2023
      %v2118 = vpop.f32.mrb[0].mxu0
      %v2119 = vadd.f32 0.0, %v2118
      %v2120 = vpop.f32.mrb[0].mxu0
      %v2121 = vpop.f32.mrb[0].mxu0
      %v2122 = vadd.f32 0.0, %v2121
      %v2123 = vpop.f32.mrb[0].mxu0
      %2124 = vdwg.mxu0
      %v2125 = vadd.f32 %v1923, %v2063
      %v2126 = vadd.f32 %v1924, %v2066
      %v2127 = vadd.f32 %v1925, %v2071
      %v2128 = vadd.f32 %v1926, %v2074
      %v2129 = vadd.f32 %v1927, %v2079
      %v2130 = vadd.f32 %v1928, %v2082
      %v2131 = vadd.f32 %v1929, %v2087
      %v2132 = vadd.f32 %v1930, %v2090
      %v2133 = vadd.f32 %v1931, %v2095
      %v2134 = vadd.f32 %v1932, %v2098
      %v2135 = vadd.f32 %v1933, %v2103
      %v2136 = vadd.f32 %v1934, %v2106
      %v2137 = vadd.f32 %v1935, %v2111
      %v2138 = vadd.f32 %v1936, %v2114
      %v2139 = vadd.f32 %v1937, %v2119
      %v2140 = vadd.f32 %v1938, %v2122
      %v2141 = vld [vmem:[%s1942] sm:$0xe]
      %v2142 = vld [vmem:[%s1942 + $0x4] sm:$0xf]
      %v2143 = vld [vmem:[%s1942 + $0x8] sm:$0x3]
      %v2144 = vld [vmem:[%s1942 + $0xc] sm:$0xe]
      %v2145 = vld [vmem:[%s1942 + $0x10] sm:$0xf]
      %v2146 = vld [vmem:[%s1942 + $0x14] sm:$0x3]
      %v2147 = vld [vmem:[%s1942 + $0x18] sm:$0xe]
      %v2148 = vld [vmem:[%s1942 + $0x1c] sm:$0xf]
      %v2149 = vld [vmem:[%s1942 + $0x20] sm:$0x3]
      %v2150 = vld [vmem:[%s1942 + $0x24] sm:$0xe]
      %v2151 = vld [vmem:[%s1942 + $0x28] sm:$0xf]
      %v2152 = vld [vmem:[%s1942 + $0x2c] sm:$0x3]
      %v2153 = vld [vmem:[%s1942 + $0x30] sm:$0xe]
      %v2154 = vld [vmem:[%s1942 + $0x34] sm:$0xf]
      %v2155 = vld [vmem:[%s1942 + $0x38] sm:$0x3]
      %v2156 = vld [vmem:[%s1942 + $0x3c] sm:$0xe]
      %v2157 = vld [vmem:[%s1942 + $0x40] sm:$0xf]
      %v2158 = vld [vmem:[%s1942 + $0x44] sm:$0x3]
      %v2159 = vld [vmem:[%s1942 + $0x48] sm:$0xe]
      %v2160 = vld [vmem:[%s1942 + $0x4c] sm:$0xf]
      %v2161 = vld [vmem:[%s1942 + $0x50] sm:$0x3]
      %v2162 = vld [vmem:[%s1942 + $0x54] sm:$0xe]
      %v2163 = vld [vmem:[%s1942 + $0x58] sm:$0xf]
      %v2164 = vld [vmem:[%s1942 + $0x5c] sm:$0x3]
      %v2166 = vshrl.u32 %v2141, 16
      %v2168 = vrot.slane %v2166, 5
      %v2169 = vshll.u32 %v2141, 16
      %v2171 = vrot.slane %v2169, 6
      %v2172 = vor.u32 %v2168, %v2171
      %v2173 = vrot.slane %v2172, 4
      %v2175 = vshrl.u32 %v2142, 16
      %v2177 = vrot.slane %v2175, 5
      %v2178 = vshll.u32 %v2142, 16
      %v2180 = vrot.slane %v2178, 6
      %v2181 = vor.u32 %v2177, %v2180
      %v2182 = vsel %vm263, %v2173, %v2181
      %v2183 = vrot.slane %v2181, 4
      %v2185 = vshrl.u32 %v2143, 16
      %v2187 = vrot.slane %v2185, 5
      %v2188 = vshll.u32 %v2143, 16
      %v2190 = vrot.slane %v2188, 6
      %v2191 = vor.u32 %v2187, %v2190
      %v2192 = vsel %vm263, %v2183, %v2191
      %v2194 = vshrl.u32 %v2144, 16
      %v2196 = vrot.slane %v2194, 5
      %v2197 = vshll.u32 %v2144, 16
      %v2199 = vrot.slane %v2197, 6
      %v2200 = vor.u32 %v2196, %v2199
      %v2201 = vrot.slane %v2200, 4
      %v2203 = vshrl.u32 %v2145, 16
      %v2205 = vrot.slane %v2203, 5
      %v2206 = vshll.u32 %v2145, 16
      %v2208 = vrot.slane %v2206, 6
      %v2209 = vor.u32 %v2205, %v2208
      %v2210 = vsel %vm263, %v2201, %v2209
      %v2211 = vrot.slane %v2209, 4
      %v2213 = vshrl.u32 %v2146, 16
      %v2215 = vrot.slane %v2213, 5
      %v2216 = vshll.u32 %v2146, 16
      %v2218 = vrot.slane %v2216, 6
      %v2219 = vor.u32 %v2215, %v2218
      %v2220 = vsel %vm263, %v2211, %v2219
      %v2222 = vshrl.u32 %v2147, 16
      %v2224 = vrot.slane %v2222, 5
      %v2225 = vshll.u32 %v2147, 16
      %v2227 = vrot.slane %v2225, 6
      %v2228 = vor.u32 %v2224, %v2227
      %v2229 = vrot.slane %v2228, 4
      %v2231 = vshrl.u32 %v2148, 16
      %v2233 = vrot.slane %v2231, 5
      %v2234 = vshll.u32 %v2148, 16
      %v2236 = vrot.slane %v2234, 6
      %v2237 = vor.u32 %v2233, %v2236
      %v2238 = vsel %vm263, %v2229, %v2237
      %v2239 = vrot.slane %v2237, 4
      %v2241 = vshrl.u32 %v2149, 16
      %v2243 = vrot.slane %v2241, 5
      %v2244 = vshll.u32 %v2149, 16
      %v2246 = vrot.slane %v2244, 6
      %v2247 = vor.u32 %v2243, %v2246
      %v2248 = vsel %vm263, %v2239, %v2247
      %v2250 = vshrl.u32 %v2150, 16
      %v2252 = vrot.slane %v2250, 5
      %v2253 = vshll.u32 %v2150, 16
      %v2255 = vrot.slane %v2253, 6
      %v2256 = vor.u32 %v2252, %v2255
      %v2257 = vrot.slane %v2256, 4
      %v2259 = vshrl.u32 %v2151, 16
      %v2261 = vrot.slane %v2259, 5
      %v2262 = vshll.u32 %v2151, 16
      %v2264 = vrot.slane %v2262, 6
      %v2265 = vor.u32 %v2261, %v2264
      %v2266 = vsel %vm263, %v2257, %v2265
      %v2267 = vrot.slane %v2265, 4
      %v2269 = vshrl.u32 %v2152, 16
      %v2271 = vrot.slane %v2269, 5
      %v2272 = vshll.u32 %v2152, 16
      %v2274 = vrot.slane %v2272, 6
      %v2275 = vor.u32 %v2271, %v2274
      %v2276 = vsel %vm263, %v2267, %v2275
      %v2278 = vshrl.u32 %v2153, 16
      %v2280 = vrot.slane %v2278, 5
      %v2281 = vshll.u32 %v2153, 16
      %v2283 = vrot.slane %v2281, 6
      %v2284 = vor.u32 %v2280, %v2283
      %v2285 = vrot.slane %v2284, 4
      %v2287 = vshrl.u32 %v2154, 16
      %v2289 = vrot.slane %v2287, 5
      %v2290 = vshll.u32 %v2154, 16
      %v2292 = vrot.slane %v2290, 6
      %v2293 = vor.u32 %v2289, %v2292
      %v2294 = vsel %vm263, %v2285, %v2293
      %v2295 = vrot.slane %v2293, 4
      %v2297 = vshrl.u32 %v2155, 16
      %v2299 = vrot.slane %v2297, 5
      %v2300 = vshll.u32 %v2155, 16
      %v2302 = vrot.slane %v2300, 6
      %v2303 = vor.u32 %v2299, %v2302
      %v2304 = vsel %vm263, %v2295, %v2303
      %v2306 = vshrl.u32 %v2156, 16
      %v2308 = vrot.slane %v2306, 5
      %v2309 = vshll.u32 %v2156, 16
      %v2311 = vrot.slane %v2309, 6
      %v2312 = vor.u32 %v2308, %v2311
      %v2313 = vrot.slane %v2312, 4
      %v2315 = vshrl.u32 %v2157, 16
      %v2317 = vrot.slane %v2315, 5
      %v2318 = vshll.u32 %v2157, 16
      %v2320 = vrot.slane %v2318, 6
      %v2321 = vor.u32 %v2317, %v2320
      %v2322 = vsel %vm263, %v2313, %v2321
      %v2323 = vrot.slane %v2321, 4
      %v2325 = vshrl.u32 %v2158, 16
      %v2327 = vrot.slane %v2325, 5
      %v2328 = vshll.u32 %v2158, 16
      %v2330 = vrot.slane %v2328, 6
      %v2331 = vor.u32 %v2327, %v2330
      %v2332 = vsel %vm263, %v2323, %v2331
      %v2334 = vshrl.u32 %v2159, 16
      %v2336 = vrot.slane %v2334, 5
      %v2337 = vshll.u32 %v2159, 16
      %v2339 = vrot.slane %v2337, 6
      %v2340 = vor.u32 %v2336, %v2339
      %v2341 = vrot.slane %v2340, 4
      %v2343 = vshrl.u32 %v2160, 16
      %v2345 = vrot.slane %v2343, 5
      %v2346 = vshll.u32 %v2160, 16
      %v2348 = vrot.slane %v2346, 6
      %v2349 = vor.u32 %v2345, %v2348
      %v2350 = vsel %vm263, %v2341, %v2349
      %v2351 = vrot.slane %v2349, 4
      %v2353 = vshrl.u32 %v2161, 16
      %v2355 = vrot.slane %v2353, 5
      %v2356 = vshll.u32 %v2161, 16
      %v2358 = vrot.slane %v2356, 6
      %v2359 = vor.u32 %v2355, %v2358
      %v2360 = vsel %vm263, %v2351, %v2359
      %v2362 = vshrl.u32 %v2162, 16
      %v2364 = vrot.slane %v2362, 5
      %v2365 = vshll.u32 %v2162, 16
      %v2367 = vrot.slane %v2365, 6
      %v2368 = vor.u32 %v2364, %v2367
      %v2369 = vrot.slane %v2368, 4
      %v2371 = vshrl.u32 %v2163, 16
      %v2373 = vrot.slane %v2371, 5
      %v2374 = vshll.u32 %v2163, 16
      %v2376 = vrot.slane %v2374, 6
      %v2377 = vor.u32 %v2373, %v2376
      %v2378 = vsel %vm263, %v2369, %v2377
      %v2379 = vrot.slane %v2377, 4
      %v2381 = vshrl.u32 %v2164, 16
      %v2383 = vrot.slane %v2381, 5
      %v2384 = vshll.u32 %v2164, 16
      %v2386 = vrot.slane %v2384, 6
      %v2387 = vor.u32 %v2383, %v2386
      %v2388 = vsel %vm263, %v2379, %v2387
      %s2389 = scalar_lea.vmem %s1, 28
      %v2390 = vld [vmem:[%s2389] sm:$0xf]
      %v2391 = vunpack.c.l.b16 %v2182
      %v2392 = vunpack.c.l.b16 %v2192
      %v2393 = vunpack.c.l.b16 %v2210
      %v2394 = vunpack.c.l.b16 %v2220
      %v2395 = vunpack.c.l.b16 %v2238
      %v2396 = vunpack.c.l.b16 %v2248
      %v2397 = vunpack.c.l.b16 %v2266
      %v2398 = vunpack.c.l.b16 %v2276
      %v2399 = vunpack.c.l.b16 %v2294
      %v2400 = vunpack.c.l.b16 %v2304
      %v2401 = vunpack.c.l.b16 %v2322
      %v2402 = vunpack.c.l.b16 %v2332
      %v2403 = vunpack.c.l.b16 %v2350
      %v2404 = vunpack.c.l.b16 %v2360
      %v2405 = vunpack.c.l.b16 %v2378
      %v2406 = vunpack.c.l.b16 %v2388
      %v2407 = vpack.c.b16 %v2392, %v2391
      %v2408 = vpack.c.b16 %v2394, %v2393
      %v2409 = vpack.c.b16 %v2396, %v2395
      %v2410 = vpack.c.b16 %v2398, %v2397
      %v2411 = vpack.c.b16 %v2400, %v2399
      %v2412 = vpack.c.b16 %v2402, %v2401
      %v2413 = vpack.c.b16 %v2404, %v2403
      %v2414 = vpack.c.b16 %v2406, %v2405
      %v2416 = vsel %vm514, %v2407, 0
      %v2419 = vsel %vm514, %v2408, 0
      %v2422 = vsel %vm514, %v2409, 0
      %v2425 = vsel %vm514, %v2410, 0
      %v2428 = vsel %vm514, %v2411, 0
      %v2431 = vsel %vm514, %v2412, 0
      %v2434 = vsel %vm514, %v2413, 0
      %v2437 = vsel %vm514, %v2414, 0
      %v2440 = vsel %vm539, %v2390, 0
      %2442 = vmatprep.subr.bf16.mxu0 0
      %2443 = vmatpush1.bf16.msra.mxu0 %v2440
      %2444 = vmatprep.subr.bf16.mxu0 0
      %2445 = vmatpush1.bf16.msra.mxu0 0
      %2446 = vmatprep.subr.bf16.mxu0 0
      %2447 = vmatpush1.bf16.msra.mxu0 0
      %2448 = vmatprep.subr.bf16.mxu0 0
      %2449 = vmatpush1.bf16.msra.mxu0 0
      %2450 = vmatprep.subr.bf16.mxu0 0
      %2451 = vmatpush1.bf16.msra.mxu0 0
      %2452 = vmatprep.subr.bf16.mxu0 0
      %2453 = vmatpush1.bf16.msra.mxu0 0
      %2454 = vmatprep.subr.bf16.mxu0 0
      %2455 = vmatpush1.bf16.msra.mxu0 0
      %2456 = vmatprep.subr.bf16.mxu0 0
      %2457 = vmatpush1.bf16.msra.mxu0 0
      %2458 = vmatprep.subr.bf16.mxu0 0
      %2459 = vmatpush1.bf16.msra.mxu0 0
      %2460 = vmatprep.subr.bf16.mxu0 0
      %2461 = vmatpush1.bf16.msra.mxu0 0
      %2462 = vmatprep.subr.bf16.mxu0 0
      %2463 = vmatpush1.bf16.msra.mxu0 0
      %2464 = vmatprep.subr.bf16.mxu0 0
      %2465 = vmatpush1.bf16.msra.mxu0 0
      %2466 = vmatprep.subr.bf16.mxu0 0
      %2467 = vmatpush1.bf16.msra.mxu0 0
      %2468 = vmatprep.subr.bf16.mxu0 0
      %2469 = vmatpush1.bf16.msra.mxu0 0
      %2470 = vmatprep.subr.bf16.mxu0 0
      %2471 = vmatpush1.bf16.msra.mxu0 0
      %2472 = vmatprep.subr.bf16.mxu0 0
      %2473 = vmatpush1.bf16.msra.mxu0 0
      %2474 = vmatprep.mubr.bf16.mxu0 0
      %2475 = vmatmul.mubr.bf16.gmra.mrb[0].mxu0 %v2416
      %v2476 = vpop.f32.mrb[0].mxu0
      %v2477 = vadd.f32 0.0, %v2476
      %v2478 = vpop.f32.mrb[0].mxu0
      %v2479 = vpop.f32.mrb[0].mxu0
      %v2480 = vadd.f32 0.0, %v2479
      %v2481 = vpop.f32.mrb[0].mxu0
      %2482 = vmatprep.mubr.bf16.mxu0 0
      %2483 = vmatmul.mubr.bf16.gmra.mrb[0].mxu0 %v2419
      %v2484 = vpop.f32.mrb[0].mxu0
      %v2485 = vadd.f32 0.0, %v2484
      %v2486 = vpop.f32.mrb[0].mxu0
      %v2487 = vpop.f32.mrb[0].mxu0
      %v2488 = vadd.f32 0.0, %v2487
      %v2489 = vpop.f32.mrb[0].mxu0
      %2490 = vmatprep.mubr.bf16.mxu0 0
      %2491 = vmatmul.mubr.bf16.gmra.mrb[0].mxu0 %v2422
      %v2492 = vpop.f32.mrb[0].mxu0
      %v2493 = vadd.f32 0.0, %v2492
      %v2494 = vpop.f32.mrb[0].mxu0
      %v2495 = vpop.f32.mrb[0].mxu0
      %v2496 = vadd.f32 0.0, %v2495
      %v2497 = vpop.f32.mrb[0].mxu0
      %2498 = vmatprep.mubr.bf16.mxu0 0
      %2499 = vmatmul.mubr.bf16.gmra.mrb[0].mxu0 %v2425
      %v2500 = vpop.f32.mrb[0].mxu0
      %v2501 = vadd.f32 0.0, %v2500
      %v2502 = vpop.f32.mrb[0].mxu0
      %v2503 = vpop.f32.mrb[0].mxu0
      %v2504 = vadd.f32 0.0, %v2503
      %v2505 = vpop.f32.mrb[0].mxu0
      %2506 = vmatprep.mubr.bf16.mxu0 0
      %2507 = vmatmul.mubr.bf16.gmra.mrb[0].mxu0 %v2428
      %v2508 = vpop.f32.mrb[0].mxu0
      %v2509 = vadd.f32 0.0, %v2508
      %v2510 = vpop.f32.mrb[0].mxu0
      %v2511 = vpop.f32.mrb[0].mxu0
      %v2512 = vadd.f32 0.0, %v2511
      %v2513 = vpop.f32.mrb[0].mxu0
      %2514 = vmatprep.mubr.bf16.mxu0 0
      %2515 = vmatmul.mubr.bf16.gmra.mrb[0].mxu0 %v2431
      %v2516 = vpop.f32.mrb[0].mxu0
      %v2517 = vadd.f32 0.0, %v2516
      %v2518 = vpop.f32.mrb[0].mxu0
      %v2519 = vpop.f32.mrb[0].mxu0
      %v2520 = vadd.f32 0.0, %v2519
      %v2521 = vpop.f32.mrb[0].mxu0
      %2522 = vmatprep.mubr.bf16.mxu0 0
      %2523 = vmatmul.mubr.bf16.gmra.mrb[0].mxu0 %v2434
      %v2524 = vpop.f32.mrb[0].mxu0
      %v2525 = vadd.f32 0.0, %v2524
      %v2526 = vpop.f32.mrb[0].mxu0
      %v2527 = vpop.f32.mrb[0].mxu0
      %v2528 = vadd.f32 0.0, %v2527
      %v2529 = vpop.f32.mrb[0].mxu0
      %2530 = vmatprep.mubr.bf16.mxu0 0
      %2531 = vmatmul.mubr.bf16.gmra.mrb[0].mxu0 %v2437
      %v2532 = vpop.f32.mrb[0].mxu0
      %v2533 = vadd.f32 0.0, %v2532
      %v2534 = vpop.f32.mrb[0].mxu0
      %v2535 = vpop.f32.mrb[0].mxu0
      %v2536 = vadd.f32 0.0, %v2535
      %v2537 = vpop.f32.mrb[0].mxu0
      %2538 = vdwg.mxu0
      %v2539 = vadd.f32 %v2125, %v2477
      %v2540 = vadd.f32 %v2126, %v2480
      %v2541 = vadd.f32 %v2127, %v2485
      %v2542 = vadd.f32 %v2128, %v2488
      %v2543 = vadd.f32 %v2129, %v2493
      %v2544 = vadd.f32 %v2130, %v2496
      %v2545 = vadd.f32 %v2131, %v2501
      %v2546 = vadd.f32 %v2132, %v2504
      %v2547 = vadd.f32 %v2133, %v2509
      %v2548 = vadd.f32 %v2134, %v2512
      %v2549 = vadd.f32 %v2135, %v2517
      %v2550 = vadd.f32 %v2136, %v2520
      %v2551 = vadd.f32 %v2137, %v2525
      %v2552 = vadd.f32 %v2138, %v2528
      %v2553 = vadd.f32 %v2139, %v2533
      %v2554 = vadd.f32 %v2140, %v2536
      %v2555 = vld [vmem:[%s1942] sm:$0x8]
      %v2556 = vld [vmem:[%s1942 + $0x8] sm:$0x7]
      %v2557 = vld [vmem:[%s1942 + $0xc] sm:$0x8]
      %v2558 = vld [vmem:[%s1942 + $0x14] sm:$0x7]
      %v2559 = vld [vmem:[%s1942 + $0x18] sm:$0x8]
      %v2560 = vld [vmem:[%s1942 + $0x20] sm:$0x7]
      %v2561 = vld [vmem:[%s1942 + $0x24] sm:$0x8]
      %v2562 = vld [vmem:[%s1942 + $0x2c] sm:$0x7]
      %v2563 = vld [vmem:[%s1942 + $0x30] sm:$0x8]
      %v2564 = vld [vmem:[%s1942 + $0x38] sm:$0x7]
      %v2565 = vld [vmem:[%s1942 + $0x3c] sm:$0x8]
      %v2566 = vld [vmem:[%s1942 + $0x44] sm:$0x7]
      %v2567 = vld [vmem:[%s1942 + $0x48] sm:$0x8]
      %v2568 = vld [vmem:[%s1942 + $0x50] sm:$0x7]
      %v2569 = vld [vmem:[%s1942 + $0x54] sm:$0x8]
      %v2570 = vld [vmem:[%s1942 + $0x5c] sm:$0x7]
      %v2595 = vrot.slane %v2555, 7
      %v2596 = vrot.slane %v2595, 4
      %v2597 = vrot.slane %v2142, 7
      %v2598 = vsel %vm838, %v2596, %v2597
      %v2599 = vrot.slane %v2597, 4
      %v2600 = vrot.slane %v2556, 7
      %v2601 = vsel %vm838, %v2599, %v2600
      %v2602 = vrot.slane %v2557, 7
      %v2603 = vrot.slane %v2602, 4
      %v2604 = vrot.slane %v2145, 7
      %v2605 = vsel %vm838, %v2603, %v2604
      %v2606 = vrot.slane %v2604, 4
      %v2607 = vrot.slane %v2558, 7
      %v2608 = vsel %vm838, %v2606, %v2607
      %v2609 = vrot.slane %v2559, 7
      %v2610 = vrot.slane %v2609, 4
      %v2611 = vrot.slane %v2148, 7
      %v2612 = vsel %vm838, %v2610, %v2611
      %v2613 = vrot.slane %v2611, 4
      %v2614 = vrot.slane %v2560, 7
      %v2615 = vsel %vm838, %v2613, %v2614
      %v2616 = vrot.slane %v2561, 7
      %v2617 = vrot.slane %v2616, 4
      %v2618 = vrot.slane %v2151, 7
      %v2619 = vsel %vm838, %v2617, %v2618
      %v2620 = vrot.slane %v2618, 4
      %v2621 = vrot.slane %v2562, 7
      %v2622 = vsel %vm838, %v2620, %v2621
      %v2623 = vrot.slane %v2563, 7
      %v2624 = vrot.slane %v2623, 4
      %v2625 = vrot.slane %v2154, 7
      %v2626 = vsel %vm838, %v2624, %v2625
      %v2627 = vrot.slane %v2625, 4
      %v2628 = vrot.slane %v2564, 7
      %v2629 = vsel %vm838, %v2627, %v2628
      %v2630 = vrot.slane %v2565, 7
      %v2631 = vrot.slane %v2630, 4
      %v2632 = vrot.slane %v2157, 7
      %v2633 = vsel %vm838, %v2631, %v2632
      %v2634 = vrot.slane %v2632, 4
      %v2635 = vrot.slane %v2566, 7
      %v2636 = vsel %vm838, %v2634, %v2635
      %v2637 = vrot.slane %v2567, 7
      %v2638 = vrot.slane %v2637, 4
      %v2639 = vrot.slane %v2160, 7
      %v2640 = vsel %vm838, %v2638, %v2639
      %v2641 = vrot.slane %v2639, 4
      %v2642 = vrot.slane %v2568, 7
      %v2643 = vsel %vm838, %v2641, %v2642
      %v2644 = vrot.slane %v2569, 7
      %v2645 = vrot.slane %v2644, 4
      %v2646 = vrot.slane %v2163, 7
      %v2647 = vsel %vm838, %v2645, %v2646
      %v2648 = vrot.slane %v2646, 4
      %v2649 = vrot.slane %v2570, 7
      %v2650 = vsel %vm838, %v2648, %v2649
      %s2651 = scalar_lea.vmem %s1, 32
      %v2652 = vld [vmem:[%s2651] sm:$0xf]
      %v2653 = vunpack.c.l.b16 %v2598
      %v2654 = vunpack.c.l.b16 %v2601
      %v2655 = vunpack.c.l.b16 %v2605
      %v2656 = vunpack.c.l.b16 %v2608
      %v2657 = vunpack.c.l.b16 %v2612
      %v2658 = vunpack.c.l.b16 %v2615
      %v2659 = vunpack.c.l.b16 %v2619
      %v2660 = vunpack.c.l.b16 %v2622
      %v2661 = vunpack.c.l.b16 %v2626
      %v2662 = vunpack.c.l.b16 %v2629
      %v2663 = vunpack.c.l.b16 %v2633
      %v2664 = vunpack.c.l.b16 %v2636
      %v2665 = vunpack.c.l.b16 %v2640
      %v2666 = vunpack.c.l.b16 %v2643
      %v2667 = vunpack.c.l.b16 %v2647
      %v2668 = vunpack.c.l.b16 %v2650
      %v2669 = vpack.c.b16 %v2654, %v2653
      %v2670 = vpack.c.b16 %v2656, %v2655
      %v2671 = vpack.c.b16 %v2658, %v2657
      %v2672 = vpack.c.b16 %v2660, %v2659
      %v2673 = vpack.c.b16 %v2662, %v2661
      %v2674 = vpack.c.b16 %v2664, %v2663
      %v2675 = vpack.c.b16 %v2666, %v2665
      %v2676 = vpack.c.b16 %v2668, %v2667
      %v2678 = vsel %vm514, %v2669, 0
      %v2681 = vsel %vm514, %v2670, 0
      %v2684 = vsel %vm514, %v2671, 0
      %v2687 = vsel %vm514, %v2672, 0
      %v2690 = vsel %vm514, %v2673, 0
      %v2693 = vsel %vm514, %v2674, 0
      %v2696 = vsel %vm514, %v2675, 0
      %v2699 = vsel %vm514, %v2676, 0
      %v2702 = vsel %vm539, %v2652, 0
      %2704 = vmatprep.subr.bf16.mxu0 0
      %2705 = vmatpush1.bf16.msra.mxu0 %v2702
      %2706 = vmatprep.subr.bf16.mxu0 0
      %2707 = vmatpush1.bf16.msra.mxu0 0
      %2708 = vmatprep.subr.bf16.mxu0 0
      %2709 = vmatpush1.bf16.msra.mxu0 0
      %2710 = vmatprep.subr.bf16.mxu0 0
      %2711 = vmatpush1.bf16.msra.mxu0 0
      %2712 = vmatprep.subr.bf16.mxu0 0
      %2713 = vmatpush1.bf16.msra.mxu0 0
      %2714 = vmatprep.subr.bf16.mxu0 0
      %2715 = vmatpush1.bf16.msra.mxu0 0
      %2716 = vmatprep.subr.bf16.mxu0 0
      %2717 = vmatpush1.bf16.msra.mxu0 0
      %2718 = vmatprep.subr.bf16.mxu0 0
      %2719 = vmatpush1.bf16.msra.mxu0 0
      %2720 = vmatprep.subr.bf16.mxu0 0
      %2721 = vmatpush1.bf16.msra.mxu0 0
      %2722 = vmatprep.subr.bf16.mxu0 0
      %2723 = vmatpush1.bf16.msra.mxu0 0
      %2724 = vmatprep.subr.bf16.mxu0 0
      %2725 = vmatpush1.bf16.msra.mxu0 0
      %2726 = vmatprep.subr.bf16.mxu0 0
      %2727 = vmatpush1.bf16.msra.mxu0 0
      %2728 = vmatprep.subr.bf16.mxu0 0
      %2729 = vmatpush1.bf16.msra.mxu0 0
      %2730 = vmatprep.subr.bf16.mxu0 0
      %2731 = vmatpush1.bf16.msra.mxu0 0
      %2732 = vmatprep.subr.bf16.mxu0 0
      %2733 = vmatpush1.bf16.msra.mxu0 0
      %2734 = vmatprep.subr.bf16.mxu0 0
      %2735 = vmatpush1.bf16.msra.mxu0 0
      %2736 = vmatprep.mubr.bf16.mxu0 0
      %2737 = vmatmul.mubr.bf16.gmra.mrb[0].mxu0 %v2678
      %v2738 = vpop.f32.mrb[0].mxu0
      %v2739 = vadd.f32 0.0, %v2738
      %v2740 = vpop.f32.mrb[0].mxu0
      %v2741 = vpop.f32.mrb[0].mxu0
      %v2742 = vadd.f32 0.0, %v2741
      %v2743 = vpop.f32.mrb[0].mxu0
      %2744 = vmatprep.mubr.bf16.mxu0 0
      %2745 = vmatmul.mubr.bf16.gmra.mrb[0].mxu0 %v2681
      %v2746 = vpop.f32.mrb[0].mxu0
      %v2747 = vadd.f32 0.0, %v2746
      %v2748 = vpop.f32.mrb[0].mxu0
      %v2749 = vpop.f32.mrb[0].mxu0
      %v2750 = vadd.f32 0.0, %v2749
      %v2751 = vpop.f32.mrb[0].mxu0
      %2752 = vmatprep.mubr.bf16.mxu0 0
      %2753 = vmatmul.mubr.bf16.gmra.mrb[0].mxu0 %v2684
      %v2754 = vpop.f32.mrb[0].mxu0
      %v2755 = vadd.f32 0.0, %v2754
      %v2756 = vpop.f32.mrb[0].mxu0
      %v2757 = vpop.f32.mrb[0].mxu0
      %v2758 = vadd.f32 0.0, %v2757
      %v2759 = vpop.f32.mrb[0].mxu0
      %2760 = vmatprep.mubr.bf16.mxu0 0
      %2761 = vmatmul.mubr.bf16.gmra.mrb[0].mxu0 %v2687
      %v2762 = vpop.f32.mrb[0].mxu0
      %v2763 = vadd.f32 0.0, %v2762
      %v2764 = vpop.f32.mrb[0].mxu0
      %v2765 = vpop.f32.mrb[0].mxu0
      %v2766 = vadd.f32 0.0, %v2765
      %v2767 = vpop.f32.mrb[0].mxu0
      %2768 = vmatprep.mubr.bf16.mxu0 0
      %2769 = vmatmul.mubr.bf16.gmra.mrb[0].mxu0 %v2690
      %v2770 = vpop.f32.mrb[0].mxu0
      %v2771 = vadd.f32 0.0, %v2770
      %v2772 = vpop.f32.mrb[0].mxu0
      %v2773 = vpop.f32.mrb[0].mxu0
      %v2774 = vadd.f32 0.0, %v2773
      %v2775 = vpop.f32.mrb[0].mxu0
      %2776 = vmatprep.mubr.bf16.mxu0 0
      %2777 = vmatmul.mubr.bf16.gmra.mrb[0].mxu0 %v2693
      %v2778 = vpop.f32.mrb[0].mxu0
      %v2779 = vadd.f32 0.0, %v2778
      %v2780 = vpop.f32.mrb[0].mxu0
      %v2781 = vpop.f32.mrb[0].mxu0
      %v2782 = vadd.f32 0.0, %v2781
      %v2783 = vpop.f32.mrb[0].mxu0
      %2784 = vmatprep.mubr.bf16.mxu0 0
      %2785 = vmatmul.mubr.bf16.gmra.mrb[0].mxu0 %v2696
      %v2786 = vpop.f32.mrb[0].mxu0
      %v2787 = vadd.f32 0.0, %v2786
      %v2788 = vpop.f32.mrb[0].mxu0
      %v2789 = vpop.f32.mrb[0].mxu0
      %v2790 = vadd.f32 0.0, %v2789
      %v2791 = vpop.f32.mrb[0].mxu0
      %2792 = vmatprep.mubr.bf16.mxu0 0
      %2793 = vmatmul.mubr.bf16.gmra.mrb[0].mxu0 %v2699
      %v2794 = vpop.f32.mrb[0].mxu0
      %v2795 = vadd.f32 0.0, %v2794
      %v2796 = vpop.f32.mrb[0].mxu0
      %v2797 = vpop.f32.mrb[0].mxu0
      %v2798 = vadd.f32 0.0, %v2797
      %v2799 = vpop.f32.mrb[0].mxu0
      %2800 = vdwg.mxu0
      %v2801 = vadd.f32 %v2539, %v2739
      %v2802 = vadd.f32 %v2540, %v2742
      %v2803 = vadd.f32 %v2541, %v2747
      %v2804 = vadd.f32 %v2542, %v2750
      %v2805 = vadd.f32 %v2543, %v2755
      %v2806 = vadd.f32 %v2544, %v2758
      %v2807 = vadd.f32 %v2545, %v2763
      %v2808 = vadd.f32 %v2546, %v2766
      %v2809 = vadd.f32 %v2547, %v2771
      %v2810 = vadd.f32 %v2548, %v2774
      %v2811 = vadd.f32 %v2549, %v2779
      %v2812 = vadd.f32 %v2550, %v2782
      %v2813 = vadd.f32 %v2551, %v2787
      %v2814 = vadd.f32 %v2552, %v2790
      %v2815 = vadd.f32 %v2553, %v2795
      %v2816 = vadd.f32 %v2554, %v2798
      %v2817 = vld [vmem:[%s2] sm:$0x1]
      %v2819 = vlaneseq
      %v2820 = vshrl.u32 %v2819, 7
      %v2821 = vsub.s32 0, %v2820
      %v2822 = vrot.slane %v2817, %v2821
      %v2824 = vmul.f32 %v2801, %v2822
      %v2825 = vmul.f32 %v2802, %v2822
      %v2826 = vmul.f32 %v2803, %v2822
      %v2827 = vmul.f32 %v2804, %v2822
      %v2828 = vmul.f32 %v2805, %v2822
      %v2829 = vmul.f32 %v2806, %v2822
      %v2830 = vmul.f32 %v2807, %v2822
      %v2831 = vmul.f32 %v2808, %v2822
      %v2832 = vmul.f32 %v2809, %v2822
      %v2833 = vmul.f32 %v2810, %v2822
      %v2834 = vmul.f32 %v2811, %v2822
      %v2835 = vmul.f32 %v2812, %v2822
      %v2836 = vmul.f32 %v2813, %v2822
      %v2837 = vmul.f32 %v2814, %v2822
      %v2838 = vmul.f32 %v2815, %v2822
      %v2839 = vmul.f32 %v2816, %v2822
      %v2840 = vld [vmem:[%s3] sm:$0x1]
      %v2842 = vlaneseq
      %v2843 = vshrl.u32 %v2842, 7
      %v2844 = vsub.s32 0, %v2843
      %v2845 = vrot.slane %v2840, %v2844
      %v2847 = vadd.f32 %v2824, %v2845
      %v2848 = vadd.f32 %v2825, %v2845
      %v2849 = vadd.f32 %v2826, %v2845
      %v2850 = vadd.f32 %v2827, %v2845
      %v2851 = vadd.f32 %v2828, %v2845
      %v2852 = vadd.f32 %v2829, %v2845
      %v2853 = vadd.f32 %v2830, %v2845
      %v2854 = vadd.f32 %v2831, %v2845
      %v2855 = vadd.f32 %v2832, %v2845
      %v2856 = vadd.f32 %v2833, %v2845
      %v2857 = vadd.f32 %v2834, %v2845
      %v2858 = vadd.f32 %v2835, %v2845
      %v2859 = vadd.f32 %v2836, %v2845
      %v2860 = vadd.f32 %v2837, %v2845
      %v2861 = vadd.f32 %v2838, %v2845
      %v2862 = vadd.f32 %v2839, %v2845
      %v2863 = vmax.f32 %v2847, 0.0
      %v2864 = vmax.f32 %v2848, 0.0
      %v2865 = vmax.f32 %v2849, 0.0
      %v2866 = vmax.f32 %v2850, 0.0
      %v2867 = vmax.f32 %v2851, 0.0
      %v2868 = vmax.f32 %v2852, 0.0
      %v2869 = vmax.f32 %v2853, 0.0
      %v2870 = vmax.f32 %v2854, 0.0
      %v2871 = vmax.f32 %v2855, 0.0
      %v2872 = vmax.f32 %v2856, 0.0
      %v2873 = vmax.f32 %v2857, 0.0
      %v2874 = vmax.f32 %v2858, 0.0
      %v2875 = vmax.f32 %v2859, 0.0
      %v2876 = vmax.f32 %v2860, 0.0
      %v2877 = vmax.f32 %v2861, 0.0
      %v2878 = vmax.f32 %v2862, 0.0
      %v2879 = vpack.c.bf16 %v2864, %v2863
      %v2880 = vpack.c.bf16 %v2866, %v2865
      %v2881 = vpack.c.bf16 %v2868, %v2867
      %v2882 = vpack.c.bf16 %v2870, %v2869
      %v2883 = vpack.c.bf16 %v2872, %v2871
      %v2884 = vpack.c.bf16 %v2874, %v2873
      %v2885 = vpack.c.bf16 %v2876, %v2875
      %v2886 = vpack.c.bf16 %v2878, %v2877
      %v2895 = vunpack.c.l.b16 %v2879
      %v2896 = vunpack.c.h.b16 %v2879
      %v2897 = vunpack.c.l.b16 %v2880
      %v2898 = vunpack.c.h.b16 %v2880
      %v2899 = vunpack.c.l.b16 %v2881
      %v2900 = vunpack.c.h.b16 %v2881
      %v2901 = vunpack.c.l.b16 %v2882
      %v2902 = vunpack.c.h.b16 %v2882
      %v2903 = vunpack.c.l.b16 %v2883
      %v2904 = vunpack.c.h.b16 %v2883
      %v2905 = vunpack.c.l.b16 %v2884
      %v2906 = vunpack.c.h.b16 %v2884
      %v2907 = vunpack.c.l.b16 %v2885
      %v2908 = vunpack.c.h.b16 %v2885
      %v2909 = vunpack.c.l.b16 %v2886
      %v2910 = vunpack.c.h.b16 %v2886
      %v2911 = vpack.c.b16 %v2895, %v2895
      %v2912 = vpack.c.b16 %v2896, %v2896
      %v2913 = vpack.c.b16 %v2897, %v2897
      %v2914 = vpack.c.b16 %v2898, %v2898
      %v2915 = vpack.c.b16 %v2899, %v2899
      %v2916 = vpack.c.b16 %v2900, %v2900
      %v2917 = vpack.c.b16 %v2901, %v2901
      %v2918 = vpack.c.b16 %v2902, %v2902
      %v2919 = vpack.c.b16 %v2903, %v2903
      %v2920 = vpack.c.b16 %v2904, %v2904
      %v2921 = vpack.c.b16 %v2905, %v2905
      %v2922 = vpack.c.b16 %v2906, %v2906
      %v2923 = vpack.c.b16 %v2907, %v2907
      %v2924 = vpack.c.b16 %v2908, %v2908
      %v2925 = vpack.c.b16 %v2909, %v2909
      %v2926 = vpack.c.b16 %v2910, %v2910
      %vm2943 = vcmask 60416
      %2944 = vst.msk [vmem:[%s221] sm:$0xf] %vm2943, %v2911
      %2945 = vst.msk [vmem:[%s221 + $0x4] sm:$0xf] %vm2943, %v2912
      %2946 = vst.msk [vmem:[%s221 + $0x8] sm:$0xf] %vm2943, %v2913
      %2947 = vst.msk [vmem:[%s221 + $0xc] sm:$0xf] %vm2943, %v2914
      %2948 = vst.msk [vmem:[%s221 + $0x10] sm:$0xf] %vm2943, %v2915
      %2949 = vst.msk [vmem:[%s221 + $0x14] sm:$0xf] %vm2943, %v2916
      %2950 = vst.msk [vmem:[%s221 + $0x18] sm:$0xf] %vm2943, %v2917
      %2951 = vst.msk [vmem:[%s221 + $0x1c] sm:$0xf] %vm2943, %v2918
      %2952 = vst.msk [vmem:[%s221 + $0x20] sm:$0xf] %vm2943, %v2919
      %2953 = vst.msk [vmem:[%s221 + $0x24] sm:$0xf] %vm2943, %v2920
      %2954 = vst.msk [vmem:[%s221 + $0x28] sm:$0xf] %vm2943, %v2921
      %2955 = vst.msk [vmem:[%s221 + $0x2c] sm:$0xf] %vm2943, %v2922
      %2956 = vst.msk [vmem:[%s221 + $0x30] sm:$0xf] %vm2943, %v2923
      %2957 = vst.msk [vmem:[%s221 + $0x34] sm:$0xf] %vm2943, %v2924
      %2958 = vst.msk [vmem:[%s221 + $0x38] sm:$0xf] %vm2943, %v2925
      %2959 = vst.msk [vmem:[%s221 + $0x3c] sm:$0xf] %vm2943, %v2926
      %s2960 = smul.u32 8, %s20
      %p2961 = scmp.lt.s32.totalorder %s19, 1
      %s2962 = scalar_select %p2961, %s19, 1
      %p2963 = scmp.lt.s32.totalorder %s2960, 15
      %s2964 = scalar_select %p2963, %s2960, 15
      %s2965 = smul.addr %s2964, 2
      %s2966 = smul.addr %s2962, 32
      %s2967 = sadd.s32 %s2965, %s2966
      %s2968 = smul.addr %s2967, 4
      %s2969 = scalar_lea.vmem %s4, %s2968
      // Predicated region
      $region37: #{easpp_forward.10} parent=35 // pred_check
        %p2970 = pneg %p136
      $region38: #{easpp_forward.10} parent=35 // pred_check_branch
        %2972 = sbr.rel (%p2970) target = $region40
      $region39: #{easpp_forward.10} parent=35 // pred_region
        %s2973 = smul.u32 8, %s20
      $region40: #{easpp_forward.10} parent=35 // pred_fallthru
        _
    $region36: #{easpp_forward.10} parent=5 // pred_fallthru
      _
    %p2974 = scmp.le.s32.totalorder 2, %s10
    // Predicated region
    $region41: #{easpp_forward.10} parent=5 // pred_check
      %p2975 = pneg %p2974
    $region42: #{easpp_forward.10} parent=5 // pred_check_branch
      %2977 = sbr.rel (%p2975) target = $region44
    $region43: #{easpp_forward.10} parent=5 // pred_region
      %s2978 = ssub.s32 %s10, 2
      // Predicated region
      $region45: #{easpp_forward.10} parent=43 // pred_check
        %p2979 = pneg %p142
      $region46: #{easpp_forward.10} parent=43 // pred_check_branch
        %2981 = sbr.rel (%p2979) target = $region48
      $region47: #{easpp_forward.10} parent=43 // pred_region
        %s2982 = smul.u32 8, %s22
        %p2983 = scmp.lt.s32.totalorder %s21, 1
        %s2984 = scalar_select %p2983, %s21, 1
        %p2985 = scmp.lt.s32.totalorder %s2982, 15
        %s2986 = scalar_select %p2985, %s2982, 15
        %s2987 = smul.addr %s2986, 2
        %s2988 = smul.addr %s2984, 32
        %s2989 = sadd.s32 %s2987, %s2988
        %s2990 = smul.addr %s2989, 4
        %s2991 = scalar_lea.vmem %s4, %s2990
      $region48: #{easpp_forward.10} parent=43 // pred_fallthru
        _
    $region44: #{easpp_forward.10} parent=5 // pred_fallthru
      _
  $region6: #{easpp_forward.10} parent=0 // loop_footer
    %s14 = sadd.s32 1, %s10
  $region7: #{easpp_forward.10} parent=0 // loop_footer_branch
    %9 = sbr.rel target = $region3
  $region8: #{easpp_forward.10} parent=0 // loop_exit
    _

// kernel: easpp_forward.16
$region0: #{easpp_forward.16}
  #allocation0 [shape = 'u32[]', space=smem, size = 0x4, offset = 0x4, fixed_abs, tag = 'smem constant byte address 0x4 - core index']
  #allocation1 [shape = 'u32[144,128]{1,0:T(1,128)}', space=vmem, size = 0x12000, scoped, tag = 'internal scratch']
  %s0 = inlined_call_operand.vmem [shape: bf16[512,24], index: 0, kind: input, shape index: {}]
  %s1 = inlined_call_operand.vmem [shape: bf16[24,96], index: 1, kind: input, shape index: {}]
  %s2 = inlined_call_operand.vmem [shape: f32[1,96], index: 2, kind: input, shape index: {}]
  %s3 = inlined_call_operand.vmem [shape: f32[1,96], index: 3, kind: input, shape index: {}]
  %s4 = inlined_call_operand.vmem [shape: f32[1,96], index: 4, kind: input, shape index: {}]
  %s5 = inlined_call_operand.vmem [shape: bf16[512,96], index: 5, kind: output, shape index: {}]
  %s6 = sld [smem:[#allocation0]]
  $region53: #{easpp_forward.16} parent=0
    _
  %s8 = ssub.s32 1, %s6
  %s9 = scalar_select 0, %s8, %s6
  loop: start=0, step=1, limit=4
  $region2: #{easpp_forward.16} parent=0 // loop_pre_header
    _
  $region3: #{easpp_forward.16} parent=0 // loop_header
    %s11 = sphi 0, %s15
    %p12 = scmp.ge.s32.totalorder %s11, 4
    %s21 = sphi 0, %s23
    %s24 = sphi 0, %s21
    %s25 = sphi 0, %s24
    %s41 = sphi 0, %s25
    %s45 = sphi 0, %s45
    %s47 = sphi 0, %s45
    %s48 = sphi 0, %s47
    %s62 = sphi 0, %s48
    %s66 = sphi 0, %s66
    %s68 = sphi 0, %s66
    %s69 = sphi 0, %s68
    %s83 = sphi 0, %s69
    %s87 = sphi 0, %s87
    %s89 = sphi 0, %s87
    %s90 = sphi 0, %s89
    %s104 = sphi 0, %s90
    %s108 = sphi 0, %s108
    %s110 = sphi 0, %s108
    %s111 = sphi 0, %s110
    %s125 = sphi 0, %s111
    %s131 = sphi 0, %s133
    %s134 = sphi 0, %s131
    %s135 = sphi 0, %s134
    %s151 = sphi 0, %s135
  $region4: #{easpp_forward.16} parent=0 // loop_header_branch
    %14 = sbr.rel (%p12) target = $region8
  $region5: #{easpp_forward.16} parent=0 // loop_body
    %s16 = ssub.s32 %s11, 1
    %s17 = ssub.s32 %s11, 2
    %s18 = sadd.s32 %s11, 1
    %s19 = ssub.s32 %s11, %s18
    %p20 = scmp.eq.s32.totalorder %s19, 0
    %s22 = sadd.s32 %s21, 1
    %s23 = scalar_select %p20, %s21, %s22
    %p26 = pneg %p20
    %p27 = scmp.eq.s32.totalorder %s11, 1
    %p28 = por %p26, %p27
    %p29 = scmp.ne.s32.totalorder %s21, %s24
    %p30 = scmp.eq.s32.totalorder %s11, 0
    %p31 = por %p29, %p30
    %p32 = scmp.ne.s32.totalorder %s21, %s24
    %p33 = scmp.eq.s32.totalorder %s16, 1
    %p34 = por %p32, %p33
    %p35 = scmp.ne.s32.totalorder %s24, %s25
    %p36 = scmp.eq.s32.totalorder %s16, 0
    %p37 = por %p35, %p36
    %p38 = scmp.ne.s32.totalorder %s24, %s25
    %p39 = scmp.eq.s32.totalorder %s17, 1
    %p40 = por %p38, %p39
    %p42 = scmp.ne.s32.totalorder %s25, %s41
    %p43 = scmp.eq.s32.totalorder %s17, 0
    %p44 = por %p42, %p43
    %s46 = sadd.s32 %s45, 1
    %p49 = scmp.eq.s32.totalorder %s11, 1
    %p50 = scmp.ne.s32.totalorder %s45, %s47
    %p51 = scmp.eq.s32.totalorder %s11, 0
    %p52 = por %p50, %p51
    %p53 = scmp.ne.s32.totalorder %s45, %s47
    %p54 = scmp.eq.s32.totalorder %s16, 1
    %p55 = por %p53, %p54
    %p56 = scmp.ne.s32.totalorder %s47, %s48
    %p57 = scmp.eq.s32.totalorder %s16, 0
    %p58 = por %p56, %p57
    %p59 = scmp.ne.s32.totalorder %s47, %s48
    %p60 = scmp.eq.s32.totalorder %s17, 1
    %p61 = por %p59, %p60
    %p63 = scmp.ne.s32.totalorder %s48, %s62
    %p64 = scmp.eq.s32.totalorder %s17, 0
    %p65 = por %p63, %p64
    %s67 = sadd.s32 %s66, 1
    %p70 = scmp.eq.s32.totalorder %s11, 1
    %p71 = scmp.ne.s32.totalorder %s66, %s68
    %p72 = scmp.eq.s32.totalorder %s11, 0
    %p73 = por %p71, %p72
    %p74 = scmp.ne.s32.totalorder %s66, %s68
    %p75 = scmp.eq.s32.totalorder %s16, 1
    %p76 = por %p74, %p75
    %p77 = scmp.ne.s32.totalorder %s68, %s69
    %p78 = scmp.eq.s32.totalorder %s16, 0
    %p79 = por %p77, %p78
    %p80 = scmp.ne.s32.totalorder %s68, %s69
    %p81 = scmp.eq.s32.totalorder %s17, 1
    %p82 = por %p80, %p81
    %p84 = scmp.ne.s32.totalorder %s69, %s83
    %p85 = scmp.eq.s32.totalorder %s17, 0
    %p86 = por %p84, %p85
    %s88 = sadd.s32 %s87, 1
    %p91 = scmp.eq.s32.totalorder %s11, 1
    %p92 = scmp.ne.s32.totalorder %s87, %s89
    %p93 = scmp.eq.s32.totalorder %s11, 0
    %p94 = por %p92, %p93
    %p95 = scmp.ne.s32.totalorder %s87, %s89
    %p96 = scmp.eq.s32.totalorder %s16, 1
    %p97 = por %p95, %p96
    %p98 = scmp.ne.s32.totalorder %s89, %s90
    %p99 = scmp.eq.s32.totalorder %s16, 0
    %p100 = por %p98, %p99
    %p101 = scmp.ne.s32.totalorder %s89, %s90
    %p102 = scmp.eq.s32.totalorder %s17, 1
    %p103 = por %p101, %p102
    %p105 = scmp.ne.s32.totalorder %s90, %s104
    %p106 = scmp.eq.s32.totalorder %s17, 0
    %p107 = por %p105, %p106
    %s109 = sadd.s32 %s108, 1
    %p112 = scmp.eq.s32.totalorder %s11, 1
    %p113 = scmp.ne.s32.totalorder %s108, %s110
    %p114 = scmp.eq.s32.totalorder %s11, 0
    %p115 = por %p113, %p114
    %p116 = scmp.ne.s32.totalorder %s108, %s110
    %p117 = scmp.eq.s32.totalorder %s16, 1
    %p118 = por %p116, %p117
    %p119 = scmp.ne.s32.totalorder %s110, %s111
    %p120 = scmp.eq.s32.totalorder %s16, 0
    %p121 = por %p119, %p120
    %p122 = scmp.ne.s32.totalorder %s110, %s111
    %p123 = scmp.eq.s32.totalorder %s17, 1
    %p124 = por %p122, %p123
    %p126 = scmp.ne.s32.totalorder %s111, %s125
    %p127 = scmp.eq.s32.totalorder %s17, 0
    %p128 = por %p126, %p127
    %s129 = ssub.s32 %s11, %s18
    %p130 = scmp.eq.s32.totalorder %s129, 0
    %s132 = sadd.s32 %s131, 1
    %s133 = scalar_select %p130, %s131, %s132
    %p136 = pneg %p130
    %p137 = scmp.eq.s32.totalorder %s11, 1
    %p138 = por %p136, %p137
    %p139 = scmp.ne.s32.totalorder %s131, %s134
    %p140 = scmp.eq.s32.totalorder %s11, 0
    %p141 = por %p139, %p140
    %p142 = scmp.ne.s32.totalorder %s131, %s134
    %p143 = scmp.eq.s32.totalorder %s16, 1
    %p144 = por %p142, %p143
    %p145 = scmp.ne.s32.totalorder %s134, %s135
    %p146 = scmp.eq.s32.totalorder %s16, 0
    %p147 = por %p145, %p146
    %p148 = scmp.ne.s32.totalorder %s134, %s135
    %p149 = scmp.eq.s32.totalorder %s17, 1
    %p150 = por %p148, %p149
    %p152 = scmp.ne.s32.totalorder %s135, %s151
    %p153 = scmp.eq.s32.totalorder %s17, 0
    %p154 = por %p152, %p153
    %p155 = scmp.le.s32.totalorder 1, %s11
    %p156 = scmp.lt.s32.totalorder %s11, 3
    %p157 = pnand %p155, %p156
    %p158 = pneg %p157
    // Predicated region
    $region9: #{easpp_forward.16} parent=5 // pred_check
      _
    $region10: #{easpp_forward.16} parent=5 // pred_check_branch
      %160 = sbr.rel (%p157) target = $region12
    $region11: #{easpp_forward.16} parent=5 // pred_region
      %s161 = ssub.s32 %s11, 1
      // Predicated region
      $region13: #{easpp_forward.16} parent=11 // pred_check
        %p162 = pneg %p58
      $region14: #{easpp_forward.16} parent=11 // pred_check_branch
        %164 = sbr.rel (%p162) target = $region16
      $region15: #{easpp_forward.16} parent=11 // pred_region
        _
      $region16: #{easpp_forward.16} parent=11 // pred_fallthru
        _
      // Predicated region
      $region17: #{easpp_forward.16} parent=11 // pred_check
        %p165 = pneg %p79
      $region18: #{easpp_forward.16} parent=11 // pred_check_branch
        %167 = sbr.rel (%p165) target = $region20
      $region19: #{easpp_forward.16} parent=11 // pred_region
        _
      $region20: #{easpp_forward.16} parent=11 // pred_fallthru
        _
      // Predicated region
      $region21: #{easpp_forward.16} parent=11 // pred_check
        %p168 = pneg %p100
      $region22: #{easpp_forward.16} parent=11 // pred_check_branch
        %170 = sbr.rel (%p168) target = $region24
      $region23: #{easpp_forward.16} parent=11 // pred_region
        _
      $region24: #{easpp_forward.16} parent=11 // pred_fallthru
        _
      // Predicated region
      $region25: #{easpp_forward.16} parent=11 // pred_check
        %p171 = pneg %p121
      $region26: #{easpp_forward.16} parent=11 // pred_check_branch
        %173 = sbr.rel (%p171) target = $region28
      $region27: #{easpp_forward.16} parent=11 // pred_region
        _
      $region28: #{easpp_forward.16} parent=11 // pred_fallthru
        _
    $region12: #{easpp_forward.16} parent=5 // pred_fallthru
      _
    %p174 = scmp.lt.s32.totalorder %s11, 2
    // Predicated region
    $region29: #{easpp_forward.16} parent=5 // pred_check
      %p175 = pneg %p174
    $region30: #{easpp_forward.16} parent=5 // pred_check_branch
      %177 = sbr.rel (%p175) target = $region32
    $region31: #{easpp_forward.16} parent=5 // pred_region
      // Predicated region
      $region33: #{easpp_forward.16} parent=31 // pred_check
        %p178 = pneg %p31
      $region34: #{easpp_forward.16} parent=31 // pred_check_branch
        %180 = sbr.rel (%p178) target = $region36
      $region35: #{easpp_forward.16} parent=31 // pred_region
        %s181 = smul.u32 32, %s11
        %p182 = scmp.lt.s32.totalorder %s181, 63
        %s183 = scalar_select %p182, %s181, 63
        %s184 = smul.addr %s183, 4
        %s185 = scalar_lea.vmem %s0, %s184
        %s186 = smul.u32 32, %s11
      $region36: #{easpp_forward.16} parent=31 // pred_fallthru
        _
    $region32: #{easpp_forward.16} parent=5 // pred_fallthru
      _
    %p187 = scmp.le.s32.totalorder 1, %s11
    %p188 = scmp.lt.s32.totalorder %s11, 3
    %p189 = pnand %p187, %p188
    %p190 = pneg %p189
    // Predicated region
    $region37: #{easpp_forward.16} parent=5 // pred_check
      _
    $region38: #{easpp_forward.16} parent=5 // pred_check_branch
      %192 = sbr.rel (%p189) target = $region40
    $region39: #{easpp_forward.16} parent=5 // pred_region
      %s193 = ssub.s32 %s11, 1
      %s194 = smul.u32 32, %s16
      %p195 = scmp.lt.s32.totalorder %s194, 63
      %s196 = scalar_select %p195, %s194, 63
      %s197 = smul.addr %s196, 4
      %s198 = scalar_lea.vmem %s0, %s197
      %p199 = pneg %p37
      %p200 = pneg %p34
      %p201 = pneg %p58
      %p202 = pneg %p55
      %p203 = pneg %p79
      %p204 = pneg %p76
      %p205 = pneg %p100
      %p206 = pneg %p97
      %p207 = pneg %p121
      %p208 = pneg %p118
      %p209 = pneg %p147
      %p210 = pneg %p144
      %s211 = smul.u32 32, %s16
      %p212 = scmp.lt.s32.totalorder %s211, 63
      %s213 = scalar_select %p212, %s211, 63
      %s214 = smul.addr %s213, 4
      %s215 = scalar_lea.vmem %s5, %s214
      %s216 = smul.u32 32, %s16
      %p217 = scmp.lt.s32.totalorder %s216, 63
      %s218 = scalar_select %p217, %s216, 63
      %s219 = smul.addr %s218, 4
      %s220 = scalar_lea.vmem %s0, %s219
      %s221 = smul.u32 32, %s16
      %s222 = smul.u32 32, %s16
      %p223 = scmp.lt.s32.totalorder %s222, 63
      %s224 = scalar_select %p223, %s222, 63
      %s225 = smul.addr %s224, 4
      %s226 = scalar_lea.vmem %s5, %s225
      %s227 = smul.u32 32, %s16
      %v229 = vld [vmem:[%s220] sm:$0xf]
      %v230 = vld [vmem:[%s220 + $0x4] sm:$0xf]
      %v231 = vld [vmem:[%s220 + $0x8] sm:$0xf]
      %v232 = vld [vmem:[%s220 + $0xc] sm:$0xf]
      %v233 = vld [vmem:[%s220 + $0x10] sm:$0xf]
      %v234 = vld [vmem:[%s220 + $0x14] sm:$0xf]
      %v235 = vld [vmem:[%s220 + $0x18] sm:$0xf]
      %v236 = vld [vmem:[%s220 + $0x1c] sm:$0xf]
      %v237 = vld [vmem:[%s220 + $0x20] sm:$0xf]
      %v238 = vld [vmem:[%s220 + $0x24] sm:$0xf]
      %v239 = vld [vmem:[%s220 + $0x28] sm:$0xf]
      %v240 = vld [vmem:[%s220 + $0x2c] sm:$0xf]
      %v241 = vld [vmem:[%s220 + $0x30] sm:$0xf]
      %v242 = vld [vmem:[%s220 + $0x34] sm:$0xf]
      %v243 = vld [vmem:[%s220 + $0x38] sm:$0xf]
      %v244 = vld [vmem:[%s220 + $0x3c] sm:$0xf]
      %v245 = vld [vmem:[%s220 + $0x40] sm:$0xf]
      %v246 = vld [vmem:[%s220 + $0x44] sm:$0xf]
      %v247 = vld [vmem:[%s220 + $0x48] sm:$0xf]
      %v248 = vld [vmem:[%s220 + $0x4c] sm:$0xf]
      %v249 = vld [vmem:[%s220 + $0x50] sm:$0xf]
      %v250 = vld [vmem:[%s220 + $0x54] sm:$0xf]
      %v251 = vld [vmem:[%s220 + $0x58] sm:$0xf]
      %v252 = vld [vmem:[%s220 + $0x5c] sm:$0xf]
      %v253 = vld [vmem:[%s220 + $0x60] sm:$0xf]
      %v254 = vld [vmem:[%s220 + $0x64] sm:$0xf]
      %v255 = vld [vmem:[%s220 + $0x68] sm:$0xf]
      %v256 = vld [vmem:[%s220 + $0x6c] sm:$0xf]
      %v257 = vld [vmem:[%s220 + $0x70] sm:$0xf]
      %v258 = vld [vmem:[%s220 + $0x74] sm:$0xf]
      %v259 = vld [vmem:[%s220 + $0x78] sm:$0xf]
      %v260 = vld [vmem:[%s220 + $0x7c] sm:$0xf]
      %v261 = vld [vmem:[%s1] sm:$0xf]
      %v262 = vld [vmem:[%s1 + $0x4] sm:$0xf]
      %v263 = vld [vmem:[%s1 + $0x8] sm:$0xf]
      %v296 = vunpack.c.l.b16 %v229
      %v297 = vunpack.c.l.b16 %v230
      %v298 = vunpack.c.l.b16 %v231
      %v299 = vunpack.c.l.b16 %v232
      %v300 = vunpack.c.l.b16 %v233
      %v301 = vunpack.c.l.b16 %v234
      %v302 = vunpack.c.l.b16 %v235
      %v303 = vunpack.c.l.b16 %v236
      %v304 = vunpack.c.l.b16 %v237
      %v305 = vunpack.c.l.b16 %v238
      %v306 = vunpack.c.l.b16 %v239
      %v307 = vunpack.c.l.b16 %v240
      %v308 = vunpack.c.l.b16 %v241
      %v309 = vunpack.c.l.b16 %v242
      %v310 = vunpack.c.l.b16 %v243
      %v311 = vunpack.c.l.b16 %v244
      %v312 = vunpack.c.l.b16 %v245
      %v313 = vunpack.c.l.b16 %v246
      %v314 = vunpack.c.l.b16 %v247
      %v315 = vunpack.c.l.b16 %v248
      %v316 = vunpack.c.l.b16 %v249
      %v317 = vunpack.c.l.b16 %v250
      %v318 = vunpack.c.l.b16 %v251
      %v319 = vunpack.c.l.b16 %v252
      %v320 = vunpack.c.l.b16 %v253
      %v321 = vunpack.c.l.b16 %v254
      %v322 = vunpack.c.l.b16 %v255
      %v323 = vunpack.c.l.b16 %v256
      %v324 = vunpack.c.l.b16 %v257
      %v325 = vunpack.c.l.b16 %v258
      %v326 = vunpack.c.l.b16 %v259
      %v327 = vunpack.c.l.b16 %v260
      %v328 = vpack.c.b16 %v297, %v296
      %v329 = vpack.c.b16 %v299, %v298
      %v330 = vpack.c.b16 %v301, %v300
      %v331 = vpack.c.b16 %v303, %v302
      %v332 = vpack.c.b16 %v305, %v304
      %v333 = vpack.c.b16 %v307, %v306
      %v334 = vpack.c.b16 %v309, %v308
      %v335 = vpack.c.b16 %v311, %v310
      %v336 = vpack.c.b16 %v313, %v312
      %v337 = vpack.c.b16 %v315, %v314
      %v338 = vpack.c.b16 %v317, %v316
      %v339 = vpack.c.b16 %v319, %v318
      %v340 = vpack.c.b16 %v321, %v320
      %v341 = vpack.c.b16 %v323, %v322
      %v342 = vpack.c.b16 %v325, %v324
      %v343 = vpack.c.b16 %v327, %v326
      %v347 = vunpack.c.l.b16 %v261
      %v348 = vunpack.c.l.b16 %v262
      %v349 = vunpack.c.l.b16 %v263
      %v350 = vpack.c.b16 %v348, %v347
      %v351 = vpack.c.b16 %v349, %v349
      %vm353 = vcmask 195584
      %v355 = vsel %vm353, %v328, 0
      %v358 = vsel %vm353, %v329, 0
      %v361 = vsel %vm353, %v330, 0
      %v364 = vsel %vm353, %v331, 0
      %v367 = vsel %vm353, %v332, 0
      %v370 = vsel %vm353, %v333, 0
      %v373 = vsel %vm353, %v334, 0
      %v376 = vsel %vm353, %v335, 0
      %v379 = vsel %vm353, %v336, 0
      %v382 = vsel %vm353, %v337, 0
      %v385 = vsel %vm353, %v338, 0
      %v388 = vsel %vm353, %v339, 0
      %v391 = vsel %vm353, %v340, 0
      %v394 = vsel %vm353, %v341, 0
      %v397 = vsel %vm353, %v342, 0
      %v400 = vsel %vm353, %v343, 0
      %vm402 = vcmask 1043456
      %v404 = vsel %vm402, %v351, 0
      %406 = vmatprep.subr.bf16.mxu0 0
      %407 = vmatpush1.bf16.msra.mxu0 %v350
      %408 = vmatprep.subr.bf16.mxu0 0
      %409 = vmatpush1.bf16.msra.mxu0 %v404
      %410 = vmatprep.subr.bf16.mxu0 0
      %411 = vmatpush1.bf16.msra.mxu0 0
      %412 = vmatprep.subr.bf16.mxu0 0
      %413 = vmatpush1.bf16.msra.mxu0 0
      %414 = vmatprep.subr.bf16.mxu0 0
      %415 = vmatpush1.bf16.msra.mxu0 0
      %416 = vmatprep.subr.bf16.mxu0 0
      %417 = vmatpush1.bf16.msra.mxu0 0
      %418 = vmatprep.subr.bf16.mxu0 0
      %419 = vmatpush1.bf16.msra.mxu0 0
      %420 = vmatprep.subr.bf16.mxu0 0
      %421 = vmatpush1.bf16.msra.mxu0 0
      %422 = vmatprep.subr.bf16.mxu0 0
      %423 = vmatpush1.bf16.msra.mxu0 0
      %424 = vmatprep.subr.bf16.mxu0 0
      %425 = vmatpush1.bf16.msra.mxu0 0
      %426 = vmatprep.subr.bf16.mxu0 0
      %427 = vmatpush1.bf16.msra.mxu0 0
      %428 = vmatprep.subr.bf16.mxu0 0
      %429 = vmatpush1.bf16.msra.mxu0 0
      %430 = vmatprep.subr.bf16.mxu0 0
      %431 = vmatpush1.bf16.msra.mxu0 0
      %432 = vmatprep.subr.bf16.mxu0 0
      %433 = vmatpush1.bf16.msra.mxu0 0
      %434 = vmatprep.subr.bf16.mxu0 0
      %435 = vmatpush1.bf16.msra.mxu0 0
      %436 = vmatprep.subr.bf16.mxu0 0
      %437 = vmatpush1.bf16.msra.mxu0 0
      %438 = vmatprep.mubr.bf16.mxu0 0
      %439 = vmatmul.mubr.bf16.gmra.mrb[0].mxu0 %v355
      %v440 = vpop.f32.mrb[0].mxu0
      %v441 = vadd.f32 0.0, %v440
      %v442 = vpop.f32.mrb[0].mxu0
      %v443 = vpop.f32.mrb[0].mxu0
      %v444 = vadd.f32 0.0, %v443
      %v445 = vpop.f32.mrb[0].mxu0
      %446 = vmatprep.mubr.bf16.mxu0 0
      %447 = vmatmul.mubr.bf16.gmra.mrb[0].mxu0 %v358
      %v448 = vpop.f32.mrb[0].mxu0
      %v449 = vadd.f32 0.0, %v448
      %v450 = vpop.f32.mrb[0].mxu0
      %v451 = vpop.f32.mrb[0].mxu0
      %v452 = vadd.f32 0.0, %v451
      %v453 = vpop.f32.mrb[0].mxu0
      %454 = vmatprep.mubr.bf16.mxu0 0
      %455 = vmatmul.mubr.bf16.gmra.mrb[0].mxu0 %v361
      %v456 = vpop.f32.mrb[0].mxu0
      %v457 = vadd.f32 0.0, %v456
      %v458 = vpop.f32.mrb[0].mxu0
      %v459 = vpop.f32.mrb[0].mxu0
      %v460 = vadd.f32 0.0, %v459
      %v461 = vpop.f32.mrb[0].mxu0
      %462 = vmatprep.mubr.bf16.mxu0 0
      %463 = vmatmul.mubr.bf16.gmra.mrb[0].mxu0 %v364
      %v464 = vpop.f32.mrb[0].mxu0
      %v465 = vadd.f32 0.0, %v464
      %v466 = vpop.f32.mrb[0].mxu0
      %v467 = vpop.f32.mrb[0].mxu0
      %v468 = vadd.f32 0.0, %v467
      %v469 = vpop.f32.mrb[0].mxu0
      %470 = vmatprep.mubr.bf16.mxu0 0
      %471 = vmatmul.mubr.bf16.gmra.mrb[0].mxu0 %v367
      %v472 = vpop.f32.mrb[0].mxu0
      %v473 = vadd.f32 0.0, %v472
      %v474 = vpop.f32.mrb[0].mxu0
      %v475 = vpop.f32.mrb[0].mxu0
      %v476 = vadd.f32 0.0, %v475
      %v477 = vpop.f32.mrb[0].mxu0
      %478 = vmatprep.mubr.bf16.mxu0 0
      %479 = vmatmul.mubr.bf16.gmra.mrb[0].mxu0 %v370
      %v480 = vpop.f32.mrb[0].mxu0
      %v481 = vadd.f32 0.0, %v480
      %v482 = vpop.f32.mrb[0].mxu0
      %v483 = vpop.f32.mrb[0].mxu0
      %v484 = vadd.f32 0.0, %v483
      %v485 = vpop.f32.mrb[0].mxu0
      %486 = vmatprep.mubr.bf16.mxu0 0
      %487 = vmatmul.mubr.bf16.gmra.mrb[0].mxu0 %v373
      %v488 = vpop.f32.mrb[0].mxu0
      %v489 = vadd.f32 0.0, %v488
      %v490 = vpop.f32.mrb[0].mxu0
      %v491 = vpop.f32.mrb[0].mxu0
      %v492 = vadd.f32 0.0, %v491
      %v493 = vpop.f32.mrb[0].mxu0
      %494 = vmatprep.mubr.bf16.mxu0 0
      %495 = vmatmul.mubr.bf16.gmra.mrb[0].mxu0 %v376
      %v496 = vpop.f32.mrb[0].mxu0
      %v497 = vadd.f32 0.0, %v496
      %v498 = vpop.f32.mrb[0].mxu0
      %v499 = vpop.f32.mrb[0].mxu0
      %v500 = vadd.f32 0.0, %v499
      %v501 = vpop.f32.mrb[0].mxu0
      %502 = vmatprep.mubr.bf16.mxu0 0
      %503 = vmatmul.mubr.bf16.gmra.mrb[0].mxu0 %v379
      %v504 = vpop.f32.mrb[0].mxu0
      %v505 = vadd.f32 0.0, %v504
      %v506 = vpop.f32.mrb[0].mxu0
      %v507 = vpop.f32.mrb[0].mxu0
      %v508 = vadd.f32 0.0, %v507
      %v509 = vpop.f32.mrb[0].mxu0
      %510 = vmatprep.mubr.bf16.mxu0 0
      %511 = vmatmul.mubr.bf16.gmra.mrb[0].mxu0 %v382
      %v512 = vpop.f32.mrb[0].mxu0
      %v513 = vadd.f32 0.0, %v512
      %v514 = vpop.f32.mrb[0].mxu0
      %v515 = vpop.f32.mrb[0].mxu0
      %v516 = vadd.f32 0.0, %v515
      %v517 = vpop.f32.mrb[0].mxu0
      %518 = vmatprep.mubr.bf16.mxu0 0
      %519 = vmatmul.mubr.bf16.gmra.mrb[0].mxu0 %v385
      %v520 = vpop.f32.mrb[0].mxu0
      %v521 = vadd.f32 0.0, %v520
      %v522 = vpop.f32.mrb[0].mxu0
      %v523 = vpop.f32.mrb[0].mxu0
      %v524 = vadd.f32 0.0, %v523
      %v525 = vpop.f32.mrb[0].mxu0
      %526 = vmatprep.mubr.bf16.mxu0 0
      %527 = vmatmul.mubr.bf16.gmra.mrb[0].mxu0 %v388
      %v528 = vpop.f32.mrb[0].mxu0
      %v529 = vadd.f32 0.0, %v528
      %v530 = vpop.f32.mrb[0].mxu0
      %v531 = vpop.f32.mrb[0].mxu0
      %v532 = vadd.f32 0.0, %v531
      %v533 = vpop.f32.mrb[0].mxu0
      %534 = vmatprep.mubr.bf16.mxu0 0
      %535 = vmatmul.mubr.bf16.gmra.mrb[0].mxu0 %v391
      %v536 = vpop.f32.mrb[0].mxu0
      %v537 = vadd.f32 0.0, %v536
      %v538 = vpop.f32.mrb[0].mxu0
      %v539 = vpop.f32.mrb[0].mxu0
      %v540 = vadd.f32 0.0, %v539
      %v541 = vpop.f32.mrb[0].mxu0
      %542 = vmatprep.mubr.bf16.mxu0 0
      %543 = vmatmul.mubr.bf16.gmra.mrb[0].mxu0 %v394
      %v544 = vpop.f32.mrb[0].mxu0
      %v545 = vadd.f32 0.0, %v544
      %v546 = vpop.f32.mrb[0].mxu0
      %v547 = vpop.f32.mrb[0].mxu0
      %v548 = vadd.f32 0.0, %v547
      %v549 = vpop.f32.mrb[0].mxu0
      %550 = vmatprep.mubr.bf16.mxu0 0
      %551 = vmatmul.mubr.bf16.gmra.mrb[0].mxu0 %v397
      %v552 = vpop.f32.mrb[0].mxu0
      %v553 = vadd.f32 0.0, %v552
      %v554 = vpop.f32.mrb[0].mxu0
      %v555 = vpop.f32.mrb[0].mxu0
      %v556 = vadd.f32 0.0, %v555
      %v557 = vpop.f32.mrb[0].mxu0
      %558 = vmatprep.mubr.bf16.mxu0 0
      %559 = vmatmul.mubr.bf16.gmra.mrb[0].mxu0 %v400
      %v560 = vpop.f32.mrb[0].mxu0
      %v561 = vadd.f32 0.0, %v560
      %v562 = vpop.f32.mrb[0].mxu0
      %v563 = vpop.f32.mrb[0].mxu0
      %v564 = vadd.f32 0.0, %v563
      %v565 = vpop.f32.mrb[0].mxu0
      %566 = vdwg.mxu0
      %v567 = vld [vmem:[%s2] sm:$0x1]
      %v569 = vlaneseq
      %v570 = vshrl.u32 %v569, 7
      %v571 = vsub.s32 0, %v570
      %v572 = vrot.slane %v567, %v571
      %v574 = vmul.f32 %v441, %v572
      %v575 = vmul.f32 %v444, %v572
      %v576 = vmul.f32 %v449, %v572
      %v577 = vmul.f32 %v452, %v572
      %v578 = vmul.f32 %v457, %v572
      %v579 = vmul.f32 %v460, %v572
      %v580 = vmul.f32 %v465, %v572
      %v581 = vmul.f32 %v468, %v572
      %v582 = vmul.f32 %v473, %v572
      %v583 = vmul.f32 %v476, %v572
      %v584 = vmul.f32 %v481, %v572
      %v585 = vmul.f32 %v484, %v572
      %v586 = vmul.f32 %v489, %v572
      %v587 = vmul.f32 %v492, %v572
      %v588 = vmul.f32 %v497, %v572
      %v589 = vmul.f32 %v500, %v572
      %v590 = vmul.f32 %v505, %v572
      %v591 = vmul.f32 %v508, %v572
      %v592 = vmul.f32 %v513, %v572
      %v593 = vmul.f32 %v516, %v572
      %v594 = vmul.f32 %v521, %v572
      %v595 = vmul.f32 %v524, %v572
      %v596 = vmul.f32 %v529, %v572
      %v597 = vmul.f32 %v532, %v572
      %v598 = vmul.f32 %v537, %v572
      %v599 = vmul.f32 %v540, %v572
      %v600 = vmul.f32 %v545, %v572
      %v601 = vmul.f32 %v548, %v572
      %v602 = vmul.f32 %v553, %v572
      %v603 = vmul.f32 %v556, %v572
      %v604 = vmul.f32 %v561, %v572
      %v605 = vmul.f32 %v564, %v572
      %v606 = vld [vmem:[%s3] sm:$0x1]
      %v608 = vlaneseq
      %v609 = vshrl.u32 %v608, 7
      %v610 = vsub.s32 0, %v609
      %v611 = vrot.slane %v606, %v610
      %v613 = vadd.f32 %v574, %v611
      %v614 = vadd.f32 %v575, %v611
      %v615 = vadd.f32 %v576, %v611
      %v616 = vadd.f32 %v577, %v611
      %v617 = vadd.f32 %v578, %v611
      %v618 = vadd.f32 %v579, %v611
      %v619 = vadd.f32 %v580, %v611
      %v620 = vadd.f32 %v581, %v611
      %v621 = vadd.f32 %v582, %v611
      %v622 = vadd.f32 %v583, %v611
      %v623 = vadd.f32 %v584, %v611
      %v624 = vadd.f32 %v585, %v611
      %v625 = vadd.f32 %v586, %v611
      %v626 = vadd.f32 %v587, %v611
      %v627 = vadd.f32 %v588, %v611
      %v628 = vadd.f32 %v589, %v611
      %v629 = vadd.f32 %v590, %v611
      %v630 = vadd.f32 %v591, %v611
      %v631 = vadd.f32 %v592, %v611
      %v632 = vadd.f32 %v593, %v611
      %v633 = vadd.f32 %v594, %v611
      %v634 = vadd.f32 %v595, %v611
      %v635 = vadd.f32 %v596, %v611
      %v636 = vadd.f32 %v597, %v611
      %v637 = vadd.f32 %v598, %v611
      %v638 = vadd.f32 %v599, %v611
      %v639 = vadd.f32 %v600, %v611
      %v640 = vadd.f32 %v601, %v611
      %v641 = vadd.f32 %v602, %v611
      %v642 = vadd.f32 %v603, %v611
      %v643 = vadd.f32 %v604, %v611
      %v644 = vadd.f32 %v605, %v611
      %v645 = vld [vmem:[%s4] sm:$0x1]
      %vm646 = vcmp.gt.f32.partialorder %v645, 0.0
      %v647 = vmax.f32 %v613, 0.0
      %v648 = vmax.f32 %v614, 0.0
      %v649 = vmax.f32 %v615, 0.0
      %v650 = vmax.f32 %v616, 0.0
      %v651 = vmax.f32 %v617, 0.0
      %v652 = vmax.f32 %v618, 0.0
      %v653 = vmax.f32 %v619, 0.0
      %v654 = vmax.f32 %v620, 0.0
      %v655 = vmax.f32 %v621, 0.0
      %v656 = vmax.f32 %v622, 0.0
      %v657 = vmax.f32 %v623, 0.0
      %v658 = vmax.f32 %v624, 0.0
      %v659 = vmax.f32 %v625, 0.0
      %v660 = vmax.f32 %v626, 0.0
      %v661 = vmax.f32 %v627, 0.0
      %v662 = vmax.f32 %v628, 0.0
      %v663 = vmax.f32 %v629, 0.0
      %v664 = vmax.f32 %v630, 0.0
      %v665 = vmax.f32 %v631, 0.0
      %v666 = vmax.f32 %v632, 0.0
      %v667 = vmax.f32 %v633, 0.0
      %v668 = vmax.f32 %v634, 0.0
      %v669 = vmax.f32 %v635, 0.0
      %v670 = vmax.f32 %v636, 0.0
      %v671 = vmax.f32 %v637, 0.0
      %v672 = vmax.f32 %v638, 0.0
      %v673 = vmax.f32 %v639, 0.0
      %v674 = vmax.f32 %v640, 0.0
      %v675 = vmax.f32 %v641, 0.0
      %v676 = vmax.f32 %v642, 0.0
      %v677 = vmax.f32 %v643, 0.0
      %v678 = vmax.f32 %v644, 0.0
      %v679 = vsel %vm646, 1, 0
      %v680 = vlaneseq
      %v681 = vshrl.u32 %v680, 7
      %v682 = vsub.s32 0, %v681
      %v683 = vrot.slane %v679, %v682
      %vm684 = vcmp.eq.s32.totalorder %v683, 1
      %v685 = vsel %vm684, %v647, %v613
      %v686 = vsel %vm684, %v648, %v614
      %v687 = vsel %vm684, %v649, %v615
      %v688 = vsel %vm684, %v650, %v616
      %v689 = vsel %vm684, %v651, %v617
      %v690 = vsel %vm684, %v652, %v618
      %v691 = vsel %vm684, %v653, %v619
      %v692 = vsel %vm684, %v654, %v620
      %v693 = vsel %vm684, %v655, %v621
      %v694 = vsel %vm684, %v656, %v622
      %v695 = vsel %vm684, %v657, %v623
      %v696 = vsel %vm684, %v658, %v624
      %v697 = vsel %vm684, %v659, %v625
      %v698 = vsel %vm684, %v660, %v626
      %v699 = vsel %vm684, %v661, %v627
      %v700 = vsel %vm684, %v662, %v628
      %v701 = vsel %vm684, %v663, %v629
      %v702 = vsel %vm684, %v664, %v630
      %v703 = vsel %vm684, %v665, %v631
      %v704 = vsel %vm684, %v666, %v632
      %v705 = vsel %vm684, %v667, %v633
      %v706 = vsel %vm684, %v668, %v634
      %v707 = vsel %vm684, %v669, %v635
      %v708 = vsel %vm684, %v670, %v636
      %v709 = vsel %vm684, %v671, %v637
      %v710 = vsel %vm684, %v672, %v638
      %v711 = vsel %vm684, %v673, %v639
      %v712 = vsel %vm684, %v674, %v640
      %v713 = vsel %vm684, %v675, %v641
      %v714 = vsel %vm684, %v676, %v642
      %v715 = vsel %vm684, %v677, %v643
      %v716 = vsel %vm684, %v678, %v644
      %v717 = vpack.c.bf16 %v686, %v685
      %v718 = vpack.c.bf16 %v688, %v687
      %v719 = vpack.c.bf16 %v690, %v689
      %v720 = vpack.c.bf16 %v692, %v691
      %v721 = vpack.c.bf16 %v694, %v693
      %v722 = vpack.c.bf16 %v696, %v695
      %v723 = vpack.c.bf16 %v698, %v697
      %v724 = vpack.c.bf16 %v700, %v699
      %v725 = vpack.c.bf16 %v702, %v701
      %v726 = vpack.c.bf16 %v704, %v703
      %v727 = vpack.c.bf16 %v706, %v705
      %v728 = vpack.c.bf16 %v708, %v707
      %v729 = vpack.c.bf16 %v710, %v709
      %v730 = vpack.c.bf16 %v712, %v711
      %v731 = vpack.c.bf16 %v714, %v713
      %v732 = vpack.c.bf16 %v716, %v715
      %v749 = vunpack.c.l.b16 %v717
      %v750 = vunpack.c.h.b16 %v717
      %v751 = vunpack.c.l.b16 %v718
      %v752 = vunpack.c.h.b16 %v718
      %v753 = vunpack.c.l.b16 %v719
      %v754 = vunpack.c.h.b16 %v719
      %v755 = vunpack.c.l.b16 %v720
      %v756 = vunpack.c.h.b16 %v720
      %v757 = vunpack.c.l.b16 %v721
      %v758 = vunpack.c.h.b16 %v721
      %v759 = vunpack.c.l.b16 %v722
      %v760 = vunpack.c.h.b16 %v722
      %v761 = vunpack.c.l.b16 %v723
      %v762 = vunpack.c.h.b16 %v723
      %v763 = vunpack.c.l.b16 %v724
      %v764 = vunpack.c.h.b16 %v724
      %v765 = vunpack.c.l.b16 %v725
      %v766 = vunpack.c.h.b16 %v725
      %v767 = vunpack.c.l.b16 %v726
      %v768 = vunpack.c.h.b16 %v726
      %v769 = vunpack.c.l.b16 %v727
      %v770 = vunpack.c.h.b16 %v727
      %v771 = vunpack.c.l.b16 %v728
      %v772 = vunpack.c.h.b16 %v728
      %v773 = vunpack.c.l.b16 %v729
      %v774 = vunpack.c.h.b16 %v729
      %v775 = vunpack.c.l.b16 %v730
      %v776 = vunpack.c.h.b16 %v730
      %v777 = vunpack.c.l.b16 %v731
      %v778 = vunpack.c.h.b16 %v731
      %v779 = vunpack.c.l.b16 %v732
      %v780 = vunpack.c.h.b16 %v732
      %v781 = vpack.c.b16 %v749, %v749
      %v782 = vpack.c.b16 %v750, %v750
      %v783 = vpack.c.b16 %v751, %v751
      %v784 = vpack.c.b16 %v752, %v752
      %v785 = vpack.c.b16 %v753, %v753
      %v786 = vpack.c.b16 %v754, %v754
      %v787 = vpack.c.b16 %v755, %v755
      %v788 = vpack.c.b16 %v756, %v756
      %v789 = vpack.c.b16 %v757, %v757
      %v790 = vpack.c.b16 %v758, %v758
      %v791 = vpack.c.b16 %v759, %v759
      %v792 = vpack.c.b16 %v760, %v760
      %v793 = vpack.c.b16 %v761, %v761
      %v794 = vpack.c.b16 %v762, %v762
      %v795 = vpack.c.b16 %v763, %v763
      %v796 = vpack.c.b16 %v764, %v764
      %v797 = vpack.c.b16 %v765, %v765
      %v798 = vpack.c.b16 %v766, %v766
      %v799 = vpack.c.b16 %v767, %v767
      %v800 = vpack.c.b16 %v768, %v768
      %v801 = vpack.c.b16 %v769, %v769
      %v802 = vpack.c.b16 %v770, %v770
      %v803 = vpack.c.b16 %v771, %v771
      %v804 = vpack.c.b16 %v772, %v772
      %v805 = vpack.c.b16 %v773, %v773
      %v806 = vpack.c.b16 %v774, %v774
      %v807 = vpack.c.b16 %v775, %v775
      %v808 = vpack.c.b16 %v776, %v776
      %v809 = vpack.c.b16 %v777, %v777
      %v810 = vpack.c.b16 %v778, %v778
      %v811 = vpack.c.b16 %v779, %v779
      %v812 = vpack.c.b16 %v780, %v780
      %vm845 = vcmask 781312
      %846 = vst.msk [vmem:[%s226] sm:$0xf] %vm845, %v781
      %847 = vst.msk [vmem:[%s226 + $0x4] sm:$0xf] %vm845, %v782
      %848 = vst.msk [vmem:[%s226 + $0x8] sm:$0xf] %vm845, %v783
      %849 = vst.msk [vmem:[%s226 + $0xc] sm:$0xf] %vm845, %v784
      %850 = vst.msk [vmem:[%s226 + $0x10] sm:$0xf] %vm845, %v785
      %851 = vst.msk [vmem:[%s226 + $0x14] sm:$0xf] %vm845, %v786
      %852 = vst.msk [vmem:[%s226 + $0x18] sm:$0xf] %vm845, %v787
      %853 = vst.msk [vmem:[%s226 + $0x1c] sm:$0xf] %vm845, %v788
      %854 = vst.msk [vmem:[%s226 + $0x20] sm:$0xf] %vm845, %v789
      %855 = vst.msk [vmem:[%s226 + $0x24] sm:$0xf] %vm845, %v790
      %856 = vst.msk [vmem:[%s226 + $0x28] sm:$0xf] %vm845, %v791
      %857 = vst.msk [vmem:[%s226 + $0x2c] sm:$0xf] %vm845, %v792
      %858 = vst.msk [vmem:[%s226 + $0x30] sm:$0xf] %vm845, %v793
      %859 = vst.msk [vmem:[%s226 + $0x34] sm:$0xf] %vm845, %v794
      %860 = vst.msk [vmem:[%s226 + $0x38] sm:$0xf] %vm845, %v795
      %861 = vst.msk [vmem:[%s226 + $0x3c] sm:$0xf] %vm845, %v796
      %862 = vst.msk [vmem:[%s226 + $0x40] sm:$0xf] %vm845, %v797
      %863 = vst.msk [vmem:[%s226 + $0x44] sm:$0xf] %vm845, %v798
      %864 = vst.msk [vmem:[%s226 + $0x48] sm:$0xf] %vm845, %v799
      %865 = vst.msk [vmem:[%s226 + $0x4c] sm:$0xf] %vm845, %v800
      %866 = vst.msk [vmem:[%s226 + $0x50] sm:$0xf] %vm845, %v801
      %867 = vst.msk [vmem:[%s226 + $0x54] sm:$0xf] %vm845, %v802
      %868 = vst.msk [vmem:[%s226 + $0x58] sm:$0xf] %vm845, %v803
      %869 = vst.msk [vmem:[%s226 + $0x5c] sm:$0xf] %vm845, %v804
      %870 = vst.msk [vmem:[%s226 + $0x60] sm:$0xf] %vm845, %v805
      %871 = vst.msk [vmem:[%s226 + $0x64] sm:$0xf] %vm845, %v806
      %872 = vst.msk [vmem:[%s226 + $0x68] sm:$0xf] %vm845, %v807
      %873 = vst.msk [vmem:[%s226 + $0x6c] sm:$0xf] %vm845, %v808
      %874 = vst.msk [vmem:[%s226 + $0x70] sm:$0xf] %vm845, %v809
      %875 = vst.msk [vmem:[%s226 + $0x74] sm:$0xf] %vm845, %v810
      %876 = vst.msk [vmem:[%s226 + $0x78] sm:$0xf] %vm845, %v811
      %877 = vst.msk [vmem:[%s226 + $0x7c] sm:$0xf] %vm845, %v812
      %s878 = smul.u32 32, %s16
      %p879 = scmp.lt.s32.totalorder %s878, 63
      %s880 = scalar_select %p879, %s878, 63
      %s881 = smul.addr %s880, 4
      %s882 = scalar_lea.vmem %s5, %s881
      // Predicated region
      $region41: #{easpp_forward.16} parent=39 // pred_check
        %p883 = pneg %p144
      $region42: #{easpp_forward.16} parent=39 // pred_check_branch
        %885 = sbr.rel (%p883) target = $region44
      $region43: #{easpp_forward.16} parent=39 // pred_region
        %s886 = smul.u32 32, %s16
      $region44: #{easpp_forward.16} parent=39 // pred_fallthru
        _
    $region40: #{easpp_forward.16} parent=5 // pred_fallthru
      _
    %p887 = scmp.le.s32.totalorder 2, %s11
    // Predicated region
    $region45: #{easpp_forward.16} parent=5 // pred_check
      %p888 = pneg %p887
    $region46: #{easpp_forward.16} parent=5 // pred_check_branch
      %890 = sbr.rel (%p888) target = $region48
    $region47: #{easpp_forward.16} parent=5 // pred_region
      %s891 = ssub.s32 %s11, 2
      // Predicated region
      $region49: #{easpp_forward.16} parent=47 // pred_check
        %p892 = pneg %p150
      $region50: #{easpp_forward.16} parent=47 // pred_check_branch
        %894 = sbr.rel (%p892) target = $region52
      $region51: #{easpp_forward.16} parent=47 // pred_region
        %s895 = smul.u32 32, %s17
        %p896 = scmp.lt.s32.totalorder %s895, 63
        %s897 = scalar_select %p896, %s895, 63
        %s898 = smul.addr %s897, 4
        %s899 = scalar_lea.vmem %s5, %s898
      $region52: #{easpp_forward.16} parent=47 // pred_fallthru
        _
    $region48: #{easpp_forward.16} parent=5 // pred_fallthru
      _
  $region6: #{easpp_forward.16} parent=0 // loop_footer
    %s15 = sadd.s32 1, %s11
  $region7: #{easpp_forward.16} parent=0 // loop_footer_branch
    %10 = sbr.rel target = $region3
  $region8: #{easpp_forward.16} parent=0 // loop_exit
    _

// kernel: easpp_forward.17
$region0: #{easpp_forward.17}
  #allocation0 [shape = 'u32[]', space=smem, size = 0x4, offset = 0x4, fixed_abs, tag = 'smem constant byte address 0x4 - core index']
  #allocation1 [shape = 'u32[144,128]{1,0:T(1,128)}', space=vmem, size = 0x12000, scoped, tag = 'internal scratch']
  %s0 = inlined_call_operand.vmem [shape: bf16[512,128], index: 0, kind: input, shape index: {}]
  %s1 = inlined_call_operand.vmem [shape: bf16[128,32], index: 1, kind: input, shape index: {}]
  %s2 = inlined_call_operand.vmem [shape: f32[1,32], index: 2, kind: input, shape index: {}]
  %s3 = inlined_call_operand.vmem [shape: f32[1,32], index: 3, kind: input, shape index: {}]
  %s4 = inlined_call_operand.vmem [shape: f32[1,32], index: 4, kind: input, shape index: {}]
  %s5 = inlined_call_operand.hbm [shape: f32[512,32], index: 5, kind: output, shape index: {}]
  %s6 = sld [smem:[#allocation0]]
  $region53: #{easpp_forward.17} parent=0
    _
  %s8 = ssub.s32 1, %s6
  %s9 = scalar_select 0, %s8, %s6
  $region1: #{easpp_forward.17} parent=0
    #allocation2 [shape = 'u8[262144]{0}', space=vmem, size = 0x40000, scoped, tag = 'output window, operand 0']
    #allocation3 [shape = 's32[2]{0}', space=sflag, size = 0x8, scoped, tag = 'scoped memory for easpp_forward.17']
    %10 = vsyncpa [#allocation3], 0
    %s11 = scalar_lea.sflag [#allocation3], 1
    %12 = vsyncpa %s11, 0
    loop: start=0, step=1, limit=4
    $region2: #{easpp_forward.17} parent=1 // loop_pre_header
      _
    $region3: #{easpp_forward.17} parent=1 // loop_header
      %s14 = sphi 0, %s18
      %p15 = scmp.ge.s32.totalorder %s14, 4
      %s24 = sphi 0, %s26
      %s27 = sphi 0, %s24
      %s28 = sphi 0, %s27
      %s44 = sphi 0, %s28
      %s48 = sphi 0, %s48
      %s50 = sphi 0, %s48
      %s51 = sphi 0, %s50
      %s65 = sphi 0, %s51
      %s69 = sphi 0, %s69
      %s71 = sphi 0, %s69
      %s72 = sphi 0, %s71
      %s86 = sphi 0, %s72
      %s90 = sphi 0, %s90
      %s92 = sphi 0, %s90
      %s93 = sphi 0, %s92
      %s107 = sphi 0, %s93
      %s111 = sphi 0, %s111
      %s113 = sphi 0, %s111
      %s114 = sphi 0, %s113
      %s128 = sphi 0, %s114
      %s134 = sphi 0, %s136
      %s137 = sphi 0, %s134
      %s138 = sphi 0, %s137
      %s154 = sphi 0, %s138
    $region4: #{easpp_forward.17} parent=1 // loop_header_branch
      %17 = sbr.rel (%p15) target = $region8
    $region5: #{easpp_forward.17} parent=1 // loop_body
      %s19 = ssub.s32 %s14, 1
      %s20 = ssub.s32 %s14, 2
      %s21 = sadd.s32 %s14, 1
      %s22 = ssub.s32 %s14, %s21
      %p23 = scmp.eq.s32.totalorder %s22, 0
      %s25 = sadd.s32 %s24, 1
      %s26 = scalar_select %p23, %s24, %s25
      %p29 = pneg %p23
      %p30 = scmp.eq.s32.totalorder %s14, 1
      %p31 = por %p29, %p30
      %p32 = scmp.ne.s32.totalorder %s24, %s27
      %p33 = scmp.eq.s32.totalorder %s14, 0
      %p34 = por %p32, %p33
      %p35 = scmp.ne.s32.totalorder %s24, %s27
      %p36 = scmp.eq.s32.totalorder %s19, 1
      %p37 = por %p35, %p36
      %p38 = scmp.ne.s32.totalorder %s27, %s28
      %p39 = scmp.eq.s32.totalorder %s19, 0
      %p40 = por %p38, %p39
      %p41 = scmp.ne.s32.totalorder %s27, %s28
      %p42 = scmp.eq.s32.totalorder %s20, 1
      %p43 = por %p41, %p42
      %p45 = scmp.ne.s32.totalorder %s28, %s44
      %p46 = scmp.eq.s32.totalorder %s20, 0
      %p47 = por %p45, %p46
      %s49 = sadd.s32 %s48, 1
      %p52 = scmp.eq.s32.totalorder %s14, 1
      %p53 = scmp.ne.s32.totalorder %s48, %s50
      %p54 = scmp.eq.s32.totalorder %s14, 0
      %p55 = por %p53, %p54
      %p56 = scmp.ne.s32.totalorder %s48, %s50
      %p57 = scmp.eq.s32.totalorder %s19, 1
      %p58 = por %p56, %p57
      %p59 = scmp.ne.s32.totalorder %s50, %s51
      %p60 = scmp.eq.s32.totalorder %s19, 0
      %p61 = por %p59, %p60
      %p62 = scmp.ne.s32.totalorder %s50, %s51
      %p63 = scmp.eq.s32.totalorder %s20, 1
      %p64 = por %p62, %p63
      %p66 = scmp.ne.s32.totalorder %s51, %s65
      %p67 = scmp.eq.s32.totalorder %s20, 0
      %p68 = por %p66, %p67
      %s70 = sadd.s32 %s69, 1
      %p73 = scmp.eq.s32.totalorder %s14, 1
      %p74 = scmp.ne.s32.totalorder %s69, %s71
      %p75 = scmp.eq.s32.totalorder %s14, 0
      %p76 = por %p74, %p75
      %p77 = scmp.ne.s32.totalorder %s69, %s71
      %p78 = scmp.eq.s32.totalorder %s19, 1
      %p79 = por %p77, %p78
      %p80 = scmp.ne.s32.totalorder %s71, %s72
      %p81 = scmp.eq.s32.totalorder %s19, 0
      %p82 = por %p80, %p81
      %p83 = scmp.ne.s32.totalorder %s71, %s72
      %p84 = scmp.eq.s32.totalorder %s20, 1
      %p85 = por %p83, %p84
      %p87 = scmp.ne.s32.totalorder %s72, %s86
      %p88 = scmp.eq.s32.totalorder %s20, 0
      %p89 = por %p87, %p88
      %s91 = sadd.s32 %s90, 1
      %p94 = scmp.eq.s32.totalorder %s14, 1
      %p95 = scmp.ne.s32.totalorder %s90, %s92
      %p96 = scmp.eq.s32.totalorder %s14, 0
      %p97 = por %p95, %p96
      %p98 = scmp.ne.s32.totalorder %s90, %s92
      %p99 = scmp.eq.s32.totalorder %s19, 1
      %p100 = por %p98, %p99
      %p101 = scmp.ne.s32.totalorder %s92, %s93
      %p102 = scmp.eq.s32.totalorder %s19, 0
      %p103 = por %p101, %p102
      %p104 = scmp.ne.s32.totalorder %s92, %s93
      %p105 = scmp.eq.s32.totalorder %s20, 1
      %p106 = por %p104, %p105
      %p108 = scmp.ne.s32.totalorder %s93, %s107
      %p109 = scmp.eq.s32.totalorder %s20, 0
      %p110 = por %p108, %p109
      %s112 = sadd.s32 %s111, 1
      %p115 = scmp.eq.s32.totalorder %s14, 1
      %p116 = scmp.ne.s32.totalorder %s111, %s113
      %p117 = scmp.eq.s32.totalorder %s14, 0
      %p118 = por %p116, %p117
      %p119 = scmp.ne.s32.totalorder %s111, %s113
      %p120 = scmp.eq.s32.totalorder %s19, 1
      %p121 = por %p119, %p120
      %p122 = scmp.ne.s32.totalorder %s113, %s114
      %p123 = scmp.eq.s32.totalorder %s19, 0
      %p124 = por %p122, %p123
      %p125 = scmp.ne.s32.totalorder %s113, %s114
      %p126 = scmp.eq.s32.totalorder %s20, 1
      %p127 = por %p125, %p126
      %p129 = scmp.ne.s32.totalorder %s114, %s128
      %p130 = scmp.eq.s32.totalorder %s20, 0
      %p131 = por %p129, %p130
      %s132 = ssub.s32 %s14, %s21
      %p133 = scmp.eq.s32.totalorder %s132, 0
      %s135 = sadd.s32 %s134, 1
      %s136 = scalar_select %p133, %s134, %s135
      %p139 = pneg %p133
      %p140 = scmp.eq.s32.totalorder %s14, 1
      %p141 = por %p139, %p140
      %p142 = scmp.ne.s32.totalorder %s134, %s137
      %p143 = scmp.eq.s32.totalorder %s14, 0
      %p144 = por %p142, %p143
      %p145 = scmp.ne.s32.totalorder %s134, %s137
      %p146 = scmp.eq.s32.totalorder %s19, 1
      %p147 = por %p145, %p146
      %p148 = scmp.ne.s32.totalorder %s137, %s138
      %p149 = scmp.eq.s32.totalorder %s19, 0
      %p150 = por %p148, %p149
      %p151 = scmp.ne.s32.totalorder %s137, %s138
      %p152 = scmp.eq.s32.totalorder %s20, 1
      %p153 = por %p151, %p152
      %p155 = scmp.ne.s32.totalorder %s138, %s154
      %p156 = scmp.eq.s32.totalorder %s20, 0
      %p157 = por %p155, %p156
      %p158 = scmp.le.s32.totalorder 1, %s14
      %p159 = scmp.lt.s32.totalorder %s14, 3
      %p160 = pnand %p158, %p159
      %p161 = pneg %p160
      // Predicated region
      $region9: #{easpp_forward.17} parent=5 // pred_check
        _
      $region10: #{easpp_forward.17} parent=5 // pred_check_branch
        %163 = sbr.rel (%p160) target = $region12
      $region11: #{easpp_forward.17} parent=5 // pred_region
        %s164 = ssub.s32 %s14, 1
        // Predicated region
        $region13: #{easpp_forward.17} parent=11 // pred_check
          %p165 = pneg %p61
        $region14: #{easpp_forward.17} parent=11 // pred_check_branch
          %167 = sbr.rel (%p165) target = $region16
        $region15: #{easpp_forward.17} parent=11 // pred_region
          _
        $region16: #{easpp_forward.17} parent=11 // pred_fallthru
          _
        // Predicated region
        $region17: #{easpp_forward.17} parent=11 // pred_check
          %p168 = pneg %p82
        $region18: #{easpp_forward.17} parent=11 // pred_check_branch
          %170 = sbr.rel (%p168) target = $region20
        $region19: #{easpp_forward.17} parent=11 // pred_region
          _
        $region20: #{easpp_forward.17} parent=11 // pred_fallthru
          _
        // Predicated region
        $region21: #{easpp_forward.17} parent=11 // pred_check
          %p171 = pneg %p103
        $region22: #{easpp_forward.17} parent=11 // pred_check_branch
          %173 = sbr.rel (%p171) target = $region24
        $region23: #{easpp_forward.17} parent=11 // pred_region
          _
        $region24: #{easpp_forward.17} parent=11 // pred_fallthru
          _
        // Predicated region
        $region25: #{easpp_forward.17} parent=11 // pred_check
          %p174 = pneg %p124
        $region26: #{easpp_forward.17} parent=11 // pred_check_branch
          %176 = sbr.rel (%p174) target = $region28
        $region27: #{easpp_forward.17} parent=11 // pred_region
          _
        $region28: #{easpp_forward.17} parent=11 // pred_fallthru
          _
      $region12: #{easpp_forward.17} parent=5 // pred_fallthru
        _
      %p177 = scmp.lt.s32.totalorder %s14, 2
      // Predicated region
      $region29: #{easpp_forward.17} parent=5 // pred_check
        %p178 = pneg %p177
      $region30: #{easpp_forward.17} parent=5 // pred_check_branch
        %180 = sbr.rel (%p178) target = $region32
      $region31: #{easpp_forward.17} parent=5 // pred_region
        // Predicated region
        $region33: #{easpp_forward.17} parent=31 // pred_check
          %p181 = pneg %p34
        $region34: #{easpp_forward.17} parent=31 // pred_check_branch
          %183 = sbr.rel (%p181) target = $region36
        $region35: #{easpp_forward.17} parent=31 // pred_region
          %s184 = smul.u32 32, %s14
          %p185 = scmp.lt.s32.totalorder %s184, 63
          %s186 = scalar_select %p185, %s184, 63
          %s187 = smul.addr %s186, 4
          %s188 = scalar_lea.vmem %s0, %s187
          %s189 = smul.u32 32, %s14
        $region36: #{easpp_forward.17} parent=31 // pred_fallthru
          _
      $region32: #{easpp_forward.17} parent=5 // pred_fallthru
        _
      %p190 = scmp.le.s32.totalorder 1, %s14
      %p191 = scmp.lt.s32.totalorder %s14, 3
      %p192 = pnand %p190, %p191
      %p193 = pneg %p192
      // Predicated region
      $region37: #{easpp_forward.17} parent=5 // pred_check
        _
      $region38: #{easpp_forward.17} parent=5 // pred_check_branch
        %195 = sbr.rel (%p192) target = $region40
      $region39: #{easpp_forward.17} parent=5 // pred_region
        %s196 = ssub.s32 %s14, 1
        %s197 = smul.u32 32, %s19
        %p198 = scmp.lt.s32.totalorder %s197, 63
        %s199 = scalar_select %p198, %s197, 63
        %s200 = smul.addr %s199, 4
        %s201 = scalar_lea.vmem %s0, %s200
        %p202 = pneg %p40
        %p203 = pneg %p37
        %p204 = pneg %p61
        %p205 = pneg %p58
        %p206 = pneg %p82
        %p207 = pneg %p79
        %p208 = pneg %p103
        %p209 = pneg %p100
        %p210 = pneg %p124
        %p211 = pneg %p121
        %p212 = pneg %p150
        %p213 = pneg %p147
        %s214 = sand.u32 %s137, 1
        %s215 = scalar_lea.sflag [#allocation3], %s214
        %s216 = sand.u32 %s137, 1
        %s217 = smul.addr %s216, 256
        %s218 = scalar_lea.vmem [#allocation2], %s217
        %s219 = smul.u32 32, %s19
        %p220 = scmp.lt.s32.totalorder %s219, 63
        %s221 = scalar_select %p220, %s219, 63
        %s222 = smul.addr %s221, 4
        %s223 = scalar_lea.vmem %s0, %s222
        %s224 = smul.u32 32, %s19
        %s225 = smul.u32 32, %s19
        %v227 = vld [vmem:[%s223] sm:$0xf]
        %v228 = vld [vmem:[%s223 + $0x4] sm:$0xf]
        %v229 = vld [vmem:[%s223 + $0x8] sm:$0xf]
        %v230 = vld [vmem:[%s223 + $0xc] sm:$0xf]
        %v231 = vld [vmem:[%s223 + $0x10] sm:$0xf]
        %v232 = vld [vmem:[%s223 + $0x14] sm:$0xf]
        %v233 = vld [vmem:[%s223 + $0x18] sm:$0xf]
        %v234 = vld [vmem:[%s223 + $0x1c] sm:$0xf]
        %v235 = vld [vmem:[%s223 + $0x20] sm:$0xf]
        %v236 = vld [vmem:[%s223 + $0x24] sm:$0xf]
        %v237 = vld [vmem:[%s223 + $0x28] sm:$0xf]
        %v238 = vld [vmem:[%s223 + $0x2c] sm:$0xf]
        %v239 = vld [vmem:[%s223 + $0x30] sm:$0xf]
        %v240 = vld [vmem:[%s223 + $0x34] sm:$0xf]
        %v241 = vld [vmem:[%s223 + $0x38] sm:$0xf]
        %v242 = vld [vmem:[%s223 + $0x3c] sm:$0xf]
        %v243 = vld [vmem:[%s223 + $0x40] sm:$0xf]
        %v244 = vld [vmem:[%s223 + $0x44] sm:$0xf]
        %v245 = vld [vmem:[%s223 + $0x48] sm:$0xf]
        %v246 = vld [vmem:[%s223 + $0x4c] sm:$0xf]
        %v247 = vld [vmem:[%s223 + $0x50] sm:$0xf]
        %v248 = vld [vmem:[%s223 + $0x54] sm:$0xf]
        %v249 = vld [vmem:[%s223 + $0x58] sm:$0xf]
        %v250 = vld [vmem:[%s223 + $0x5c] sm:$0xf]
        %v251 = vld [vmem:[%s223 + $0x60] sm:$0xf]
        %v252 = vld [vmem:[%s223 + $0x64] sm:$0xf]
        %v253 = vld [vmem:[%s223 + $0x68] sm:$0xf]
        %v254 = vld [vmem:[%s223 + $0x6c] sm:$0xf]
        %v255 = vld [vmem:[%s223 + $0x70] sm:$0xf]
        %v256 = vld [vmem:[%s223 + $0x74] sm:$0xf]
        %v257 = vld [vmem:[%s223 + $0x78] sm:$0xf]
        %v258 = vld [vmem:[%s223 + $0x7c] sm:$0xf]
        %v259 = vld [vmem:[%s1] sm:$0xf]
        %v260 = vld [vmem:[%s1 + $0x4] sm:$0xf]
        %v261 = vld [vmem:[%s1 + $0x8] sm:$0xf]
        %v262 = vld [vmem:[%s1 + $0xc] sm:$0xf]
        %v263 = vld [vmem:[%s1 + $0x10] sm:$0xf]
        %v264 = vld [vmem:[%s1 + $0x14] sm:$0xf]
        %v265 = vld [vmem:[%s1 + $0x18] sm:$0xf]
        %v266 = vld [vmem:[%s1 + $0x1c] sm:$0xf]
        %v267 = vld [vmem:[%s1 + $0x20] sm:$0xf]
        %v268 = vld [vmem:[%s1 + $0x24] sm:$0xf]
        %v269 = vld [vmem:[%s1 + $0x28] sm:$0xf]
        %v270 = vld [vmem:[%s1 + $0x2c] sm:$0xf]
        %v271 = vld [vmem:[%s1 + $0x30] sm:$0xf]
        %v272 = vld [vmem:[%s1 + $0x34] sm:$0xf]
        %v273 = vld [vmem:[%s1 + $0x38] sm:$0xf]
        %v274 = vld [vmem:[%s1 + $0x3c] sm:$0xf]
        %v307 = vunpack.c.l.b16 %v227
        %v308 = vunpack.c.l.b16 %v228
        %v309 = vunpack.c.l.b16 %v229
        %v310 = vunpack.c.l.b16 %v230
        %v311 = vunpack.c.l.b16 %v231
        %v312 = vunpack.c.l.b16 %v232
        %v313 = vunpack.c.l.b16 %v233
        %v314 = vunpack.c.l.b16 %v234
        %v315 = vunpack.c.l.b16 %v235
        %v316 = vunpack.c.l.b16 %v236
        %v317 = vunpack.c.l.b16 %v237
        %v318 = vunpack.c.l.b16 %v238
        %v319 = vunpack.c.l.b16 %v239
        %v320 = vunpack.c.l.b16 %v240
        %v321 = vunpack.c.l.b16 %v241
        %v322 = vunpack.c.l.b16 %v242
        %v323 = vunpack.c.l.b16 %v243
        %v324 = vunpack.c.l.b16 %v244
        %v325 = vunpack.c.l.b16 %v245
        %v326 = vunpack.c.l.b16 %v246
        %v327 = vunpack.c.l.b16 %v247
        %v328 = vunpack.c.l.b16 %v248
        %v329 = vunpack.c.l.b16 %v249
        %v330 = vunpack.c.l.b16 %v250
        %v331 = vunpack.c.l.b16 %v251
        %v332 = vunpack.c.l.b16 %v252
        %v333 = vunpack.c.l.b16 %v253
        %v334 = vunpack.c.l.b16 %v254
        %v335 = vunpack.c.l.b16 %v255
        %v336 = vunpack.c.l.b16 %v256
        %v337 = vunpack.c.l.b16 %v257
        %v338 = vunpack.c.l.b16 %v258
        %v339 = vpack.c.b16 %v308, %v307
        %v340 = vpack.c.b16 %v310, %v309
        %v341 = vpack.c.b16 %v312, %v311
        %v342 = vpack.c.b16 %v314, %v313
        %v343 = vpack.c.b16 %v316, %v315
        %v344 = vpack.c.b16 %v318, %v317
        %v345 = vpack.c.b16 %v320, %v319
        %v346 = vpack.c.b16 %v322, %v321
        %v347 = vpack.c.b16 %v324, %v323
        %v348 = vpack.c.b16 %v326, %v325
        %v349 = vpack.c.b16 %v328, %v327
        %v350 = vpack.c.b16 %v330, %v329
        %v351 = vpack.c.b16 %v332, %v331
        %v352 = vpack.c.b16 %v334, %v333
        %v353 = vpack.c.b16 %v336, %v335
        %v354 = vpack.c.b16 %v338, %v337
        %v387 = vunpack.c.l.b16 %v259
        %v388 = vunpack.c.l.b16 %v260
        %v389 = vunpack.c.l.b16 %v261
        %v390 = vunpack.c.l.b16 %v262
        %v391 = vunpack.c.l.b16 %v263
        %v392 = vunpack.c.l.b16 %v264
        %v393 = vunpack.c.l.b16 %v265
        %v394 = vunpack.c.l.b16 %v266
        %v395 = vunpack.c.l.b16 %v267
        %v396 = vunpack.c.l.b16 %v268
        %v397 = vunpack.c.l.b16 %v269
        %v398 = vunpack.c.l.b16 %v270
        %v399 = vunpack.c.l.b16 %v271
        %v400 = vunpack.c.l.b16 %v272
        %v401 = vunpack.c.l.b16 %v273
        %v402 = vunpack.c.l.b16 %v274
        %v403 = vpack.c.b16 %v388, %v387
        %v404 = vpack.c.b16 %v390, %v389
        %v405 = vpack.c.b16 %v392, %v391
        %v406 = vpack.c.b16 %v394, %v393
        %v407 = vpack.c.b16 %v396, %v395
        %v408 = vpack.c.b16 %v398, %v397
        %v409 = vpack.c.b16 %v400, %v399
        %v410 = vpack.c.b16 %v402, %v401
        %419 = vmatprep.subr.bf16.mxu0 0
        %420 = vmatpush1.bf16.msra.mxu0 %v403
        %421 = vmatprep.subr.bf16.mxu0 0
        %422 = vmatpush1.bf16.msra.mxu0 %v404
        %423 = vmatprep.subr.bf16.mxu0 0
        %424 = vmatpush1.bf16.msra.mxu0 %v405
        %425 = vmatprep.subr.bf16.mxu0 0
        %426 = vmatpush1.bf16.msra.mxu0 %v406
        %427 = vmatprep.subr.bf16.mxu0 0
        %428 = vmatpush1.bf16.msra.mxu0 %v407
        %429 = vmatprep.subr.bf16.mxu0 0
        %430 = vmatpush1.bf16.msra.mxu0 %v408
        %431 = vmatprep.subr.bf16.mxu0 0
        %432 = vmatpush1.bf16.msra.mxu0 %v409
        %433 = vmatprep.subr.bf16.mxu0 0
        %434 = vmatpush1.bf16.msra.mxu0 %v410
        %435 = vmatprep.subr.bf16.mxu0 0
        %436 = vmatpush1.bf16.msra.mxu0 0
        %437 = vmatprep.subr.bf16.mxu0 0
        %438 = vmatpush1.bf16.msra.mxu0 0
        %439 = vmatprep.subr.bf16.mxu0 0
        %440 = vmatpush1.bf16.msra.mxu0 0
        %441 = vmatprep.subr.bf16.mxu0 0
        %442 = vmatpush1.bf16.msra.mxu0 0
        %443 = vmatprep.subr.bf16.mxu0 0
        %444 = vmatpush1.bf16.msra.mxu0 0
        %445 = vmatprep.subr.bf16.mxu0 0
        %446 = vmatpush1.bf16.msra.mxu0 0
        %447 = vmatprep.subr.bf16.mxu0 0
        %448 = vmatpush1.bf16.msra.mxu0 0
        %449 = vmatprep.subr.bf16.mxu0 0
        %450 = vmatpush1.bf16.msra.mxu0 0
        %451 = vmatprep.mubr.bf16.mxu0 0
        %452 = vmatmul.mubr.bf16.gmra.mrb[0].mxu0 %v339
        %v453 = vpop.f32.mrb[0].mxu0
        %v454 = vadd.f32 0.0, %v453
        %v455 = vpop.f32.mrb[0].mxu0
        %v456 = vpop.f32.mrb[0].mxu0
        %v457 = vadd.f32 0.0, %v456
        %v458 = vpop.f32.mrb[0].mxu0
        %459 = vmatprep.mubr.bf16.mxu0 0
        %460 = vmatmul.mubr.bf16.gmra.mrb[0].mxu0 %v340
        %v461 = vpop.f32.mrb[0].mxu0
        %v462 = vadd.f32 0.0, %v461
        %v463 = vpop.f32.mrb[0].mxu0
        %v464 = vpop.f32.mrb[0].mxu0
        %v465 = vadd.f32 0.0, %v464
        %v466 = vpop.f32.mrb[0].mxu0
        %467 = vmatprep.mubr.bf16.mxu0 0
        %468 = vmatmul.mubr.bf16.gmra.mrb[0].mxu0 %v341
        %v469 = vpop.f32.mrb[0].mxu0
        %v470 = vadd.f32 0.0, %v469
        %v471 = vpop.f32.mrb[0].mxu0
        %v472 = vpop.f32.mrb[0].mxu0
        %v473 = vadd.f32 0.0, %v472
        %v474 = vpop.f32.mrb[0].mxu0
        %475 = vmatprep.mubr.bf16.mxu0 0
        %476 = vmatmul.mubr.bf16.gmra.mrb[0].mxu0 %v342
        %v477 = vpop.f32.mrb[0].mxu0
        %v478 = vadd.f32 0.0, %v477
        %v479 = vpop.f32.mrb[0].mxu0
        %v480 = vpop.f32.mrb[0].mxu0
        %v481 = vadd.f32 0.0, %v480
        %v482 = vpop.f32.mrb[0].mxu0
        %483 = vmatprep.mubr.bf16.mxu0 0
        %484 = vmatmul.mubr.bf16.gmra.mrb[0].mxu0 %v343
        %v485 = vpop.f32.mrb[0].mxu0
        %v486 = vadd.f32 0.0, %v485
        %v487 = vpop.f32.mrb[0].mxu0
        %v488 = vpop.f32.mrb[0].mxu0
        %v489 = vadd.f32 0.0, %v488
        %v490 = vpop.f32.mrb[0].mxu0
        %491 = vmatprep.mubr.bf16.mxu0 0
        %492 = vmatmul.mubr.bf16.gmra.mrb[0].mxu0 %v344
        %v493 = vpop.f32.mrb[0].mxu0
        %v494 = vadd.f32 0.0, %v493
        %v495 = vpop.f32.mrb[0].mxu0
        %v496 = vpop.f32.mrb[0].mxu0
        %v497 = vadd.f32 0.0, %v496
        %v498 = vpop.f32.mrb[0].mxu0
        %499 = vmatprep.mubr.bf16.mxu0 0
        %500 = vmatmul.mubr.bf16.gmra.mrb[0].mxu0 %v345
        %v501 = vpop.f32.mrb[0].mxu0
        %v502 = vadd.f32 0.0, %v501
        %v503 = vpop.f32.mrb[0].mxu0
        %v504 = vpop.f32.mrb[0].mxu0
        %v505 = vadd.f32 0.0, %v504
        %v506 = vpop.f32.mrb[0].mxu0
        %507 = vmatprep.mubr.bf16.mxu0 0
        %508 = vmatmul.mubr.bf16.gmra.mrb[0].mxu0 %v346
        %v509 = vpop.f32.mrb[0].mxu0
        %v510 = vadd.f32 0.0, %v509
        %v511 = vpop.f32.mrb[0].mxu0
        %v512 = vpop.f32.mrb[0].mxu0
        %v513 = vadd.f32 0.0, %v512
        %v514 = vpop.f32.mrb[0].mxu0
        %515 = vmatprep.mubr.bf16.mxu0 0
        %516 = vmatmul.mubr.bf16.gmra.mrb[0].mxu0 %v347
        %v517 = vpop.f32.mrb[0].mxu0
        %v518 = vadd.f32 0.0, %v517
        %v519 = vpop.f32.mrb[0].mxu0
        %v520 = vpop.f32.mrb[0].mxu0
        %v521 = vadd.f32 0.0, %v520
        %v522 = vpop.f32.mrb[0].mxu0
        %523 = vmatprep.mubr.bf16.mxu0 0
        %524 = vmatmul.mubr.bf16.gmra.mrb[0].mxu0 %v348
        %v525 = vpop.f32.mrb[0].mxu0
        %v526 = vadd.f32 0.0, %v525
        %v527 = vpop.f32.mrb[0].mxu0
        %v528 = vpop.f32.mrb[0].mxu0
        %v529 = vadd.f32 0.0, %v528
        %v530 = vpop.f32.mrb[0].mxu0
        %531 = vmatprep.mubr.bf16.mxu0 0
        %532 = vmatmul.mubr.bf16.gmra.mrb[0].mxu0 %v349
        %v533 = vpop.f32.mrb[0].mxu0
        %v534 = vadd.f32 0.0, %v533
        %v535 = vpop.f32.mrb[0].mxu0
        %v536 = vpop.f32.mrb[0].mxu0
        %v537 = vadd.f32 0.0, %v536
        %v538 = vpop.f32.mrb[0].mxu0
        %539 = vmatprep.mubr.bf16.mxu0 0
        %540 = vmatmul.mubr.bf16.gmra.mrb[0].mxu0 %v350
        %v541 = vpop.f32.mrb[0].mxu0
        %v542 = vadd.f32 0.0, %v541
        %v543 = vpop.f32.mrb[0].mxu0
        %v544 = vpop.f32.mrb[0].mxu0
        %v545 = vadd.f32 0.0, %v544
        %v546 = vpop.f32.mrb[0].mxu0
        %547 = vmatprep.mubr.bf16.mxu0 0
        %548 = vmatmul.mubr.bf16.gmra.mrb[0].mxu0 %v351
        %v549 = vpop.f32.mrb[0].mxu0
        %v550 = vadd.f32 0.0, %v549
        %v551 = vpop.f32.mrb[0].mxu0
        %v552 = vpop.f32.mrb[0].mxu0
        %v553 = vadd.f32 0.0, %v552
        %v554 = vpop.f32.mrb[0].mxu0
        %555 = vmatprep.mubr.bf16.mxu0 0
        %556 = vmatmul.mubr.bf16.gmra.mrb[0].mxu0 %v352
        %v557 = vpop.f32.mrb[0].mxu0
        %v558 = vadd.f32 0.0, %v557
        %v559 = vpop.f32.mrb[0].mxu0
        %v560 = vpop.f32.mrb[0].mxu0
        %v561 = vadd.f32 0.0, %v560
        %v562 = vpop.f32.mrb[0].mxu0
        %563 = vmatprep.mubr.bf16.mxu0 0
        %564 = vmatmul.mubr.bf16.gmra.mrb[0].mxu0 %v353
        %v565 = vpop.f32.mrb[0].mxu0
        %v566 = vadd.f32 0.0, %v565
        %v567 = vpop.f32.mrb[0].mxu0
        %v568 = vpop.f32.mrb[0].mxu0
        %v569 = vadd.f32 0.0, %v568
        %v570 = vpop.f32.mrb[0].mxu0
        %571 = vmatprep.mubr.bf16.mxu0 0
        %572 = vmatmul.mubr.bf16.gmra.mrb[0].mxu0 %v354
        %v573 = vpop.f32.mrb[0].mxu0
        %v574 = vadd.f32 0.0, %v573
        %v575 = vpop.f32.mrb[0].mxu0
        %v576 = vpop.f32.mrb[0].mxu0
        %v577 = vadd.f32 0.0, %v576
        %v578 = vpop.f32.mrb[0].mxu0
        %579 = vdwg.mxu0
        %v580 = vld [vmem:[%s2] sm:$0x1]
        %v582 = vlaneseq
        %v583 = vshrl.u32 %v582, 7
        %v584 = vsub.s32 0, %v583
        %v585 = vrot.slane %v580, %v584
        %v587 = vmul.f32 %v454, %v585
        %v588 = vmul.f32 %v457, %v585
        %v589 = vmul.f32 %v462, %v585
        %v590 = vmul.f32 %v465, %v585
        %v591 = vmul.f32 %v470, %v585
        %v592 = vmul.f32 %v473, %v585
        %v593 = vmul.f32 %v478, %v585
        %v594 = vmul.f32 %v481, %v585
        %v595 = vmul.f32 %v486, %v585
        %v596 = vmul.f32 %v489, %v585
        %v597 = vmul.f32 %v494, %v585
        %v598 = vmul.f32 %v497, %v585
        %v599 = vmul.f32 %v502, %v585
        %v600 = vmul.f32 %v505, %v585
        %v601 = vmul.f32 %v510, %v585
        %v602 = vmul.f32 %v513, %v585
        %v603 = vmul.f32 %v518, %v585
        %v604 = vmul.f32 %v521, %v585
        %v605 = vmul.f32 %v526, %v585
        %v606 = vmul.f32 %v529, %v585
        %v607 = vmul.f32 %v534, %v585
        %v608 = vmul.f32 %v537, %v585
        %v609 = vmul.f32 %v542, %v585
        %v610 = vmul.f32 %v545, %v585
        %v611 = vmul.f32 %v550, %v585
        %v612 = vmul.f32 %v553, %v585
        %v613 = vmul.f32 %v558, %v585
        %v614 = vmul.f32 %v561, %v585
        %v615 = vmul.f32 %v566, %v585
        %v616 = vmul.f32 %v569, %v585
        %v617 = vmul.f32 %v574, %v585
        %v618 = vmul.f32 %v577, %v585
        %v619 = vld [vmem:[%s3] sm:$0x1]
        %v621 = vlaneseq
        %v622 = vshrl.u32 %v621, 7
        %v623 = vsub.s32 0, %v622
        %v624 = vrot.slane %v619, %v623
        %v626 = vadd.f32 %v587, %v624
        %v627 = vadd.f32 %v588, %v624
        %v628 = vadd.f32 %v589, %v624
        %v629 = vadd.f32 %v590, %v624
        %v630 = vadd.f32 %v591, %v624
        %v631 = vadd.f32 %v592, %v624
        %v632 = vadd.f32 %v593, %v624
        %v633 = vadd.f32 %v594, %v624
        %v634 = vadd.f32 %v595, %v624
        %v635 = vadd.f32 %v596, %v624
        %v636 = vadd.f32 %v597, %v624
        %v637 = vadd.f32 %v598, %v624
        %v638 = vadd.f32 %v599, %v624
        %v639 = vadd.f32 %v600, %v624
        %v640 = vadd.f32 %v601, %v624
        %v641 = vadd.f32 %v602, %v624
        %v642 = vadd.f32 %v603, %v624
        %v643 = vadd.f32 %v604, %v624
        %v644 = vadd.f32 %v605, %v624
        %v645 = vadd.f32 %v606, %v624
        %v646 = vadd.f32 %v607, %v624
        %v647 = vadd.f32 %v608, %v624
        %v648 = vadd.f32 %v609, %v624
        %v649 = vadd.f32 %v610, %v624
        %v650 = vadd.f32 %v611, %v624
        %v651 = vadd.f32 %v612, %v624
        %v652 = vadd.f32 %v613, %v624
        %v653 = vadd.f32 %v614, %v624
        %v654 = vadd.f32 %v615, %v624
        %v655 = vadd.f32 %v616, %v624
        %v656 = vadd.f32 %v617, %v624
        %v657 = vadd.f32 %v618, %v624
        %v658 = vld [vmem:[%s4] sm:$0x1]
        %vm659 = vcmp.gt.f32.partialorder %v658, 0.0
        %v660 = vmax.f32 %v626, 0.0
        %v661 = vmax.f32 %v627, 0.0
        %v662 = vmax.f32 %v628, 0.0
        %v663 = vmax.f32 %v629, 0.0
        %v664 = vmax.f32 %v630, 0.0
        %v665 = vmax.f32 %v631, 0.0
        %v666 = vmax.f32 %v632, 0.0
        %v667 = vmax.f32 %v633, 0.0
        %v668 = vmax.f32 %v634, 0.0
        %v669 = vmax.f32 %v635, 0.0
        %v670 = vmax.f32 %v636, 0.0
        %v671 = vmax.f32 %v637, 0.0
        %v672 = vmax.f32 %v638, 0.0
        %v673 = vmax.f32 %v639, 0.0
        %v674 = vmax.f32 %v640, 0.0
        %v675 = vmax.f32 %v641, 0.0
        %v676 = vmax.f32 %v642, 0.0
        %v677 = vmax.f32 %v643, 0.0
        %v678 = vmax.f32 %v644, 0.0
        %v679 = vmax.f32 %v645, 0.0
        %v680 = vmax.f32 %v646, 0.0
        %v681 = vmax.f32 %v647, 0.0
        %v682 = vmax.f32 %v648, 0.0
        %v683 = vmax.f32 %v649, 0.0
        %v684 = vmax.f32 %v650, 0.0
        %v685 = vmax.f32 %v651, 0.0
        %v686 = vmax.f32 %v652, 0.0
        %v687 = vmax.f32 %v653, 0.0
        %v688 = vmax.f32 %v654, 0.0
        %v689 = vmax.f32 %v655, 0.0
        %v690 = vmax.f32 %v656, 0.0
        %v691 = vmax.f32 %v657, 0.0
        %v692 = vsel %vm659, 1, 0
        %v693 = vlaneseq
        %v694 = vshrl.u32 %v693, 7
        %v695 = vsub.s32 0, %v694
        %v696 = vrot.slane %v692, %v695
        %vm697 = vcmp.eq.s32.totalorder %v696, 1
        %v698 = vsel %vm697, %v660, %v626
        %v699 = vsel %vm697, %v661, %v627
        %v700 = vsel %vm697, %v662, %v628
        %v701 = vsel %vm697, %v663, %v629
        %v702 = vsel %vm697, %v664, %v630
        %v703 = vsel %vm697, %v665, %v631
        %v704 = vsel %vm697, %v666, %v632
        %v705 = vsel %vm697, %v667, %v633
        %v706 = vsel %vm697, %v668, %v634
        %v707 = vsel %vm697, %v669, %v635
        %v708 = vsel %vm697, %v670, %v636
        %v709 = vsel %vm697, %v671, %v637
        %v710 = vsel %vm697, %v672, %v638
        %v711 = vsel %vm697, %v673, %v639
        %v712 = vsel %vm697, %v674, %v640
        %v713 = vsel %vm697, %v675, %v641
        %v714 = vsel %vm697, %v676, %v642
        %v715 = vsel %vm697, %v677, %v643
        %v716 = vsel %vm697, %v678, %v644
        %v717 = vsel %vm697, %v679, %v645
        %v718 = vsel %vm697, %v680, %v646
        %v719 = vsel %vm697, %v681, %v647
        %v720 = vsel %vm697, %v682, %v648
        %v721 = vsel %vm697, %v683, %v649
        %v722 = vsel %vm697, %v684, %v650
        %v723 = vsel %vm697, %v685, %v651
        %v724 = vsel %vm697, %v686, %v652
        %v725 = vsel %vm697, %v687, %v653
        %v726 = vsel %vm697, %v688, %v654
        %v727 = vsel %vm697, %v689, %v655
        %v728 = vsel %vm697, %v690, %v656
        %v729 = vsel %vm697, %v691, %v657
        %vm730 = vcmask 261120
        %731 = vst.msk [vmem:[%s218] sm:$0xff] %vm730, %v698
        %732 = vst.msk [vmem:[%s218 + $0x8] sm:$0xff] %vm730, %v699
        %733 = vst.msk [vmem:[%s218 + $0x10] sm:$0xff] %vm730, %v700
        %734 = vst.msk [vmem:[%s218 + $0x18] sm:$0xff] %vm730, %v701
        %735 = vst.msk [vmem:[%s218 + $0x20] sm:$0xff] %vm730, %v702
        %736 = vst.msk [vmem:[%s218 + $0x28] sm:$0xff] %vm730, %v703
        %737 = vst.msk [vmem:[%s218 + $0x30] sm:$0xff] %vm730, %v704
        %738 = vst.msk [vmem:[%s218 + $0x38] sm:$0xff] %vm730, %v705
        %739 = vst.msk [vmem:[%s218 + $0x40] sm:$0xff] %vm730, %v706
        %740 = vst.msk [vmem:[%s218 + $0x48] sm:$0xff] %vm730, %v707
        %741 = vst.msk [vmem:[%s218 + $0x50] sm:$0xff] %vm730, %v708
        %742 = vst.msk [vmem:[%s218 + $0x58] sm:$0xff] %vm730, %v709
        %743 = vst.msk [vmem:[%s218 + $0x60] sm:$0xff] %vm730, %v710
        %744 = vst.msk [vmem:[%s218 + $0x68] sm:$0xff] %vm730, %v711
        %745 = vst.msk [vmem:[%s218 + $0x70] sm:$0xff] %vm730, %v712
        %746 = vst.msk [vmem:[%s218 + $0x78] sm:$0xff] %vm730, %v713
        %747 = vst.msk [vmem:[%s218 + $0x80] sm:$0xff] %vm730, %v714
        %748 = vst.msk [vmem:[%s218 + $0x88] sm:$0xff] %vm730, %v715
        %749 = vst.msk [vmem:[%s218 + $0x90] sm:$0xff] %vm730, %v716
        %750 = vst.msk [vmem:[%s218 + $0x98] sm:$0xff] %vm730, %v717
        %751 = vst.msk [vmem:[%s218 + $0xa0] sm:$0xff] %vm730, %v718
        %752 = vst.msk [vmem:[%s218 + $0xa8] sm:$0xff] %vm730, %v719
        %753 = vst.msk [vmem:[%s218 + $0xb0] sm:$0xff] %vm730, %v720
        %754 = vst.msk [vmem:[%s218 + $0xb8] sm:$0xff] %vm730, %v721
        %755 = vst.msk [vmem:[%s218 + $0xc0] sm:$0xff] %vm730, %v722
        %756 = vst.msk [vmem:[%s218 + $0xc8] sm:$0xff] %vm730, %v723
        %757 = vst.msk [vmem:[%s218 + $0xd0] sm:$0xff] %vm730, %v724
        %758 = vst.msk [vmem:[%s218 + $0xd8] sm:$0xff] %vm730, %v725
        %759 = vst.msk [vmem:[%s218 + $0xe0] sm:$0xff] %vm730, %v726
        %760 = vst.msk [vmem:[%s218 + $0xe8] sm:$0xff] %vm730, %v727
        %761 = vst.msk [vmem:[%s218 + $0xf0] sm:$0xff] %vm730, %v728
        %762 = vst.msk [vmem:[%s218 + $0xf8] sm:$0xff] %vm730, %v729
        %s763 = sand.u32 %s137, 1
        %s764 = scalar_lea.sflag [#allocation3], %s763
        %s765 = sand.u32 %s137, 1
        %s766 = smul.addr %s765, 256
        %s767 = scalar_lea.vmem [#allocation2], %s766
        // Predicated region
        $region41: #{easpp_forward.17} parent=39 // pred_check
          %p768 = pneg %p147
        $region42: #{easpp_forward.17} parent=39 // pred_check_branch
          %770 = sbr.rel (%p768) target = $region44
        $region43: #{easpp_forward.17} parent=39 // pred_region
          %s771 = smul.u32 32, %s19
          %s773 = ssub.s32 4096, 4096
          %774 = vsyncadd %s764, %s773
          %s775 = smul.addr %s771, 128
          %s776 = scalar_lea.hbm %s5, %s775
          %s777 = sshll.u32 %s767, 4
          %s778 = int_to_ptr.vmem [resolvable:$true] %s777
          %783 = dma.vmem_to_hbm [thread:$0]  %s778, 4096, %s776, %s764, 128, 128, 8
        $region44: #{easpp_forward.17} parent=39 // pred_fallthru
          _
      $region40: #{easpp_forward.17} parent=5 // pred_fallthru
        _
      %p784 = scmp.le.s32.totalorder 2, %s14
      // Predicated region
      $region45: #{easpp_forward.17} parent=5 // pred_check
        %p785 = pneg %p784
      $region46: #{easpp_forward.17} parent=5 // pred_check_branch
        %787 = sbr.rel (%p785) target = $region48
      $region47: #{easpp_forward.17} parent=5 // pred_region
        %s788 = ssub.s32 %s14, 2
        // Predicated region
        $region49: #{easpp_forward.17} parent=47 // pred_check
          %p789 = pneg %p153
        $region50: #{easpp_forward.17} parent=47 // pred_check_branch
          %791 = sbr.rel (%p789) target = $region52
        $region51: #{easpp_forward.17} parent=47 // pred_region
          %s792 = sand.u32 %s138, 1
          %s793 = scalar_lea.sflag [#allocation3], %s792
          %s794 = sand.u32 %s138, 1
          %s795 = smul.addr %s794, 256
          %s796 = scalar_lea.vmem [#allocation2], %s795
          %797 = dma.done %s793, 4096
        $region52: #{easpp_forward.17} parent=47 // pred_fallthru
          _
      $region48: #{easpp_forward.17} parent=5 // pred_fallthru
        _
    $region6: #{easpp_forward.17} parent=1 // loop_footer
      %s18 = sadd.s32 1, %s14
    $region7: #{easpp_forward.17} parent=1 // loop_footer_branch
      %13 = sbr.rel target = $region3
    $region8: #{easpp_forward.17} parent=1 // loop_exit
      _
    %798 = vsyncpa [#allocation3], 1
    %s799 = scalar_lea.sflag [#allocation3], 1
    %800 = vsyncpa %s799, 1

</llo_original>
